<compile_context>
chip_gen: v5e
topology: v5e:2x2
jax: 0.10.0
libtpu: 0.0.40
codegen_flags: <defaults>
</compile_context>

<pallas_src>
import jax
import jax.numpy as jnp
import numpy as np
from jax.experimental import pallas as pl
from jax.experimental.pallas import tpu as pltpu


_VMEM_LIMIT_BYTES = 48 * 1024 * 1024     # fits every generation (v7x: 64 MiB/TC)


def _round_up(x, m):
    return (x + m - 1) // m * m


def _bspec(shape, index_map, n_buffers=None):
    """BlockSpec, optionally with an explicit buffer count (constant blocks)."""
    if n_buffers is not None and hasattr(pl, "Buffered"):
        try:
            return pl.BlockSpec(shape, index_map, pipeline_mode=pl.Buffered(n_buffers))
        except TypeError:        # older jax without the pipeline_mode kwarg
            pass
    return pl.BlockSpec(shape, index_map)


# ----------------------------- Pallas kernels ------------------------------

def _make_conv3x3_kernel(*, wp, wo, lg, head, shortcut, res_off, zero_garbage):
    """3x3 / stride-1 conv over a flattened zero-padded NHWC image.

    The input block is one image, zero-padded and flattened with row length
    wp = wo + 2.  Tap (ky, kx) of the conv is then the contiguous slice at
    offset ky*wp + kx, so the conv is 9 MXU matmuls accumulated in f32.
    The output is written as flat rows of length wp (wo valid + 2 garbage
    columns); with head > 0 the garbage columns and the margins are zeroed so
    the block output *is* the next 3x3 conv's zero-padded flat input.
    """

    def kernel(*refs):
        if shortcut == "none":
            x_ref, w_ref, b_ref, o_ref, acc_ref = refs
        elif shortcut == "identity":
            x_ref, res_ref, w_ref, b_ref, o_ref, acc_ref = refs
        else:  # "conv": fused 1x1-conv shortcut (+ folded BN)
            x_ref, res_ref, w_ref, b_ref, wsc_ref, bsc_ref, o_ref, acc_ref = refs

        for t in range(9):
            ky, kx = divmod(t, 3)
            off = ky * wp + kx
            d = jnp.dot(x_ref[0, off:off + lg, :], w_ref[t],
                        preferred_element_type=jnp.float32)
            if t == 0:
                acc_ref[...] = d
            else:
                acc_ref[...] += d

        out = acc_ref[...] + b_ref[...]
        if shortcut == "identity":
            out = out + res_ref[0, res_off:res_off + lg, :].astype(jnp.float32)
        elif shortcut == "conv":
            sc = jnp.dot(res_ref[0, res_off:res_off + lg, :], wsc_ref[...],
                         preferred_element_type=jnp.float32) + bsc_ref[...]
            out = out + sc
        out = jnp.maximum(out, 0.0)

        if zero_garbage:                      # zero the 2 garbage cols per row
            col = jax.lax.broadcasted_iota(jnp.int32, (lg, 1), 0) % wp
            out = jnp.where(col < wo, out, 0.0)

        if head:                              # emit next conv's padded layout
            o_ref[...] = jnp.zeros(o_ref.shape, o_ref.dtype)
            o_ref[0, head:head + lg, :] = out.astype(o_ref.dtype)
        else:
            o_ref[0] = out.astype(o_ref.dtype)

    return kernel


def _matmul_bias_relu_kernel(p_ref, w_ref, b_ref, o_ref):
    """Single-K fused matmul (+bias +ReLU): writes o_ref directly, no scratch."""
    out = jnp.dot(p_ref[0], w_ref[...],
                  preferred_element_type=jnp.float32) + b_ref[...]
    o_ref[0] = jnp.maximum(out, 0.0).astype(o_ref.dtype)


# ----------------------------- kernel wrappers ------------------------------

def _conv3x3_flat(x_pf, w9, bias, *, h_out, w_out, out_dtype,
                  shortcut="none", res=None, res_off=0, wsc=None, bsc=None,
                  repad_for_next=False):
    """Fused 3x3 stride-1 conv + folded BN (+fused shortcut) + ReLU.

    x_pf : (N, Lp, Cin) bf16  flattened zero-padded image, row length w_out+2
    w9   : (9, Cin, Cp) bf16  scale-folded conv weights
    bias : (1, Cp) f32        folded BN bias
    res  : optional (N, Lr, Cr) residual source in the same flat layout
    """
    n, lp, cin = x_pf.shape
    cp = w9.shape[2]
    wp = w_out + 2
    lg = h_out * wp
    head = wp + 1 if repad_for_next else 0
    lout = (h_out + 3) * wp if repad_for_next else lg
    assert lp >= (h_out + 3) * wp and w9.shape[1] == cin

    kernel = _make_conv3x3_kernel(wp=wp, wo=w_out, lg=lg, head=head,
                                  shortcut=shortcut, res_off=res_off,
                                  zero_garbage=repad_for_next)

    in_specs = [pl.BlockSpec((1, lp, cin), lambda i: (i, 0, 0))]
    args = [x_pf]
    if shortcut != "none":
        lr, cr = res.shape[1], res.shape[2]
        in_specs.append(pl.BlockSpec((1, lr, cr), lambda i: (i, 0, 0)))
        args.append(res)
    in_specs += [_bspec((9, cin, cp), lambda i: (0, 0, 0), 1),
                 _bspec((1, cp), lambda i: (0, 0), 1)]
    args += [w9, bias]
    if shortcut == "conv":
        in_specs += [_bspec(wsc.shape, lambda i: (0, 0), 1),
                     _bspec((1, cp), lambda i: (0, 0), 1)]
        args += [wsc, bsc]

    return pl.pallas_call(
        kernel,
        out_shape=jax.ShapeDtypeStruct((n, lout, cp), out_dtype),
        grid=(n,),
        in_specs=in_specs,
        out_specs=pl.BlockSpec((1, lout, cp), lambda i: (i, 0, 0)),
        scratch_shapes=[pltpu.VMEM((lg, cp), jnp.float32)],
        compiler_params=pltpu.CompilerParams(
            dimension_semantics=("parallel",),
            vmem_limit_bytes=_VMEM_LIMIT_BYTES),
    )(*args)


def _matmul_bias_relu(p, w, bias, out_dtype):
    """(N, M, K) @ (K, Cp) + bias, ReLU -- weight/bias VMEM-resident."""
    n, m, k = p.shape
    cp = w.shape[1]
    return pl.pallas_call(
        _matmul_bias_relu_kernel,
        out_shape=jax.ShapeDtypeStruct((n, m, cp), out_dtype),
        grid=(n,),
        in_specs=[pl.BlockSpec((1, m, k), lambda i: (i, 0, 0)),
                  _bspec((k, cp), lambda i: (0, 0), 1),
                  _bspec((1, cp), lambda i: (0, 0), 1)],
        out_specs=pl.BlockSpec((1, m, cp), lambda i: (i, 0, 0)),
        compiler_params=pltpu.CompilerParams(
            dimension_semantics=("parallel",),
            vmem_limit_bytes=_VMEM_LIMIT_BYTES),
    )(p, w, bias)


# ------------------------------- JAX glue ----------------------------------

def _fold_bn(gamma, beta, mean, var, eps=1e-5):
    scale = gamma / jnp.sqrt(var + eps)
    return scale, beta - mean * scale


def _prep_w3x3(w_hwio, scale, cin_p, cout_p):
    """(3,3,ci,co) f32 -> BN-scale folded, zero padded, bf16, (9, cin_p, cout_p)."""
    kh, kw, ci, co = w_hwio.shape
    w = (w_hwio * scale).astype(jnp.bfloat16)
    w = jnp.pad(w, ((0, 0), (0, 0), (0, cin_p - ci), (0, cout_p - co)))
    return w.reshape(kh * kw, cin_p, cout_p)


def _prep_vec(v, cp):
    return jnp.pad(v.astype(jnp.float32), (0, cp - v.shape[0])).reshape(1, cp)


def basic_block_forward(x_nchw, params, stride):
    """out = relu(bn2(conv2(relu(bn1(conv1(x))))) + shortcut(x))  (eval mode)."""
    x = jnp.transpose(x_nchw, (0, 2, 3, 1)).astype(jnp.bfloat16)   # NCHW -> NHWC
    n, h, w, cin = x.shape
    planes = params["w1"].shape[-1]
    cin_p = _round_up(cin, 128)
    cp = _round_up(planes, 128)

    s1, b1 = _fold_bn(*params["bn1"])
    s2, b2 = _fold_bn(*params["bn2"])
    w1 = _prep_w3x3(params["w1"], s1, cin_p, cp)
    w2 = _prep_w3x3(params["w2"], s2, cp, cp)
    b1p = _prep_vec(b1, cp)
    b2p = _prep_vec(b2, cp)

    # zero-padded (pad=1, +1 extra bottom row for the flat-tap over-read),
    # channel-padded, flattened image: (N, (H+3)*(W+2), cin_p), bf16
    xp4 = jnp.pad(x, ((0, 0), (1, 2), (1, 1), (0, cin_p - cin)))
    xpf = xp4.reshape(n, (h + 3) * (w + 2), cin_p)

    ho = (h - 1) // stride + 1
    wo = (w - 1) // stride + 1

    if stride == 1:
        # conv1+bn1+relu, written directly in conv2's zero-padded flat layout
        out1_pf = _conv3x3_flat(xpf, w1, b1p, h_out=h, w_out=w,
                                out_dtype=jnp.bfloat16, repad_for_next=True)
    else:
        # TODO(synk): stride!=1 3x3 conv still goes through an XLA im2col.
        cols = [xp4[:, ky:ky + stride * (ho - 1) + 1:stride,
                       kx:kx + stride * (wo - 1) + 1:stride, :]
                for ky in range(3) for kx in range(3)]
        patches = jnp.concatenate(cols, axis=-1).reshape(n, ho * wo, 9 * cin_p)
        out1 = _matmul_bias_relu(patches, w1.reshape(9 * cin_p, cp), b1p,
                                 jnp.bfloat16)
        out1_pf = jnp.pad(out1.reshape(n, ho, wo, cp),
                          ((0, 0), (1, 2), (1, 1), (0, 0))
                          ).reshape(n, (ho + 3) * (wo + 2), cp)

    if stride != 1 or cin != planes:
        # conv2 + bn2 + fused 1x1-conv shortcut (+bn_sc) + relu
        ssc, bsc = _fold_bn(*params["bn_sc"])
        wsc = jnp.pad((params["w_sc"][0, 0] * ssc).astype(jnp.bfloat16),
                      ((0, cin_p - cin), (0, cp - planes)))
        bscp = _prep_vec(bsc, cp)
        if stride == 1:
            res_src, res_off = xpf, w + 3            # x[y, x] in flat coords
        else:
            xs = jnp.pad(x[:, ::stride, ::stride, :],
                         ((0, 0), (0, 0), (0, 2), (0, cin_p - cin)))
            res_src, res_off = xs.reshape(n, ho * (wo + 2), cin_p), 0
        out2 = _conv3x3_flat(out1_pf, w2, b2p, h_out=ho, w_out=wo,
                             out_dtype=jnp.float32, shortcut="conv",
                             res=res_src, res_off=res_off, wsc=wsc, bsc=bscp)
    else:
        # conv2 + bn2 + identity residual (re-read straight from xpf) + relu
        out2 = _conv3x3_flat(out1_pf, w2, b2p, h_out=ho, w_out=wo,
                             out_dtype=jnp.float32, shortcut="identity",
                             res=xpf, res_off=w + 3)

    out = out2.reshape(n, ho, wo + 2, cp)[:, :, :wo, :planes]
    return jnp.transpose(out, (0, 3, 1, 2))                       # NHWC -> NCHW


# --------------------------- pure-JAX reference -----------------------------

def _reference_forward(x_nchw, params, stride):
    x = jnp.transpose(x_nchw, (0, 2, 3, 1))

    def conv(inp, w, s, pad):
        return jax.lax.conv_general_dilated(
            inp, w, (s, s), [(pad, pad), (pad, pad)],
            dimension_numbers=("NHWC", "HWIO", "NHWC"))

    def bn(y, p):
        g, b, m, v = p
        return (y - m) / jnp.sqrt(v + 1e-5) * g + b

    out = jax.nn.relu(bn(conv(x, params["w1"], stride, 1), params["bn1"]))
    out = bn(conv(out, params["w2"], 1, 1), params["bn2"])
    in_planes, planes = x.shape[-1], params["w1"].shape[-1]
    if stride != 1 or in_planes != planes:
        sc = bn(conv(x, params["w_sc"], stride, 0), params["bn_sc"])
    else:
        sc = x
    return jnp.transpose(jax.nn.relu(out + sc), (0, 3, 1, 2))


# --------------------------------- main -------------------------------------

if __name__ == "__main__":
    key = jax.random.PRNGKey(0)

    def bn_params(k, c):
        k1, k2, k3, k4 = jax.random.split(k, 4)
        gamma = 1.0 + 0.1 * jax.random.normal(k1, (c,), jnp.float32)
        beta = 0.1 * jax.random.normal(k2, (c,), jnp.float32)
        mean = 0.1 * jax.random.normal(k3, (c,), jnp.float32)
        var = jnp.abs(jax.random.normal(k4, (c,), jnp.float32)) + 0.5
        return (gamma, beta, mean, var)

    def conv_w(k, kh, kw, cin, cout):
        std = (2.0 / (kh * kw * cin)) ** 0.5
        return std * jax.random.normal(k, (kh, kw, cin, cout), jnp.float32)

    def make_params(k, cin, planes, with_shortcut):
        ks = jax.random.split(k, 6)
        p = {"w1": conv_w(ks[0], 3, 3, cin, planes), "bn1": bn_params(ks[1], planes),
             "w2": conv_w(ks[2], 3, 3, planes, planes), "bn2": bn_params(ks[3], planes)}
        if with_shortcut:
            p["w_sc"] = conv_w(ks[4], 1, 1, cin, planes)
            p["bn_sc"] = bn_params(ks[5], planes)
        return p

    fwd = jax.jit(basic_block_forward, static_argnums=2)

    def check(x, params, stride):
        out = jax.block_until_ready(fwd(x, params, stride))
        ref = _reference_forward(x, params, stride)
        np.testing.assert_allclose(np.asarray(out), np.asarray(ref),
                                   rtol=5e-2, atol=5e-2)

    ks = jax.random.split(key, 6)

    # 1: stride=1, conv shortcut (in_planes != planes)
    x1 = jax.random.normal(ks[0], (2, 4, 16, 16), jnp.float32)
    check(x1, make_params(ks[1], 4, 8, True), 1)

    # 2: stride=1, identity shortcut (channels not a multiple of 128)
    x2 = jax.random.normal(ks[2], (1, 64, 8, 8), jnp.float32)
    check(x2, make_params(ks[3], 64, 64, False), 1)

    # 3: stride=2 downsample block (im2col fallback + fused 1x1 shortcut)
    x3 = jax.random.normal(ks[4], (2, 8, 8, 8), jnp.float32)
    check(x3, make_params(ks[5], 8, 16, True), 2)

    print("KERNEL_OK")
</pallas_src>

<mosaic_0001>
module attributes {stable_mosaic.version = 11 : i64} {
  func.func @kernel(%arg0: i32, %arg1: memref<1x342x128xbf16, #tpu.memory_space<vmem>>, %arg2: memref<9x128x128xbf16, #tpu.memory_space<vmem>>, %arg3: memref<1x128xf32, #tpu.memory_space<vmem>>, %arg4: memref<1x342x128xbf16, #tpu.memory_space<vmem>>, %arg5: memref<288x128xf32, #tpu.memory_space<vmem>>) attributes {dimension_semantics = [#tpu.dimension_semantics<parallel>], iteration_bounds = array<i64: 2>, scalar_prefetch = 0 : i64, scratch_operands = 1 : i64, tpu.core_type = #tpu.core_type<tc>, window_params = [{transform_indices = @transform_0, window_bounds = array<i64: 1, 342, 128>}, {pipeline_mode = #tpu.pipeline_mode<synchronous>, transform_indices = @transform_1, window_bounds = array<i64: 9, 128, 128>}, {pipeline_mode = #tpu.pipeline_mode<synchronous>, transform_indices = @transform_2, window_bounds = array<i64: 1, 128>}, {transform_indices = @transform_3, window_bounds = array<i64: 1, 342, 128>}]} {
    %c0 = arith.constant 0 : index
    %c0_0 = arith.constant 0 : index
    %c0_1 = arith.constant 0 : index
    %0 = vector.load %arg1[%c0, %c0_0, %c0_1] : memref<1x342x128xbf16, #tpu.memory_space<vmem>>, vector<1x288x128xbf16>
    %1 = vector.shape_cast %0 : vector<1x288x128xbf16> to vector<288x128xbf16>
    %c0_2 = arith.constant 0 : index
    %c0_3 = arith.constant 0 : index
    %c0_4 = arith.constant 0 : index
    %2 = vector.load %arg2[%c0_2, %c0_3, %c0_4] : memref<9x128x128xbf16, #tpu.memory_space<vmem>>, vector<1x128x128xbf16>
    %3 = vector.shape_cast %2 : vector<1x128x128xbf16> to vector<128x128xbf16>
    %cst = arith.constant dense<0.000000e+00> : vector<288x128xf32>
    %4 = tpu.matmul %1, %3, %cst {dimension_numbers = #tpu.dot_dimension_numbers<[1], [0], [0], [1], [0, 0, 1, 1], [], []>} : vector<288x128xbf16>, vector<128x128xbf16>, vector<288x128xf32> -> vector<288x128xf32>
    %c0_5 = arith.constant 0 : index
    %c0_6 = arith.constant 0 : index
    %5 = vector.load %arg5[%c0_5, %c0_6] : memref<288x128xf32, #tpu.memory_space<vmem>>, vector<288x128xf32>
    tpu.vector_store %arg5[%c0_5, %c0_6], %4 {strides = array<i32>} : memref<288x128xf32, #tpu.memory_space<vmem>>, vector<288x128xf32>,
    %c0_7 = arith.constant 0 : index
    %c1 = arith.constant 1 : index
    %c0_8 = arith.constant 0 : index
    %6 = vector.load %arg1[%c0_7, %c1, %c0_8] : memref<1x342x128xbf16, #tpu.memory_space<vmem>>, vector<1x288x128xbf16>
    %7 = vector.shape_cast %6 : vector<1x288x128xbf16> to vector<288x128xbf16>
    %c1_9 = arith.constant 1 : index
    %c0_10 = arith.constant 0 : index
    %c0_11 = arith.constant 0 : index
    %8 = vector.load %arg2[%c1_9, %c0_10, %c0_11] : memref<9x128x128xbf16, #tpu.memory_space<vmem>>, vector<1x128x128xbf16>
    %9 = vector.shape_cast %8 : vector<1x128x128xbf16> to vector<128x128xbf16>
    %cst_12 = arith.constant dense<0.000000e+00> : vector<288x128xf32>
    %10 = tpu.matmul %7, %9, %cst_12 {dimension_numbers = #tpu.dot_dimension_numbers<[1], [0], [0], [1], [0, 0, 1, 1], [], []>} : vector<288x128xbf16>, vector<128x128xbf16>, vector<288x128xf32> -> vector<288x128xf32>
    %c0_13 = arith.constant 0 : index
    %c0_14 = arith.constant 0 : index
    %11 = vector.load %arg5[%c0_13, %c0_14] : memref<288x128xf32, #tpu.memory_space<vmem>>, vector<288x128xf32>
    %12 = arith.addf %11, %10 : vector<288x128xf32>
    %c0_15 = arith.constant 0 : index
    %c0_16 = arith.constant 0 : index
    %13 = vector.load %arg5[%c0_15, %c0_16] : memref<288x128xf32, #tpu.memory_space<vmem>>, vector<288x128xf32>
    tpu.vector_store %arg5[%c0_15, %c0_16], %12 {strides = array<i32>} : memref<288x128xf32, #tpu.memory_space<vmem>>, vector<288x128xf32>,
    %c0_17 = arith.constant 0 : index
    %c2 = arith.constant 2 : index
    %c0_18 = arith.constant 0 : index
    %14 = vector.load %arg1[%c0_17, %c2, %c0_18] : memref<1x342x128xbf16, #tpu.memory_space<vmem>>, vector<1x288x128xbf16>
    %15 = vector.shape_cast %14 : vector<1x288x128xbf16> to vector<288x128xbf16>
    %c2_19 = arith.constant 2 : index
    %c0_20 = arith.constant 0 : index
    %c0_21 = arith.constant 0 : index
    %16 = vector.load %arg2[%c2_19, %c0_20, %c0_21] : memref<9x128x128xbf16, #tpu.memory_space<vmem>>, vector<1x128x128xbf16>
    %17 = vector.shape_cast %16 : vector<1x128x128xbf16> to vector<128x128xbf16>
    %cst_22 = arith.constant dense<0.000000e+00> : vector<288x128xf32>
    %18 = tpu.matmul %15, %17, %cst_22 {dimension_numbers = #tpu.dot_dimension_numbers<[1], [0], [0], [1], [0, 0, 1, 1], [], []>} : vector<288x128xbf16>, vector<128x128xbf16>, vector<288x128xf32> -> vector<288x128xf32>
    %c0_23 = arith.constant 0 : index
    %c0_24 = arith.constant 0 : index
    %19 = vector.load %arg5[%c0_23, %c0_24] : memref<288x128xf32, #tpu.memory_space<vmem>>, vector<288x128xf32>
    %20 = arith.addf %19, %18 : vector<288x128xf32>
    %c0_25 = arith.constant 0 : index
    %c0_26 = arith.constant 0 : index
    %21 = vector.load %arg5[%c0_25, %c0_26] : memref<288x128xf32, #tpu.memory_space<vmem>>, vector<288x128xf32>
    tpu.vector_store %arg5[%c0_25, %c0_26], %20 {strides = array<i32>} : memref<288x128xf32, #tpu.memory_space<vmem>>, vector<288x128xf32>,
    %c0_27 = arith.constant 0 : index
    %c18 = arith.constant 18 : index
    %c0_28 = arith.constant 0 : index
    %22 = vector.load %arg1[%c0_27, %c18, %c0_28] : memref<1x342x128xbf16, #tpu.memory_space<vmem>>, vector<1x288x128xbf16>
    %23 = vector.shape_cast %22 : vector<1x288x128xbf16> to vector<288x128xbf16>
    %c3 = arith.constant 3 : index
    %c0_29 = arith.constant 0 : index
    %c0_30 = arith.constant 0 : index
    %24 = vector.load %arg2[%c3, %c0_29, %c0_30] : memref<9x128x128xbf16, #tpu.memory_space<vmem>>, vector<1x128x128xbf16>
    %25 = vector.shape_cast %24 : vector<1x128x128xbf16> to vector<128x128xbf16>
    %cst_31 = arith.constant dense<0.000000e+00> : vector<288x128xf32>
    %26 = tpu.matmul %23, %25, %cst_31 {dimension_numbers = #tpu.dot_dimension_numbers<[1], [0], [0], [1], [0, 0, 1, 1], [], []>} : vector<288x128xbf16>, vector<128x128xbf16>, vector<288x128xf32> -> vector<288x128xf32>
    %c0_32 = arith.constant 0 : index
    %c0_33 = arith.constant 0 : index
    %27 = vector.load %arg5[%c0_32, %c0_33] : memref<288x128xf32, #tpu.memory_space<vmem>>, vector<288x128xf32>
    %28 = arith.addf %27, %26 : vector<288x128xf32>
    %c0_34 = arith.constant 0 : index
    %c0_35 = arith.constant 0 : index
    %29 = vector.load %arg5[%c0_34, %c0_35] : memref<288x128xf32, #tpu.memory_space<vmem>>, vector<288x128xf32>
    tpu.vector_store %arg5[%c0_34, %c0_35], %28 {strides = array<i32>} : memref<288x128xf32, #tpu.memory_space<vmem>>, vector<288x128xf32>,
    %c0_36 = arith.constant 0 : index
    %c19 = arith.constant 19 : index
    %c0_37 = arith.constant 0 : index
    %30 = vector.load %arg1[%c0_36, %c19, %c0_37] : memref<1x342x128xbf16, #tpu.memory_space<vmem>>, vector<1x288x128xbf16>
    %31 = vector.shape_cast %30 : vector<1x288x128xbf16> to vector<288x128xbf16>
    %c4 = arith.constant 4 : index
    %c0_38 = arith.constant 0 : index
    %c0_39 = arith.constant 0 : index
    %32 = vector.load %arg2[%c4, %c0_38, %c0_39] : memref<9x128x128xbf16, #tpu.memory_space<vmem>>, vector<1x128x128xbf16>
    %33 = vector.shape_cast %32 : vector<1x128x128xbf16> to vector<128x128xbf16>
    %cst_40 = arith.constant dense<0.000000e+00> : vector<288x128xf32>
    %34 = tpu.matmul %31, %33, %cst_40 {dimension_numbers = #tpu.dot_dimension_numbers<[1], [0], [0], [1], [0, 0, 1, 1], [], []>} : vector<288x128xbf16>, vector<128x128xbf16>, vector<288x128xf32> -> vector<288x128xf32>
    %c0_41 = arith.constant 0 : index
    %c0_42 = arith.constant 0 : index
    %35 = vector.load %arg5[%c0_41, %c0_42] : memref<288x128xf32, #tpu.memory_space<vmem>>, vector<288x128xf32>
    %36 = arith.addf %35, %34 : vector<288x128xf32>
    %c0_43 = arith.constant 0 : index
    %c0_44 = arith.constant 0 : index
    %37 = vector.load %arg5[%c0_43, %c0_44] : memref<288x128xf32, #tpu.memory_space<vmem>>, vector<288x128xf32>
    tpu.vector_store %arg5[%c0_43, %c0_44], %36 {strides = array<i32>} : memref<288x128xf32, #tpu.memory_space<vmem>>, vector<288x128xf32>,
    %c0_45 = arith.constant 0 : index
    %c20 = arith.constant 20 : index
    %c0_46 = arith.constant 0 : index
    %38 = vector.load %arg1[%c0_45, %c20, %c0_46] : memref<1x342x128xbf16, #tpu.memory_space<vmem>>, vector<1x288x128xbf16>
    %39 = vector.shape_cast %38 : vector<1x288x128xbf16> to vector<288x128xbf16>
    %c5 = arith.constant 5 : index
    %c0_47 = arith.constant 0 : index
    %c0_48 = arith.constant 0 : index
    %40 = vector.load %arg2[%c5, %c0_47, %c0_48] : memref<9x128x128xbf16, #tpu.memory_space<vmem>>, vector<1x128x128xbf16>
    %41 = vector.shape_cast %40 : vector<1x128x128xbf16> to vector<128x128xbf16>
    %cst_49 = arith.constant dense<0.000000e+00> : vector<288x128xf32>
    %42 = tpu.matmul %39, %41, %cst_49 {dimension_numbers = #tpu.dot_dimension_numbers<[1], [0], [0], [1], [0, 0, 1, 1], [], []>} : vector<288x128xbf16>, vector<128x128xbf16>, vector<288x128xf32> -> vector<288x128xf32>
    %c0_50 = arith.constant 0 : index
    %c0_51 = arith.constant 0 : index
    %43 = vector.load %arg5[%c0_50, %c0_51] : memref<288x128xf32, #tpu.memory_space<vmem>>, vector<288x128xf32>
    %44 = arith.addf %43, %42 : vector<288x128xf32>
    %c0_52 = arith.constant 0 : index
    %c0_53 = arith.constant 0 : index
    %45 = vector.load %arg5[%c0_52, %c0_53] : memref<288x128xf32, #tpu.memory_space<vmem>>, vector<288x128xf32>
    tpu.vector_store %arg5[%c0_52, %c0_53], %44 {strides = array<i32>} : memref<288x128xf32, #tpu.memory_space<vmem>>, vector<288x128xf32>,
    %c0_54 = arith.constant 0 : index
    %c36 = arith.constant 36 : index
    %c0_55 = arith.constant 0 : index
    %46 = vector.load %arg1[%c0_54, %c36, %c0_55] : memref<1x342x128xbf16, #tpu.memory_space<vmem>>, vector<1x288x128xbf16>
    %47 = vector.shape_cast %46 : vector<1x288x128xbf16> to vector<288x128xbf16>
    %c6 = arith.constant 6 : index
    %c0_56 = arith.constant 0 : index
    %c0_57 = arith.constant 0 : index
    %48 = vector.load %arg2[%c6, %c0_56, %c0_57] : memref<9x128x128xbf16, #tpu.memory_space<vmem>>, vector<1x128x128xbf16>
    %49 = vector.shape_cast %48 : vector<1x128x128xbf16> to vector<128x128xbf16>
    %cst_58 = arith.constant dense<0.000000e+00> : vector<288x128xf32>
    %50 = tpu.matmul %47, %49, %cst_58 {dimension_numbers = #tpu.dot_dimension_numbers<[1], [0], [0], [1], [0, 0, 1, 1], [], []>} : vector<288x128xbf16>, vector<128x128xbf16>, vector<288x128xf32> -> vector<288x128xf32>
    %c0_59 = arith.constant 0 : index
    %c0_60 = arith.constant 0 : index
    %51 = vector.load %arg5[%c0_59, %c0_60] : memref<288x128xf32, #tpu.memory_space<vmem>>, vector<288x128xf32>
    %52 = arith.addf %51, %50 : vector<288x128xf32>
    %c0_61 = arith.constant 0 : index
    %c0_62 = arith.constant 0 : index
    %53 = vector.load %arg5[%c0_61, %c0_62] : memref<288x128xf32, #tpu.memory_space<vmem>>, vector<288x128xf32>
    tpu.vector_store %arg5[%c0_61, %c0_62], %52 {strides = array<i32>} : memref<288x128xf32, #tpu.memory_space<vmem>>, vector<288x128xf32>,
    %c0_63 = arith.constant 0 : index
    %c37 = arith.constant 37 : index
    %c0_64 = arith.constant 0 : index
    %54 = vector.load %arg1[%c0_63, %c37, %c0_64] : memref<1x342x128xbf16, #tpu.memory_space<vmem>>, vector<1x288x128xbf16>
    %55 = vector.shape_cast %54 : vector<1x288x128xbf16> to vector<288x128xbf16>
    %c7 = arith.constant 7 : index
    %c0_65 = arith.constant 0 : index
    %c0_66 = arith.constant 0 : index
    %56 = vector.load %arg2[%c7, %c0_65, %c0_66] : memref<9x128x128xbf16, #tpu.memory_space<vmem>>, vector<1x128x128xbf16>
    %57 = vector.shape_cast %56 : vector<1x128x128xbf16> to vector<128x128xbf16>
    %cst_67 = arith.constant dense<0.000000e+00> : vector<288x128xf32>
    %58 = tpu.matmul %55, %57, %cst_67 {dimension_numbers = #tpu.dot_dimension_numbers<[1], [0], [0], [1], [0, 0, 1, 1], [], []>} : vector<288x128xbf16>, vector<128x128xbf16>, vector<288x128xf32> -> vector<288x128xf32>
    %c0_68 = arith.constant 0 : index
    %c0_69 = arith.constant 0 : index
    %59 = vector.load %arg5[%c0_68, %c0_69] : memref<288x128xf32, #tpu.memory_space<vmem>>, vector<288x128xf32>
    %60 = arith.addf %59, %58 : vector<288x128xf32>
    %c0_70 = arith.constant 0 : index
    %c0_71 = arith.constant 0 : index
    %61 = vector.load %arg5[%c0_70, %c0_71] : memref<288x128xf32, #tpu.memory_space<vmem>>, vector<288x128xf32>
    tpu.vector_store %arg5[%c0_70, %c0_71], %60 {strides = array<i32>} : memref<288x128xf32, #tpu.memory_space<vmem>>, vector<288x128xf32>,
    %c0_72 = arith.constant 0 : index
    %c38 = arith.constant 38 : index
    %c0_73 = arith.constant 0 : index
    %62 = vector.load %arg1[%c0_72, %c38, %c0_73] : memref<1x342x128xbf16, #tpu.memory_space<vmem>>, vector<1x288x128xbf16>
    %63 = vector.shape_cast %62 : vector<1x288x128xbf16> to vector<288x128xbf16>
    %c8 = arith.constant 8 : index
    %c0_74 = arith.constant 0 : index
    %c0_75 = arith.constant 0 : index
    %64 = vector.load %arg2[%c8, %c0_74, %c0_75] : memref<9x128x128xbf16, #tpu.memory_space<vmem>>, vector<1x128x128xbf16>
    %65 = vector.shape_cast %64 : vector<1x128x128xbf16> to vector<128x128xbf16>
    %cst_76 = arith.constant dense<0.000000e+00> : vector<288x128xf32>
    %66 = tpu.matmul %63, %65, %cst_76 {dimension_numbers = #tpu.dot_dimension_numbers<[1], [0], [0], [1], [0, 0, 1, 1], [], []>} : vector<288x128xbf16>, vector<128x128xbf16>, vector<288x128xf32> -> vector<288x128xf32>
    %c0_77 = arith.constant 0 : index
    %c0_78 = arith.constant 0 : index
    %67 = vector.load %arg5[%c0_77, %c0_78] : memref<288x128xf32, #tpu.memory_space<vmem>>, vector<288x128xf32>
    %68 = arith.addf %67, %66 : vector<288x128xf32>
    %c0_79 = arith.constant 0 : index
    %c0_80 = arith.constant 0 : index
    %69 = vector.load %arg5[%c0_79, %c0_80] : memref<288x128xf32, #tpu.memory_space<vmem>>, vector<288x128xf32>
    tpu.vector_store %arg5[%c0_79, %c0_80], %68 {strides = array<i32>} : memref<288x128xf32, #tpu.memory_space<vmem>>, vector<288x128xf32>,
    %c0_81 = arith.constant 0 : index
    %c0_82 = arith.constant 0 : index
    %70 = vector.load %arg5[%c0_81, %c0_82] : memref<288x128xf32, #tpu.memory_space<vmem>>, vector<288x128xf32>
    %c0_83 = arith.constant 0 : index
    %c0_84 = arith.constant 0 : index
    %71 = vector.load %arg3[%c0_83, %c0_84] : memref<1x128xf32, #tpu.memory_space<vmem>>, vector<1x128xf32>
    %72 = vector.broadcast %71 : vector<1x128xf32> to vector<288x128xf32>
    %73 = arith.addf %70, %72 : vector<288x128xf32>
    %cst_85 = arith.constant 0.000000e+00 : f32
    %74 = vector.broadcast %cst_85 : f32 to vector<288x128xf32>
    %75 = arith.maximumf %73, %74 : vector<288x128xf32>
    %76 = tpu.iota {dimensions = array<i32: 0>} : vector<288x1xi32>
    %c18_i32 = arith.constant 18 : i32
    %c0_i32 = arith.constant 0 : i32
    %77 = arith.cmpi eq, %c18_i32, %c0_i32 : i32
    %c1_i32 = arith.constant 1 : i32
    %78 = arith.select %77, %c1_i32, %c18_i32 : i32
    %79 = vector.broadcast %78 : i32 to vector<288x1xi32>
    %80 = arith.remsi %76, %79 : vector<288x1xi32>
    %c0_i32_86 = arith.constant 0 : i32
    %81 = vector.broadcast %c0_i32_86 : i32 to vector<288x1xi32>
    %82 = arith.cmpi ne, %80, %81 : vector<288x1xi32>
    %c0_i32_87 = arith.constant 0 : i32
    %83 = vector.broadcast %c0_i32_87 : i32 to vector<288x1xi32>
    %84 = arith.cmpi slt, %80, %83 : vector<288x1xi32>
    %c0_i32_88 = arith.constant 0 : i32
    %85 = arith.cmpi slt, %78, %c0_i32_88 : i32
    %86 = vector.broadcast %85 : i1 to vector<288x1xi1>
    %87 = vector.broadcast %86 : vector<288x1xi1> to vector<288x1xi1>
    %88 = arith.xori %84, %87 : vector<288x1xi1>
    %89 = arith.andi %88, %82 : vector<288x1xi1>
    %90 = vector.broadcast %78 : i32 to vector<288x1xi32>
    %91 = arith.addi %80, %90 : vector<288x1xi32>
    %92 = arith.select %89, %91, %80 : vector<288x1xi1>, vector<288x1xi32>
    %c16_i32 = arith.constant 16 : i32
    %93 = vector.broadcast %c16_i32 : i32 to vector<288x1xi32>
    %94 = arith.cmpi slt, %92, %93 : vector<288x1xi32>
    %cst_89 = arith.constant 0.000000e+00 : f32
    %95 = vector.shape_cast %94 : vector<288x1xi1> to vector<288x1xi1>
    %96 = vector.broadcast %95 : vector<288x1xi1> to vector<288x128xi1>
    %97 = vector.broadcast %cst_89 : f32 to vector<288x128xf32>
    %98 = arith.select %96, %75, %97 : vector<288x128xi1>, vector<288x128xf32>
    %cst_90 = arith.constant 0.000000e+00 : bf16
    %99 = vector.broadcast %cst_90 : bf16 to vector<1x342x128xbf16>
    %c0_91 = arith.constant 0 : index
    %c0_92 = arith.constant 0 : index
    %c0_93 = arith.constant 0 : index
    %100 = vector.load %arg4[%c0_91, %c0_92, %c0_93] : memref<1x342x128xbf16, #tpu.memory_space<vmem>>, vector<1x342x128xbf16>
    tpu.vector_store %arg4[%c0_91, %c0_92, %c0_93], %99 {strides = array<i32>} : memref<1x342x128xbf16, #tpu.memory_space<vmem>>, vector<1x342x128xbf16>,
    %101 = arith.truncf %98 : vector<288x128xf32> to vector<288x128xbf16>
    %c0_94 = arith.constant 0 : index
    %c19_95 = arith.constant 19 : index
    %c0_96 = arith.constant 0 : index
    %102 = vector.load %arg4[%c0_94, %c19_95, %c0_96] : memref<1x342x128xbf16, #tpu.memory_space<vmem>>, vector<1x288x128xbf16>
    %103 = vector.shape_cast %102 : vector<1x288x128xbf16> to vector<288x128xbf16>
    %104 = vector.shape_cast %101 : vector<288x128xbf16> to vector<1x288x128xbf16>
    tpu.vector_store %arg4[%c0_94, %c19_95, %c0_96], %104 {strides = array<i32>} : memref<1x342x128xbf16, #tpu.memory_space<vmem>>, vector<1x288x128xbf16>,
    return
  }
  func.func @transform_0(%arg0: i32) -> (i32, i32, i32) {
    %c0_i32 = arith.constant 0 : i32
    %c0_i32_0 = arith.constant 0 : i32
    %c0_i32_1 = arith.constant 0 : i32
    return %arg0, %c0_i32, %c0_i32_0 : i32, i32, i32
  }
  func.func @transform_1(%arg0: i32) -> (i32, i32, i32) {
    %c0_i32 = arith.constant 0 : i32
    %c0_i32_0 = arith.constant 0 : i32
    %c0_i32_1 = arith.constant 0 : i32
    %c0_i32_2 = arith.constant 0 : i32
    return %c0_i32, %c0_i32_0, %c0_i32_1 : i32, i32, i32
  }
  func.func @transform_2(%arg0: i32) -> (i32, i32) {
    %c0_i32 = arith.constant 0 : i32
    %c0_i32_0 = arith.constant 0 : i32
    %c0_i32_1 = arith.constant 0 : i32
    return %c0_i32, %c0_i32_0 : i32, i32
  }
  func.func @transform_3(%arg0: i32) -> (i32, i32, i32) {
    %c0_i32 = arith.constant 0 : i32
    %c0_i32_0 = arith.constant 0 : i32
    %c0_i32_1 = arith.constant 0 : i32
    return %arg0, %c0_i32, %c0_i32_0 : i32, i32, i32
  }
}

module attributes {stable_mosaic.version = 11 : i64} {
  func.func @kernel(%arg0: i32, %arg1: memref<1x342x128xbf16, #tpu.memory_space<vmem>>, %arg2: memref<1x342x128xbf16, #tpu.memory_space<vmem>>, %arg3: memref<9x128x128xbf16, #tpu.memory_space<vmem>>, %arg4: memref<1x128xf32, #tpu.memory_space<vmem>>, %arg5: memref<128x128xbf16, #tpu.memory_space<vmem>>, %arg6: memref<1x128xf32, #tpu.memory_space<vmem>>, %arg7: memref<1x288x128xf32, #tpu.memory_space<vmem>>, %arg8: memref<288x128xf32, #tpu.memory_space<vmem>>) attributes {dimension_semantics = [#tpu.dimension_semantics<parallel>], iteration_bounds = array<i64: 2>, scalar_prefetch = 0 : i64, scratch_operands = 1 : i64, tpu.core_type = #tpu.core_type<tc>, window_params = [{transform_indices = @transform_0, window_bounds = array<i64: 1, 342, 128>}, {transform_indices = @transform_1, window_bounds = array<i64: 1, 342, 128>}, {pipeline_mode = #tpu.pipeline_mode<synchronous>, transform_indices = @transform_2, window_bounds = array<i64: 9, 128, 128>}, {pipeline_mode = #tpu.pipeline_mode<synchronous>, transform_indices = @transform_3, window_bounds = array<i64: 1, 128>}, {pipeline_mode = #tpu.pipeline_mode<synchronous>, transform_indices = @transform_4, window_bounds = array<i64: 128, 128>}, {pipeline_mode = #tpu.pipeline_mode<synchronous>, transform_indices = @transform_5, window_bounds = array<i64: 1, 128>}, {transform_indices = @transform_6, window_bounds = array<i64: 1, 288, 128>}]} {
    %c0 = arith.constant 0 : index
    %c0_0 = arith.constant 0 : index
    %c0_1 = arith.constant 0 : index
    %0 = vector.load %arg1[%c0, %c0_0, %c0_1] : memref<1x342x128xbf16, #tpu.memory_space<vmem>>, vector<1x288x128xbf16>
    %1 = vector.shape_cast %0 : vector<1x288x128xbf16> to vector<288x128xbf16>
    %c0_2 = arith.constant 0 : index
    %c0_3 = arith.constant 0 : index
    %c0_4 = arith.constant 0 : index
    %2 = vector.load %arg3[%c0_2, %c0_3, %c0_4] : memref<9x128x128xbf16, #tpu.memory_space<vmem>>, vector<1x128x128xbf16>
    %3 = vector.shape_cast %2 : vector<1x128x128xbf16> to vector<128x128xbf16>
    %cst = arith.constant dense<0.000000e+00> : vector<288x128xf32>
    %4 = tpu.matmul %1, %3, %cst {dimension_numbers = #tpu.dot_dimension_numbers<[1], [0], [0], [1], [0, 0, 1, 1], [], []>} : vector<288x128xbf16>, vector<128x128xbf16>, vector<288x128xf32> -> vector<288x128xf32>
    %c0_5 = arith.constant 0 : index
    %c0_6 = arith.constant 0 : index
    %5 = vector.load %arg8[%c0_5, %c0_6] : memref<288x128xf32, #tpu.memory_space<vmem>>, vector<288x128xf32>
    tpu.vector_store %arg8[%c0_5, %c0_6], %4 {strides = array<i32>} : memref<288x128xf32, #tpu.memory_space<vmem>>, vector<288x128xf32>,
    %c0_7 = arith.constant 0 : index
    %c1 = arith.constant 1 : index
    %c0_8 = arith.constant 0 : index
    %6 = vector.load %arg1[%c0_7, %c1, %c0_8] : memref<1x342x128xbf16, #tpu.memory_space<vmem>>, vector<1x288x128xbf16>
    %7 = vector.shape_cast %6 : vector<1x288x128xbf16> to vector<288x128xbf16>
    %c1_9 = arith.constant 1 : index
    %c0_10 = arith.constant 0 : index
    %c0_11 = arith.constant 0 : index
    %8 = vector.load %arg3[%c1_9, %c0_10, %c0_11] : memref<9x128x128xbf16, #tpu.memory_space<vmem>>, vector<1x128x128xbf16>
    %9 = vector.shape_cast %8 : vector<1x128x128xbf16> to vector<128x128xbf16>
    %cst_12 = arith.constant dense<0.000000e+00> : vector<288x128xf32>
    %10 = tpu.matmul %7, %9, %cst_12 {dimension_numbers = #tpu.dot_dimension_numbers<[1], [0], [0], [1], [0, 0, 1, 1], [], []>} : vector<288x128xbf16>, vector<128x128xbf16>, vector<288x128xf32> -> vector<288x128xf32>
    %c0_13 = arith.constant 0 : index
    %c0_14 = arith.constant 0 : index
    %11 = vector.load %arg8[%c0_13, %c0_14] : memref<288x128xf32, #tpu.memory_space<vmem>>, vector<288x128xf32>
    %12 = arith.addf %11, %10 : vector<288x128xf32>
    %c0_15 = arith.constant 0 : index
    %c0_16 = arith.constant 0 : index
    %13 = vector.load %arg8[%c0_15, %c0_16] : memref<288x128xf32, #tpu.memory_space<vmem>>, vector<288x128xf32>
    tpu.vector_store %arg8[%c0_15, %c0_16], %12 {strides = array<i32>} : memref<288x128xf32, #tpu.memory_space<vmem>>, vector<288x128xf32>,
    %c0_17 = arith.constant 0 : index
    %c2 = arith.constant 2 : index
    %c0_18 = arith.constant 0 : index
    %14 = vector.load %arg1[%c0_17, %c2, %c0_18] : memref<1x342x128xbf16, #tpu.memory_space<vmem>>, vector<1x288x128xbf16>
    %15 = vector.shape_cast %14 : vector<1x288x128xbf16> to vector<288x128xbf16>
    %c2_19 = arith.constant 2 : index
    %c0_20 = arith.constant 0 : index
    %c0_21 = arith.constant 0 : index
    %16 = vector.load %arg3[%c2_19, %c0_20, %c0_21] : memref<9x128x128xbf16, #tpu.memory_space<vmem>>, vector<1x128x128xbf16>
    %17 = vector.shape_cast %16 : vector<1x128x128xbf16> to vector<128x128xbf16>
    %cst_22 = arith.constant dense<0.000000e+00> : vector<288x128xf32>
    %18 = tpu.matmul %15, %17, %cst_22 {dimension_numbers = #tpu.dot_dimension_numbers<[1], [0], [0], [1], [0, 0, 1, 1], [], []>} : vector<288x128xbf16>, vector<128x128xbf16>, vector<288x128xf32> -> vector<288x128xf32>
    %c0_23 = arith.constant 0 : index
    %c0_24 = arith.constant 0 : index
    %19 = vector.load %arg8[%c0_23, %c0_24] : memref<288x128xf32, #tpu.memory_space<vmem>>, vector<288x128xf32>
    %20 = arith.addf %19, %18 : vector<288x128xf32>
    %c0_25 = arith.constant 0 : index
    %c0_26 = arith.constant 0 : index
    %21 = vector.load %arg8[%c0_25, %c0_26] : memref<288x128xf32, #tpu.memory_space<vmem>>, vector<288x128xf32>
    tpu.vector_store %arg8[%c0_25, %c0_26], %20 {strides = array<i32>} : memref<288x128xf32, #tpu.memory_space<vmem>>, vector<288x128xf32>,
    %c0_27 = arith.constant 0 : index
    %c18 = arith.constant 18 : index
    %c0_28 = arith.constant 0 : index
    %22 = vector.load %arg1[%c0_27, %c18, %c0_28] : memref<1x342x128xbf16, #tpu.memory_space<vmem>>, vector<1x288x128xbf16>
    %23 = vector.shape_cast %22 : vector<1x288x128xbf16> to vector<288x128xbf16>
    %c3 = arith.constant 3 : index
    %c0_29 = arith.constant 0 : index
    %c0_30 = arith.constant 0 : index
    %24 = vector.load %arg3[%c3, %c0_29, %c0_30] : memref<9x128x128xbf16, #tpu.memory_space<vmem>>, vector<1x128x128xbf16>
    %25 = vector.shape_cast %24 : vector<1x128x128xbf16> to vector<128x128xbf16>
    %cst_31 = arith.constant dense<0.000000e+00> : vector<288x128xf32>
    %26 = tpu.matmul %23, %25, %cst_31 {dimension_numbers = #tpu.dot_dimension_numbers<[1], [0], [0], [1], [0, 0, 1, 1], [], []>} : vector<288x128xbf16>, vector<128x128xbf16>, vector<288x128xf32> -> vector<288x128xf32>
    %c0_32 = arith.constant 0 : index
    %c0_33 = arith.constant 0 : index
    %27 = vector.load %arg8[%c0_32, %c0_33] : memref<288x128xf32, #tpu.memory_space<vmem>>, vector<288x128xf32>
    %28 = arith.addf %27, %26 : vector<288x128xf32>
    %c0_34 = arith.constant 0 : index
    %c0_35 = arith.constant 0 : index
    %29 = vector.load %arg8[%c0_34, %c0_35] : memref<288x128xf32, #tpu.memory_space<vmem>>, vector<288x128xf32>
    tpu.vector_store %arg8[%c0_34, %c0_35], %28 {strides = array<i32>} : memref<288x128xf32, #tpu.memory_space<vmem>>, vector<288x128xf32>,
    %c0_36 = arith.constant 0 : index
    %c19 = arith.constant 19 : index
    %c0_37 = arith.constant 0 : index
    %30 = vector.load %arg1[%c0_36, %c19, %c0_37] : memref<1x342x128xbf16, #tpu.memory_space<vmem>>, vector<1x288x128xbf16>
    %31 = vector.shape_cast %30 : vector<1x288x128xbf16> to vector<288x128xbf16>
    %c4 = arith.constant 4 : index
    %c0_38 = arith.constant 0 : index
    %c0_39 = arith.constant 0 : index
    %32 = vector.load %arg3[%c4, %c0_38, %c0_39] : memref<9x128x128xbf16, #tpu.memory_space<vmem>>, vector<1x128x128xbf16>
    %33 = vector.shape_cast %32 : vector<1x128x128xbf16> to vector<128x128xbf16>
    %cst_40 = arith.constant dense<0.000000e+00> : vector<288x128xf32>
    %34 = tpu.matmul %31, %33, %cst_40 {dimension_numbers = #tpu.dot_dimension_numbers<[1], [0], [0], [1], [0, 0, 1, 1], [], []>} : vector<288x128xbf16>, vector<128x128xbf16>, vector<288x128xf32> -> vector<288x128xf32>
    %c0_41 = arith.constant 0 : index
    %c0_42 = arith.constant 0 : index
    %35 = vector.load %arg8[%c0_41, %c0_42] : memref<288x128xf32, #tpu.memory_space<vmem>>, vector<288x128xf32>
    %36 = arith.addf %35, %34 : vector<288x128xf32>
    %c0_43 = arith.constant 0 : index
    %c0_44 = arith.constant 0 : index
    %37 = vector.load %arg8[%c0_43, %c0_44] : memref<288x128xf32, #tpu.memory_space<vmem>>, vector<288x128xf32>
    tpu.vector_store %arg8[%c0_43, %c0_44], %36 {strides = array<i32>} : memref<288x128xf32, #tpu.memory_space<vmem>>, vector<288x128xf32>,
    %c0_45 = arith.constant 0 : index
    %c20 = arith.constant 20 : index
    %c0_46 = arith.constant 0 : index
    %38 = vector.load %arg1[%c0_45, %c20, %c0_46] : memref<1x342x128xbf16, #tpu.memory_space<vmem>>, vector<1x288x128xbf16>
    %39 = vector.shape_cast %38 : vector<1x288x128xbf16> to vector<288x128xbf16>
    %c5 = arith.constant 5 : index
    %c0_47 = arith.constant 0 : index
    %c0_48 = arith.constant 0 : index
    %40 = vector.load %arg3[%c5, %c0_47, %c0_48] : memref<9x128x128xbf16, #tpu.memory_space<vmem>>, vector<1x128x128xbf16>
    %41 = vector.shape_cast %40 : vector<1x128x128xbf16> to vector<128x128xbf16>
    %cst_49 = arith.constant dense<0.000000e+00> : vector<288x128xf32>
    %42 = tpu.matmul %39, %41, %cst_49 {dimension_numbers = #tpu.dot_dimension_numbers<[1], [0], [0], [1], [0, 0, 1, 1], [], []>} : vector<288x128xbf16>, vector<128x128xbf16>, vector<288x128xf32> -> vector<288x128xf32>
    %c0_50 = arith.constant 0 : index
    %c0_51 = arith.constant 0 : index
    %43 = vector.load %arg8[%c0_50, %c0_51] : memref<288x128xf32, #tpu.memory_space<vmem>>, vector<288x128xf32>
    %44 = arith.addf %43, %42 : vector<288x128xf32>
    %c0_52 = arith.constant 0 : index
    %c0_53 = arith.constant 0 : index
    %45 = vector.load %arg8[%c0_52, %c0_53] : memref<288x128xf32, #tpu.memory_space<vmem>>, vector<288x128xf32>
    tpu.vector_store %arg8[%c0_52, %c0_53], %44 {strides = array<i32>} : memref<288x128xf32, #tpu.memory_space<vmem>>, vector<288x128xf32>,
    %c0_54 = arith.constant 0 : index
    %c36 = arith.constant 36 : index
    %c0_55 = arith.constant 0 : index
    %46 = vector.load %arg1[%c0_54, %c36, %c0_55] : memref<1x342x128xbf16, #tpu.memory_space<vmem>>, vector<1x288x128xbf16>
    %47 = vector.shape_cast %46 : vector<1x288x128xbf16> to vector<288x128xbf16>
    %c6 = arith.constant 6 : index
    %c0_56 = arith.constant 0 : index
    %c0_57 = arith.constant 0 : index
    %48 = vector.load %arg3[%c6, %c0_56, %c0_57] : memref<9x128x128xbf16, #tpu.memory_space<vmem>>, vector<1x128x128xbf16>
    %49 = vector.shape_cast %48 : vector<1x128x128xbf16> to vector<128x128xbf16>
    %cst_58 = arith.constant dense<0.000000e+00> : vector<288x128xf32>
    %50 = tpu.matmul %47, %49, %cst_58 {dimension_numbers = #tpu.dot_dimension_numbers<[1], [0], [0], [1], [0, 0, 1, 1], [], []>} : vector<288x128xbf16>, vector<128x128xbf16>, vector<288x128xf32> -> vector<288x128xf32>
    %c0_59 = arith.constant 0 : index
    %c0_60 = arith.constant 0 : index
    %51 = vector.load %arg8[%c0_59, %c0_60] : memref<288x128xf32, #tpu.memory_space<vmem>>, vector<288x128xf32>
    %52 = arith.addf %51, %50 : vector<288x128xf32>
    %c0_61 = arith.constant 0 : index
    %c0_62 = arith.constant 0 : index
    %53 = vector.load %arg8[%c0_61, %c0_62] : memref<288x128xf32, #tpu.memory_space<vmem>>, vector<288x128xf32>
    tpu.vector_store %arg8[%c0_61, %c0_62], %52 {strides = array<i32>} : memref<288x128xf32, #tpu.memory_space<vmem>>, vector<288x128xf32>,
    %c0_63 = arith.constant 0 : index
    %c37 = arith.constant 37 : index
    %c0_64 = arith.constant 0 : index
    %54 = vector.load %arg1[%c0_63, %c37, %c0_64] : memref<1x342x128xbf16, #tpu.memory_space<vmem>>, vector<1x288x128xbf16>
    %55 = vector.shape_cast %54 : vector<1x288x128xbf16> to vector<288x128xbf16>
    %c7 = arith.constant 7 : index
    %c0_65 = arith.constant 0 : index
    %c0_66 = arith.constant 0 : index
    %56 = vector.load %arg3[%c7, %c0_65, %c0_66] : memref<9x128x128xbf16, #tpu.memory_space<vmem>>, vector<1x128x128xbf16>
    %57 = vector.shape_cast %56 : vector<1x128x128xbf16> to vector<128x128xbf16>
    %cst_67 = arith.constant dense<0.000000e+00> : vector<288x128xf32>
    %58 = tpu.matmul %55, %57, %cst_67 {dimension_numbers = #tpu.dot_dimension_numbers<[1], [0], [0], [1], [0, 0, 1, 1], [], []>} : vector<288x128xbf16>, vector<128x128xbf16>, vector<288x128xf32> -> vector<288x128xf32>
    %c0_68 = arith.constant 0 : index
    %c0_69 = arith.constant 0 : index
    %59 = vector.load %arg8[%c0_68, %c0_69] : memref<288x128xf32, #tpu.memory_space<vmem>>, vector<288x128xf32>
    %60 = arith.addf %59, %58 : vector<288x128xf32>
    %c0_70 = arith.constant 0 : index
    %c0_71 = arith.constant 0 : index
    %61 = vector.load %arg8[%c0_70, %c0_71] : memref<288x128xf32, #tpu.memory_space<vmem>>, vector<288x128xf32>
    tpu.vector_store %arg8[%c0_70, %c0_71], %60 {strides = array<i32>} : memref<288x128xf32, #tpu.memory_space<vmem>>, vector<288x128xf32>,
    %c0_72 = arith.constant 0 : index
    %c38 = arith.constant 38 : index
    %c0_73 = arith.constant 0 : index
    %62 = vector.load %arg1[%c0_72, %c38, %c0_73] : memref<1x342x128xbf16, #tpu.memory_space<vmem>>, vector<1x288x128xbf16>
    %63 = vector.shape_cast %62 : vector<1x288x128xbf16> to vector<288x128xbf16>
    %c8 = arith.constant 8 : index
    %c0_74 = arith.constant 0 : index
    %c0_75 = arith.constant 0 : index
    %64 = vector.load %arg3[%c8, %c0_74, %c0_75] : memref<9x128x128xbf16, #tpu.memory_space<vmem>>, vector<1x128x128xbf16>
    %65 = vector.shape_cast %64 : vector<1x128x128xbf16> to vector<128x128xbf16>
    %cst_76 = arith.constant dense<0.000000e+00> : vector<288x128xf32>
    %66 = tpu.matmul %63, %65, %cst_76 {dimension_numbers = #tpu.dot_dimension_numbers<[1], [0], [0], [1], [0, 0, 1, 1], [], []>} : vector<288x128xbf16>, vector<128x128xbf16>, vector<288x128xf32> -> vector<288x128xf32>
    %c0_77 = arith.constant 0 : index
    %c0_78 = arith.constant 0 : index
    %67 = vector.load %arg8[%c0_77, %c0_78] : memref<288x128xf32, #tpu.memory_space<vmem>>, vector<288x128xf32>
    %68 = arith.addf %67, %66 : vector<288x128xf32>
    %c0_79 = arith.constant 0 : index
    %c0_80 = arith.constant 0 : index
    %69 = vector.load %arg8[%c0_79, %c0_80] : memref<288x128xf32, #tpu.memory_space<vmem>>, vector<288x128xf32>
    tpu.vector_store %arg8[%c0_79, %c0_80], %68 {strides = array<i32>} : memref<288x128xf32, #tpu.memory_space<vmem>>, vector<288x128xf32>,
    %c0_81 = arith.constant 0 : index
    %c0_82 = arith.constant 0 : index
    %70 = vector.load %arg8[%c0_81, %c0_82] : memref<288x128xf32, #tpu.memory_space<vmem>>, vector<288x128xf32>
    %c0_83 = arith.constant 0 : index
    %c0_84 = arith.constant 0 : index
    %71 = vector.load %arg4[%c0_83, %c0_84] : memref<1x128xf32, #tpu.memory_space<vmem>>, vector<1x128xf32>
    %72 = vector.broadcast %71 : vector<1x128xf32> to vector<288x128xf32>
    %73 = arith.addf %70, %72 : vector<288x128xf32>
    %c0_85 = arith.constant 0 : index
    %c19_86 = arith.constant 19 : index
    %c0_87 = arith.constant 0 : index
    %74 = vector.load %arg2[%c0_85, %c19_86, %c0_87] : memref<1x342x128xbf16, #tpu.memory_space<vmem>>, vector<1x288x128xbf16>
    %75 = vector.shape_cast %74 : vector<1x288x128xbf16> to vector<288x128xbf16>
    %c0_88 = arith.constant 0 : index
    %c0_89 = arith.constant 0 : index
    %76 = vector.load %arg5[%c0_88, %c0_89] : memref<128x128xbf16, #tpu.memory_space<vmem>>, vector<128x128xbf16>
    %cst_90 = arith.constant dense<0.000000e+00> : vector<288x128xf32>
    %77 = tpu.matmul %75, %76, %cst_90 {dimension_numbers = #tpu.dot_dimension_numbers<[1], [0], [0], [1], [0, 0, 1, 1], [], []>} : vector<288x128xbf16>, vector<128x128xbf16>, vector<288x128xf32> -> vector<288x128xf32>
    %c0_91 = arith.constant 0 : index
    %c0_92 = arith.constant 0 : index
    %78 = vector.load %arg6[%c0_91, %c0_92] : memref<1x128xf32, #tpu.memory_space<vmem>>, vector<1x128xf32>
    %79 = vector.broadcast %78 : vector<1x128xf32> to vector<288x128xf32>
    %80 = arith.addf %77, %79 : vector<288x128xf32>
    %81 = arith.addf %73, %80 : vector<288x128xf32>
    %cst_93 = arith.constant 0.000000e+00 : f32
    %82 = vector.broadcast %cst_93 : f32 to vector<288x128xf32>
    %83 = arith.maximumf %81, %82 : vector<288x128xf32>
    %c0_94 = arith.constant 0 : index
    %c0_95 = arith.constant 0 : index
    %c0_96 = arith.constant 0 : index
    %84 = vector.load %arg7[%c0_94, %c0_95, %c0_96] : memref<1x288x128xf32, #tpu.memory_space<vmem>>, vector<1x288x128xf32>
    %85 = vector.shape_cast %84 : vector<1x288x128xf32> to vector<288x128xf32>
    %86 = vector.shape_cast %83 : vector<288x128xf32> to vector<1x288x128xf32>
    tpu.vector_store %arg7[%c0_94, %c0_95, %c0_96], %86 {strides = array<i32>} : memref<1x288x128xf32, #tpu.memory_space<vmem>>, vector<1x288x128xf32>,
    return
  }
  func.func @transform_0(%arg0: i32) -> (i32, i32, i32) {
    %c0_i32 = arith.constant 0 : i32
    %c0_i32_0 = arith.constant 0 : i32
    %c0_i32_1 = arith.constant 0 : i32
    return %arg0, %c0_i32, %c0_i32_0 : i32, i32, i32
  }
  func.func @transform_1(%arg0: i32) -> (i32, i32, i32) {
    %c0_i32 = arith.constant 0 : i32
    %c0_i32_0 = arith.constant 0 : i32
    %c0_i32_1 = arith.constant 0 : i32
    return %arg0, %c0_i32, %c0_i32_0 : i32, i32, i32
  }
  func.func @transform_2(%arg0: i32) -> (i32, i32, i32) {
    %c0_i32 = arith.constant 0 : i32
    %c0_i32_0 = arith.constant 0 : i32
    %c0_i32_1 = arith.constant 0 : i32
    %c0_i32_2 = arith.constant 0 : i32
    return %c0_i32, %c0_i32_0, %c0_i32_1 : i32, i32, i32
  }
  func.func @transform_3(%arg0: i32) -> (i32, i32) {
    %c0_i32 = arith.constant 0 : i32
    %c0_i32_0 = arith.constant 0 : i32
    %c0_i32_1 = arith.constant 0 : i32
    return %c0_i32, %c0_i32_0 : i32, i32
  }
  func.func @transform_4(%arg0: i32) -> (i32, i32) {
    %c0_i32 = arith.constant 0 : i32
    %c0_i32_0 = arith.constant 0 : i32
    %c0_i32_1 = arith.constant 0 : i32
    return %c0_i32, %c0_i32_0 : i32, i32
  }
  func.func @transform_5(%arg0: i32) -> (i32, i32) {
    %c0_i32 = arith.constant 0 : i32
    %c0_i32_0 = arith.constant 0 : i32
    %c0_i32_1 = arith.constant 0 : i32
    return %c0_i32, %c0_i32_0 : i32, i32
  }
  func.func @transform_6(%arg0: i32) -> (i32, i32, i32) {
    %c0_i32 = arith.constant 0 : i32
    %c0_i32_0 = arith.constant 0 : i32
    %c0_i32_1 = arith.constant 0 : i32
    return %arg0, %c0_i32, %c0_i32_0 : i32, i32, i32
  }
}

</mosaic_0001>

<llo_original>
// kernel: basic_block_forward.3
$region0: #{basic_block_forward.3}
  #allocation0 [shape = 'u32[]', space=smem, size = 0x4, offset = 0x4, fixed_abs, tag = 'smem constant byte address 0x4 - core index']
  #allocation1 [shape = 'u32[72,128]{1,0:T(1,128)}', space=vmem, size = 0x9000, scoped, tag = 'internal scratch']
  #allocation2 [shape = 'f32[288,128]{1,0:T(8,128)}', space=vmem, size = 0x24000, scoped, tag = 'scratch operand']
  %s0 = inlined_call_operand.vmem [shape: bf16[2,342,128], index: 0, kind: input, shape index: {}]
  %s1 = inlined_call_operand.vmem [shape: bf16[2,342,128], index: 1, kind: input, shape index: {}]
  %s2 = inlined_call_operand.vmem [shape: bf16[9,128,128], index: 2, kind: input, shape index: {}]
  %s3 = inlined_call_operand.vmem [shape: f32[1,128], index: 3, kind: input, shape index: {}]
  %s4 = inlined_call_operand.vmem [shape: bf16[128,128], index: 4, kind: input, shape index: {}]
  %s5 = inlined_call_operand.vmem [shape: f32[1,128], index: 5, kind: input, shape index: {}]
  %s6 = inlined_call_operand.vmem [shape: f32[2,288,128], index: 6, kind: output, shape index: {}]
  %s7 = sld [smem:[#allocation0]]
  $region57: #{basic_block_forward.3} parent=0
    _
  %s9 = ssub.s32 1, %s7
  %s10 = scalar_select 0, %s9, %s7
  loop: start=0, step=1, limit=4
  $region2: #{basic_block_forward.3} parent=0 // loop_pre_header
    _
  $region3: #{basic_block_forward.3} parent=0 // loop_header
    %s12 = sphi 0, %s16
    %p13 = scmp.ge.s32.totalorder %s12, 4
    %s22 = sphi 0, %s24
    %s25 = sphi 0, %s22
    %s26 = sphi 0, %s25
    %s42 = sphi 0, %s26
    %s48 = sphi 0, %s50
    %s51 = sphi 0, %s48
    %s52 = sphi 0, %s51
    %s68 = sphi 0, %s52
    %s72 = sphi 0, %s72
    %s74 = sphi 0, %s72
    %s75 = sphi 0, %s74
    %s89 = sphi 0, %s75
    %s93 = sphi 0, %s93
    %s95 = sphi 0, %s93
    %s96 = sphi 0, %s95
    %s110 = sphi 0, %s96
    %s114 = sphi 0, %s114
    %s116 = sphi 0, %s114
    %s117 = sphi 0, %s116
    %s131 = sphi 0, %s117
    %s135 = sphi 0, %s135
    %s137 = sphi 0, %s135
    %s138 = sphi 0, %s137
    %s152 = sphi 0, %s138
    %s158 = sphi 0, %s160
    %s161 = sphi 0, %s158
    %s162 = sphi 0, %s161
    %s178 = sphi 0, %s162
  $region4: #{basic_block_forward.3} parent=0 // loop_header_branch
    %15 = sbr.rel (%p13) target = $region8
  $region5: #{basic_block_forward.3} parent=0 // loop_body
    %s17 = ssub.s32 %s12, 1
    %s18 = ssub.s32 %s12, 2
    %s19 = sadd.s32 %s12, 1
    %s20 = ssub.s32 %s12, %s19
    %p21 = scmp.eq.s32.totalorder %s20, 0
    %s23 = sadd.s32 %s22, 1
    %s24 = scalar_select %p21, %s22, %s23
    %p27 = pneg %p21
    %p28 = scmp.eq.s32.totalorder %s12, 1
    %p29 = por %p27, %p28
    %p30 = scmp.ne.s32.totalorder %s22, %s25
    %p31 = scmp.eq.s32.totalorder %s12, 0
    %p32 = por %p30, %p31
    %p33 = scmp.ne.s32.totalorder %s22, %s25
    %p34 = scmp.eq.s32.totalorder %s17, 1
    %p35 = por %p33, %p34
    %p36 = scmp.ne.s32.totalorder %s25, %s26
    %p37 = scmp.eq.s32.totalorder %s17, 0
    %p38 = por %p36, %p37
    %p39 = scmp.ne.s32.totalorder %s25, %s26
    %p40 = scmp.eq.s32.totalorder %s18, 1
    %p41 = por %p39, %p40
    %p43 = scmp.ne.s32.totalorder %s26, %s42
    %p44 = scmp.eq.s32.totalorder %s18, 0
    %p45 = por %p43, %p44
    %s46 = ssub.s32 %s12, %s19
    %p47 = scmp.eq.s32.totalorder %s46, 0
    %s49 = sadd.s32 %s48, 1
    %s50 = scalar_select %p47, %s48, %s49
    %p53 = pneg %p47
    %p54 = scmp.eq.s32.totalorder %s12, 1
    %p55 = por %p53, %p54
    %p56 = scmp.ne.s32.totalorder %s48, %s51
    %p57 = scmp.eq.s32.totalorder %s12, 0
    %p58 = por %p56, %p57
    %p59 = scmp.ne.s32.totalorder %s48, %s51
    %p60 = scmp.eq.s32.totalorder %s17, 1
    %p61 = por %p59, %p60
    %p62 = scmp.ne.s32.totalorder %s51, %s52
    %p63 = scmp.eq.s32.totalorder %s17, 0
    %p64 = por %p62, %p63
    %p65 = scmp.ne.s32.totalorder %s51, %s52
    %p66 = scmp.eq.s32.totalorder %s18, 1
    %p67 = por %p65, %p66
    %p69 = scmp.ne.s32.totalorder %s52, %s68
    %p70 = scmp.eq.s32.totalorder %s18, 0
    %p71 = por %p69, %p70
    %s73 = sadd.s32 %s72, 1
    %p76 = scmp.eq.s32.totalorder %s12, 1
    %p77 = scmp.ne.s32.totalorder %s72, %s74
    %p78 = scmp.eq.s32.totalorder %s12, 0
    %p79 = por %p77, %p78
    %p80 = scmp.ne.s32.totalorder %s72, %s74
    %p81 = scmp.eq.s32.totalorder %s17, 1
    %p82 = por %p80, %p81
    %p83 = scmp.ne.s32.totalorder %s74, %s75
    %p84 = scmp.eq.s32.totalorder %s17, 0
    %p85 = por %p83, %p84
    %p86 = scmp.ne.s32.totalorder %s74, %s75
    %p87 = scmp.eq.s32.totalorder %s18, 1
    %p88 = por %p86, %p87
    %p90 = scmp.ne.s32.totalorder %s75, %s89
    %p91 = scmp.eq.s32.totalorder %s18, 0
    %p92 = por %p90, %p91
    %s94 = sadd.s32 %s93, 1
    %p97 = scmp.eq.s32.totalorder %s12, 1
    %p98 = scmp.ne.s32.totalorder %s93, %s95
    %p99 = scmp.eq.s32.totalorder %s12, 0
    %p100 = por %p98, %p99
    %p101 = scmp.ne.s32.totalorder %s93, %s95
    %p102 = scmp.eq.s32.totalorder %s17, 1
    %p103 = por %p101, %p102
    %p104 = scmp.ne.s32.totalorder %s95, %s96
    %p105 = scmp.eq.s32.totalorder %s17, 0
    %p106 = por %p104, %p105
    %p107 = scmp.ne.s32.totalorder %s95, %s96
    %p108 = scmp.eq.s32.totalorder %s18, 1
    %p109 = por %p107, %p108
    %p111 = scmp.ne.s32.totalorder %s96, %s110
    %p112 = scmp.eq.s32.totalorder %s18, 0
    %p113 = por %p111, %p112
    %s115 = sadd.s32 %s114, 1
    %p118 = scmp.eq.s32.totalorder %s12, 1
    %p119 = scmp.ne.s32.totalorder %s114, %s116
    %p120 = scmp.eq.s32.totalorder %s12, 0
    %p121 = por %p119, %p120
    %p122 = scmp.ne.s32.totalorder %s114, %s116
    %p123 = scmp.eq.s32.totalorder %s17, 1
    %p124 = por %p122, %p123
    %p125 = scmp.ne.s32.totalorder %s116, %s117
    %p126 = scmp.eq.s32.totalorder %s17, 0
    %p127 = por %p125, %p126
    %p128 = scmp.ne.s32.totalorder %s116, %s117
    %p129 = scmp.eq.s32.totalorder %s18, 1
    %p130 = por %p128, %p129
    %p132 = scmp.ne.s32.totalorder %s117, %s131
    %p133 = scmp.eq.s32.totalorder %s18, 0
    %p134 = por %p132, %p133
    %s136 = sadd.s32 %s135, 1
    %p139 = scmp.eq.s32.totalorder %s12, 1
    %p140 = scmp.ne.s32.totalorder %s135, %s137
    %p141 = scmp.eq.s32.totalorder %s12, 0
    %p142 = por %p140, %p141
    %p143 = scmp.ne.s32.totalorder %s135, %s137
    %p144 = scmp.eq.s32.totalorder %s17, 1
    %p145 = por %p143, %p144
    %p146 = scmp.ne.s32.totalorder %s137, %s138
    %p147 = scmp.eq.s32.totalorder %s17, 0
    %p148 = por %p146, %p147
    %p149 = scmp.ne.s32.totalorder %s137, %s138
    %p150 = scmp.eq.s32.totalorder %s18, 1
    %p151 = por %p149, %p150
    %p153 = scmp.ne.s32.totalorder %s138, %s152
    %p154 = scmp.eq.s32.totalorder %s18, 0
    %p155 = por %p153, %p154
    %s156 = ssub.s32 %s12, %s19
    %p157 = scmp.eq.s32.totalorder %s156, 0
    %s159 = sadd.s32 %s158, 1
    %s160 = scalar_select %p157, %s158, %s159
    %p163 = pneg %p157
    %p164 = scmp.eq.s32.totalorder %s12, 1
    %p165 = por %p163, %p164
    %p166 = scmp.ne.s32.totalorder %s158, %s161
    %p167 = scmp.eq.s32.totalorder %s12, 0
    %p168 = por %p166, %p167
    %p169 = scmp.ne.s32.totalorder %s158, %s161
    %p170 = scmp.eq.s32.totalorder %s17, 1
    %p171 = por %p169, %p170
    %p172 = scmp.ne.s32.totalorder %s161, %s162
    %p173 = scmp.eq.s32.totalorder %s17, 0
    %p174 = por %p172, %p173
    %p175 = scmp.ne.s32.totalorder %s161, %s162
    %p176 = scmp.eq.s32.totalorder %s18, 1
    %p177 = por %p175, %p176
    %p179 = scmp.ne.s32.totalorder %s162, %s178
    %p180 = scmp.eq.s32.totalorder %s18, 0
    %p181 = por %p179, %p180
    %p182 = scmp.le.s32.totalorder 1, %s12
    %p183 = scmp.lt.s32.totalorder %s12, 3
    %p184 = pnand %p182, %p183
    %p185 = pneg %p184
    // Predicated region
    $region9: #{basic_block_forward.3} parent=5 // pred_check
      _
    $region10: #{basic_block_forward.3} parent=5 // pred_check_branch
      %187 = sbr.rel (%p184) target = $region12
    $region11: #{basic_block_forward.3} parent=5 // pred_region
      %s188 = ssub.s32 %s12, 1
      // Predicated region
      $region13: #{basic_block_forward.3} parent=11 // pred_check
        %p189 = pneg %p85
      $region14: #{basic_block_forward.3} parent=11 // pred_check_branch
        %191 = sbr.rel (%p189) target = $region16
      $region15: #{basic_block_forward.3} parent=11 // pred_region
        _
      $region16: #{basic_block_forward.3} parent=11 // pred_fallthru
        _
      // Predicated region
      $region17: #{basic_block_forward.3} parent=11 // pred_check
        %p192 = pneg %p106
      $region18: #{basic_block_forward.3} parent=11 // pred_check_branch
        %194 = sbr.rel (%p192) target = $region20
      $region19: #{basic_block_forward.3} parent=11 // pred_region
        _
      $region20: #{basic_block_forward.3} parent=11 // pred_fallthru
        _
      // Predicated region
      $region21: #{basic_block_forward.3} parent=11 // pred_check
        %p195 = pneg %p127
      $region22: #{basic_block_forward.3} parent=11 // pred_check_branch
        %197 = sbr.rel (%p195) target = $region24
      $region23: #{basic_block_forward.3} parent=11 // pred_region
        _
      $region24: #{basic_block_forward.3} parent=11 // pred_fallthru
        _
      // Predicated region
      $region25: #{basic_block_forward.3} parent=11 // pred_check
        %p198 = pneg %p148
      $region26: #{basic_block_forward.3} parent=11 // pred_check_branch
        %200 = sbr.rel (%p198) target = $region28
      $region27: #{basic_block_forward.3} parent=11 // pred_region
        _
      $region28: #{basic_block_forward.3} parent=11 // pred_fallthru
        _
    $region12: #{basic_block_forward.3} parent=5 // pred_fallthru
      _
    %p201 = scmp.lt.s32.totalorder %s12, 2
    // Predicated region
    $region29: #{basic_block_forward.3} parent=5 // pred_check
      %p202 = pneg %p201
    $region30: #{basic_block_forward.3} parent=5 // pred_check_branch
      %204 = sbr.rel (%p202) target = $region32
    $region31: #{basic_block_forward.3} parent=5 // pred_region
      // Predicated region
      $region33: #{basic_block_forward.3} parent=31 // pred_check
        %p205 = pneg %p32
      $region34: #{basic_block_forward.3} parent=31 // pred_check_branch
        %207 = sbr.rel (%p205) target = $region36
      $region35: #{basic_block_forward.3} parent=31 // pred_region
        %p208 = scmp.lt.s32.totalorder %s12, 1
        %s209 = scalar_select %p208, %s12, 1
        %s210 = smul.addr %s209, 43
        %s211 = smul.addr %s210, 4
        %s212 = scalar_lea.vmem %s0, %s211
      $region36: #{basic_block_forward.3} parent=31 // pred_fallthru
        _
      // Predicated region
      $region37: #{basic_block_forward.3} parent=31 // pred_check
        %p213 = pneg %p58
      $region38: #{basic_block_forward.3} parent=31 // pred_check_branch
        %215 = sbr.rel (%p213) target = $region40
      $region39: #{basic_block_forward.3} parent=31 // pred_region
        %p216 = scmp.lt.s32.totalorder %s12, 1
        %s217 = scalar_select %p216, %s12, 1
        %s218 = smul.addr %s217, 43
        %s219 = smul.addr %s218, 4
        %s220 = scalar_lea.vmem %s1, %s219
      $region40: #{basic_block_forward.3} parent=31 // pred_fallthru
        _
    $region32: #{basic_block_forward.3} parent=5 // pred_fallthru
      _
    %p221 = scmp.le.s32.totalorder 1, %s12
    %p222 = scmp.lt.s32.totalorder %s12, 3
    %p223 = pnand %p221, %p222
    %p224 = pneg %p223
    // Predicated region
    $region41: #{basic_block_forward.3} parent=5 // pred_check
      _
    $region42: #{basic_block_forward.3} parent=5 // pred_check_branch
      %226 = sbr.rel (%p223) target = $region44
    $region43: #{basic_block_forward.3} parent=5 // pred_region
      %s227 = ssub.s32 %s12, 1
      %p228 = scmp.lt.s32.totalorder %s17, 1
      %s229 = scalar_select %p228, %s17, 1
      %s230 = smul.addr %s229, 43
      %s231 = smul.addr %s230, 4
      %s232 = scalar_lea.vmem %s0, %s231
      %p233 = pneg %p38
      %p234 = pneg %p35
      %p235 = scmp.lt.s32.totalorder %s17, 1
      %s236 = scalar_select %p235, %s17, 1
      %s237 = smul.addr %s236, 43
      %s238 = smul.addr %s237, 4
      %s239 = scalar_lea.vmem %s1, %s238
      %p240 = pneg %p64
      %p241 = pneg %p61
      %p242 = pneg %p85
      %p243 = pneg %p82
      %p244 = pneg %p106
      %p245 = pneg %p103
      %p246 = pneg %p127
      %p247 = pneg %p124
      %p248 = pneg %p148
      %p249 = pneg %p145
      %p250 = pneg %p174
      %p251 = pneg %p171
      %p252 = scmp.lt.s32.totalorder %s17, 1
      %s253 = scalar_select %p252, %s17, 1
      %s254 = smul.addr %s253, 36
      %s255 = smul.addr %s254, 8
      %s256 = scalar_lea.vmem %s6, %s255
      %p257 = scmp.lt.s32.totalorder %s17, 1
      %s258 = scalar_select %p257, %s17, 1
      %s259 = smul.addr %s258, 43
      %s260 = smul.addr %s259, 4
      %s261 = scalar_lea.vmem %s0, %s260
      %p262 = scmp.lt.s32.totalorder %s17, 1
      %s263 = scalar_select %p262, %s17, 1
      %s264 = smul.addr %s263, 43
      %s265 = smul.addr %s264, 4
      %s266 = scalar_lea.vmem %s1, %s265
      %p267 = scmp.lt.s32.totalorder %s17, 1
      %s268 = scalar_select %p267, %s17, 1
      %s269 = smul.addr %s268, 36
      %s270 = smul.addr %s269, 8
      %s271 = scalar_lea.vmem %s6, %s270
      %v272 = vld [vmem:[%s261] sm:$0xf]
      %v273 = vld [vmem:[%s261 + $0x4] sm:$0xf]
      %v274 = vld [vmem:[%s261 + $0x8] sm:$0xf]
      %v275 = vld [vmem:[%s261 + $0xc] sm:$0xf]
      %v276 = vld [vmem:[%s261 + $0x10] sm:$0xf]
      %v277 = vld [vmem:[%s261 + $0x14] sm:$0xf]
      %v278 = vld [vmem:[%s261 + $0x18] sm:$0xf]
      %v279 = vld [vmem:[%s261 + $0x1c] sm:$0xf]
      %v280 = vld [vmem:[%s261 + $0x20] sm:$0xf]
      %v281 = vld [vmem:[%s261 + $0x24] sm:$0xf]
      %v282 = vld [vmem:[%s261 + $0x28] sm:$0xf]
      %v283 = vld [vmem:[%s261 + $0x2c] sm:$0xf]
      %v284 = vld [vmem:[%s261 + $0x30] sm:$0xf]
      %v285 = vld [vmem:[%s261 + $0x34] sm:$0xf]
      %v286 = vld [vmem:[%s261 + $0x38] sm:$0xf]
      %v287 = vld [vmem:[%s261 + $0x3c] sm:$0xf]
      %v288 = vld [vmem:[%s261 + $0x40] sm:$0xf]
      %v289 = vld [vmem:[%s261 + $0x44] sm:$0xf]
      %v290 = vld [vmem:[%s261 + $0x48] sm:$0xf]
      %v291 = vld [vmem:[%s261 + $0x4c] sm:$0xf]
      %v292 = vld [vmem:[%s261 + $0x50] sm:$0xf]
      %v293 = vld [vmem:[%s261 + $0x54] sm:$0xf]
      %v294 = vld [vmem:[%s261 + $0x58] sm:$0xf]
      %v295 = vld [vmem:[%s261 + $0x5c] sm:$0xf]
      %v296 = vld [vmem:[%s261 + $0x60] sm:$0xf]
      %v297 = vld [vmem:[%s261 + $0x64] sm:$0xf]
      %v298 = vld [vmem:[%s261 + $0x68] sm:$0xf]
      %v299 = vld [vmem:[%s261 + $0x6c] sm:$0xf]
      %v300 = vld [vmem:[%s261 + $0x70] sm:$0xf]
      %v301 = vld [vmem:[%s261 + $0x74] sm:$0xf]
      %v302 = vld [vmem:[%s261 + $0x78] sm:$0xf]
      %v303 = vld [vmem:[%s261 + $0x7c] sm:$0xf]
      %v304 = vld [vmem:[%s261 + $0x80] sm:$0xf]
      %v305 = vld [vmem:[%s261 + $0x84] sm:$0xf]
      %v306 = vld [vmem:[%s261 + $0x88] sm:$0xf]
      %v307 = vld [vmem:[%s261 + $0x8c] sm:$0xf]
      %v308 = vld [vmem:[%s2] sm:$0xf]
      %v309 = vld [vmem:[%s2 + $0x4] sm:$0xf]
      %v310 = vld [vmem:[%s2 + $0x8] sm:$0xf]
      %v311 = vld [vmem:[%s2 + $0xc] sm:$0xf]
      %v312 = vld [vmem:[%s2 + $0x10] sm:$0xf]
      %v313 = vld [vmem:[%s2 + $0x14] sm:$0xf]
      %v314 = vld [vmem:[%s2 + $0x18] sm:$0xf]
      %v315 = vld [vmem:[%s2 + $0x1c] sm:$0xf]
      %v316 = vld [vmem:[%s2 + $0x20] sm:$0xf]
      %v317 = vld [vmem:[%s2 + $0x24] sm:$0xf]
      %v318 = vld [vmem:[%s2 + $0x28] sm:$0xf]
      %v319 = vld [vmem:[%s2 + $0x2c] sm:$0xf]
      %v320 = vld [vmem:[%s2 + $0x30] sm:$0xf]
      %v321 = vld [vmem:[%s2 + $0x34] sm:$0xf]
      %v322 = vld [vmem:[%s2 + $0x38] sm:$0xf]
      %v323 = vld [vmem:[%s2 + $0x3c] sm:$0xf]
      %v360 = vunpack.c.l.b16 %v272
      %v361 = vunpack.c.l.b16 %v273
      %v362 = vunpack.c.l.b16 %v274
      %v363 = vunpack.c.l.b16 %v275
      %v364 = vunpack.c.l.b16 %v276
      %v365 = vunpack.c.l.b16 %v277
      %v366 = vunpack.c.l.b16 %v278
      %v367 = vunpack.c.l.b16 %v279
      %v368 = vunpack.c.l.b16 %v280
      %v369 = vunpack.c.l.b16 %v281
      %v370 = vunpack.c.l.b16 %v282
      %v371 = vunpack.c.l.b16 %v283
      %v372 = vunpack.c.l.b16 %v284
      %v373 = vunpack.c.l.b16 %v285
      %v374 = vunpack.c.l.b16 %v286
      %v375 = vunpack.c.l.b16 %v287
      %v376 = vunpack.c.l.b16 %v288
      %v377 = vunpack.c.l.b16 %v289
      %v378 = vunpack.c.l.b16 %v290
      %v379 = vunpack.c.l.b16 %v291
      %v380 = vunpack.c.l.b16 %v292
      %v381 = vunpack.c.l.b16 %v293
      %v382 = vunpack.c.l.b16 %v294
      %v383 = vunpack.c.l.b16 %v295
      %v384 = vunpack.c.l.b16 %v296
      %v385 = vunpack.c.l.b16 %v297
      %v386 = vunpack.c.l.b16 %v298
      %v387 = vunpack.c.l.b16 %v299
      %v388 = vunpack.c.l.b16 %v300
      %v389 = vunpack.c.l.b16 %v301
      %v390 = vunpack.c.l.b16 %v302
      %v391 = vunpack.c.l.b16 %v303
      %v392 = vunpack.c.l.b16 %v304
      %v393 = vunpack.c.l.b16 %v305
      %v394 = vunpack.c.l.b16 %v306
      %v395 = vunpack.c.l.b16 %v307
      %v396 = vpack.c.b16 %v361, %v360
      %v397 = vpack.c.b16 %v363, %v362
      %v398 = vpack.c.b16 %v365, %v364
      %v399 = vpack.c.b16 %v367, %v366
      %v400 = vpack.c.b16 %v369, %v368
      %v401 = vpack.c.b16 %v371, %v370
      %v402 = vpack.c.b16 %v373, %v372
      %v403 = vpack.c.b16 %v375, %v374
      %v404 = vpack.c.b16 %v377, %v376
      %v405 = vpack.c.b16 %v379, %v378
      %v406 = vpack.c.b16 %v381, %v380
      %v407 = vpack.c.b16 %v383, %v382
      %v408 = vpack.c.b16 %v385, %v384
      %v409 = vpack.c.b16 %v387, %v386
      %v410 = vpack.c.b16 %v389, %v388
      %v411 = vpack.c.b16 %v391, %v390
      %v412 = vpack.c.b16 %v393, %v392
      %v413 = vpack.c.b16 %v395, %v394
      %v448 = vunpack.c.l.b16 %v308
      %v449 = vunpack.c.l.b16 %v309
      %v450 = vunpack.c.l.b16 %v310
      %v451 = vunpack.c.l.b16 %v311
      %v452 = vunpack.c.l.b16 %v312
      %v453 = vunpack.c.l.b16 %v313
      %v454 = vunpack.c.l.b16 %v314
      %v455 = vunpack.c.l.b16 %v315
      %v456 = vunpack.c.l.b16 %v316
      %v457 = vunpack.c.l.b16 %v317
      %v458 = vunpack.c.l.b16 %v318
      %v459 = vunpack.c.l.b16 %v319
      %v460 = vunpack.c.l.b16 %v320
      %v461 = vunpack.c.l.b16 %v321
      %v462 = vunpack.c.l.b16 %v322
      %v463 = vunpack.c.l.b16 %v323
      %v464 = vpack.c.b16 %v449, %v448
      %v465 = vpack.c.b16 %v451, %v450
      %v466 = vpack.c.b16 %v453, %v452
      %v467 = vpack.c.b16 %v455, %v454
      %v468 = vpack.c.b16 %v457, %v456
      %v469 = vpack.c.b16 %v459, %v458
      %v470 = vpack.c.b16 %v461, %v460
      %v471 = vpack.c.b16 %v463, %v462
      %480 = vmatpush.bf16.msra.mxu0 %v471
      %481 = vmatpush.bf16.msra.mxu0 %v470
      %482 = vmatpush.bf16.msra.mxu0 %v469
      %483 = vmatpush.bf16.msra.mxu0 %v468
      %484 = vmatpush.bf16.msra.mxu0 %v467
      %485 = vmatpush.bf16.msra.mxu0 %v466
      %486 = vmatpush.bf16.msra.mxu0 %v465
      %487 = vmatpush.bf16.msra.mxu0 %v464
      %488 = vmatmul.bf16.gmra.mxu0 %v396
      %v489 = vpop.f32.mrf.mxu0
      %v490 = vadd.f32 0.0, %v489
      %v491 = vpop.f32.mrf.mxu0
      %v492 = vadd.f32 0.0, %v491
      %493 = vmatmul.bf16.gmra.mxu0 %v397
      %v494 = vpop.f32.mrf.mxu0
      %v495 = vadd.f32 0.0, %v494
      %v496 = vpop.f32.mrf.mxu0
      %v497 = vadd.f32 0.0, %v496
      %498 = vmatmul.bf16.gmra.mxu0 %v398
      %v499 = vpop.f32.mrf.mxu0
      %v500 = vadd.f32 0.0, %v499
      %v501 = vpop.f32.mrf.mxu0
      %v502 = vadd.f32 0.0, %v501
      %503 = vmatmul.bf16.gmra.mxu0 %v399
      %v504 = vpop.f32.mrf.mxu0
      %v505 = vadd.f32 0.0, %v504
      %v506 = vpop.f32.mrf.mxu0
      %v507 = vadd.f32 0.0, %v506
      %508 = vmatmul.bf16.gmra.mxu0 %v400
      %v509 = vpop.f32.mrf.mxu0
      %v510 = vadd.f32 0.0, %v509
      %v511 = vpop.f32.mrf.mxu0
      %v512 = vadd.f32 0.0, %v511
      %513 = vmatmul.bf16.gmra.mxu0 %v401
      %v514 = vpop.f32.mrf.mxu0
      %v515 = vadd.f32 0.0, %v514
      %v516 = vpop.f32.mrf.mxu0
      %v517 = vadd.f32 0.0, %v516
      %518 = vmatmul.bf16.gmra.mxu0 %v402
      %v519 = vpop.f32.mrf.mxu0
      %v520 = vadd.f32 0.0, %v519
      %v521 = vpop.f32.mrf.mxu0
      %v522 = vadd.f32 0.0, %v521
      %523 = vmatmul.bf16.gmra.mxu0 %v403
      %v524 = vpop.f32.mrf.mxu0
      %v525 = vadd.f32 0.0, %v524
      %v526 = vpop.f32.mrf.mxu0
      %v527 = vadd.f32 0.0, %v526
      %528 = vmatmul.bf16.gmra.mxu0 %v404
      %v529 = vpop.f32.mrf.mxu0
      %v530 = vadd.f32 0.0, %v529
      %v531 = vpop.f32.mrf.mxu0
      %v532 = vadd.f32 0.0, %v531
      %533 = vmatmul.bf16.gmra.mxu0 %v405
      %v534 = vpop.f32.mrf.mxu0
      %v535 = vadd.f32 0.0, %v534
      %v536 = vpop.f32.mrf.mxu0
      %v537 = vadd.f32 0.0, %v536
      %538 = vmatmul.bf16.gmra.mxu0 %v406
      %v539 = vpop.f32.mrf.mxu0
      %v540 = vadd.f32 0.0, %v539
      %v541 = vpop.f32.mrf.mxu0
      %v542 = vadd.f32 0.0, %v541
      %543 = vmatmul.bf16.gmra.mxu0 %v407
      %v544 = vpop.f32.mrf.mxu0
      %v545 = vadd.f32 0.0, %v544
      %v546 = vpop.f32.mrf.mxu0
      %v547 = vadd.f32 0.0, %v546
      %548 = vmatmul.bf16.gmra.mxu0 %v408
      %v549 = vpop.f32.mrf.mxu0
      %v550 = vadd.f32 0.0, %v549
      %v551 = vpop.f32.mrf.mxu0
      %v552 = vadd.f32 0.0, %v551
      %553 = vmatmul.bf16.gmra.mxu0 %v409
      %v554 = vpop.f32.mrf.mxu0
      %v555 = vadd.f32 0.0, %v554
      %v556 = vpop.f32.mrf.mxu0
      %v557 = vadd.f32 0.0, %v556
      %558 = vmatmul.bf16.gmra.mxu0 %v410
      %v559 = vpop.f32.mrf.mxu0
      %v560 = vadd.f32 0.0, %v559
      %v561 = vpop.f32.mrf.mxu0
      %v562 = vadd.f32 0.0, %v561
      %563 = vmatmul.bf16.gmra.mxu0 %v411
      %v564 = vpop.f32.mrf.mxu0
      %v565 = vadd.f32 0.0, %v564
      %v566 = vpop.f32.mrf.mxu0
      %v567 = vadd.f32 0.0, %v566
      %568 = vmatmul.bf16.gmra.mxu0 %v412
      %v569 = vpop.f32.mrf.mxu0
      %v570 = vadd.f32 0.0, %v569
      %v571 = vpop.f32.mrf.mxu0
      %v572 = vadd.f32 0.0, %v571
      %573 = vmatmul.bf16.gmra.mxu0 %v413
      %v574 = vpop.f32.mrf.mxu0
      %v575 = vadd.f32 0.0, %v574
      %v576 = vpop.f32.mrf.mxu0
      %v577 = vadd.f32 0.0, %v576
      %578 = vdwg.mxu0
      %579 = vst [vmem:[#allocation2] sm:$0xff] %v490
      %580 = vst [vmem:[#allocation2 + $0x8] sm:$0xff] %v492
      %581 = vst [vmem:[#allocation2 + $0x10] sm:$0xff] %v495
      %582 = vst [vmem:[#allocation2 + $0x18] sm:$0xff] %v497
      %583 = vst [vmem:[#allocation2 + $0x20] sm:$0xff] %v500
      %584 = vst [vmem:[#allocation2 + $0x28] sm:$0xff] %v502
      %585 = vst [vmem:[#allocation2 + $0x30] sm:$0xff] %v505
      %586 = vst [vmem:[#allocation2 + $0x38] sm:$0xff] %v507
      %587 = vst [vmem:[#allocation2 + $0x40] sm:$0xff] %v510
      %588 = vst [vmem:[#allocation2 + $0x48] sm:$0xff] %v512
      %589 = vst [vmem:[#allocation2 + $0x50] sm:$0xff] %v515
      %590 = vst [vmem:[#allocation2 + $0x58] sm:$0xff] %v517
      %591 = vst [vmem:[#allocation2 + $0x60] sm:$0xff] %v520
      %592 = vst [vmem:[#allocation2 + $0x68] sm:$0xff] %v522
      %593 = vst [vmem:[#allocation2 + $0x70] sm:$0xff] %v525
      %594 = vst [vmem:[#allocation2 + $0x78] sm:$0xff] %v527
      %595 = vst [vmem:[#allocation2 + $0x80] sm:$0xff] %v530
      %596 = vst [vmem:[#allocation2 + $0x88] sm:$0xff] %v532
      %597 = vst [vmem:[#allocation2 + $0x90] sm:$0xff] %v535
      %598 = vst [vmem:[#allocation2 + $0x98] sm:$0xff] %v537
      %599 = vst [vmem:[#allocation2 + $0xa0] sm:$0xff] %v540
      %600 = vst [vmem:[#allocation2 + $0xa8] sm:$0xff] %v542
      %601 = vst [vmem:[#allocation2 + $0xb0] sm:$0xff] %v545
      %602 = vst [vmem:[#allocation2 + $0xb8] sm:$0xff] %v547
      %603 = vst [vmem:[#allocation2 + $0xc0] sm:$0xff] %v550
      %604 = vst [vmem:[#allocation2 + $0xc8] sm:$0xff] %v552
      %605 = vst [vmem:[#allocation2 + $0xd0] sm:$0xff] %v555
      %606 = vst [vmem:[#allocation2 + $0xd8] sm:$0xff] %v557
      %607 = vst [vmem:[#allocation2 + $0xe0] sm:$0xff] %v560
      %608 = vst [vmem:[#allocation2 + $0xe8] sm:$0xff] %v562
      %609 = vst [vmem:[#allocation2 + $0xf0] sm:$0xff] %v565
      %610 = vst [vmem:[#allocation2 + $0xf8] sm:$0xff] %v567
      %611 = vst [vmem:[#allocation2 + $0x100] sm:$0xff] %v570
      %612 = vst [vmem:[#allocation2 + $0x108] sm:$0xff] %v572
      %613 = vst [vmem:[#allocation2 + $0x110] sm:$0xff] %v575
      %614 = vst [vmem:[#allocation2 + $0x118] sm:$0xff] %v577
      %v615 = vld [vmem:[%s261] sm:$0xf]
      %v616 = vld [vmem:[%s261 + $0x4] sm:$0xf]
      %v617 = vld [vmem:[%s261 + $0x8] sm:$0xf]
      %v618 = vld [vmem:[%s261 + $0xc] sm:$0xf]
      %v619 = vld [vmem:[%s261 + $0x10] sm:$0xf]
      %v620 = vld [vmem:[%s261 + $0x14] sm:$0xf]
      %v621 = vld [vmem:[%s261 + $0x18] sm:$0xf]
      %v622 = vld [vmem:[%s261 + $0x1c] sm:$0xf]
      %v623 = vld [vmem:[%s261 + $0x20] sm:$0xf]
      %v624 = vld [vmem:[%s261 + $0x24] sm:$0xf]
      %v625 = vld [vmem:[%s261 + $0x28] sm:$0xf]
      %v626 = vld [vmem:[%s261 + $0x2c] sm:$0xf]
      %v627 = vld [vmem:[%s261 + $0x30] sm:$0xf]
      %v628 = vld [vmem:[%s261 + $0x34] sm:$0xf]
      %v629 = vld [vmem:[%s261 + $0x38] sm:$0xf]
      %v630 = vld [vmem:[%s261 + $0x3c] sm:$0xf]
      %v631 = vld [vmem:[%s261 + $0x40] sm:$0xf]
      %v632 = vld [vmem:[%s261 + $0x44] sm:$0xf]
      %v633 = vld [vmem:[%s261 + $0x48] sm:$0xf]
      %v634 = vld [vmem:[%s261 + $0x4c] sm:$0xf]
      %v635 = vld [vmem:[%s261 + $0x50] sm:$0xf]
      %v636 = vld [vmem:[%s261 + $0x54] sm:$0xf]
      %v637 = vld [vmem:[%s261 + $0x58] sm:$0xf]
      %v638 = vld [vmem:[%s261 + $0x5c] sm:$0xf]
      %v639 = vld [vmem:[%s261 + $0x60] sm:$0xf]
      %v640 = vld [vmem:[%s261 + $0x64] sm:$0xf]
      %v641 = vld [vmem:[%s261 + $0x68] sm:$0xf]
      %v642 = vld [vmem:[%s261 + $0x6c] sm:$0xf]
      %v643 = vld [vmem:[%s261 + $0x70] sm:$0xf]
      %v644 = vld [vmem:[%s261 + $0x74] sm:$0xf]
      %v645 = vld [vmem:[%s261 + $0x78] sm:$0xf]
      %v646 = vld [vmem:[%s261 + $0x7c] sm:$0xf]
      %v647 = vld [vmem:[%s261 + $0x80] sm:$0xf]
      %v648 = vld [vmem:[%s261 + $0x84] sm:$0xf]
      %v649 = vld [vmem:[%s261 + $0x88] sm:$0xf]
      %v650 = vld [vmem:[%s261 + $0x8c] sm:$0xf]
      %v651 = vld [vmem:[%s261 + $0x90] sm:$0x1]
      %s652 = scalar_lea.vmem %s2, 64
      %v653 = vld [vmem:[%s652] sm:$0xf]
      %v654 = vld [vmem:[%s652 + $0x4] sm:$0xf]
      %v655 = vld [vmem:[%s652 + $0x8] sm:$0xf]
      %v656 = vld [vmem:[%s652 + $0xc] sm:$0xf]
      %v657 = vld [vmem:[%s652 + $0x10] sm:$0xf]
      %v658 = vld [vmem:[%s652 + $0x14] sm:$0xf]
      %v659 = vld [vmem:[%s652 + $0x18] sm:$0xf]
      %v660 = vld [vmem:[%s652 + $0x1c] sm:$0xf]
      %v661 = vld [vmem:[%s652 + $0x20] sm:$0xf]
      %v662 = vld [vmem:[%s652 + $0x24] sm:$0xf]
      %v663 = vld [vmem:[%s652 + $0x28] sm:$0xf]
      %v664 = vld [vmem:[%s652 + $0x2c] sm:$0xf]
      %v665 = vld [vmem:[%s652 + $0x30] sm:$0xf]
      %v666 = vld [vmem:[%s652 + $0x34] sm:$0xf]
      %v667 = vld [vmem:[%s652 + $0x38] sm:$0xf]
      %v668 = vld [vmem:[%s652 + $0x3c] sm:$0xf]
      %v706 = vunpack.c.l.b16 %v615
      %v707 = vunpack.c.l.b16 %v616
      %v708 = vunpack.c.l.b16 %v617
      %v709 = vunpack.c.l.b16 %v618
      %v710 = vunpack.c.l.b16 %v619
      %v711 = vunpack.c.l.b16 %v620
      %v712 = vunpack.c.l.b16 %v621
      %v713 = vunpack.c.l.b16 %v622
      %v714 = vunpack.c.l.b16 %v623
      %v715 = vunpack.c.l.b16 %v624
      %v716 = vunpack.c.l.b16 %v625
      %v717 = vunpack.c.l.b16 %v626
      %v718 = vunpack.c.l.b16 %v627
      %v719 = vunpack.c.l.b16 %v628
      %v720 = vunpack.c.l.b16 %v629
      %v721 = vunpack.c.l.b16 %v630
      %v722 = vunpack.c.l.b16 %v631
      %v723 = vunpack.c.l.b16 %v632
      %v724 = vunpack.c.l.b16 %v633
      %v725 = vunpack.c.l.b16 %v634
      %v726 = vunpack.c.l.b16 %v635
      %v727 = vunpack.c.l.b16 %v636
      %v728 = vunpack.c.l.b16 %v637
      %v729 = vunpack.c.l.b16 %v638
      %v730 = vunpack.c.l.b16 %v639
      %v731 = vunpack.c.l.b16 %v640
      %v732 = vunpack.c.l.b16 %v641
      %v733 = vunpack.c.l.b16 %v642
      %v734 = vunpack.c.l.b16 %v643
      %v735 = vunpack.c.l.b16 %v644
      %v736 = vunpack.c.l.b16 %v645
      %v737 = vunpack.c.l.b16 %v646
      %v738 = vunpack.c.l.b16 %v647
      %v739 = vunpack.c.l.b16 %v648
      %v740 = vunpack.c.l.b16 %v649
      %v741 = vunpack.c.l.b16 %v650
      %v742 = vunpack.c.l.b16 %v651
      %v743 = vpack.c.b16 %v707, %v706
      %v744 = vpack.c.b16 %v709, %v708
      %v745 = vpack.c.b16 %v711, %v710
      %v746 = vpack.c.b16 %v713, %v712
      %v747 = vpack.c.b16 %v715, %v714
      %v748 = vpack.c.b16 %v717, %v716
      %v749 = vpack.c.b16 %v719, %v718
      %v750 = vpack.c.b16 %v721, %v720
      %v751 = vpack.c.b16 %v723, %v722
      %v752 = vpack.c.b16 %v725, %v724
      %v753 = vpack.c.b16 %v727, %v726
      %v754 = vpack.c.b16 %v729, %v728
      %v755 = vpack.c.b16 %v731, %v730
      %v756 = vpack.c.b16 %v733, %v732
      %v757 = vpack.c.b16 %v735, %v734
      %v758 = vpack.c.b16 %v737, %v736
      %v759 = vpack.c.b16 %v739, %v738
      %v760 = vpack.c.b16 %v741, %v740
      %v761 = vpack.c.b16 %v742, %v742
      %vm762 = vsmask.f32 7424
      %v764 = vshrl.u32 %v743, 16
      %v766 = vshll.u32 %v743, 16
      %v768 = vrot.slane %v766, 1
      %v769 = vor.u32 %v764, %v768
      %v771 = vshll.u32 %v744, 16
      %v773 = vrot.slane %v771, 1
      %v774 = vsel %vm762, %v769, %v773
      %v775 = vshrl.u32 %v744, 16
      %v777 = vor.u32 %v775, %v773
      %v779 = vshll.u32 %v745, 16
      %v781 = vrot.slane %v779, 1
      %v782 = vsel %vm762, %v777, %v781
      %v783 = vshrl.u32 %v745, 16
      %v785 = vor.u32 %v783, %v781
      %v787 = vshll.u32 %v746, 16
      %v789 = vrot.slane %v787, 1
      %v790 = vsel %vm762, %v785, %v789
      %v791 = vshrl.u32 %v746, 16
      %v793 = vor.u32 %v791, %v789
      %v795 = vshll.u32 %v747, 16
      %v797 = vrot.slane %v795, 1
      %v798 = vsel %vm762, %v793, %v797
      %v799 = vshrl.u32 %v747, 16
      %v801 = vor.u32 %v799, %v797
      %v803 = vshll.u32 %v748, 16
      %v805 = vrot.slane %v803, 1
      %v806 = vsel %vm762, %v801, %v805
      %v807 = vshrl.u32 %v748, 16
      %v809 = vor.u32 %v807, %v805
      %v811 = vshll.u32 %v749, 16
      %v813 = vrot.slane %v811, 1
      %v814 = vsel %vm762, %v809, %v813
      %v815 = vshrl.u32 %v749, 16
      %v817 = vor.u32 %v815, %v813
      %v819 = vshll.u32 %v750, 16
      %v821 = vrot.slane %v819, 1
      %v822 = vsel %vm762, %v817, %v821
      %v823 = vshrl.u32 %v750, 16
      %v825 = vor.u32 %v823, %v821
      %v827 = vshll.u32 %v751, 16
      %v829 = vrot.slane %v827, 1
      %v830 = vsel %vm762, %v825, %v829
      %v831 = vshrl.u32 %v751, 16
      %v833 = vor.u32 %v831, %v829
      %v835 = vshll.u32 %v752, 16
      %v837 = vrot.slane %v835, 1
      %v838 = vsel %vm762, %v833, %v837
      %v839 = vshrl.u32 %v752, 16
      %v841 = vor.u32 %v839, %v837
      %v843 = vshll.u32 %v753, 16
      %v845 = vrot.slane %v843, 1
      %v846 = vsel %vm762, %v841, %v845
      %v847 = vshrl.u32 %v753, 16
      %v849 = vor.u32 %v847, %v845
      %v851 = vshll.u32 %v754, 16
      %v853 = vrot.slane %v851, 1
      %v854 = vsel %vm762, %v849, %v853
      %v855 = vshrl.u32 %v754, 16
      %v857 = vor.u32 %v855, %v853
      %v859 = vshll.u32 %v755, 16
      %v861 = vrot.slane %v859, 1
      %v862 = vsel %vm762, %v857, %v861
      %v863 = vshrl.u32 %v755, 16
      %v865 = vor.u32 %v863, %v861
      %v867 = vshll.u32 %v756, 16
      %v869 = vrot.slane %v867, 1
      %v870 = vsel %vm762, %v865, %v869
      %v871 = vshrl.u32 %v756, 16
      %v873 = vor.u32 %v871, %v869
      %v875 = vshll.u32 %v757, 16
      %v877 = vrot.slane %v875, 1
      %v878 = vsel %vm762, %v873, %v877
      %v879 = vshrl.u32 %v757, 16
      %v881 = vor.u32 %v879, %v877
      %v883 = vshll.u32 %v758, 16
      %v885 = vrot.slane %v883, 1
      %v886 = vsel %vm762, %v881, %v885
      %v887 = vshrl.u32 %v758, 16
      %v889 = vor.u32 %v887, %v885
      %v891 = vshll.u32 %v759, 16
      %v893 = vrot.slane %v891, 1
      %v894 = vsel %vm762, %v889, %v893
      %v895 = vshrl.u32 %v759, 16
      %v897 = vor.u32 %v895, %v893
      %v899 = vshll.u32 %v760, 16
      %v901 = vrot.slane %v899, 1
      %v902 = vsel %vm762, %v897, %v901
      %v903 = vshrl.u32 %v760, 16
      %v905 = vor.u32 %v903, %v901
      %v907 = vshll.u32 %v761, 16
      %v909 = vrot.slane %v907, 1
      %v910 = vsel %vm762, %v905, %v909
      %v945 = vunpack.c.l.b16 %v653
      %v946 = vunpack.c.l.b16 %v654
      %v947 = vunpack.c.l.b16 %v655
      %v948 = vunpack.c.l.b16 %v656
      %v949 = vunpack.c.l.b16 %v657
      %v950 = vunpack.c.l.b16 %v658
      %v951 = vunpack.c.l.b16 %v659
      %v952 = vunpack.c.l.b16 %v660
      %v953 = vunpack.c.l.b16 %v661
      %v954 = vunpack.c.l.b16 %v662
      %v955 = vunpack.c.l.b16 %v663
      %v956 = vunpack.c.l.b16 %v664
      %v957 = vunpack.c.l.b16 %v665
      %v958 = vunpack.c.l.b16 %v666
      %v959 = vunpack.c.l.b16 %v667
      %v960 = vunpack.c.l.b16 %v668
      %v961 = vpack.c.b16 %v946, %v945
      %v962 = vpack.c.b16 %v948, %v947
      %v963 = vpack.c.b16 %v950, %v949
      %v964 = vpack.c.b16 %v952, %v951
      %v965 = vpack.c.b16 %v954, %v953
      %v966 = vpack.c.b16 %v956, %v955
      %v967 = vpack.c.b16 %v958, %v957
      %v968 = vpack.c.b16 %v960, %v959
      %977 = vmatpush.bf16.msra.mxu0 %v968
      %978 = vmatpush.bf16.msra.mxu0 %v967
      %979 = vmatpush.bf16.msra.mxu0 %v966
      %980 = vmatpush.bf16.msra.mxu0 %v965
      %981 = vmatpush.bf16.msra.mxu0 %v964
      %982 = vmatpush.bf16.msra.mxu0 %v963
      %983 = vmatpush.bf16.msra.mxu0 %v962
      %984 = vmatpush.bf16.msra.mxu0 %v961
      %985 = vmatmul.bf16.gmra.mxu0 %v774
      %v986 = vpop.f32.mrf.mxu0
      %v987 = vadd.f32 0.0, %v986
      %v988 = vpop.f32.mrf.mxu0
      %v989 = vadd.f32 0.0, %v988
      %990 = vmatmul.bf16.gmra.mxu0 %v782
      %v991 = vpop.f32.mrf.mxu0
      %v992 = vadd.f32 0.0, %v991
      %v993 = vpop.f32.mrf.mxu0
      %v994 = vadd.f32 0.0, %v993
      %995 = vmatmul.bf16.gmra.mxu0 %v790
      %v996 = vpop.f32.mrf.mxu0
      %v997 = vadd.f32 0.0, %v996
      %v998 = vpop.f32.mrf.mxu0
      %v999 = vadd.f32 0.0, %v998
      %1000 = vmatmul.bf16.gmra.mxu0 %v798
      %v1001 = vpop.f32.mrf.mxu0
      %v1002 = vadd.f32 0.0, %v1001
      %v1003 = vpop.f32.mrf.mxu0
      %v1004 = vadd.f32 0.0, %v1003
      %1005 = vmatmul.bf16.gmra.mxu0 %v806
      %v1006 = vpop.f32.mrf.mxu0
      %v1007 = vadd.f32 0.0, %v1006
      %v1008 = vpop.f32.mrf.mxu0
      %v1009 = vadd.f32 0.0, %v1008
      %1010 = vmatmul.bf16.gmra.mxu0 %v814
      %v1011 = vpop.f32.mrf.mxu0
      %v1012 = vadd.f32 0.0, %v1011
      %v1013 = vpop.f32.mrf.mxu0
      %v1014 = vadd.f32 0.0, %v1013
      %1015 = vmatmul.bf16.gmra.mxu0 %v822
      %v1016 = vpop.f32.mrf.mxu0
      %v1017 = vadd.f32 0.0, %v1016
      %v1018 = vpop.f32.mrf.mxu0
      %v1019 = vadd.f32 0.0, %v1018
      %1020 = vmatmul.bf16.gmra.mxu0 %v830
      %v1021 = vpop.f32.mrf.mxu0
      %v1022 = vadd.f32 0.0, %v1021
      %v1023 = vpop.f32.mrf.mxu0
      %v1024 = vadd.f32 0.0, %v1023
      %1025 = vmatmul.bf16.gmra.mxu0 %v838
      %v1026 = vpop.f32.mrf.mxu0
      %v1027 = vadd.f32 0.0, %v1026
      %v1028 = vpop.f32.mrf.mxu0
      %v1029 = vadd.f32 0.0, %v1028
      %1030 = vmatmul.bf16.gmra.mxu0 %v846
      %v1031 = vpop.f32.mrf.mxu0
      %v1032 = vadd.f32 0.0, %v1031
      %v1033 = vpop.f32.mrf.mxu0
      %v1034 = vadd.f32 0.0, %v1033
      %1035 = vmatmul.bf16.gmra.mxu0 %v854
      %v1036 = vpop.f32.mrf.mxu0
      %v1037 = vadd.f32 0.0, %v1036
      %v1038 = vpop.f32.mrf.mxu0
      %v1039 = vadd.f32 0.0, %v1038
      %1040 = vmatmul.bf16.gmra.mxu0 %v862
      %v1041 = vpop.f32.mrf.mxu0
      %v1042 = vadd.f32 0.0, %v1041
      %v1043 = vpop.f32.mrf.mxu0
      %v1044 = vadd.f32 0.0, %v1043
      %1045 = vmatmul.bf16.gmra.mxu0 %v870
      %v1046 = vpop.f32.mrf.mxu0
      %v1047 = vadd.f32 0.0, %v1046
      %v1048 = vpop.f32.mrf.mxu0
      %v1049 = vadd.f32 0.0, %v1048
      %1050 = vmatmul.bf16.gmra.mxu0 %v878
      %v1051 = vpop.f32.mrf.mxu0
      %v1052 = vadd.f32 0.0, %v1051
      %v1053 = vpop.f32.mrf.mxu0
      %v1054 = vadd.f32 0.0, %v1053
      %1055 = vmatmul.bf16.gmra.mxu0 %v886
      %v1056 = vpop.f32.mrf.mxu0
      %v1057 = vadd.f32 0.0, %v1056
      %v1058 = vpop.f32.mrf.mxu0
      %v1059 = vadd.f32 0.0, %v1058
      %1060 = vmatmul.bf16.gmra.mxu0 %v894
      %v1061 = vpop.f32.mrf.mxu0
      %v1062 = vadd.f32 0.0, %v1061
      %v1063 = vpop.f32.mrf.mxu0
      %v1064 = vadd.f32 0.0, %v1063
      %1065 = vmatmul.bf16.gmra.mxu0 %v902
      %v1066 = vpop.f32.mrf.mxu0
      %v1067 = vadd.f32 0.0, %v1066
      %v1068 = vpop.f32.mrf.mxu0
      %v1069 = vadd.f32 0.0, %v1068
      %1070 = vmatmul.bf16.gmra.mxu0 %v910
      %v1071 = vpop.f32.mrf.mxu0
      %v1072 = vadd.f32 0.0, %v1071
      %v1073 = vpop.f32.mrf.mxu0
      %v1074 = vadd.f32 0.0, %v1073
      %1075 = vdwg.mxu0
      %v1076 = vld [vmem:[#allocation2] sm:$0xff]
      %v1077 = vld [vmem:[#allocation2 + $0x8] sm:$0xff]
      %v1078 = vld [vmem:[#allocation2 + $0x10] sm:$0xff]
      %v1079 = vld [vmem:[#allocation2 + $0x18] sm:$0xff]
      %v1080 = vld [vmem:[#allocation2 + $0x20] sm:$0xff]
      %v1081 = vld [vmem:[#allocation2 + $0x28] sm:$0xff]
      %v1082 = vld [vmem:[#allocation2 + $0x30] sm:$0xff]
      %v1083 = vld [vmem:[#allocation2 + $0x38] sm:$0xff]
      %v1084 = vld [vmem:[#allocation2 + $0x40] sm:$0xff]
      %v1085 = vld [vmem:[#allocation2 + $0x48] sm:$0xff]
      %v1086 = vld [vmem:[#allocation2 + $0x50] sm:$0xff]
      %v1087 = vld [vmem:[#allocation2 + $0x58] sm:$0xff]
      %v1088 = vld [vmem:[#allocation2 + $0x60] sm:$0xff]
      %v1089 = vld [vmem:[#allocation2 + $0x68] sm:$0xff]
      %v1090 = vld [vmem:[#allocation2 + $0x70] sm:$0xff]
      %v1091 = vld [vmem:[#allocation2 + $0x78] sm:$0xff]
      %v1092 = vld [vmem:[#allocation2 + $0x80] sm:$0xff]
      %v1093 = vld [vmem:[#allocation2 + $0x88] sm:$0xff]
      %v1094 = vld [vmem:[#allocation2 + $0x90] sm:$0xff]
      %v1095 = vld [vmem:[#allocation2 + $0x98] sm:$0xff]
      %v1096 = vld [vmem:[#allocation2 + $0xa0] sm:$0xff]
      %v1097 = vld [vmem:[#allocation2 + $0xa8] sm:$0xff]
      %v1098 = vld [vmem:[#allocation2 + $0xb0] sm:$0xff]
      %v1099 = vld [vmem:[#allocation2 + $0xb8] sm:$0xff]
      %v1100 = vld [vmem:[#allocation2 + $0xc0] sm:$0xff]
      %v1101 = vld [vmem:[#allocation2 + $0xc8] sm:$0xff]
      %v1102 = vld [vmem:[#allocation2 + $0xd0] sm:$0xff]
      %v1103 = vld [vmem:[#allocation2 + $0xd8] sm:$0xff]
      %v1104 = vld [vmem:[#allocation2 + $0xe0] sm:$0xff]
      %v1105 = vld [vmem:[#allocation2 + $0xe8] sm:$0xff]
      %v1106 = vld [vmem:[#allocation2 + $0xf0] sm:$0xff]
      %v1107 = vld [vmem:[#allocation2 + $0xf8] sm:$0xff]
      %v1108 = vld [vmem:[#allocation2 + $0x100] sm:$0xff]
      %v1109 = vld [vmem:[#allocation2 + $0x108] sm:$0xff]
      %v1110 = vld [vmem:[#allocation2 + $0x110] sm:$0xff]
      %v1111 = vld [vmem:[#allocation2 + $0x118] sm:$0xff]
      %v1112 = vadd.f32 %v1076, %v987
      %v1113 = vadd.f32 %v1077, %v989
      %v1114 = vadd.f32 %v1078, %v992
      %v1115 = vadd.f32 %v1079, %v994
      %v1116 = vadd.f32 %v1080, %v997
      %v1117 = vadd.f32 %v1081, %v999
      %v1118 = vadd.f32 %v1082, %v1002
      %v1119 = vadd.f32 %v1083, %v1004
      %v1120 = vadd.f32 %v1084, %v1007
      %v1121 = vadd.f32 %v1085, %v1009
      %v1122 = vadd.f32 %v1086, %v1012
      %v1123 = vadd.f32 %v1087, %v1014
      %v1124 = vadd.f32 %v1088, %v1017
      %v1125 = vadd.f32 %v1089, %v1019
      %v1126 = vadd.f32 %v1090, %v1022
      %v1127 = vadd.f32 %v1091, %v1024
      %v1128 = vadd.f32 %v1092, %v1027
      %v1129 = vadd.f32 %v1093, %v1029
      %v1130 = vadd.f32 %v1094, %v1032
      %v1131 = vadd.f32 %v1095, %v1034
      %v1132 = vadd.f32 %v1096, %v1037
      %v1133 = vadd.f32 %v1097, %v1039
      %v1134 = vadd.f32 %v1098, %v1042
      %v1135 = vadd.f32 %v1099, %v1044
      %v1136 = vadd.f32 %v1100, %v1047
      %v1137 = vadd.f32 %v1101, %v1049
      %v1138 = vadd.f32 %v1102, %v1052
      %v1139 = vadd.f32 %v1103, %v1054
      %v1140 = vadd.f32 %v1104, %v1057
      %v1141 = vadd.f32 %v1105, %v1059
      %v1142 = vadd.f32 %v1106, %v1062
      %v1143 = vadd.f32 %v1107, %v1064
      %v1144 = vadd.f32 %v1108, %v1067
      %v1145 = vadd.f32 %v1109, %v1069
      %v1146 = vadd.f32 %v1110, %v1072
      %v1147 = vadd.f32 %v1111, %v1074
      %1148 = vst [vmem:[#allocation2] sm:$0xff] %v1112
      %1149 = vst [vmem:[#allocation2 + $0x8] sm:$0xff] %v1113
      %1150 = vst [vmem:[#allocation2 + $0x10] sm:$0xff] %v1114
      %1151 = vst [vmem:[#allocation2 + $0x18] sm:$0xff] %v1115
      %1152 = vst [vmem:[#allocation2 + $0x20] sm:$0xff] %v1116
      %1153 = vst [vmem:[#allocation2 + $0x28] sm:$0xff] %v1117
      %1154 = vst [vmem:[#allocation2 + $0x30] sm:$0xff] %v1118
      %1155 = vst [vmem:[#allocation2 + $0x38] sm:$0xff] %v1119
      %1156 = vst [vmem:[#allocation2 + $0x40] sm:$0xff] %v1120
      %1157 = vst [vmem:[#allocation2 + $0x48] sm:$0xff] %v1121
      %1158 = vst [vmem:[#allocation2 + $0x50] sm:$0xff] %v1122
      %1159 = vst [vmem:[#allocation2 + $0x58] sm:$0xff] %v1123
      %1160 = vst [vmem:[#allocation2 + $0x60] sm:$0xff] %v1124
      %1161 = vst [vmem:[#allocation2 + $0x68] sm:$0xff] %v1125
      %1162 = vst [vmem:[#allocation2 + $0x70] sm:$0xff] %v1126
      %1163 = vst [vmem:[#allocation2 + $0x78] sm:$0xff] %v1127
      %1164 = vst [vmem:[#allocation2 + $0x80] sm:$0xff] %v1128
      %1165 = vst [vmem:[#allocation2 + $0x88] sm:$0xff] %v1129
      %1166 = vst [vmem:[#allocation2 + $0x90] sm:$0xff] %v1130
      %1167 = vst [vmem:[#allocation2 + $0x98] sm:$0xff] %v1131
      %1168 = vst [vmem:[#allocation2 + $0xa0] sm:$0xff] %v1132
      %1169 = vst [vmem:[#allocation2 + $0xa8] sm:$0xff] %v1133
      %1170 = vst [vmem:[#allocation2 + $0xb0] sm:$0xff] %v1134
      %1171 = vst [vmem:[#allocation2 + $0xb8] sm:$0xff] %v1135
      %1172 = vst [vmem:[#allocation2 + $0xc0] sm:$0xff] %v1136
      %1173 = vst [vmem:[#allocation2 + $0xc8] sm:$0xff] %v1137
      %1174 = vst [vmem:[#allocation2 + $0xd0] sm:$0xff] %v1138
      %1175 = vst [vmem:[#allocation2 + $0xd8] sm:$0xff] %v1139
      %1176 = vst [vmem:[#allocation2 + $0xe0] sm:$0xff] %v1140
      %1177 = vst [vmem:[#allocation2 + $0xe8] sm:$0xff] %v1141
      %1178 = vst [vmem:[#allocation2 + $0xf0] sm:$0xff] %v1142
      %1179 = vst [vmem:[#allocation2 + $0xf8] sm:$0xff] %v1143
      %1180 = vst [vmem:[#allocation2 + $0x100] sm:$0xff] %v1144
      %1181 = vst [vmem:[#allocation2 + $0x108] sm:$0xff] %v1145
      %1182 = vst [vmem:[#allocation2 + $0x110] sm:$0xff] %v1146
      %1183 = vst [vmem:[#allocation2 + $0x118] sm:$0xff] %v1147
      %v1184 = vld [vmem:[%s261] sm:$0xe]
      %v1185 = vld [vmem:[%s261 + $0x4] sm:$0xf]
      %v1186 = vld [vmem:[%s261 + $0x8] sm:$0xf]
      %v1187 = vld [vmem:[%s261 + $0xc] sm:$0xf]
      %v1188 = vld [vmem:[%s261 + $0x10] sm:$0xf]
      %v1189 = vld [vmem:[%s261 + $0x14] sm:$0xf]
      %v1190 = vld [vmem:[%s261 + $0x18] sm:$0xf]
      %v1191 = vld [vmem:[%s261 + $0x1c] sm:$0xf]
      %v1192 = vld [vmem:[%s261 + $0x20] sm:$0xf]
      %v1193 = vld [vmem:[%s261 + $0x24] sm:$0xf]
      %v1194 = vld [vmem:[%s261 + $0x28] sm:$0xf]
      %v1195 = vld [vmem:[%s261 + $0x2c] sm:$0xf]
      %v1196 = vld [vmem:[%s261 + $0x30] sm:$0xf]
      %v1197 = vld [vmem:[%s261 + $0x34] sm:$0xf]
      %v1198 = vld [vmem:[%s261 + $0x38] sm:$0xf]
      %v1199 = vld [vmem:[%s261 + $0x3c] sm:$0xf]
      %v1200 = vld [vmem:[%s261 + $0x40] sm:$0xf]
      %v1201 = vld [vmem:[%s261 + $0x44] sm:$0xf]
      %v1202 = vld [vmem:[%s261 + $0x48] sm:$0xf]
      %v1203 = vld [vmem:[%s261 + $0x4c] sm:$0xf]
      %v1204 = vld [vmem:[%s261 + $0x50] sm:$0xf]
      %v1205 = vld [vmem:[%s261 + $0x54] sm:$0xf]
      %v1206 = vld [vmem:[%s261 + $0x58] sm:$0xf]
      %v1207 = vld [vmem:[%s261 + $0x5c] sm:$0xf]
      %v1208 = vld [vmem:[%s261 + $0x60] sm:$0xf]
      %v1209 = vld [vmem:[%s261 + $0x64] sm:$0xf]
      %v1210 = vld [vmem:[%s261 + $0x68] sm:$0xf]
      %v1211 = vld [vmem:[%s261 + $0x6c] sm:$0xf]
      %v1212 = vld [vmem:[%s261 + $0x70] sm:$0xf]
      %v1213 = vld [vmem:[%s261 + $0x74] sm:$0xf]
      %v1214 = vld [vmem:[%s261 + $0x78] sm:$0xf]
      %v1215 = vld [vmem:[%s261 + $0x7c] sm:$0xf]
      %v1216 = vld [vmem:[%s261 + $0x80] sm:$0xf]
      %v1217 = vld [vmem:[%s261 + $0x84] sm:$0xf]
      %v1218 = vld [vmem:[%s261 + $0x88] sm:$0xf]
      %v1219 = vld [vmem:[%s261 + $0x8c] sm:$0xf]
      %v1220 = vld [vmem:[%s261 + $0x90] sm:$0x1]
      %s1221 = scalar_lea.vmem %s2, 128
      %v1222 = vld [vmem:[%s1221] sm:$0xf]
      %v1223 = vld [vmem:[%s1221 + $0x4] sm:$0xf]
      %v1224 = vld [vmem:[%s1221 + $0x8] sm:$0xf]
      %v1225 = vld [vmem:[%s1221 + $0xc] sm:$0xf]
      %v1226 = vld [vmem:[%s1221 + $0x10] sm:$0xf]
      %v1227 = vld [vmem:[%s1221 + $0x14] sm:$0xf]
      %v1228 = vld [vmem:[%s1221 + $0x18] sm:$0xf]
      %v1229 = vld [vmem:[%s1221 + $0x1c] sm:$0xf]
      %v1230 = vld [vmem:[%s1221 + $0x20] sm:$0xf]
      %v1231 = vld [vmem:[%s1221 + $0x24] sm:$0xf]
      %v1232 = vld [vmem:[%s1221 + $0x28] sm:$0xf]
      %v1233 = vld [vmem:[%s1221 + $0x2c] sm:$0xf]
      %v1234 = vld [vmem:[%s1221 + $0x30] sm:$0xf]
      %v1235 = vld [vmem:[%s1221 + $0x34] sm:$0xf]
      %v1236 = vld [vmem:[%s1221 + $0x38] sm:$0xf]
      %v1237 = vld [vmem:[%s1221 + $0x3c] sm:$0xf]
      %v1275 = vunpack.c.l.b16 %v1184
      %v1276 = vunpack.c.l.b16 %v1185
      %v1277 = vunpack.c.l.b16 %v1186
      %v1278 = vunpack.c.l.b16 %v1187
      %v1279 = vunpack.c.l.b16 %v1188
      %v1280 = vunpack.c.l.b16 %v1189
      %v1281 = vunpack.c.l.b16 %v1190
      %v1282 = vunpack.c.l.b16 %v1191
      %v1283 = vunpack.c.l.b16 %v1192
      %v1284 = vunpack.c.l.b16 %v1193
      %v1285 = vunpack.c.l.b16 %v1194
      %v1286 = vunpack.c.l.b16 %v1195
      %v1287 = vunpack.c.l.b16 %v1196
      %v1288 = vunpack.c.l.b16 %v1197
      %v1289 = vunpack.c.l.b16 %v1198
      %v1290 = vunpack.c.l.b16 %v1199
      %v1291 = vunpack.c.l.b16 %v1200
      %v1292 = vunpack.c.l.b16 %v1201
      %v1293 = vunpack.c.l.b16 %v1202
      %v1294 = vunpack.c.l.b16 %v1203
      %v1295 = vunpack.c.l.b16 %v1204
      %v1296 = vunpack.c.l.b16 %v1205
      %v1297 = vunpack.c.l.b16 %v1206
      %v1298 = vunpack.c.l.b16 %v1207
      %v1299 = vunpack.c.l.b16 %v1208
      %v1300 = vunpack.c.l.b16 %v1209
      %v1301 = vunpack.c.l.b16 %v1210
      %v1302 = vunpack.c.l.b16 %v1211
      %v1303 = vunpack.c.l.b16 %v1212
      %v1304 = vunpack.c.l.b16 %v1213
      %v1305 = vunpack.c.l.b16 %v1214
      %v1306 = vunpack.c.l.b16 %v1215
      %v1307 = vunpack.c.l.b16 %v1216
      %v1308 = vunpack.c.l.b16 %v1217
      %v1309 = vunpack.c.l.b16 %v1218
      %v1310 = vunpack.c.l.b16 %v1219
      %v1311 = vunpack.c.l.b16 %v1220
      %v1312 = vpack.c.b16 %v1276, %v1275
      %v1313 = vpack.c.b16 %v1278, %v1277
      %v1314 = vpack.c.b16 %v1280, %v1279
      %v1315 = vpack.c.b16 %v1282, %v1281
      %v1316 = vpack.c.b16 %v1284, %v1283
      %v1317 = vpack.c.b16 %v1286, %v1285
      %v1318 = vpack.c.b16 %v1288, %v1287
      %v1319 = vpack.c.b16 %v1290, %v1289
      %v1320 = vpack.c.b16 %v1292, %v1291
      %v1321 = vpack.c.b16 %v1294, %v1293
      %v1322 = vpack.c.b16 %v1296, %v1295
      %v1323 = vpack.c.b16 %v1298, %v1297
      %v1324 = vpack.c.b16 %v1300, %v1299
      %v1325 = vpack.c.b16 %v1302, %v1301
      %v1326 = vpack.c.b16 %v1304, %v1303
      %v1327 = vpack.c.b16 %v1306, %v1305
      %v1328 = vpack.c.b16 %v1308, %v1307
      %v1329 = vpack.c.b16 %v1310, %v1309
      %v1330 = vpack.c.b16 %v1311, %v1311
      %vm1331 = vcmask 1046528
      %v1332 = vrot.slane %v1312, 1
      %v1333 = vrot.slane %v1313, 1
      %v1334 = vsel %vm1331, %v1332, %v1333
      %v1335 = vrot.slane %v1314, 1
      %v1336 = vsel %vm1331, %v1333, %v1335
      %v1337 = vrot.slane %v1315, 1
      %v1338 = vsel %vm1331, %v1335, %v1337
      %v1339 = vrot.slane %v1316, 1
      %v1340 = vsel %vm1331, %v1337, %v1339
      %v1341 = vrot.slane %v1317, 1
      %v1342 = vsel %vm1331, %v1339, %v1341
      %v1343 = vrot.slane %v1318, 1
      %v1344 = vsel %vm1331, %v1341, %v1343
      %v1345 = vrot.slane %v1319, 1
      %v1346 = vsel %vm1331, %v1343, %v1345
      %v1347 = vrot.slane %v1320, 1
      %v1348 = vsel %vm1331, %v1345, %v1347
      %v1349 = vrot.slane %v1321, 1
      %v1350 = vsel %vm1331, %v1347, %v1349
      %v1351 = vrot.slane %v1322, 1
      %v1352 = vsel %vm1331, %v1349, %v1351
      %v1353 = vrot.slane %v1323, 1
      %v1354 = vsel %vm1331, %v1351, %v1353
      %v1355 = vrot.slane %v1324, 1
      %v1356 = vsel %vm1331, %v1353, %v1355
      %v1357 = vrot.slane %v1325, 1
      %v1358 = vsel %vm1331, %v1355, %v1357
      %v1359 = vrot.slane %v1326, 1
      %v1360 = vsel %vm1331, %v1357, %v1359
      %v1361 = vrot.slane %v1327, 1
      %v1362 = vsel %vm1331, %v1359, %v1361
      %v1363 = vrot.slane %v1328, 1
      %v1364 = vsel %vm1331, %v1361, %v1363
      %v1365 = vrot.slane %v1329, 1
      %v1366 = vsel %vm1331, %v1363, %v1365
      %v1367 = vrot.slane %v1330, 1
      %v1368 = vsel %vm1331, %v1365, %v1367
      %v1403 = vunpack.c.l.b16 %v1222
      %v1404 = vunpack.c.l.b16 %v1223
      %v1405 = vunpack.c.l.b16 %v1224
      %v1406 = vunpack.c.l.b16 %v1225
      %v1407 = vunpack.c.l.b16 %v1226
      %v1408 = vunpack.c.l.b16 %v1227
      %v1409 = vunpack.c.l.b16 %v1228
      %v1410 = vunpack.c.l.b16 %v1229
      %v1411 = vunpack.c.l.b16 %v1230
      %v1412 = vunpack.c.l.b16 %v1231
      %v1413 = vunpack.c.l.b16 %v1232
      %v1414 = vunpack.c.l.b16 %v1233
      %v1415 = vunpack.c.l.b16 %v1234
      %v1416 = vunpack.c.l.b16 %v1235
      %v1417 = vunpack.c.l.b16 %v1236
      %v1418 = vunpack.c.l.b16 %v1237
      %v1419 = vpack.c.b16 %v1404, %v1403
      %v1420 = vpack.c.b16 %v1406, %v1405
      %v1421 = vpack.c.b16 %v1408, %v1407
      %v1422 = vpack.c.b16 %v1410, %v1409
      %v1423 = vpack.c.b16 %v1412, %v1411
      %v1424 = vpack.c.b16 %v1414, %v1413
      %v1425 = vpack.c.b16 %v1416, %v1415
      %v1426 = vpack.c.b16 %v1418, %v1417
      %1435 = vmatpush.bf16.msra.mxu0 %v1426
      %1436 = vmatpush.bf16.msra.mxu0 %v1425
      %1437 = vmatpush.bf16.msra.mxu0 %v1424
      %1438 = vmatpush.bf16.msra.mxu0 %v1423
      %1439 = vmatpush.bf16.msra.mxu0 %v1422
      %1440 = vmatpush.bf16.msra.mxu0 %v1421
      %1441 = vmatpush.bf16.msra.mxu0 %v1420
      %1442 = vmatpush.bf16.msra.mxu0 %v1419
      %1443 = vmatmul.bf16.gmra.mxu0 %v1334
      %v1444 = vpop.f32.mrf.mxu0
      %v1445 = vadd.f32 0.0, %v1444
      %v1446 = vpop.f32.mrf.mxu0
      %v1447 = vadd.f32 0.0, %v1446
      %1448 = vmatmul.bf16.gmra.mxu0 %v1336
      %v1449 = vpop.f32.mrf.mxu0
      %v1450 = vadd.f32 0.0, %v1449
      %v1451 = vpop.f32.mrf.mxu0
      %v1452 = vadd.f32 0.0, %v1451
      %1453 = vmatmul.bf16.gmra.mxu0 %v1338
      %v1454 = vpop.f32.mrf.mxu0
      %v1455 = vadd.f32 0.0, %v1454
      %v1456 = vpop.f32.mrf.mxu0
      %v1457 = vadd.f32 0.0, %v1456
      %1458 = vmatmul.bf16.gmra.mxu0 %v1340
      %v1459 = vpop.f32.mrf.mxu0
      %v1460 = vadd.f32 0.0, %v1459
      %v1461 = vpop.f32.mrf.mxu0
      %v1462 = vadd.f32 0.0, %v1461
      %1463 = vmatmul.bf16.gmra.mxu0 %v1342
      %v1464 = vpop.f32.mrf.mxu0
      %v1465 = vadd.f32 0.0, %v1464
      %v1466 = vpop.f32.mrf.mxu0
      %v1467 = vadd.f32 0.0, %v1466
      %1468 = vmatmul.bf16.gmra.mxu0 %v1344
      %v1469 = vpop.f32.mrf.mxu0
      %v1470 = vadd.f32 0.0, %v1469
      %v1471 = vpop.f32.mrf.mxu0
      %v1472 = vadd.f32 0.0, %v1471
      %1473 = vmatmul.bf16.gmra.mxu0 %v1346
      %v1474 = vpop.f32.mrf.mxu0
      %v1475 = vadd.f32 0.0, %v1474
      %v1476 = vpop.f32.mrf.mxu0
      %v1477 = vadd.f32 0.0, %v1476
      %1478 = vmatmul.bf16.gmra.mxu0 %v1348
      %v1479 = vpop.f32.mrf.mxu0
      %v1480 = vadd.f32 0.0, %v1479
      %v1481 = vpop.f32.mrf.mxu0
      %v1482 = vadd.f32 0.0, %v1481
      %1483 = vmatmul.bf16.gmra.mxu0 %v1350
      %v1484 = vpop.f32.mrf.mxu0
      %v1485 = vadd.f32 0.0, %v1484
      %v1486 = vpop.f32.mrf.mxu0
      %v1487 = vadd.f32 0.0, %v1486
      %1488 = vmatmul.bf16.gmra.mxu0 %v1352
      %v1489 = vpop.f32.mrf.mxu0
      %v1490 = vadd.f32 0.0, %v1489
      %v1491 = vpop.f32.mrf.mxu0
      %v1492 = vadd.f32 0.0, %v1491
      %1493 = vmatmul.bf16.gmra.mxu0 %v1354
      %v1494 = vpop.f32.mrf.mxu0
      %v1495 = vadd.f32 0.0, %v1494
      %v1496 = vpop.f32.mrf.mxu0
      %v1497 = vadd.f32 0.0, %v1496
      %1498 = vmatmul.bf16.gmra.mxu0 %v1356
      %v1499 = vpop.f32.mrf.mxu0
      %v1500 = vadd.f32 0.0, %v1499
      %v1501 = vpop.f32.mrf.mxu0
      %v1502 = vadd.f32 0.0, %v1501
      %1503 = vmatmul.bf16.gmra.mxu0 %v1358
      %v1504 = vpop.f32.mrf.mxu0
      %v1505 = vadd.f32 0.0, %v1504
      %v1506 = vpop.f32.mrf.mxu0
      %v1507 = vadd.f32 0.0, %v1506
      %1508 = vmatmul.bf16.gmra.mxu0 %v1360
      %v1509 = vpop.f32.mrf.mxu0
      %v1510 = vadd.f32 0.0, %v1509
      %v1511 = vpop.f32.mrf.mxu0
      %v1512 = vadd.f32 0.0, %v1511
      %1513 = vmatmul.bf16.gmra.mxu0 %v1362
      %v1514 = vpop.f32.mrf.mxu0
      %v1515 = vadd.f32 0.0, %v1514
      %v1516 = vpop.f32.mrf.mxu0
      %v1517 = vadd.f32 0.0, %v1516
      %1518 = vmatmul.bf16.gmra.mxu0 %v1364
      %v1519 = vpop.f32.mrf.mxu0
      %v1520 = vadd.f32 0.0, %v1519
      %v1521 = vpop.f32.mrf.mxu0
      %v1522 = vadd.f32 0.0, %v1521
      %1523 = vmatmul.bf16.gmra.mxu0 %v1366
      %v1524 = vpop.f32.mrf.mxu0
      %v1525 = vadd.f32 0.0, %v1524
      %v1526 = vpop.f32.mrf.mxu0
      %v1527 = vadd.f32 0.0, %v1526
      %1528 = vmatmul.bf16.gmra.mxu0 %v1368
      %v1529 = vpop.f32.mrf.mxu0
      %v1530 = vadd.f32 0.0, %v1529
      %v1531 = vpop.f32.mrf.mxu0
      %v1532 = vadd.f32 0.0, %v1531
      %1533 = vdwg.mxu0
      %v1534 = vld [vmem:[#allocation2] sm:$0xff]
      %v1535 = vld [vmem:[#allocation2 + $0x8] sm:$0xff]
      %v1536 = vld [vmem:[#allocation2 + $0x10] sm:$0xff]
      %v1537 = vld [vmem:[#allocation2 + $0x18] sm:$0xff]
      %v1538 = vld [vmem:[#allocation2 + $0x20] sm:$0xff]
      %v1539 = vld [vmem:[#allocation2 + $0x28] sm:$0xff]
      %v1540 = vld [vmem:[#allocation2 + $0x30] sm:$0xff]
      %v1541 = vld [vmem:[#allocation2 + $0x38] sm:$0xff]
      %v1542 = vld [vmem:[#allocation2 + $0x40] sm:$0xff]
      %v1543 = vld [vmem:[#allocation2 + $0x48] sm:$0xff]
      %v1544 = vld [vmem:[#allocation2 + $0x50] sm:$0xff]
      %v1545 = vld [vmem:[#allocation2 + $0x58] sm:$0xff]
      %v1546 = vld [vmem:[#allocation2 + $0x60] sm:$0xff]
      %v1547 = vld [vmem:[#allocation2 + $0x68] sm:$0xff]
      %v1548 = vld [vmem:[#allocation2 + $0x70] sm:$0xff]
      %v1549 = vld [vmem:[#allocation2 + $0x78] sm:$0xff]
      %v1550 = vld [vmem:[#allocation2 + $0x80] sm:$0xff]
      %v1551 = vld [vmem:[#allocation2 + $0x88] sm:$0xff]
      %v1552 = vld [vmem:[#allocation2 + $0x90] sm:$0xff]
      %v1553 = vld [vmem:[#allocation2 + $0x98] sm:$0xff]
      %v1554 = vld [vmem:[#allocation2 + $0xa0] sm:$0xff]
      %v1555 = vld [vmem:[#allocation2 + $0xa8] sm:$0xff]
      %v1556 = vld [vmem:[#allocation2 + $0xb0] sm:$0xff]
      %v1557 = vld [vmem:[#allocation2 + $0xb8] sm:$0xff]
      %v1558 = vld [vmem:[#allocation2 + $0xc0] sm:$0xff]
      %v1559 = vld [vmem:[#allocation2 + $0xc8] sm:$0xff]
      %v1560 = vld [vmem:[#allocation2 + $0xd0] sm:$0xff]
      %v1561 = vld [vmem:[#allocation2 + $0xd8] sm:$0xff]
      %v1562 = vld [vmem:[#allocation2 + $0xe0] sm:$0xff]
      %v1563 = vld [vmem:[#allocation2 + $0xe8] sm:$0xff]
      %v1564 = vld [vmem:[#allocation2 + $0xf0] sm:$0xff]
      %v1565 = vld [vmem:[#allocation2 + $0xf8] sm:$0xff]
      %v1566 = vld [vmem:[#allocation2 + $0x100] sm:$0xff]
      %v1567 = vld [vmem:[#allocation2 + $0x108] sm:$0xff]
      %v1568 = vld [vmem:[#allocation2 + $0x110] sm:$0xff]
      %v1569 = vld [vmem:[#allocation2 + $0x118] sm:$0xff]
      %v1570 = vadd.f32 %v1534, %v1445
      %v1571 = vadd.f32 %v1535, %v1447
      %v1572 = vadd.f32 %v1536, %v1450
      %v1573 = vadd.f32 %v1537, %v1452
      %v1574 = vadd.f32 %v1538, %v1455
      %v1575 = vadd.f32 %v1539, %v1457
      %v1576 = vadd.f32 %v1540, %v1460
      %v1577 = vadd.f32 %v1541, %v1462
      %v1578 = vadd.f32 %v1542, %v1465
      %v1579 = vadd.f32 %v1543, %v1467
      %v1580 = vadd.f32 %v1544, %v1470
      %v1581 = vadd.f32 %v1545, %v1472
      %v1582 = vadd.f32 %v1546, %v1475
      %v1583 = vadd.f32 %v1547, %v1477
      %v1584 = vadd.f32 %v1548, %v1480
      %v1585 = vadd.f32 %v1549, %v1482
      %v1586 = vadd.f32 %v1550, %v1485
      %v1587 = vadd.f32 %v1551, %v1487
      %v1588 = vadd.f32 %v1552, %v1490
      %v1589 = vadd.f32 %v1553, %v1492
      %v1590 = vadd.f32 %v1554, %v1495
      %v1591 = vadd.f32 %v1555, %v1497
      %v1592 = vadd.f32 %v1556, %v1500
      %v1593 = vadd.f32 %v1557, %v1502
      %v1594 = vadd.f32 %v1558, %v1505
      %v1595 = vadd.f32 %v1559, %v1507
      %v1596 = vadd.f32 %v1560, %v1510
      %v1597 = vadd.f32 %v1561, %v1512
      %v1598 = vadd.f32 %v1562, %v1515
      %v1599 = vadd.f32 %v1563, %v1517
      %v1600 = vadd.f32 %v1564, %v1520
      %v1601 = vadd.f32 %v1565, %v1522
      %v1602 = vadd.f32 %v1566, %v1525
      %v1603 = vadd.f32 %v1567, %v1527
      %v1604 = vadd.f32 %v1568, %v1530
      %v1605 = vadd.f32 %v1569, %v1532
      %1606 = vst [vmem:[#allocation2] sm:$0xff] %v1570
      %1607 = vst [vmem:[#allocation2 + $0x8] sm:$0xff] %v1571
      %1608 = vst [vmem:[#allocation2 + $0x10] sm:$0xff] %v1572
      %1609 = vst [vmem:[#allocation2 + $0x18] sm:$0xff] %v1573
      %1610 = vst [vmem:[#allocation2 + $0x20] sm:$0xff] %v1574
      %1611 = vst [vmem:[#allocation2 + $0x28] sm:$0xff] %v1575
      %1612 = vst [vmem:[#allocation2 + $0x30] sm:$0xff] %v1576
      %1613 = vst [vmem:[#allocation2 + $0x38] sm:$0xff] %v1577
      %1614 = vst [vmem:[#allocation2 + $0x40] sm:$0xff] %v1578
      %1615 = vst [vmem:[#allocation2 + $0x48] sm:$0xff] %v1579
      %1616 = vst [vmem:[#allocation2 + $0x50] sm:$0xff] %v1580
      %1617 = vst [vmem:[#allocation2 + $0x58] sm:$0xff] %v1581
      %1618 = vst [vmem:[#allocation2 + $0x60] sm:$0xff] %v1582
      %1619 = vst [vmem:[#allocation2 + $0x68] sm:$0xff] %v1583
      %1620 = vst [vmem:[#allocation2 + $0x70] sm:$0xff] %v1584
      %1621 = vst [vmem:[#allocation2 + $0x78] sm:$0xff] %v1585
      %1622 = vst [vmem:[#allocation2 + $0x80] sm:$0xff] %v1586
      %1623 = vst [vmem:[#allocation2 + $0x88] sm:$0xff] %v1587
      %1624 = vst [vmem:[#allocation2 + $0x90] sm:$0xff] %v1588
      %1625 = vst [vmem:[#allocation2 + $0x98] sm:$0xff] %v1589
      %1626 = vst [vmem:[#allocation2 + $0xa0] sm:$0xff] %v1590
      %1627 = vst [vmem:[#allocation2 + $0xa8] sm:$0xff] %v1591
      %1628 = vst [vmem:[#allocation2 + $0xb0] sm:$0xff] %v1592
      %1629 = vst [vmem:[#allocation2 + $0xb8] sm:$0xff] %v1593
      %1630 = vst [vmem:[#allocation2 + $0xc0] sm:$0xff] %v1594
      %1631 = vst [vmem:[#allocation2 + $0xc8] sm:$0xff] %v1595
      %1632 = vst [vmem:[#allocation2 + $0xd0] sm:$0xff] %v1596
      %1633 = vst [vmem:[#allocation2 + $0xd8] sm:$0xff] %v1597
      %1634 = vst [vmem:[#allocation2 + $0xe0] sm:$0xff] %v1598
      %1635 = vst [vmem:[#allocation2 + $0xe8] sm:$0xff] %v1599
      %1636 = vst [vmem:[#allocation2 + $0xf0] sm:$0xff] %v1600
      %1637 = vst [vmem:[#allocation2 + $0xf8] sm:$0xff] %v1601
      %1638 = vst [vmem:[#allocation2 + $0x100] sm:$0xff] %v1602
      %1639 = vst [vmem:[#allocation2 + $0x108] sm:$0xff] %v1603
      %1640 = vst [vmem:[#allocation2 + $0x110] sm:$0xff] %v1604
      %1641 = vst [vmem:[#allocation2 + $0x118] sm:$0xff] %v1605
      %v1642 = vld [vmem:[%s261 + $0x8] sm:$0xe]
      %v1643 = vld [vmem:[%s261 + $0xc] sm:$0xf]
      %v1644 = vld [vmem:[%s261 + $0x10] sm:$0xf]
      %v1645 = vld [vmem:[%s261 + $0x14] sm:$0xf]
      %v1646 = vld [vmem:[%s261 + $0x18] sm:$0xf]
      %v1647 = vld [vmem:[%s261 + $0x1c] sm:$0xf]
      %v1648 = vld [vmem:[%s261 + $0x20] sm:$0xf]
      %v1649 = vld [vmem:[%s261 + $0x24] sm:$0xf]
      %v1650 = vld [vmem:[%s261 + $0x28] sm:$0xf]
      %v1651 = vld [vmem:[%s261 + $0x2c] sm:$0xf]
      %v1652 = vld [vmem:[%s261 + $0x30] sm:$0xf]
      %v1653 = vld [vmem:[%s261 + $0x34] sm:$0xf]
      %v1654 = vld [vmem:[%s261 + $0x38] sm:$0xf]
      %v1655 = vld [vmem:[%s261 + $0x3c] sm:$0xf]
      %v1656 = vld [vmem:[%s261 + $0x40] sm:$0xf]
      %v1657 = vld [vmem:[%s261 + $0x44] sm:$0xf]
      %v1658 = vld [vmem:[%s261 + $0x48] sm:$0xf]
      %v1659 = vld [vmem:[%s261 + $0x4c] sm:$0xf]
      %v1660 = vld [vmem:[%s261 + $0x50] sm:$0xf]
      %v1661 = vld [vmem:[%s261 + $0x54] sm:$0xf]
      %v1662 = vld [vmem:[%s261 + $0x58] sm:$0xf]
      %v1663 = vld [vmem:[%s261 + $0x5c] sm:$0xf]
      %v1664 = vld [vmem:[%s261 + $0x60] sm:$0xf]
      %v1665 = vld [vmem:[%s261 + $0x64] sm:$0xf]
      %v1666 = vld [vmem:[%s261 + $0x68] sm:$0xf]
      %v1667 = vld [vmem:[%s261 + $0x6c] sm:$0xf]
      %v1668 = vld [vmem:[%s261 + $0x70] sm:$0xf]
      %v1669 = vld [vmem:[%s261 + $0x74] sm:$0xf]
      %v1670 = vld [vmem:[%s261 + $0x78] sm:$0xf]
      %v1671 = vld [vmem:[%s261 + $0x7c] sm:$0xf]
      %v1672 = vld [vmem:[%s261 + $0x80] sm:$0xf]
      %v1673 = vld [vmem:[%s261 + $0x84] sm:$0xf]
      %v1674 = vld [vmem:[%s261 + $0x88] sm:$0xf]
      %v1675 = vld [vmem:[%s261 + $0x8c] sm:$0xf]
      %v1676 = vld [vmem:[%s261 + $0x90] sm:$0xf]
      %v1677 = vld [vmem:[%s261 + $0x94] sm:$0xf]
      %v1678 = vld [vmem:[%s261 + $0x98] sm:$0x1]
      %s1679 = scalar_lea.vmem %s2, 192
      %v1680 = vld [vmem:[%s1679] sm:$0xf]
      %v1681 = vld [vmem:[%s1679 + $0x4] sm:$0xf]
      %v1682 = vld [vmem:[%s1679 + $0x8] sm:$0xf]
      %v1683 = vld [vmem:[%s1679 + $0xc] sm:$0xf]
      %v1684 = vld [vmem:[%s1679 + $0x10] sm:$0xf]
      %v1685 = vld [vmem:[%s1679 + $0x14] sm:$0xf]
      %v1686 = vld [vmem:[%s1679 + $0x18] sm:$0xf]
      %v1687 = vld [vmem:[%s1679 + $0x1c] sm:$0xf]
      %v1688 = vld [vmem:[%s1679 + $0x20] sm:$0xf]
      %v1689 = vld [vmem:[%s1679 + $0x24] sm:$0xf]
      %v1690 = vld [vmem:[%s1679 + $0x28] sm:$0xf]
      %v1691 = vld [vmem:[%s1679 + $0x2c] sm:$0xf]
      %v1692 = vld [vmem:[%s1679 + $0x30] sm:$0xf]
      %v1693 = vld [vmem:[%s1679 + $0x34] sm:$0xf]
      %v1694 = vld [vmem:[%s1679 + $0x38] sm:$0xf]
      %v1695 = vld [vmem:[%s1679 + $0x3c] sm:$0xf]
      %v1733 = vunpack.c.l.b16 %v1642
      %v1734 = vunpack.c.l.b16 %v1643
      %v1735 = vunpack.c.l.b16 %v1644
      %v1736 = vunpack.c.l.b16 %v1645
      %v1737 = vunpack.c.l.b16 %v1646
      %v1738 = vunpack.c.l.b16 %v1647
      %v1739 = vunpack.c.l.b16 %v1648
      %v1740 = vunpack.c.l.b16 %v1649
      %v1741 = vunpack.c.l.b16 %v1650
      %v1742 = vunpack.c.l.b16 %v1651
      %v1743 = vunpack.c.l.b16 %v1652
      %v1744 = vunpack.c.l.b16 %v1653
      %v1745 = vunpack.c.l.b16 %v1654
      %v1746 = vunpack.c.l.b16 %v1655
      %v1747 = vunpack.c.l.b16 %v1656
      %v1748 = vunpack.c.l.b16 %v1657
      %v1749 = vunpack.c.l.b16 %v1658
      %v1750 = vunpack.c.l.b16 %v1659
      %v1751 = vunpack.c.l.b16 %v1660
      %v1752 = vunpack.c.l.b16 %v1661
      %v1753 = vunpack.c.l.b16 %v1662
      %v1754 = vunpack.c.l.b16 %v1663
      %v1755 = vunpack.c.l.b16 %v1664
      %v1756 = vunpack.c.l.b16 %v1665
      %v1757 = vunpack.c.l.b16 %v1666
      %v1758 = vunpack.c.l.b16 %v1667
      %v1759 = vunpack.c.l.b16 %v1668
      %v1760 = vunpack.c.l.b16 %v1669
      %v1761 = vunpack.c.l.b16 %v1670
      %v1762 = vunpack.c.l.b16 %v1671
      %v1763 = vunpack.c.l.b16 %v1672
      %v1764 = vunpack.c.l.b16 %v1673
      %v1765 = vunpack.c.l.b16 %v1674
      %v1766 = vunpack.c.l.b16 %v1675
      %v1767 = vunpack.c.l.b16 %v1676
      %v1768 = vunpack.c.l.b16 %v1677
      %v1769 = vunpack.c.l.b16 %v1678
      %v1770 = vpack.c.b16 %v1734, %v1733
      %v1771 = vpack.c.b16 %v1736, %v1735
      %v1772 = vpack.c.b16 %v1738, %v1737
      %v1773 = vpack.c.b16 %v1740, %v1739
      %v1774 = vpack.c.b16 %v1742, %v1741
      %v1775 = vpack.c.b16 %v1744, %v1743
      %v1776 = vpack.c.b16 %v1746, %v1745
      %v1777 = vpack.c.b16 %v1748, %v1747
      %v1778 = vpack.c.b16 %v1750, %v1749
      %v1779 = vpack.c.b16 %v1752, %v1751
      %v1780 = vpack.c.b16 %v1754, %v1753
      %v1781 = vpack.c.b16 %v1756, %v1755
      %v1782 = vpack.c.b16 %v1758, %v1757
      %v1783 = vpack.c.b16 %v1760, %v1759
      %v1784 = vpack.c.b16 %v1762, %v1761
      %v1785 = vpack.c.b16 %v1764, %v1763
      %v1786 = vpack.c.b16 %v1766, %v1765
      %v1787 = vpack.c.b16 %v1768, %v1767
      %v1788 = vpack.c.b16 %v1769, %v1769
      %v1789 = vrot.slane %v1770, 1
      %v1790 = vrot.slane %v1771, 1
      %v1791 = vsel %vm1331, %v1789, %v1790
      %v1792 = vrot.slane %v1772, 1
      %v1793 = vsel %vm1331, %v1790, %v1792
      %v1794 = vrot.slane %v1773, 1
      %v1795 = vsel %vm1331, %v1792, %v1794
      %v1796 = vrot.slane %v1774, 1
      %v1797 = vsel %vm1331, %v1794, %v1796
      %v1798 = vrot.slane %v1775, 1
      %v1799 = vsel %vm1331, %v1796, %v1798
      %v1800 = vrot.slane %v1776, 1
      %v1801 = vsel %vm1331, %v1798, %v1800
      %v1802 = vrot.slane %v1777, 1
      %v1803 = vsel %vm1331, %v1800, %v1802
      %v1804 = vrot.slane %v1778, 1
      %v1805 = vsel %vm1331, %v1802, %v1804
      %v1806 = vrot.slane %v1779, 1
      %v1807 = vsel %vm1331, %v1804, %v1806
      %v1808 = vrot.slane %v1780, 1
      %v1809 = vsel %vm1331, %v1806, %v1808
      %v1810 = vrot.slane %v1781, 1
      %v1811 = vsel %vm1331, %v1808, %v1810
      %v1812 = vrot.slane %v1782, 1
      %v1813 = vsel %vm1331, %v1810, %v1812
      %v1814 = vrot.slane %v1783, 1
      %v1815 = vsel %vm1331, %v1812, %v1814
      %v1816 = vrot.slane %v1784, 1
      %v1817 = vsel %vm1331, %v1814, %v1816
      %v1818 = vrot.slane %v1785, 1
      %v1819 = vsel %vm1331, %v1816, %v1818
      %v1820 = vrot.slane %v1786, 1
      %v1821 = vsel %vm1331, %v1818, %v1820
      %v1822 = vrot.slane %v1787, 1
      %v1823 = vsel %vm1331, %v1820, %v1822
      %v1824 = vrot.slane %v1788, 1
      %v1825 = vsel %vm1331, %v1822, %v1824
      %v1860 = vunpack.c.l.b16 %v1680
      %v1861 = vunpack.c.l.b16 %v1681
      %v1862 = vunpack.c.l.b16 %v1682
      %v1863 = vunpack.c.l.b16 %v1683
      %v1864 = vunpack.c.l.b16 %v1684
      %v1865 = vunpack.c.l.b16 %v1685
      %v1866 = vunpack.c.l.b16 %v1686
      %v1867 = vunpack.c.l.b16 %v1687
      %v1868 = vunpack.c.l.b16 %v1688
      %v1869 = vunpack.c.l.b16 %v1689
      %v1870 = vunpack.c.l.b16 %v1690
      %v1871 = vunpack.c.l.b16 %v1691
      %v1872 = vunpack.c.l.b16 %v1692
      %v1873 = vunpack.c.l.b16 %v1693
      %v1874 = vunpack.c.l.b16 %v1694
      %v1875 = vunpack.c.l.b16 %v1695
      %v1876 = vpack.c.b16 %v1861, %v1860
      %v1877 = vpack.c.b16 %v1863, %v1862
      %v1878 = vpack.c.b16 %v1865, %v1864
      %v1879 = vpack.c.b16 %v1867, %v1866
      %v1880 = vpack.c.b16 %v1869, %v1868
      %v1881 = vpack.c.b16 %v1871, %v1870
      %v1882 = vpack.c.b16 %v1873, %v1872
      %v1883 = vpack.c.b16 %v1875, %v1874
      %1892 = vmatpush.bf16.msra.mxu0 %v1883
      %1893 = vmatpush.bf16.msra.mxu0 %v1882
      %1894 = vmatpush.bf16.msra.mxu0 %v1881
      %1895 = vmatpush.bf16.msra.mxu0 %v1880
      %1896 = vmatpush.bf16.msra.mxu0 %v1879
      %1897 = vmatpush.bf16.msra.mxu0 %v1878
      %1898 = vmatpush.bf16.msra.mxu0 %v1877
      %1899 = vmatpush.bf16.msra.mxu0 %v1876
      %1900 = vmatmul.bf16.gmra.mxu0 %v1791
      %v1901 = vpop.f32.mrf.mxu0
      %v1902 = vadd.f32 0.0, %v1901
      %v1903 = vpop.f32.mrf.mxu0
      %v1904 = vadd.f32 0.0, %v1903
      %1905 = vmatmul.bf16.gmra.mxu0 %v1793
      %v1906 = vpop.f32.mrf.mxu0
      %v1907 = vadd.f32 0.0, %v1906
      %v1908 = vpop.f32.mrf.mxu0
      %v1909 = vadd.f32 0.0, %v1908
      %1910 = vmatmul.bf16.gmra.mxu0 %v1795
      %v1911 = vpop.f32.mrf.mxu0
      %v1912 = vadd.f32 0.0, %v1911
      %v1913 = vpop.f32.mrf.mxu0
      %v1914 = vadd.f32 0.0, %v1913
      %1915 = vmatmul.bf16.gmra.mxu0 %v1797
      %v1916 = vpop.f32.mrf.mxu0
      %v1917 = vadd.f32 0.0, %v1916
      %v1918 = vpop.f32.mrf.mxu0
      %v1919 = vadd.f32 0.0, %v1918
      %1920 = vmatmul.bf16.gmra.mxu0 %v1799
      %v1921 = vpop.f32.mrf.mxu0
      %v1922 = vadd.f32 0.0, %v1921
      %v1923 = vpop.f32.mrf.mxu0
      %v1924 = vadd.f32 0.0, %v1923
      %1925 = vmatmul.bf16.gmra.mxu0 %v1801
      %v1926 = vpop.f32.mrf.mxu0
      %v1927 = vadd.f32 0.0, %v1926
      %v1928 = vpop.f32.mrf.mxu0
      %v1929 = vadd.f32 0.0, %v1928
      %1930 = vmatmul.bf16.gmra.mxu0 %v1803
      %v1931 = vpop.f32.mrf.mxu0
      %v1932 = vadd.f32 0.0, %v1931
      %v1933 = vpop.f32.mrf.mxu0
      %v1934 = vadd.f32 0.0, %v1933
      %1935 = vmatmul.bf16.gmra.mxu0 %v1805
      %v1936 = vpop.f32.mrf.mxu0
      %v1937 = vadd.f32 0.0, %v1936
      %v1938 = vpop.f32.mrf.mxu0
      %v1939 = vadd.f32 0.0, %v1938
      %1940 = vmatmul.bf16.gmra.mxu0 %v1807
      %v1941 = vpop.f32.mrf.mxu0
      %v1942 = vadd.f32 0.0, %v1941
      %v1943 = vpop.f32.mrf.mxu0
      %v1944 = vadd.f32 0.0, %v1943
      %1945 = vmatmul.bf16.gmra.mxu0 %v1809
      %v1946 = vpop.f32.mrf.mxu0
      %v1947 = vadd.f32 0.0, %v1946
      %v1948 = vpop.f32.mrf.mxu0
      %v1949 = vadd.f32 0.0, %v1948
      %1950 = vmatmul.bf16.gmra.mxu0 %v1811
      %v1951 = vpop.f32.mrf.mxu0
      %v1952 = vadd.f32 0.0, %v1951
      %v1953 = vpop.f32.mrf.mxu0
      %v1954 = vadd.f32 0.0, %v1953
      %1955 = vmatmul.bf16.gmra.mxu0 %v1813
      %v1956 = vpop.f32.mrf.mxu0
      %v1957 = vadd.f32 0.0, %v1956
      %v1958 = vpop.f32.mrf.mxu0
      %v1959 = vadd.f32 0.0, %v1958
      %1960 = vmatmul.bf16.gmra.mxu0 %v1815
      %v1961 = vpop.f32.mrf.mxu0
      %v1962 = vadd.f32 0.0, %v1961
      %v1963 = vpop.f32.mrf.mxu0
      %v1964 = vadd.f32 0.0, %v1963
      %1965 = vmatmul.bf16.gmra.mxu0 %v1817
      %v1966 = vpop.f32.mrf.mxu0
      %v1967 = vadd.f32 0.0, %v1966
      %v1968 = vpop.f32.mrf.mxu0
      %v1969 = vadd.f32 0.0, %v1968
      %1970 = vmatmul.bf16.gmra.mxu0 %v1819
      %v1971 = vpop.f32.mrf.mxu0
      %v1972 = vadd.f32 0.0, %v1971
      %v1973 = vpop.f32.mrf.mxu0
      %v1974 = vadd.f32 0.0, %v1973
      %1975 = vmatmul.bf16.gmra.mxu0 %v1821
      %v1976 = vpop.f32.mrf.mxu0
      %v1977 = vadd.f32 0.0, %v1976
      %v1978 = vpop.f32.mrf.mxu0
      %v1979 = vadd.f32 0.0, %v1978
      %1980 = vmatmul.bf16.gmra.mxu0 %v1823
      %v1981 = vpop.f32.mrf.mxu0
      %v1982 = vadd.f32 0.0, %v1981
      %v1983 = vpop.f32.mrf.mxu0
      %v1984 = vadd.f32 0.0, %v1983
      %1985 = vmatmul.bf16.gmra.mxu0 %v1825
      %v1986 = vpop.f32.mrf.mxu0
      %v1987 = vadd.f32 0.0, %v1986
      %v1988 = vpop.f32.mrf.mxu0
      %v1989 = vadd.f32 0.0, %v1988
      %1990 = vdwg.mxu0
      %v1991 = vld [vmem:[#allocation2] sm:$0xff]
      %v1992 = vld [vmem:[#allocation2 + $0x8] sm:$0xff]
      %v1993 = vld [vmem:[#allocation2 + $0x10] sm:$0xff]
      %v1994 = vld [vmem:[#allocation2 + $0x18] sm:$0xff]
      %v1995 = vld [vmem:[#allocation2 + $0x20] sm:$0xff]
      %v1996 = vld [vmem:[#allocation2 + $0x28] sm:$0xff]
      %v1997 = vld [vmem:[#allocation2 + $0x30] sm:$0xff]
      %v1998 = vld [vmem:[#allocation2 + $0x38] sm:$0xff]
      %v1999 = vld [vmem:[#allocation2 + $0x40] sm:$0xff]
      %v2000 = vld [vmem:[#allocation2 + $0x48] sm:$0xff]
      %v2001 = vld [vmem:[#allocation2 + $0x50] sm:$0xff]
      %v2002 = vld [vmem:[#allocation2 + $0x58] sm:$0xff]
      %v2003 = vld [vmem:[#allocation2 + $0x60] sm:$0xff]
      %v2004 = vld [vmem:[#allocation2 + $0x68] sm:$0xff]
      %v2005 = vld [vmem:[#allocation2 + $0x70] sm:$0xff]
      %v2006 = vld [vmem:[#allocation2 + $0x78] sm:$0xff]
      %v2007 = vld [vmem:[#allocation2 + $0x80] sm:$0xff]
      %v2008 = vld [vmem:[#allocation2 + $0x88] sm:$0xff]
      %v2009 = vld [vmem:[#allocation2 + $0x90] sm:$0xff]
      %v2010 = vld [vmem:[#allocation2 + $0x98] sm:$0xff]
      %v2011 = vld [vmem:[#allocation2 + $0xa0] sm:$0xff]
      %v2012 = vld [vmem:[#allocation2 + $0xa8] sm:$0xff]
      %v2013 = vld [vmem:[#allocation2 + $0xb0] sm:$0xff]
      %v2014 = vld [vmem:[#allocation2 + $0xb8] sm:$0xff]
      %v2015 = vld [vmem:[#allocation2 + $0xc0] sm:$0xff]
      %v2016 = vld [vmem:[#allocation2 + $0xc8] sm:$0xff]
      %v2017 = vld [vmem:[#allocation2 + $0xd0] sm:$0xff]
      %v2018 = vld [vmem:[#allocation2 + $0xd8] sm:$0xff]
      %v2019 = vld [vmem:[#allocation2 + $0xe0] sm:$0xff]
      %v2020 = vld [vmem:[#allocation2 + $0xe8] sm:$0xff]
      %v2021 = vld [vmem:[#allocation2 + $0xf0] sm:$0xff]
      %v2022 = vld [vmem:[#allocation2 + $0xf8] sm:$0xff]
      %v2023 = vld [vmem:[#allocation2 + $0x100] sm:$0xff]
      %v2024 = vld [vmem:[#allocation2 + $0x108] sm:$0xff]
      %v2025 = vld [vmem:[#allocation2 + $0x110] sm:$0xff]
      %v2026 = vld [vmem:[#allocation2 + $0x118] sm:$0xff]
      %v2027 = vadd.f32 %v1991, %v1902
      %v2028 = vadd.f32 %v1992, %v1904
      %v2029 = vadd.f32 %v1993, %v1907
      %v2030 = vadd.f32 %v1994, %v1909
      %v2031 = vadd.f32 %v1995, %v1912
      %v2032 = vadd.f32 %v1996, %v1914
      %v2033 = vadd.f32 %v1997, %v1917
      %v2034 = vadd.f32 %v1998, %v1919
      %v2035 = vadd.f32 %v1999, %v1922
      %v2036 = vadd.f32 %v2000, %v1924
      %v2037 = vadd.f32 %v2001, %v1927
      %v2038 = vadd.f32 %v2002, %v1929
      %v2039 = vadd.f32 %v2003, %v1932
      %v2040 = vadd.f32 %v2004, %v1934
      %v2041 = vadd.f32 %v2005, %v1937
      %v2042 = vadd.f32 %v2006, %v1939
      %v2043 = vadd.f32 %v2007, %v1942
      %v2044 = vadd.f32 %v2008, %v1944
      %v2045 = vadd.f32 %v2009, %v1947
      %v2046 = vadd.f32 %v2010, %v1949
      %v2047 = vadd.f32 %v2011, %v1952
      %v2048 = vadd.f32 %v2012, %v1954
      %v2049 = vadd.f32 %v2013, %v1957
      %v2050 = vadd.f32 %v2014, %v1959
      %v2051 = vadd.f32 %v2015, %v1962
      %v2052 = vadd.f32 %v2016, %v1964
      %v2053 = vadd.f32 %v2017, %v1967
      %v2054 = vadd.f32 %v2018, %v1969
      %v2055 = vadd.f32 %v2019, %v1972
      %v2056 = vadd.f32 %v2020, %v1974
      %v2057 = vadd.f32 %v2021, %v1977
      %v2058 = vadd.f32 %v2022, %v1979
      %v2059 = vadd.f32 %v2023, %v1982
      %v2060 = vadd.f32 %v2024, %v1984
      %v2061 = vadd.f32 %v2025, %v1987
      %v2062 = vadd.f32 %v2026, %v1989
      %2063 = vst [vmem:[#allocation2] sm:$0xff] %v2027
      %2064 = vst [vmem:[#allocation2 + $0x8] sm:$0xff] %v2028
      %2065 = vst [vmem:[#allocation2 + $0x10] sm:$0xff] %v2029
      %2066 = vst [vmem:[#allocation2 + $0x18] sm:$0xff] %v2030
      %2067 = vst [vmem:[#allocation2 + $0x20] sm:$0xff] %v2031
      %2068 = vst [vmem:[#allocation2 + $0x28] sm:$0xff] %v2032
      %2069 = vst [vmem:[#allocation2 + $0x30] sm:$0xff] %v2033
      %2070 = vst [vmem:[#allocation2 + $0x38] sm:$0xff] %v2034
      %2071 = vst [vmem:[#allocation2 + $0x40] sm:$0xff] %v2035
      %2072 = vst [vmem:[#allocation2 + $0x48] sm:$0xff] %v2036
      %2073 = vst [vmem:[#allocation2 + $0x50] sm:$0xff] %v2037
      %2074 = vst [vmem:[#allocation2 + $0x58] sm:$0xff] %v2038
      %2075 = vst [vmem:[#allocation2 + $0x60] sm:$0xff] %v2039
      %2076 = vst [vmem:[#allocation2 + $0x68] sm:$0xff] %v2040
      %2077 = vst [vmem:[#allocation2 + $0x70] sm:$0xff] %v2041
      %2078 = vst [vmem:[#allocation2 + $0x78] sm:$0xff] %v2042
      %2079 = vst [vmem:[#allocation2 + $0x80] sm:$0xff] %v2043
      %2080 = vst [vmem:[#allocation2 + $0x88] sm:$0xff] %v2044
      %2081 = vst [vmem:[#allocation2 + $0x90] sm:$0xff] %v2045
      %2082 = vst [vmem:[#allocation2 + $0x98] sm:$0xff] %v2046
      %2083 = vst [vmem:[#allocation2 + $0xa0] sm:$0xff] %v2047
      %2084 = vst [vmem:[#allocation2 + $0xa8] sm:$0xff] %v2048
      %2085 = vst [vmem:[#allocation2 + $0xb0] sm:$0xff] %v2049
      %2086 = vst [vmem:[#allocation2 + $0xb8] sm:$0xff] %v2050
      %2087 = vst [vmem:[#allocation2 + $0xc0] sm:$0xff] %v2051
      %2088 = vst [vmem:[#allocation2 + $0xc8] sm:$0xff] %v2052
      %2089 = vst [vmem:[#allocation2 + $0xd0] sm:$0xff] %v2053
      %2090 = vst [vmem:[#allocation2 + $0xd8] sm:$0xff] %v2054
      %2091 = vst [vmem:[#allocation2 + $0xe0] sm:$0xff] %v2055
      %2092 = vst [vmem:[#allocation2 + $0xe8] sm:$0xff] %v2056
      %2093 = vst [vmem:[#allocation2 + $0xf0] sm:$0xff] %v2057
      %2094 = vst [vmem:[#allocation2 + $0xf8] sm:$0xff] %v2058
      %2095 = vst [vmem:[#allocation2 + $0x100] sm:$0xff] %v2059
      %2096 = vst [vmem:[#allocation2 + $0x108] sm:$0xff] %v2060
      %2097 = vst [vmem:[#allocation2 + $0x110] sm:$0xff] %v2061
      %2098 = vst [vmem:[#allocation2 + $0x118] sm:$0xff] %v2062
      %v2099 = vld [vmem:[%s261 + $0x8] sm:$0xe]
      %v2100 = vld [vmem:[%s261 + $0xc] sm:$0xf]
      %v2101 = vld [vmem:[%s261 + $0x10] sm:$0xf]
      %v2102 = vld [vmem:[%s261 + $0x14] sm:$0xf]
      %v2103 = vld [vmem:[%s261 + $0x18] sm:$0xf]
      %v2104 = vld [vmem:[%s261 + $0x1c] sm:$0xf]
      %v2105 = vld [vmem:[%s261 + $0x20] sm:$0xf]
      %v2106 = vld [vmem:[%s261 + $0x24] sm:$0xf]
      %v2107 = vld [vmem:[%s261 + $0x28] sm:$0xf]
      %v2108 = vld [vmem:[%s261 + $0x2c] sm:$0xf]
      %v2109 = vld [vmem:[%s261 + $0x30] sm:$0xf]
      %v2110 = vld [vmem:[%s261 + $0x34] sm:$0xf]
      %v2111 = vld [vmem:[%s261 + $0x38] sm:$0xf]
      %v2112 = vld [vmem:[%s261 + $0x3c] sm:$0xf]
      %v2113 = vld [vmem:[%s261 + $0x40] sm:$0xf]
      %v2114 = vld [vmem:[%s261 + $0x44] sm:$0xf]
      %v2115 = vld [vmem:[%s261 + $0x48] sm:$0xf]
      %v2116 = vld [vmem:[%s261 + $0x4c] sm:$0xf]
      %v2117 = vld [vmem:[%s261 + $0x50] sm:$0xf]
      %v2118 = vld [vmem:[%s261 + $0x54] sm:$0xf]
      %v2119 = vld [vmem:[%s261 + $0x58] sm:$0xf]
      %v2120 = vld [vmem:[%s261 + $0x5c] sm:$0xf]
      %v2121 = vld [vmem:[%s261 + $0x60] sm:$0xf]
      %v2122 = vld [vmem:[%s261 + $0x64] sm:$0xf]
      %v2123 = vld [vmem:[%s261 + $0x68] sm:$0xf]
      %v2124 = vld [vmem:[%s261 + $0x6c] sm:$0xf]
      %v2125 = vld [vmem:[%s261 + $0x70] sm:$0xf]
      %v2126 = vld [vmem:[%s261 + $0x74] sm:$0xf]
      %v2127 = vld [vmem:[%s261 + $0x78] sm:$0xf]
      %v2128 = vld [vmem:[%s261 + $0x7c] sm:$0xf]
      %v2129 = vld [vmem:[%s261 + $0x80] sm:$0xf]
      %v2130 = vld [vmem:[%s261 + $0x84] sm:$0xf]
      %v2131 = vld [vmem:[%s261 + $0x88] sm:$0xf]
      %v2132 = vld [vmem:[%s261 + $0x8c] sm:$0xf]
      %v2133 = vld [vmem:[%s261 + $0x90] sm:$0xf]
      %v2134 = vld [vmem:[%s261 + $0x94] sm:$0xf]
      %v2135 = vld [vmem:[%s261 + $0x98] sm:$0x3]
      %s2136 = scalar_lea.vmem %s2, 256
      %v2137 = vld [vmem:[%s2136] sm:$0xf]
      %v2138 = vld [vmem:[%s2136 + $0x4] sm:$0xf]
      %v2139 = vld [vmem:[%s2136 + $0x8] sm:$0xf]
      %v2140 = vld [vmem:[%s2136 + $0xc] sm:$0xf]
      %v2141 = vld [vmem:[%s2136 + $0x10] sm:$0xf]
      %v2142 = vld [vmem:[%s2136 + $0x14] sm:$0xf]
      %v2143 = vld [vmem:[%s2136 + $0x18] sm:$0xf]
      %v2144 = vld [vmem:[%s2136 + $0x1c] sm:$0xf]
      %v2145 = vld [vmem:[%s2136 + $0x20] sm:$0xf]
      %v2146 = vld [vmem:[%s2136 + $0x24] sm:$0xf]
      %v2147 = vld [vmem:[%s2136 + $0x28] sm:$0xf]
      %v2148 = vld [vmem:[%s2136 + $0x2c] sm:$0xf]
      %v2149 = vld [vmem:[%s2136 + $0x30] sm:$0xf]
      %v2150 = vld [vmem:[%s2136 + $0x34] sm:$0xf]
      %v2151 = vld [vmem:[%s2136 + $0x38] sm:$0xf]
      %v2152 = vld [vmem:[%s2136 + $0x3c] sm:$0xf]
      %v2190 = vunpack.c.l.b16 %v2099
      %v2191 = vunpack.c.l.b16 %v2100
      %v2192 = vunpack.c.l.b16 %v2101
      %v2193 = vunpack.c.l.b16 %v2102
      %v2194 = vunpack.c.l.b16 %v2103
      %v2195 = vunpack.c.l.b16 %v2104
      %v2196 = vunpack.c.l.b16 %v2105
      %v2197 = vunpack.c.l.b16 %v2106
      %v2198 = vunpack.c.l.b16 %v2107
      %v2199 = vunpack.c.l.b16 %v2108
      %v2200 = vunpack.c.l.b16 %v2109
      %v2201 = vunpack.c.l.b16 %v2110
      %v2202 = vunpack.c.l.b16 %v2111
      %v2203 = vunpack.c.l.b16 %v2112
      %v2204 = vunpack.c.l.b16 %v2113
      %v2205 = vunpack.c.l.b16 %v2114
      %v2206 = vunpack.c.l.b16 %v2115
      %v2207 = vunpack.c.l.b16 %v2116
      %v2208 = vunpack.c.l.b16 %v2117
      %v2209 = vunpack.c.l.b16 %v2118
      %v2210 = vunpack.c.l.b16 %v2119
      %v2211 = vunpack.c.l.b16 %v2120
      %v2212 = vunpack.c.l.b16 %v2121
      %v2213 = vunpack.c.l.b16 %v2122
      %v2214 = vunpack.c.l.b16 %v2123
      %v2215 = vunpack.c.l.b16 %v2124
      %v2216 = vunpack.c.l.b16 %v2125
      %v2217 = vunpack.c.l.b16 %v2126
      %v2218 = vunpack.c.l.b16 %v2127
      %v2219 = vunpack.c.l.b16 %v2128
      %v2220 = vunpack.c.l.b16 %v2129
      %v2221 = vunpack.c.l.b16 %v2130
      %v2222 = vunpack.c.l.b16 %v2131
      %v2223 = vunpack.c.l.b16 %v2132
      %v2224 = vunpack.c.l.b16 %v2133
      %v2225 = vunpack.c.l.b16 %v2134
      %v2226 = vunpack.c.l.b16 %v2135
      %v2227 = vpack.c.b16 %v2191, %v2190
      %v2228 = vpack.c.b16 %v2193, %v2192
      %v2229 = vpack.c.b16 %v2195, %v2194
      %v2230 = vpack.c.b16 %v2197, %v2196
      %v2231 = vpack.c.b16 %v2199, %v2198
      %v2232 = vpack.c.b16 %v2201, %v2200
      %v2233 = vpack.c.b16 %v2203, %v2202
      %v2234 = vpack.c.b16 %v2205, %v2204
      %v2235 = vpack.c.b16 %v2207, %v2206
      %v2236 = vpack.c.b16 %v2209, %v2208
      %v2237 = vpack.c.b16 %v2211, %v2210
      %v2238 = vpack.c.b16 %v2213, %v2212
      %v2239 = vpack.c.b16 %v2215, %v2214
      %v2240 = vpack.c.b16 %v2217, %v2216
      %v2241 = vpack.c.b16 %v2219, %v2218
      %v2242 = vpack.c.b16 %v2221, %v2220
      %v2243 = vpack.c.b16 %v2223, %v2222
      %v2244 = vpack.c.b16 %v2225, %v2224
      %v2245 = vpack.c.b16 %v2226, %v2226
      %vm2246 = vsmask.f32 6400
      %v2248 = vshrl.u32 %v2227, 16
      %v2250 = vrot.slane %v2248, 1
      %v2251 = vshll.u32 %v2227, 16
      %v2253 = vrot.slane %v2251, 2
      %v2254 = vor.u32 %v2250, %v2253
      %v2256 = vshrl.u32 %v2228, 16
      %v2258 = vrot.slane %v2256, 1
      %v2259 = vshll.u32 %v2228, 16
      %v2261 = vrot.slane %v2259, 2
      %v2262 = vor.u32 %v2258, %v2261
      %v2263 = vsel %vm2246, %v2254, %v2262
      %v2265 = vshrl.u32 %v2229, 16
      %v2267 = vrot.slane %v2265, 1
      %v2268 = vshll.u32 %v2229, 16
      %v2270 = vrot.slane %v2268, 2
      %v2271 = vor.u32 %v2267, %v2270
      %v2272 = vsel %vm2246, %v2262, %v2271
      %v2274 = vshrl.u32 %v2230, 16
      %v2276 = vrot.slane %v2274, 1
      %v2277 = vshll.u32 %v2230, 16
      %v2279 = vrot.slane %v2277, 2
      %v2280 = vor.u32 %v2276, %v2279
      %v2281 = vsel %vm2246, %v2271, %v2280
      %v2283 = vshrl.u32 %v2231, 16
      %v2285 = vrot.slane %v2283, 1
      %v2286 = vshll.u32 %v2231, 16
      %v2288 = vrot.slane %v2286, 2
      %v2289 = vor.u32 %v2285, %v2288
      %v2290 = vsel %vm2246, %v2280, %v2289
      %v2292 = vshrl.u32 %v2232, 16
      %v2294 = vrot.slane %v2292, 1
      %v2295 = vshll.u32 %v2232, 16
      %v2297 = vrot.slane %v2295, 2
      %v2298 = vor.u32 %v2294, %v2297
      %v2299 = vsel %vm2246, %v2289, %v2298
      %v2301 = vshrl.u32 %v2233, 16
      %v2303 = vrot.slane %v2301, 1
      %v2304 = vshll.u32 %v2233, 16
      %v2306 = vrot.slane %v2304, 2
      %v2307 = vor.u32 %v2303, %v2306
      %v2308 = vsel %vm2246, %v2298, %v2307
      %v2310 = vshrl.u32 %v2234, 16
      %v2312 = vrot.slane %v2310, 1
      %v2313 = vshll.u32 %v2234, 16
      %v2315 = vrot.slane %v2313, 2
      %v2316 = vor.u32 %v2312, %v2315
      %v2317 = vsel %vm2246, %v2307, %v2316
      %v2319 = vshrl.u32 %v2235, 16
      %v2321 = vrot.slane %v2319, 1
      %v2322 = vshll.u32 %v2235, 16
      %v2324 = vrot.slane %v2322, 2
      %v2325 = vor.u32 %v2321, %v2324
      %v2326 = vsel %vm2246, %v2316, %v2325
      %v2328 = vshrl.u32 %v2236, 16
      %v2330 = vrot.slane %v2328, 1
      %v2331 = vshll.u32 %v2236, 16
      %v2333 = vrot.slane %v2331, 2
      %v2334 = vor.u32 %v2330, %v2333
      %v2335 = vsel %vm2246, %v2325, %v2334
      %v2337 = vshrl.u32 %v2237, 16
      %v2339 = vrot.slane %v2337, 1
      %v2340 = vshll.u32 %v2237, 16
      %v2342 = vrot.slane %v2340, 2
      %v2343 = vor.u32 %v2339, %v2342
      %v2344 = vsel %vm2246, %v2334, %v2343
      %v2346 = vshrl.u32 %v2238, 16
      %v2348 = vrot.slane %v2346, 1
      %v2349 = vshll.u32 %v2238, 16
      %v2351 = vrot.slane %v2349, 2
      %v2352 = vor.u32 %v2348, %v2351
      %v2353 = vsel %vm2246, %v2343, %v2352
      %v2355 = vshrl.u32 %v2239, 16
      %v2357 = vrot.slane %v2355, 1
      %v2358 = vshll.u32 %v2239, 16
      %v2360 = vrot.slane %v2358, 2
      %v2361 = vor.u32 %v2357, %v2360
      %v2362 = vsel %vm2246, %v2352, %v2361
      %v2364 = vshrl.u32 %v2240, 16
      %v2366 = vrot.slane %v2364, 1
      %v2367 = vshll.u32 %v2240, 16
      %v2369 = vrot.slane %v2367, 2
      %v2370 = vor.u32 %v2366, %v2369
      %v2371 = vsel %vm2246, %v2361, %v2370
      %v2373 = vshrl.u32 %v2241, 16
      %v2375 = vrot.slane %v2373, 1
      %v2376 = vshll.u32 %v2241, 16
      %v2378 = vrot.slane %v2376, 2
      %v2379 = vor.u32 %v2375, %v2378
      %v2380 = vsel %vm2246, %v2370, %v2379
      %v2382 = vshrl.u32 %v2242, 16
      %v2384 = vrot.slane %v2382, 1
      %v2385 = vshll.u32 %v2242, 16
      %v2387 = vrot.slane %v2385, 2
      %v2388 = vor.u32 %v2384, %v2387
      %v2389 = vsel %vm2246, %v2379, %v2388
      %v2391 = vshrl.u32 %v2243, 16
      %v2393 = vrot.slane %v2391, 1
      %v2394 = vshll.u32 %v2243, 16
      %v2396 = vrot.slane %v2394, 2
      %v2397 = vor.u32 %v2393, %v2396
      %v2398 = vsel %vm2246, %v2388, %v2397
      %v2400 = vshrl.u32 %v2244, 16
      %v2402 = vrot.slane %v2400, 1
      %v2403 = vshll.u32 %v2244, 16
      %v2405 = vrot.slane %v2403, 2
      %v2406 = vor.u32 %v2402, %v2405
      %v2407 = vsel %vm2246, %v2397, %v2406
      %v2409 = vshrl.u32 %v2245, 16
      %v2411 = vrot.slane %v2409, 1
      %v2412 = vshll.u32 %v2245, 16
      %v2414 = vrot.slane %v2412, 2
      %v2415 = vor.u32 %v2411, %v2414
      %v2416 = vsel %vm2246, %v2406, %v2415
      %v2451 = vunpack.c.l.b16 %v2137
      %v2452 = vunpack.c.l.b16 %v2138
      %v2453 = vunpack.c.l.b16 %v2139
      %v2454 = vunpack.c.l.b16 %v2140
      %v2455 = vunpack.c.l.b16 %v2141
      %v2456 = vunpack.c.l.b16 %v2142
      %v2457 = vunpack.c.l.b16 %v2143
      %v2458 = vunpack.c.l.b16 %v2144
      %v2459 = vunpack.c.l.b16 %v2145
      %v2460 = vunpack.c.l.b16 %v2146
      %v2461 = vunpack.c.l.b16 %v2147
      %v2462 = vunpack.c.l.b16 %v2148
      %v2463 = vunpack.c.l.b16 %v2149
      %v2464 = vunpack.c.l.b16 %v2150
      %v2465 = vunpack.c.l.b16 %v2151
      %v2466 = vunpack.c.l.b16 %v2152
      %v2467 = vpack.c.b16 %v2452, %v2451
      %v2468 = vpack.c.b16 %v2454, %v2453
      %v2469 = vpack.c.b16 %v2456, %v2455
      %v2470 = vpack.c.b16 %v2458, %v2457
      %v2471 = vpack.c.b16 %v2460, %v2459
      %v2472 = vpack.c.b16 %v2462, %v2461
      %v2473 = vpack.c.b16 %v2464, %v2463
      %v2474 = vpack.c.b16 %v2466, %v2465
      %2483 = vmatpush.bf16.msra.mxu0 %v2474
      %2484 = vmatpush.bf16.msra.mxu0 %v2473
      %2485 = vmatpush.bf16.msra.mxu0 %v2472
      %2486 = vmatpush.bf16.msra.mxu0 %v2471
      %2487 = vmatpush.bf16.msra.mxu0 %v2470
      %2488 = vmatpush.bf16.msra.mxu0 %v2469
      %2489 = vmatpush.bf16.msra.mxu0 %v2468
      %2490 = vmatpush.bf16.msra.mxu0 %v2467
      %2491 = vmatmul.bf16.gmra.mxu0 %v2263
      %v2492 = vpop.f32.mrf.mxu0
      %v2493 = vadd.f32 0.0, %v2492
      %v2494 = vpop.f32.mrf.mxu0
      %v2495 = vadd.f32 0.0, %v2494
      %2496 = vmatmul.bf16.gmra.mxu0 %v2272
      %v2497 = vpop.f32.mrf.mxu0
      %v2498 = vadd.f32 0.0, %v2497
      %v2499 = vpop.f32.mrf.mxu0
      %v2500 = vadd.f32 0.0, %v2499
      %2501 = vmatmul.bf16.gmra.mxu0 %v2281
      %v2502 = vpop.f32.mrf.mxu0
      %v2503 = vadd.f32 0.0, %v2502
      %v2504 = vpop.f32.mrf.mxu0
      %v2505 = vadd.f32 0.0, %v2504
      %2506 = vmatmul.bf16.gmra.mxu0 %v2290
      %v2507 = vpop.f32.mrf.mxu0
      %v2508 = vadd.f32 0.0, %v2507
      %v2509 = vpop.f32.mrf.mxu0
      %v2510 = vadd.f32 0.0, %v2509
      %2511 = vmatmul.bf16.gmra.mxu0 %v2299
      %v2512 = vpop.f32.mrf.mxu0
      %v2513 = vadd.f32 0.0, %v2512
      %v2514 = vpop.f32.mrf.mxu0
      %v2515 = vadd.f32 0.0, %v2514
      %2516 = vmatmul.bf16.gmra.mxu0 %v2308
      %v2517 = vpop.f32.mrf.mxu0
      %v2518 = vadd.f32 0.0, %v2517
      %v2519 = vpop.f32.mrf.mxu0
      %v2520 = vadd.f32 0.0, %v2519
      %2521 = vmatmul.bf16.gmra.mxu0 %v2317
      %v2522 = vpop.f32.mrf.mxu0
      %v2523 = vadd.f32 0.0, %v2522
      %v2524 = vpop.f32.mrf.mxu0
      %v2525 = vadd.f32 0.0, %v2524
      %2526 = vmatmul.bf16.gmra.mxu0 %v2326
      %v2527 = vpop.f32.mrf.mxu0
      %v2528 = vadd.f32 0.0, %v2527
      %v2529 = vpop.f32.mrf.mxu0
      %v2530 = vadd.f32 0.0, %v2529
      %2531 = vmatmul.bf16.gmra.mxu0 %v2335
      %v2532 = vpop.f32.mrf.mxu0
      %v2533 = vadd.f32 0.0, %v2532
      %v2534 = vpop.f32.mrf.mxu0
      %v2535 = vadd.f32 0.0, %v2534
      %2536 = vmatmul.bf16.gmra.mxu0 %v2344
      %v2537 = vpop.f32.mrf.mxu0
      %v2538 = vadd.f32 0.0, %v2537
      %v2539 = vpop.f32.mrf.mxu0
      %v2540 = vadd.f32 0.0, %v2539
      %2541 = vmatmul.bf16.gmra.mxu0 %v2353
      %v2542 = vpop.f32.mrf.mxu0
      %v2543 = vadd.f32 0.0, %v2542
      %v2544 = vpop.f32.mrf.mxu0
      %v2545 = vadd.f32 0.0, %v2544
      %2546 = vmatmul.bf16.gmra.mxu0 %v2362
      %v2547 = vpop.f32.mrf.mxu0
      %v2548 = vadd.f32 0.0, %v2547
      %v2549 = vpop.f32.mrf.mxu0
      %v2550 = vadd.f32 0.0, %v2549
      %2551 = vmatmul.bf16.gmra.mxu0 %v2371
      %v2552 = vpop.f32.mrf.mxu0
      %v2553 = vadd.f32 0.0, %v2552
      %v2554 = vpop.f32.mrf.mxu0
      %v2555 = vadd.f32 0.0, %v2554
      %2556 = vmatmul.bf16.gmra.mxu0 %v2380
      %v2557 = vpop.f32.mrf.mxu0
      %v2558 = vadd.f32 0.0, %v2557
      %v2559 = vpop.f32.mrf.mxu0
      %v2560 = vadd.f32 0.0, %v2559
      %2561 = vmatmul.bf16.gmra.mxu0 %v2389
      %v2562 = vpop.f32.mrf.mxu0
      %v2563 = vadd.f32 0.0, %v2562
      %v2564 = vpop.f32.mrf.mxu0
      %v2565 = vadd.f32 0.0, %v2564
      %2566 = vmatmul.bf16.gmra.mxu0 %v2398
      %v2567 = vpop.f32.mrf.mxu0
      %v2568 = vadd.f32 0.0, %v2567
      %v2569 = vpop.f32.mrf.mxu0
      %v2570 = vadd.f32 0.0, %v2569
      %2571 = vmatmul.bf16.gmra.mxu0 %v2407
      %v2572 = vpop.f32.mrf.mxu0
      %v2573 = vadd.f32 0.0, %v2572
      %v2574 = vpop.f32.mrf.mxu0
      %v2575 = vadd.f32 0.0, %v2574
      %2576 = vmatmul.bf16.gmra.mxu0 %v2416
      %v2577 = vpop.f32.mrf.mxu0
      %v2578 = vadd.f32 0.0, %v2577
      %v2579 = vpop.f32.mrf.mxu0
      %v2580 = vadd.f32 0.0, %v2579
      %2581 = vdwg.mxu0
      %v2582 = vld [vmem:[#allocation2] sm:$0xff]
      %v2583 = vld [vmem:[#allocation2 + $0x8] sm:$0xff]
      %v2584 = vld [vmem:[#allocation2 + $0x10] sm:$0xff]
      %v2585 = vld [vmem:[#allocation2 + $0x18] sm:$0xff]
      %v2586 = vld [vmem:[#allocation2 + $0x20] sm:$0xff]
      %v2587 = vld [vmem:[#allocation2 + $0x28] sm:$0xff]
      %v2588 = vld [vmem:[#allocation2 + $0x30] sm:$0xff]
      %v2589 = vld [vmem:[#allocation2 + $0x38] sm:$0xff]
      %v2590 = vld [vmem:[#allocation2 + $0x40] sm:$0xff]
      %v2591 = vld [vmem:[#allocation2 + $0x48] sm:$0xff]
      %v2592 = vld [vmem:[#allocation2 + $0x50] sm:$0xff]
      %v2593 = vld [vmem:[#allocation2 + $0x58] sm:$0xff]
      %v2594 = vld [vmem:[#allocation2 + $0x60] sm:$0xff]
      %v2595 = vld [vmem:[#allocation2 + $0x68] sm:$0xff]
      %v2596 = vld [vmem:[#allocation2 + $0x70] sm:$0xff]
      %v2597 = vld [vmem:[#allocation2 + $0x78] sm:$0xff]
      %v2598 = vld [vmem:[#allocation2 + $0x80] sm:$0xff]
      %v2599 = vld [vmem:[#allocation2 + $0x88] sm:$0xff]
      %v2600 = vld [vmem:[#allocation2 + $0x90] sm:$0xff]
      %v2601 = vld [vmem:[#allocation2 + $0x98] sm:$0xff]
      %v2602 = vld [vmem:[#allocation2 + $0xa0] sm:$0xff]
      %v2603 = vld [vmem:[#allocation2 + $0xa8] sm:$0xff]
      %v2604 = vld [vmem:[#allocation2 + $0xb0] sm:$0xff]
      %v2605 = vld [vmem:[#allocation2 + $0xb8] sm:$0xff]
      %v2606 = vld [vmem:[#allocation2 + $0xc0] sm:$0xff]
      %v2607 = vld [vmem:[#allocation2 + $0xc8] sm:$0xff]
      %v2608 = vld [vmem:[#allocation2 + $0xd0] sm:$0xff]
      %v2609 = vld [vmem:[#allocation2 + $0xd8] sm:$0xff]
      %v2610 = vld [vmem:[#allocation2 + $0xe0] sm:$0xff]
      %v2611 = vld [vmem:[#allocation2 + $0xe8] sm:$0xff]
      %v2612 = vld [vmem:[#allocation2 + $0xf0] sm:$0xff]
      %v2613 = vld [vmem:[#allocation2 + $0xf8] sm:$0xff]
      %v2614 = vld [vmem:[#allocation2 + $0x100] sm:$0xff]
      %v2615 = vld [vmem:[#allocation2 + $0x108] sm:$0xff]
      %v2616 = vld [vmem:[#allocation2 + $0x110] sm:$0xff]
      %v2617 = vld [vmem:[#allocation2 + $0x118] sm:$0xff]
      %v2618 = vadd.f32 %v2582, %v2493
      %v2619 = vadd.f32 %v2583, %v2495
      %v2620 = vadd.f32 %v2584, %v2498
      %v2621 = vadd.f32 %v2585, %v2500
      %v2622 = vadd.f32 %v2586, %v2503
      %v2623 = vadd.f32 %v2587, %v2505
      %v2624 = vadd.f32 %v2588, %v2508
      %v2625 = vadd.f32 %v2589, %v2510
      %v2626 = vadd.f32 %v2590, %v2513
      %v2627 = vadd.f32 %v2591, %v2515
      %v2628 = vadd.f32 %v2592, %v2518
      %v2629 = vadd.f32 %v2593, %v2520
      %v2630 = vadd.f32 %v2594, %v2523
      %v2631 = vadd.f32 %v2595, %v2525
      %v2632 = vadd.f32 %v2596, %v2528
      %v2633 = vadd.f32 %v2597, %v2530
      %v2634 = vadd.f32 %v2598, %v2533
      %v2635 = vadd.f32 %v2599, %v2535
      %v2636 = vadd.f32 %v2600, %v2538
      %v2637 = vadd.f32 %v2601, %v2540
      %v2638 = vadd.f32 %v2602, %v2543
      %v2639 = vadd.f32 %v2603, %v2545
      %v2640 = vadd.f32 %v2604, %v2548
      %v2641 = vadd.f32 %v2605, %v2550
      %v2642 = vadd.f32 %v2606, %v2553
      %v2643 = vadd.f32 %v2607, %v2555
      %v2644 = vadd.f32 %v2608, %v2558
      %v2645 = vadd.f32 %v2609, %v2560
      %v2646 = vadd.f32 %v2610, %v2563
      %v2647 = vadd.f32 %v2611, %v2565
      %v2648 = vadd.f32 %v2612, %v2568
      %v2649 = vadd.f32 %v2613, %v2570
      %v2650 = vadd.f32 %v2614, %v2573
      %v2651 = vadd.f32 %v2615, %v2575
      %v2652 = vadd.f32 %v2616, %v2578
      %v2653 = vadd.f32 %v2617, %v2580
      %2654 = vst [vmem:[#allocation2] sm:$0xff] %v2618
      %2655 = vst [vmem:[#allocation2 + $0x8] sm:$0xff] %v2619
      %2656 = vst [vmem:[#allocation2 + $0x10] sm:$0xff] %v2620
      %2657 = vst [vmem:[#allocation2 + $0x18] sm:$0xff] %v2621
      %2658 = vst [vmem:[#allocation2 + $0x20] sm:$0xff] %v2622
      %2659 = vst [vmem:[#allocation2 + $0x28] sm:$0xff] %v2623
      %2660 = vst [vmem:[#allocation2 + $0x30] sm:$0xff] %v2624
      %2661 = vst [vmem:[#allocation2 + $0x38] sm:$0xff] %v2625
      %2662 = vst [vmem:[#allocation2 + $0x40] sm:$0xff] %v2626
      %2663 = vst [vmem:[#allocation2 + $0x48] sm:$0xff] %v2627
      %2664 = vst [vmem:[#allocation2 + $0x50] sm:$0xff] %v2628
      %2665 = vst [vmem:[#allocation2 + $0x58] sm:$0xff] %v2629
      %2666 = vst [vmem:[#allocation2 + $0x60] sm:$0xff] %v2630
      %2667 = vst [vmem:[#allocation2 + $0x68] sm:$0xff] %v2631
      %2668 = vst [vmem:[#allocation2 + $0x70] sm:$0xff] %v2632
      %2669 = vst [vmem:[#allocation2 + $0x78] sm:$0xff] %v2633
      %2670 = vst [vmem:[#allocation2 + $0x80] sm:$0xff] %v2634
      %2671 = vst [vmem:[#allocation2 + $0x88] sm:$0xff] %v2635
      %2672 = vst [vmem:[#allocation2 + $0x90] sm:$0xff] %v2636
      %2673 = vst [vmem:[#allocation2 + $0x98] sm:$0xff] %v2637
      %2674 = vst [vmem:[#allocation2 + $0xa0] sm:$0xff] %v2638
      %2675 = vst [vmem:[#allocation2 + $0xa8] sm:$0xff] %v2639
      %2676 = vst [vmem:[#allocation2 + $0xb0] sm:$0xff] %v2640
      %2677 = vst [vmem:[#allocation2 + $0xb8] sm:$0xff] %v2641
      %2678 = vst [vmem:[#allocation2 + $0xc0] sm:$0xff] %v2642
      %2679 = vst [vmem:[#allocation2 + $0xc8] sm:$0xff] %v2643
      %2680 = vst [vmem:[#allocation2 + $0xd0] sm:$0xff] %v2644
      %2681 = vst [vmem:[#allocation2 + $0xd8] sm:$0xff] %v2645
      %2682 = vst [vmem:[#allocation2 + $0xe0] sm:$0xff] %v2646
      %2683 = vst [vmem:[#allocation2 + $0xe8] sm:$0xff] %v2647
      %2684 = vst [vmem:[#allocation2 + $0xf0] sm:$0xff] %v2648
      %2685 = vst [vmem:[#allocation2 + $0xf8] sm:$0xff] %v2649
      %2686 = vst [vmem:[#allocation2 + $0x100] sm:$0xff] %v2650
      %2687 = vst [vmem:[#allocation2 + $0x108] sm:$0xff] %v2651
      %2688 = vst [vmem:[#allocation2 + $0x110] sm:$0xff] %v2652
      %2689 = vst [vmem:[#allocation2 + $0x118] sm:$0xff] %v2653
      %v2690 = vld [vmem:[%s261 + $0x8] sm:$0xc]
      %v2691 = vld [vmem:[%s261 + $0xc] sm:$0xf]
      %v2692 = vld [vmem:[%s261 + $0x10] sm:$0xf]
      %v2693 = vld [vmem:[%s261 + $0x14] sm:$0xf]
      %v2694 = vld [vmem:[%s261 + $0x18] sm:$0xf]
      %v2695 = vld [vmem:[%s261 + $0x1c] sm:$0xf]
      %v2696 = vld [vmem:[%s261 + $0x20] sm:$0xf]
      %v2697 = vld [vmem:[%s261 + $0x24] sm:$0xf]
      %v2698 = vld [vmem:[%s261 + $0x28] sm:$0xf]
      %v2699 = vld [vmem:[%s261 + $0x2c] sm:$0xf]
      %v2700 = vld [vmem:[%s261 + $0x30] sm:$0xf]
      %v2701 = vld [vmem:[%s261 + $0x34] sm:$0xf]
      %v2702 = vld [vmem:[%s261 + $0x38] sm:$0xf]
      %v2703 = vld [vmem:[%s261 + $0x3c] sm:$0xf]
      %v2704 = vld [vmem:[%s261 + $0x40] sm:$0xf]
      %v2705 = vld [vmem:[%s261 + $0x44] sm:$0xf]
      %v2706 = vld [vmem:[%s261 + $0x48] sm:$0xf]
      %v2707 = vld [vmem:[%s261 + $0x4c] sm:$0xf]
      %v2708 = vld [vmem:[%s261 + $0x50] sm:$0xf]
      %v2709 = vld [vmem:[%s261 + $0x54] sm:$0xf]
      %v2710 = vld [vmem:[%s261 + $0x58] sm:$0xf]
      %v2711 = vld [vmem:[%s261 + $0x5c] sm:$0xf]
      %v2712 = vld [vmem:[%s261 + $0x60] sm:$0xf]
      %v2713 = vld [vmem:[%s261 + $0x64] sm:$0xf]
      %v2714 = vld [vmem:[%s261 + $0x68] sm:$0xf]
      %v2715 = vld [vmem:[%s261 + $0x6c] sm:$0xf]
      %v2716 = vld [vmem:[%s261 + $0x70] sm:$0xf]
      %v2717 = vld [vmem:[%s261 + $0x74] sm:$0xf]
      %v2718 = vld [vmem:[%s261 + $0x78] sm:$0xf]
      %v2719 = vld [vmem:[%s261 + $0x7c] sm:$0xf]
      %v2720 = vld [vmem:[%s261 + $0x80] sm:$0xf]
      %v2721 = vld [vmem:[%s261 + $0x84] sm:$0xf]
      %v2722 = vld [vmem:[%s261 + $0x88] sm:$0xf]
      %v2723 = vld [vmem:[%s261 + $0x8c] sm:$0xf]
      %v2724 = vld [vmem:[%s261 + $0x90] sm:$0xf]
      %v2725 = vld [vmem:[%s261 + $0x94] sm:$0xf]
      %v2726 = vld [vmem:[%s261 + $0x98] sm:$0x3]
      %s2727 = scalar_lea.vmem %s2, 320
      %v2728 = vld [vmem:[%s2727] sm:$0xf]
      %v2729 = vld [vmem:[%s2727 + $0x4] sm:$0xf]
      %v2730 = vld [vmem:[%s2727 + $0x8] sm:$0xf]
      %v2731 = vld [vmem:[%s2727 + $0xc] sm:$0xf]
      %v2732 = vld [vmem:[%s2727 + $0x10] sm:$0xf]
      %v2733 = vld [vmem:[%s2727 + $0x14] sm:$0xf]
      %v2734 = vld [vmem:[%s2727 + $0x18] sm:$0xf]
      %v2735 = vld [vmem:[%s2727 + $0x1c] sm:$0xf]
      %v2736 = vld [vmem:[%s2727 + $0x20] sm:$0xf]
      %v2737 = vld [vmem:[%s2727 + $0x24] sm:$0xf]
      %v2738 = vld [vmem:[%s2727 + $0x28] sm:$0xf]
      %v2739 = vld [vmem:[%s2727 + $0x2c] sm:$0xf]
      %v2740 = vld [vmem:[%s2727 + $0x30] sm:$0xf]
      %v2741 = vld [vmem:[%s2727 + $0x34] sm:$0xf]
      %v2742 = vld [vmem:[%s2727 + $0x38] sm:$0xf]
      %v2743 = vld [vmem:[%s2727 + $0x3c] sm:$0xf]
      %v2781 = vunpack.c.l.b16 %v2690
      %v2782 = vunpack.c.l.b16 %v2691
      %v2783 = vunpack.c.l.b16 %v2692
      %v2784 = vunpack.c.l.b16 %v2693
      %v2785 = vunpack.c.l.b16 %v2694
      %v2786 = vunpack.c.l.b16 %v2695
      %v2787 = vunpack.c.l.b16 %v2696
      %v2788 = vunpack.c.l.b16 %v2697
      %v2789 = vunpack.c.l.b16 %v2698
      %v2790 = vunpack.c.l.b16 %v2699
      %v2791 = vunpack.c.l.b16 %v2700
      %v2792 = vunpack.c.l.b16 %v2701
      %v2793 = vunpack.c.l.b16 %v2702
      %v2794 = vunpack.c.l.b16 %v2703
      %v2795 = vunpack.c.l.b16 %v2704
      %v2796 = vunpack.c.l.b16 %v2705
      %v2797 = vunpack.c.l.b16 %v2706
      %v2798 = vunpack.c.l.b16 %v2707
      %v2799 = vunpack.c.l.b16 %v2708
      %v2800 = vunpack.c.l.b16 %v2709
      %v2801 = vunpack.c.l.b16 %v2710
      %v2802 = vunpack.c.l.b16 %v2711
      %v2803 = vunpack.c.l.b16 %v2712
      %v2804 = vunpack.c.l.b16 %v2713
      %v2805 = vunpack.c.l.b16 %v2714
      %v2806 = vunpack.c.l.b16 %v2715
      %v2807 = vunpack.c.l.b16 %v2716
      %v2808 = vunpack.c.l.b16 %v2717
      %v2809 = vunpack.c.l.b16 %v2718
      %v2810 = vunpack.c.l.b16 %v2719
      %v2811 = vunpack.c.l.b16 %v2720
      %v2812 = vunpack.c.l.b16 %v2721
      %v2813 = vunpack.c.l.b16 %v2722
      %v2814 = vunpack.c.l.b16 %v2723
      %v2815 = vunpack.c.l.b16 %v2724
      %v2816 = vunpack.c.l.b16 %v2725
      %v2817 = vunpack.c.l.b16 %v2726
      %v2818 = vpack.c.b16 %v2782, %v2781
      %v2819 = vpack.c.b16 %v2784, %v2783
      %v2820 = vpack.c.b16 %v2786, %v2785
      %v2821 = vpack.c.b16 %v2788, %v2787
      %v2822 = vpack.c.b16 %v2790, %v2789
      %v2823 = vpack.c.b16 %v2792, %v2791
      %v2824 = vpack.c.b16 %v2794, %v2793
      %v2825 = vpack.c.b16 %v2796, %v2795
      %v2826 = vpack.c.b16 %v2798, %v2797
      %v2827 = vpack.c.b16 %v2800, %v2799
      %v2828 = vpack.c.b16 %v2802, %v2801
      %v2829 = vpack.c.b16 %v2804, %v2803
      %v2830 = vpack.c.b16 %v2806, %v2805
      %v2831 = vpack.c.b16 %v2808, %v2807
      %v2832 = vpack.c.b16 %v2810, %v2809
      %v2833 = vpack.c.b16 %v2812, %v2811
      %v2834 = vpack.c.b16 %v2814, %v2813
      %v2835 = vpack.c.b16 %v2816, %v2815
      %v2836 = vpack.c.b16 %v2817, %v2817
      %vm2837 = vcmask 1045504
      %v2838 = vrot.slane %v2818, 2
      %v2839 = vrot.slane %v2819, 2
      %v2840 = vsel %vm2837, %v2838, %v2839
      %v2841 = vrot.slane %v2820, 2
      %v2842 = vsel %vm2837, %v2839, %v2841
      %v2843 = vrot.slane %v2821, 2
      %v2844 = vsel %vm2837, %v2841, %v2843
      %v2845 = vrot.slane %v2822, 2
      %v2846 = vsel %vm2837, %v2843, %v2845
      %v2847 = vrot.slane %v2823, 2
      %v2848 = vsel %vm2837, %v2845, %v2847
      %v2849 = vrot.slane %v2824, 2
      %v2850 = vsel %vm2837, %v2847, %v2849
      %v2851 = vrot.slane %v2825, 2
      %v2852 = vsel %vm2837, %v2849, %v2851
      %v2853 = vrot.slane %v2826, 2
      %v2854 = vsel %vm2837, %v2851, %v2853
      %v2855 = vrot.slane %v2827, 2
      %v2856 = vsel %vm2837, %v2853, %v2855
      %v2857 = vrot.slane %v2828, 2
      %v2858 = vsel %vm2837, %v2855, %v2857
      %v2859 = vrot.slane %v2829, 2
      %v2860 = vsel %vm2837, %v2857, %v2859
      %v2861 = vrot.slane %v2830, 2
      %v2862 = vsel %vm2837, %v2859, %v2861
      %v2863 = vrot.slane %v2831, 2
      %v2864 = vsel %vm2837, %v2861, %v2863
      %v2865 = vrot.slane %v2832, 2
      %v2866 = vsel %vm2837, %v2863, %v2865
      %v2867 = vrot.slane %v2833, 2
      %v2868 = vsel %vm2837, %v2865, %v2867
      %v2869 = vrot.slane %v2834, 2
      %v2870 = vsel %vm2837, %v2867, %v2869
      %v2871 = vrot.slane %v2835, 2
      %v2872 = vsel %vm2837, %v2869, %v2871
      %v2873 = vrot.slane %v2836, 2
      %v2874 = vsel %vm2837, %v2871, %v2873
      %v2909 = vunpack.c.l.b16 %v2728
      %v2910 = vunpack.c.l.b16 %v2729
      %v2911 = vunpack.c.l.b16 %v2730
      %v2912 = vunpack.c.l.b16 %v2731
      %v2913 = vunpack.c.l.b16 %v2732
      %v2914 = vunpack.c.l.b16 %v2733
      %v2915 = vunpack.c.l.b16 %v2734
      %v2916 = vunpack.c.l.b16 %v2735
      %v2917 = vunpack.c.l.b16 %v2736
      %v2918 = vunpack.c.l.b16 %v2737
      %v2919 = vunpack.c.l.b16 %v2738
      %v2920 = vunpack.c.l.b16 %v2739
      %v2921 = vunpack.c.l.b16 %v2740
      %v2922 = vunpack.c.l.b16 %v2741
      %v2923 = vunpack.c.l.b16 %v2742
      %v2924 = vunpack.c.l.b16 %v2743
      %v2925 = vpack.c.b16 %v2910, %v2909
      %v2926 = vpack.c.b16 %v2912, %v2911
      %v2927 = vpack.c.b16 %v2914, %v2913
      %v2928 = vpack.c.b16 %v2916, %v2915
      %v2929 = vpack.c.b16 %v2918, %v2917
      %v2930 = vpack.c.b16 %v2920, %v2919
      %v2931 = vpack.c.b16 %v2922, %v2921
      %v2932 = vpack.c.b16 %v2924, %v2923
      %2941 = vmatpush.bf16.msra.mxu0 %v2932
      %2942 = vmatpush.bf16.msra.mxu0 %v2931
      %2943 = vmatpush.bf16.msra.mxu0 %v2930
      %2944 = vmatpush.bf16.msra.mxu0 %v2929
      %2945 = vmatpush.bf16.msra.mxu0 %v2928
      %2946 = vmatpush.bf16.msra.mxu0 %v2927
      %2947 = vmatpush.bf16.msra.mxu0 %v2926
      %2948 = vmatpush.bf16.msra.mxu0 %v2925
      %2949 = vmatmul.bf16.gmra.mxu0 %v2840
      %v2950 = vpop.f32.mrf.mxu0
      %v2951 = vadd.f32 0.0, %v2950
      %v2952 = vpop.f32.mrf.mxu0
      %v2953 = vadd.f32 0.0, %v2952
      %2954 = vmatmul.bf16.gmra.mxu0 %v2842
      %v2955 = vpop.f32.mrf.mxu0
      %v2956 = vadd.f32 0.0, %v2955
      %v2957 = vpop.f32.mrf.mxu0
      %v2958 = vadd.f32 0.0, %v2957
      %2959 = vmatmul.bf16.gmra.mxu0 %v2844
      %v2960 = vpop.f32.mrf.mxu0
      %v2961 = vadd.f32 0.0, %v2960
      %v2962 = vpop.f32.mrf.mxu0
      %v2963 = vadd.f32 0.0, %v2962
      %2964 = vmatmul.bf16.gmra.mxu0 %v2846
      %v2965 = vpop.f32.mrf.mxu0
      %v2966 = vadd.f32 0.0, %v2965
      %v2967 = vpop.f32.mrf.mxu0
      %v2968 = vadd.f32 0.0, %v2967
      %2969 = vmatmul.bf16.gmra.mxu0 %v2848
      %v2970 = vpop.f32.mrf.mxu0
      %v2971 = vadd.f32 0.0, %v2970
      %v2972 = vpop.f32.mrf.mxu0
      %v2973 = vadd.f32 0.0, %v2972
      %2974 = vmatmul.bf16.gmra.mxu0 %v2850
      %v2975 = vpop.f32.mrf.mxu0
      %v2976 = vadd.f32 0.0, %v2975
      %v2977 = vpop.f32.mrf.mxu0
      %v2978 = vadd.f32 0.0, %v2977
      %2979 = vmatmul.bf16.gmra.mxu0 %v2852
      %v2980 = vpop.f32.mrf.mxu0
      %v2981 = vadd.f32 0.0, %v2980
      %v2982 = vpop.f32.mrf.mxu0
      %v2983 = vadd.f32 0.0, %v2982
      %2984 = vmatmul.bf16.gmra.mxu0 %v2854
      %v2985 = vpop.f32.mrf.mxu0
      %v2986 = vadd.f32 0.0, %v2985
      %v2987 = vpop.f32.mrf.mxu0
      %v2988 = vadd.f32 0.0, %v2987
      %2989 = vmatmul.bf16.gmra.mxu0 %v2856
      %v2990 = vpop.f32.mrf.mxu0
      %v2991 = vadd.f32 0.0, %v2990
      %v2992 = vpop.f32.mrf.mxu0
      %v2993 = vadd.f32 0.0, %v2992
      %2994 = vmatmul.bf16.gmra.mxu0 %v2858
      %v2995 = vpop.f32.mrf.mxu0
      %v2996 = vadd.f32 0.0, %v2995
      %v2997 = vpop.f32.mrf.mxu0
      %v2998 = vadd.f32 0.0, %v2997
      %2999 = vmatmul.bf16.gmra.mxu0 %v2860
      %v3000 = vpop.f32.mrf.mxu0
      %v3001 = vadd.f32 0.0, %v3000
      %v3002 = vpop.f32.mrf.mxu0
      %v3003 = vadd.f32 0.0, %v3002
      %3004 = vmatmul.bf16.gmra.mxu0 %v2862
      %v3005 = vpop.f32.mrf.mxu0
      %v3006 = vadd.f32 0.0, %v3005
      %v3007 = vpop.f32.mrf.mxu0
      %v3008 = vadd.f32 0.0, %v3007
      %3009 = vmatmul.bf16.gmra.mxu0 %v2864
      %v3010 = vpop.f32.mrf.mxu0
      %v3011 = vadd.f32 0.0, %v3010
      %v3012 = vpop.f32.mrf.mxu0
      %v3013 = vadd.f32 0.0, %v3012
      %3014 = vmatmul.bf16.gmra.mxu0 %v2866
      %v3015 = vpop.f32.mrf.mxu0
      %v3016 = vadd.f32 0.0, %v3015
      %v3017 = vpop.f32.mrf.mxu0
      %v3018 = vadd.f32 0.0, %v3017
      %3019 = vmatmul.bf16.gmra.mxu0 %v2868
      %v3020 = vpop.f32.mrf.mxu0
      %v3021 = vadd.f32 0.0, %v3020
      %v3022 = vpop.f32.mrf.mxu0
      %v3023 = vadd.f32 0.0, %v3022
      %3024 = vmatmul.bf16.gmra.mxu0 %v2870
      %v3025 = vpop.f32.mrf.mxu0
      %v3026 = vadd.f32 0.0, %v3025
      %v3027 = vpop.f32.mrf.mxu0
      %v3028 = vadd.f32 0.0, %v3027
      %3029 = vmatmul.bf16.gmra.mxu0 %v2872
      %v3030 = vpop.f32.mrf.mxu0
      %v3031 = vadd.f32 0.0, %v3030
      %v3032 = vpop.f32.mrf.mxu0
      %v3033 = vadd.f32 0.0, %v3032
      %3034 = vmatmul.bf16.gmra.mxu0 %v2874
      %v3035 = vpop.f32.mrf.mxu0
      %v3036 = vadd.f32 0.0, %v3035
      %v3037 = vpop.f32.mrf.mxu0
      %v3038 = vadd.f32 0.0, %v3037
      %3039 = vdwg.mxu0
      %v3040 = vld [vmem:[#allocation2] sm:$0xff]
      %v3041 = vld [vmem:[#allocation2 + $0x8] sm:$0xff]
      %v3042 = vld [vmem:[#allocation2 + $0x10] sm:$0xff]
      %v3043 = vld [vmem:[#allocation2 + $0x18] sm:$0xff]
      %v3044 = vld [vmem:[#allocation2 + $0x20] sm:$0xff]
      %v3045 = vld [vmem:[#allocation2 + $0x28] sm:$0xff]
      %v3046 = vld [vmem:[#allocation2 + $0x30] sm:$0xff]
      %v3047 = vld [vmem:[#allocation2 + $0x38] sm:$0xff]
      %v3048 = vld [vmem:[#allocation2 + $0x40] sm:$0xff]
      %v3049 = vld [vmem:[#allocation2 + $0x48] sm:$0xff]
      %v3050 = vld [vmem:[#allocation2 + $0x50] sm:$0xff]
      %v3051 = vld [vmem:[#allocation2 + $0x58] sm:$0xff]
      %v3052 = vld [vmem:[#allocation2 + $0x60] sm:$0xff]
      %v3053 = vld [vmem:[#allocation2 + $0x68] sm:$0xff]
      %v3054 = vld [vmem:[#allocation2 + $0x70] sm:$0xff]
      %v3055 = vld [vmem:[#allocation2 + $0x78] sm:$0xff]
      %v3056 = vld [vmem:[#allocation2 + $0x80] sm:$0xff]
      %v3057 = vld [vmem:[#allocation2 + $0x88] sm:$0xff]
      %v3058 = vld [vmem:[#allocation2 + $0x90] sm:$0xff]
      %v3059 = vld [vmem:[#allocation2 + $0x98] sm:$0xff]
      %v3060 = vld [vmem:[#allocation2 + $0xa0] sm:$0xff]
      %v3061 = vld [vmem:[#allocation2 + $0xa8] sm:$0xff]
      %v3062 = vld [vmem:[#allocation2 + $0xb0] sm:$0xff]
      %v3063 = vld [vmem:[#allocation2 + $0xb8] sm:$0xff]
      %v3064 = vld [vmem:[#allocation2 + $0xc0] sm:$0xff]
      %v3065 = vld [vmem:[#allocation2 + $0xc8] sm:$0xff]
      %v3066 = vld [vmem:[#allocation2 + $0xd0] sm:$0xff]
      %v3067 = vld [vmem:[#allocation2 + $0xd8] sm:$0xff]
      %v3068 = vld [vmem:[#allocation2 + $0xe0] sm:$0xff]
      %v3069 = vld [vmem:[#allocation2 + $0xe8] sm:$0xff]
      %v3070 = vld [vmem:[#allocation2 + $0xf0] sm:$0xff]
      %v3071 = vld [vmem:[#allocation2 + $0xf8] sm:$0xff]
      %v3072 = vld [vmem:[#allocation2 + $0x100] sm:$0xff]
      %v3073 = vld [vmem:[#allocation2 + $0x108] sm:$0xff]
      %v3074 = vld [vmem:[#allocation2 + $0x110] sm:$0xff]
      %v3075 = vld [vmem:[#allocation2 + $0x118] sm:$0xff]
      %v3076 = vadd.f32 %v3040, %v2951
      %v3077 = vadd.f32 %v3041, %v2953
      %v3078 = vadd.f32 %v3042, %v2956
      %v3079 = vadd.f32 %v3043, %v2958
      %v3080 = vadd.f32 %v3044, %v2961
      %v3081 = vadd.f32 %v3045, %v2963
      %v3082 = vadd.f32 %v3046, %v2966
      %v3083 = vadd.f32 %v3047, %v2968
      %v3084 = vadd.f32 %v3048, %v2971
      %v3085 = vadd.f32 %v3049, %v2973
      %v3086 = vadd.f32 %v3050, %v2976
      %v3087 = vadd.f32 %v3051, %v2978
      %v3088 = vadd.f32 %v3052, %v2981
      %v3089 = vadd.f32 %v3053, %v2983
      %v3090 = vadd.f32 %v3054, %v2986
      %v3091 = vadd.f32 %v3055, %v2988
      %v3092 = vadd.f32 %v3056, %v2991
      %v3093 = vadd.f32 %v3057, %v2993
      %v3094 = vadd.f32 %v3058, %v2996
      %v3095 = vadd.f32 %v3059, %v2998
      %v3096 = vadd.f32 %v3060, %v3001
      %v3097 = vadd.f32 %v3061, %v3003
      %v3098 = vadd.f32 %v3062, %v3006
      %v3099 = vadd.f32 %v3063, %v3008
      %v3100 = vadd.f32 %v3064, %v3011
      %v3101 = vadd.f32 %v3065, %v3013
      %v3102 = vadd.f32 %v3066, %v3016
      %v3103 = vadd.f32 %v3067, %v3018
      %v3104 = vadd.f32 %v3068, %v3021
      %v3105 = vadd.f32 %v3069, %v3023
      %v3106 = vadd.f32 %v3070, %v3026
      %v3107 = vadd.f32 %v3071, %v3028
      %v3108 = vadd.f32 %v3072, %v3031
      %v3109 = vadd.f32 %v3073, %v3033
      %v3110 = vadd.f32 %v3074, %v3036
      %v3111 = vadd.f32 %v3075, %v3038
      %3112 = vst [vmem:[#allocation2] sm:$0xff] %v3076
      %3113 = vst [vmem:[#allocation2 + $0x8] sm:$0xff] %v3077
      %3114 = vst [vmem:[#allocation2 + $0x10] sm:$0xff] %v3078
      %3115 = vst [vmem:[#allocation2 + $0x18] sm:$0xff] %v3079
      %3116 = vst [vmem:[#allocation2 + $0x20] sm:$0xff] %v3080
      %3117 = vst [vmem:[#allocation2 + $0x28] sm:$0xff] %v3081
      %3118 = vst [vmem:[#allocation2 + $0x30] sm:$0xff] %v3082
      %3119 = vst [vmem:[#allocation2 + $0x38] sm:$0xff] %v3083
      %3120 = vst [vmem:[#allocation2 + $0x40] sm:$0xff] %v3084
      %3121 = vst [vmem:[#allocation2 + $0x48] sm:$0xff] %v3085
      %3122 = vst [vmem:[#allocation2 + $0x50] sm:$0xff] %v3086
      %3123 = vst [vmem:[#allocation2 + $0x58] sm:$0xff] %v3087
      %3124 = vst [vmem:[#allocation2 + $0x60] sm:$0xff] %v3088
      %3125 = vst [vmem:[#allocation2 + $0x68] sm:$0xff] %v3089
      %3126 = vst [vmem:[#allocation2 + $0x70] sm:$0xff] %v3090
      %3127 = vst [vmem:[#allocation2 + $0x78] sm:$0xff] %v3091
      %3128 = vst [vmem:[#allocation2 + $0x80] sm:$0xff] %v3092
      %3129 = vst [vmem:[#allocation2 + $0x88] sm:$0xff] %v3093
      %3130 = vst [vmem:[#allocation2 + $0x90] sm:$0xff] %v3094
      %3131 = vst [vmem:[#allocation2 + $0x98] sm:$0xff] %v3095
      %3132 = vst [vmem:[#allocation2 + $0xa0] sm:$0xff] %v3096
      %3133 = vst [vmem:[#allocation2 + $0xa8] sm:$0xff] %v3097
      %3134 = vst [vmem:[#allocation2 + $0xb0] sm:$0xff] %v3098
      %3135 = vst [vmem:[#allocation2 + $0xb8] sm:$0xff] %v3099
      %3136 = vst [vmem:[#allocation2 + $0xc0] sm:$0xff] %v3100
      %3137 = vst [vmem:[#allocation2 + $0xc8] sm:$0xff] %v3101
      %3138 = vst [vmem:[#allocation2 + $0xd0] sm:$0xff] %v3102
      %3139 = vst [vmem:[#allocation2 + $0xd8] sm:$0xff] %v3103
      %3140 = vst [vmem:[#allocation2 + $0xe0] sm:$0xff] %v3104
      %3141 = vst [vmem:[#allocation2 + $0xe8] sm:$0xff] %v3105
      %3142 = vst [vmem:[#allocation2 + $0xf0] sm:$0xff] %v3106
      %3143 = vst [vmem:[#allocation2 + $0xf8] sm:$0xff] %v3107
      %3144 = vst [vmem:[#allocation2 + $0x100] sm:$0xff] %v3108
      %3145 = vst [vmem:[#allocation2 + $0x108] sm:$0xff] %v3109
      %3146 = vst [vmem:[#allocation2 + $0x110] sm:$0xff] %v3110
      %3147 = vst [vmem:[#allocation2 + $0x118] sm:$0xff] %v3111
      %v3148 = vld [vmem:[%s261 + $0x10] sm:$0xc]
      %v3149 = vld [vmem:[%s261 + $0x14] sm:$0xf]
      %v3150 = vld [vmem:[%s261 + $0x18] sm:$0xf]
      %v3151 = vld [vmem:[%s261 + $0x1c] sm:$0xf]
      %v3152 = vld [vmem:[%s261 + $0x20] sm:$0xf]
      %v3153 = vld [vmem:[%s261 + $0x24] sm:$0xf]
      %v3154 = vld [vmem:[%s261 + $0x28] sm:$0xf]
      %v3155 = vld [vmem:[%s261 + $0x2c] sm:$0xf]
      %v3156 = vld [vmem:[%s261 + $0x30] sm:$0xf]
      %v3157 = vld [vmem:[%s261 + $0x34] sm:$0xf]
      %v3158 = vld [vmem:[%s261 + $0x38] sm:$0xf]
      %v3159 = vld [vmem:[%s261 + $0x3c] sm:$0xf]
      %v3160 = vld [vmem:[%s261 + $0x40] sm:$0xf]
      %v3161 = vld [vmem:[%s261 + $0x44] sm:$0xf]
      %v3162 = vld [vmem:[%s261 + $0x48] sm:$0xf]
      %v3163 = vld [vmem:[%s261 + $0x4c] sm:$0xf]
      %v3164 = vld [vmem:[%s261 + $0x50] sm:$0xf]
      %v3165 = vld [vmem:[%s261 + $0x54] sm:$0xf]
      %v3166 = vld [vmem:[%s261 + $0x58] sm:$0xf]
      %v3167 = vld [vmem:[%s261 + $0x5c] sm:$0xf]
      %v3168 = vld [vmem:[%s261 + $0x60] sm:$0xf]
      %v3169 = vld [vmem:[%s261 + $0x64] sm:$0xf]
      %v3170 = vld [vmem:[%s261 + $0x68] sm:$0xf]
      %v3171 = vld [vmem:[%s261 + $0x6c] sm:$0xf]
      %v3172 = vld [vmem:[%s261 + $0x70] sm:$0xf]
      %v3173 = vld [vmem:[%s261 + $0x74] sm:$0xf]
      %v3174 = vld [vmem:[%s261 + $0x78] sm:$0xf]
      %v3175 = vld [vmem:[%s261 + $0x7c] sm:$0xf]
      %v3176 = vld [vmem:[%s261 + $0x80] sm:$0xf]
      %v3177 = vld [vmem:[%s261 + $0x84] sm:$0xf]
      %v3178 = vld [vmem:[%s261 + $0x88] sm:$0xf]
      %v3179 = vld [vmem:[%s261 + $0x8c] sm:$0xf]
      %v3180 = vld [vmem:[%s261 + $0x90] sm:$0xf]
      %v3181 = vld [vmem:[%s261 + $0x94] sm:$0xf]
      %v3182 = vld [vmem:[%s261 + $0x98] sm:$0xf]
      %v3183 = vld [vmem:[%s261 + $0x9c] sm:$0xf]
      %v3184 = vld [vmem:[%s261 + $0xa0] sm:$0x3]
      %s3185 = scalar_lea.vmem %s2, 384
      %v3186 = vld [vmem:[%s3185] sm:$0xf]
      %v3187 = vld [vmem:[%s3185 + $0x4] sm:$0xf]
      %v3188 = vld [vmem:[%s3185 + $0x8] sm:$0xf]
      %v3189 = vld [vmem:[%s3185 + $0xc] sm:$0xf]
      %v3190 = vld [vmem:[%s3185 + $0x10] sm:$0xf]
      %v3191 = vld [vmem:[%s3185 + $0x14] sm:$0xf]
      %v3192 = vld [vmem:[%s3185 + $0x18] sm:$0xf]
      %v3193 = vld [vmem:[%s3185 + $0x1c] sm:$0xf]
      %v3194 = vld [vmem:[%s3185 + $0x20] sm:$0xf]
      %v3195 = vld [vmem:[%s3185 + $0x24] sm:$0xf]
      %v3196 = vld [vmem:[%s3185 + $0x28] sm:$0xf]
      %v3197 = vld [vmem:[%s3185 + $0x2c] sm:$0xf]
      %v3198 = vld [vmem:[%s3185 + $0x30] sm:$0xf]
      %v3199 = vld [vmem:[%s3185 + $0x34] sm:$0xf]
      %v3200 = vld [vmem:[%s3185 + $0x38] sm:$0xf]
      %v3201 = vld [vmem:[%s3185 + $0x3c] sm:$0xf]
      %v3239 = vunpack.c.l.b16 %v3148
      %v3240 = vunpack.c.l.b16 %v3149
      %v3241 = vunpack.c.l.b16 %v3150
      %v3242 = vunpack.c.l.b16 %v3151
      %v3243 = vunpack.c.l.b16 %v3152
      %v3244 = vunpack.c.l.b16 %v3153
      %v3245 = vunpack.c.l.b16 %v3154
      %v3246 = vunpack.c.l.b16 %v3155
      %v3247 = vunpack.c.l.b16 %v3156
      %v3248 = vunpack.c.l.b16 %v3157
      %v3249 = vunpack.c.l.b16 %v3158
      %v3250 = vunpack.c.l.b16 %v3159
      %v3251 = vunpack.c.l.b16 %v3160
      %v3252 = vunpack.c.l.b16 %v3161
      %v3253 = vunpack.c.l.b16 %v3162
      %v3254 = vunpack.c.l.b16 %v3163
      %v3255 = vunpack.c.l.b16 %v3164
      %v3256 = vunpack.c.l.b16 %v3165
      %v3257 = vunpack.c.l.b16 %v3166
      %v3258 = vunpack.c.l.b16 %v3167
      %v3259 = vunpack.c.l.b16 %v3168
      %v3260 = vunpack.c.l.b16 %v3169
      %v3261 = vunpack.c.l.b16 %v3170
      %v3262 = vunpack.c.l.b16 %v3171
      %v3263 = vunpack.c.l.b16 %v3172
      %v3264 = vunpack.c.l.b16 %v3173
      %v3265 = vunpack.c.l.b16 %v3174
      %v3266 = vunpack.c.l.b16 %v3175
      %v3267 = vunpack.c.l.b16 %v3176
      %v3268 = vunpack.c.l.b16 %v3177
      %v3269 = vunpack.c.l.b16 %v3178
      %v3270 = vunpack.c.l.b16 %v3179
      %v3271 = vunpack.c.l.b16 %v3180
      %v3272 = vunpack.c.l.b16 %v3181
      %v3273 = vunpack.c.l.b16 %v3182
      %v3274 = vunpack.c.l.b16 %v3183
      %v3275 = vunpack.c.l.b16 %v3184
      %v3276 = vpack.c.b16 %v3240, %v3239
      %v3277 = vpack.c.b16 %v3242, %v3241
      %v3278 = vpack.c.b16 %v3244, %v3243
      %v3279 = vpack.c.b16 %v3246, %v3245
      %v3280 = vpack.c.b16 %v3248, %v3247
      %v3281 = vpack.c.b16 %v3250, %v3249
      %v3282 = vpack.c.b16 %v3252, %v3251
      %v3283 = vpack.c.b16 %v3254, %v3253
      %v3284 = vpack.c.b16 %v3256, %v3255
      %v3285 = vpack.c.b16 %v3258, %v3257
      %v3286 = vpack.c.b16 %v3260, %v3259
      %v3287 = vpack.c.b16 %v3262, %v3261
      %v3288 = vpack.c.b16 %v3264, %v3263
      %v3289 = vpack.c.b16 %v3266, %v3265
      %v3290 = vpack.c.b16 %v3268, %v3267
      %v3291 = vpack.c.b16 %v3270, %v3269
      %v3292 = vpack.c.b16 %v3272, %v3271
      %v3293 = vpack.c.b16 %v3274, %v3273
      %v3294 = vpack.c.b16 %v3275, %v3275
      %v3295 = vrot.slane %v3276, 2
      %v3296 = vrot.slane %v3277, 2
      %v3297 = vsel %vm2837, %v3295, %v3296
      %v3298 = vrot.slane %v3278, 2
      %v3299 = vsel %vm2837, %v3296, %v3298
      %v3300 = vrot.slane %v3279, 2
      %v3301 = vsel %vm2837, %v3298, %v3300
      %v3302 = vrot.slane %v3280, 2
      %v3303 = vsel %vm2837, %v3300, %v3302
      %v3304 = vrot.slane %v3281, 2
      %v3305 = vsel %vm2837, %v3302, %v3304
      %v3306 = vrot.slane %v3282, 2
      %v3307 = vsel %vm2837, %v3304, %v3306
      %v3308 = vrot.slane %v3283, 2
      %v3309 = vsel %vm2837, %v3306, %v3308
      %v3310 = vrot.slane %v3284, 2
      %v3311 = vsel %vm2837, %v3308, %v3310
      %v3312 = vrot.slane %v3285, 2
      %v3313 = vsel %vm2837, %v3310, %v3312
      %v3314 = vrot.slane %v3286, 2
      %v3315 = vsel %vm2837, %v3312, %v3314
      %v3316 = vrot.slane %v3287, 2
      %v3317 = vsel %vm2837, %v3314, %v3316
      %v3318 = vrot.slane %v3288, 2
      %v3319 = vsel %vm2837, %v3316, %v3318
      %v3320 = vrot.slane %v3289, 2
      %v3321 = vsel %vm2837, %v3318, %v3320
      %v3322 = vrot.slane %v3290, 2
      %v3323 = vsel %vm2837, %v3320, %v3322
      %v3324 = vrot.slane %v3291, 2
      %v3325 = vsel %vm2837, %v3322, %v3324
      %v3326 = vrot.slane %v3292, 2
      %v3327 = vsel %vm2837, %v3324, %v3326
      %v3328 = vrot.slane %v3293, 2
      %v3329 = vsel %vm2837, %v3326, %v3328
      %v3330 = vrot.slane %v3294, 2
      %v3331 = vsel %vm2837, %v3328, %v3330
      %v3366 = vunpack.c.l.b16 %v3186
      %v3367 = vunpack.c.l.b16 %v3187
      %v3368 = vunpack.c.l.b16 %v3188
      %v3369 = vunpack.c.l.b16 %v3189
      %v3370 = vunpack.c.l.b16 %v3190
      %v3371 = vunpack.c.l.b16 %v3191
      %v3372 = vunpack.c.l.b16 %v3192
      %v3373 = vunpack.c.l.b16 %v3193
      %v3374 = vunpack.c.l.b16 %v3194
      %v3375 = vunpack.c.l.b16 %v3195
      %v3376 = vunpack.c.l.b16 %v3196
      %v3377 = vunpack.c.l.b16 %v3197
      %v3378 = vunpack.c.l.b16 %v3198
      %v3379 = vunpack.c.l.b16 %v3199
      %v3380 = vunpack.c.l.b16 %v3200
      %v3381 = vunpack.c.l.b16 %v3201
      %v3382 = vpack.c.b16 %v3367, %v3366
      %v3383 = vpack.c.b16 %v3369, %v3368
      %v3384 = vpack.c.b16 %v3371, %v3370
      %v3385 = vpack.c.b16 %v3373, %v3372
      %v3386 = vpack.c.b16 %v3375, %v3374
      %v3387 = vpack.c.b16 %v3377, %v3376
      %v3388 = vpack.c.b16 %v3379, %v3378
      %v3389 = vpack.c.b16 %v3381, %v3380
      %3398 = vmatpush.bf16.msra.mxu0 %v3389
      %3399 = vmatpush.bf16.msra.mxu0 %v3388
      %3400 = vmatpush.bf16.msra.mxu0 %v3387
      %3401 = vmatpush.bf16.msra.mxu0 %v3386
      %3402 = vmatpush.bf16.msra.mxu0 %v3385
      %3403 = vmatpush.bf16.msra.mxu0 %v3384
      %3404 = vmatpush.bf16.msra.mxu0 %v3383
      %3405 = vmatpush.bf16.msra.mxu0 %v3382
      %3406 = vmatmul.bf16.gmra.mxu0 %v3297
      %v3407 = vpop.f32.mrf.mxu0
      %v3408 = vadd.f32 0.0, %v3407
      %v3409 = vpop.f32.mrf.mxu0
      %v3410 = vadd.f32 0.0, %v3409
      %3411 = vmatmul.bf16.gmra.mxu0 %v3299
      %v3412 = vpop.f32.mrf.mxu0
      %v3413 = vadd.f32 0.0, %v3412
      %v3414 = vpop.f32.mrf.mxu0
      %v3415 = vadd.f32 0.0, %v3414
      %3416 = vmatmul.bf16.gmra.mxu0 %v3301
      %v3417 = vpop.f32.mrf.mxu0
      %v3418 = vadd.f32 0.0, %v3417
      %v3419 = vpop.f32.mrf.mxu0
      %v3420 = vadd.f32 0.0, %v3419
      %3421 = vmatmul.bf16.gmra.mxu0 %v3303
      %v3422 = vpop.f32.mrf.mxu0
      %v3423 = vadd.f32 0.0, %v3422
      %v3424 = vpop.f32.mrf.mxu0
      %v3425 = vadd.f32 0.0, %v3424
      %3426 = vmatmul.bf16.gmra.mxu0 %v3305
      %v3427 = vpop.f32.mrf.mxu0
      %v3428 = vadd.f32 0.0, %v3427
      %v3429 = vpop.f32.mrf.mxu0
      %v3430 = vadd.f32 0.0, %v3429
      %3431 = vmatmul.bf16.gmra.mxu0 %v3307
      %v3432 = vpop.f32.mrf.mxu0
      %v3433 = vadd.f32 0.0, %v3432
      %v3434 = vpop.f32.mrf.mxu0
      %v3435 = vadd.f32 0.0, %v3434
      %3436 = vmatmul.bf16.gmra.mxu0 %v3309
      %v3437 = vpop.f32.mrf.mxu0
      %v3438 = vadd.f32 0.0, %v3437
      %v3439 = vpop.f32.mrf.mxu0
      %v3440 = vadd.f32 0.0, %v3439
      %3441 = vmatmul.bf16.gmra.mxu0 %v3311
      %v3442 = vpop.f32.mrf.mxu0
      %v3443 = vadd.f32 0.0, %v3442
      %v3444 = vpop.f32.mrf.mxu0
      %v3445 = vadd.f32 0.0, %v3444
      %3446 = vmatmul.bf16.gmra.mxu0 %v3313
      %v3447 = vpop.f32.mrf.mxu0
      %v3448 = vadd.f32 0.0, %v3447
      %v3449 = vpop.f32.mrf.mxu0
      %v3450 = vadd.f32 0.0, %v3449
      %3451 = vmatmul.bf16.gmra.mxu0 %v3315
      %v3452 = vpop.f32.mrf.mxu0
      %v3453 = vadd.f32 0.0, %v3452
      %v3454 = vpop.f32.mrf.mxu0
      %v3455 = vadd.f32 0.0, %v3454
      %3456 = vmatmul.bf16.gmra.mxu0 %v3317
      %v3457 = vpop.f32.mrf.mxu0
      %v3458 = vadd.f32 0.0, %v3457
      %v3459 = vpop.f32.mrf.mxu0
      %v3460 = vadd.f32 0.0, %v3459
      %3461 = vmatmul.bf16.gmra.mxu0 %v3319
      %v3462 = vpop.f32.mrf.mxu0
      %v3463 = vadd.f32 0.0, %v3462
      %v3464 = vpop.f32.mrf.mxu0
      %v3465 = vadd.f32 0.0, %v3464
      %3466 = vmatmul.bf16.gmra.mxu0 %v3321
      %v3467 = vpop.f32.mrf.mxu0
      %v3468 = vadd.f32 0.0, %v3467
      %v3469 = vpop.f32.mrf.mxu0
      %v3470 = vadd.f32 0.0, %v3469
      %3471 = vmatmul.bf16.gmra.mxu0 %v3323
      %v3472 = vpop.f32.mrf.mxu0
      %v3473 = vadd.f32 0.0, %v3472
      %v3474 = vpop.f32.mrf.mxu0
      %v3475 = vadd.f32 0.0, %v3474
      %3476 = vmatmul.bf16.gmra.mxu0 %v3325
      %v3477 = vpop.f32.mrf.mxu0
      %v3478 = vadd.f32 0.0, %v3477
      %v3479 = vpop.f32.mrf.mxu0
      %v3480 = vadd.f32 0.0, %v3479
      %3481 = vmatmul.bf16.gmra.mxu0 %v3327
      %v3482 = vpop.f32.mrf.mxu0
      %v3483 = vadd.f32 0.0, %v3482
      %v3484 = vpop.f32.mrf.mxu0
      %v3485 = vadd.f32 0.0, %v3484
      %3486 = vmatmul.bf16.gmra.mxu0 %v3329
      %v3487 = vpop.f32.mrf.mxu0
      %v3488 = vadd.f32 0.0, %v3487
      %v3489 = vpop.f32.mrf.mxu0
      %v3490 = vadd.f32 0.0, %v3489
      %3491 = vmatmul.bf16.gmra.mxu0 %v3331
      %v3492 = vpop.f32.mrf.mxu0
      %v3493 = vadd.f32 0.0, %v3492
      %v3494 = vpop.f32.mrf.mxu0
      %v3495 = vadd.f32 0.0, %v3494
      %3496 = vdwg.mxu0
      %v3497 = vld [vmem:[#allocation2] sm:$0xff]
      %v3498 = vld [vmem:[#allocation2 + $0x8] sm:$0xff]
      %v3499 = vld [vmem:[#allocation2 + $0x10] sm:$0xff]
      %v3500 = vld [vmem:[#allocation2 + $0x18] sm:$0xff]
      %v3501 = vld [vmem:[#allocation2 + $0x20] sm:$0xff]
      %v3502 = vld [vmem:[#allocation2 + $0x28] sm:$0xff]
      %v3503 = vld [vmem:[#allocation2 + $0x30] sm:$0xff]
      %v3504 = vld [vmem:[#allocation2 + $0x38] sm:$0xff]
      %v3505 = vld [vmem:[#allocation2 + $0x40] sm:$0xff]
      %v3506 = vld [vmem:[#allocation2 + $0x48] sm:$0xff]
      %v3507 = vld [vmem:[#allocation2 + $0x50] sm:$0xff]
      %v3508 = vld [vmem:[#allocation2 + $0x58] sm:$0xff]
      %v3509 = vld [vmem:[#allocation2 + $0x60] sm:$0xff]
      %v3510 = vld [vmem:[#allocation2 + $0x68] sm:$0xff]
      %v3511 = vld [vmem:[#allocation2 + $0x70] sm:$0xff]
      %v3512 = vld [vmem:[#allocation2 + $0x78] sm:$0xff]
      %v3513 = vld [vmem:[#allocation2 + $0x80] sm:$0xff]
      %v3514 = vld [vmem:[#allocation2 + $0x88] sm:$0xff]
      %v3515 = vld [vmem:[#allocation2 + $0x90] sm:$0xff]
      %v3516 = vld [vmem:[#allocation2 + $0x98] sm:$0xff]
      %v3517 = vld [vmem:[#allocation2 + $0xa0] sm:$0xff]
      %v3518 = vld [vmem:[#allocation2 + $0xa8] sm:$0xff]
      %v3519 = vld [vmem:[#allocation2 + $0xb0] sm:$0xff]
      %v3520 = vld [vmem:[#allocation2 + $0xb8] sm:$0xff]
      %v3521 = vld [vmem:[#allocation2 + $0xc0] sm:$0xff]
      %v3522 = vld [vmem:[#allocation2 + $0xc8] sm:$0xff]
      %v3523 = vld [vmem:[#allocation2 + $0xd0] sm:$0xff]
      %v3524 = vld [vmem:[#allocation2 + $0xd8] sm:$0xff]
      %v3525 = vld [vmem:[#allocation2 + $0xe0] sm:$0xff]
      %v3526 = vld [vmem:[#allocation2 + $0xe8] sm:$0xff]
      %v3527 = vld [vmem:[#allocation2 + $0xf0] sm:$0xff]
      %v3528 = vld [vmem:[#allocation2 + $0xf8] sm:$0xff]
      %v3529 = vld [vmem:[#allocation2 + $0x100] sm:$0xff]
      %v3530 = vld [vmem:[#allocation2 + $0x108] sm:$0xff]
      %v3531 = vld [vmem:[#allocation2 + $0x110] sm:$0xff]
      %v3532 = vld [vmem:[#allocation2 + $0x118] sm:$0xff]
      %v3533 = vadd.f32 %v3497, %v3408
      %v3534 = vadd.f32 %v3498, %v3410
      %v3535 = vadd.f32 %v3499, %v3413
      %v3536 = vadd.f32 %v3500, %v3415
      %v3537 = vadd.f32 %v3501, %v3418
      %v3538 = vadd.f32 %v3502, %v3420
      %v3539 = vadd.f32 %v3503, %v3423
      %v3540 = vadd.f32 %v3504, %v3425
      %v3541 = vadd.f32 %v3505, %v3428
      %v3542 = vadd.f32 %v3506, %v3430
      %v3543 = vadd.f32 %v3507, %v3433
      %v3544 = vadd.f32 %v3508, %v3435
      %v3545 = vadd.f32 %v3509, %v3438
      %v3546 = vadd.f32 %v3510, %v3440
      %v3547 = vadd.f32 %v3511, %v3443
      %v3548 = vadd.f32 %v3512, %v3445
      %v3549 = vadd.f32 %v3513, %v3448
      %v3550 = vadd.f32 %v3514, %v3450
      %v3551 = vadd.f32 %v3515, %v3453
      %v3552 = vadd.f32 %v3516, %v3455
      %v3553 = vadd.f32 %v3517, %v3458
      %v3554 = vadd.f32 %v3518, %v3460
      %v3555 = vadd.f32 %v3519, %v3463
      %v3556 = vadd.f32 %v3520, %v3465
      %v3557 = vadd.f32 %v3521, %v3468
      %v3558 = vadd.f32 %v3522, %v3470
      %v3559 = vadd.f32 %v3523, %v3473
      %v3560 = vadd.f32 %v3524, %v3475
      %v3561 = vadd.f32 %v3525, %v3478
      %v3562 = vadd.f32 %v3526, %v3480
      %v3563 = vadd.f32 %v3527, %v3483
      %v3564 = vadd.f32 %v3528, %v3485
      %v3565 = vadd.f32 %v3529, %v3488
      %v3566 = vadd.f32 %v3530, %v3490
      %v3567 = vadd.f32 %v3531, %v3493
      %v3568 = vadd.f32 %v3532, %v3495
      %3569 = vst [vmem:[#allocation2] sm:$0xff] %v3533
      %3570 = vst [vmem:[#allocation2 + $0x8] sm:$0xff] %v3534
      %3571 = vst [vmem:[#allocation2 + $0x10] sm:$0xff] %v3535
      %3572 = vst [vmem:[#allocation2 + $0x18] sm:$0xff] %v3536
      %3573 = vst [vmem:[#allocation2 + $0x20] sm:$0xff] %v3537
      %3574 = vst [vmem:[#allocation2 + $0x28] sm:$0xff] %v3538
      %3575 = vst [vmem:[#allocation2 + $0x30] sm:$0xff] %v3539
      %3576 = vst [vmem:[#allocation2 + $0x38] sm:$0xff] %v3540
      %3577 = vst [vmem:[#allocation2 + $0x40] sm:$0xff] %v3541
      %3578 = vst [vmem:[#allocation2 + $0x48] sm:$0xff] %v3542
      %3579 = vst [vmem:[#allocation2 + $0x50] sm:$0xff] %v3543
      %3580 = vst [vmem:[#allocation2 + $0x58] sm:$0xff] %v3544
      %3581 = vst [vmem:[#allocation2 + $0x60] sm:$0xff] %v3545
      %3582 = vst [vmem:[#allocation2 + $0x68] sm:$0xff] %v3546
      %3583 = vst [vmem:[#allocation2 + $0x70] sm:$0xff] %v3547
      %3584 = vst [vmem:[#allocation2 + $0x78] sm:$0xff] %v3548
      %3585 = vst [vmem:[#allocation2 + $0x80] sm:$0xff] %v3549
      %3586 = vst [vmem:[#allocation2 + $0x88] sm:$0xff] %v3550
      %3587 = vst [vmem:[#allocation2 + $0x90] sm:$0xff] %v3551
      %3588 = vst [vmem:[#allocation2 + $0x98] sm:$0xff] %v3552
      %3589 = vst [vmem:[#allocation2 + $0xa0] sm:$0xff] %v3553
      %3590 = vst [vmem:[#allocation2 + $0xa8] sm:$0xff] %v3554
      %3591 = vst [vmem:[#allocation2 + $0xb0] sm:$0xff] %v3555
      %3592 = vst [vmem:[#allocation2 + $0xb8] sm:$0xff] %v3556
      %3593 = vst [vmem:[#allocation2 + $0xc0] sm:$0xff] %v3557
      %3594 = vst [vmem:[#allocation2 + $0xc8] sm:$0xff] %v3558
      %3595 = vst [vmem:[#allocation2 + $0xd0] sm:$0xff] %v3559
      %3596 = vst [vmem:[#allocation2 + $0xd8] sm:$0xff] %v3560
      %3597 = vst [vmem:[#allocation2 + $0xe0] sm:$0xff] %v3561
      %3598 = vst [vmem:[#allocation2 + $0xe8] sm:$0xff] %v3562
      %3599 = vst [vmem:[#allocation2 + $0xf0] sm:$0xff] %v3563
      %3600 = vst [vmem:[#allocation2 + $0xf8] sm:$0xff] %v3564
      %3601 = vst [vmem:[#allocation2 + $0x100] sm:$0xff] %v3565
      %3602 = vst [vmem:[#allocation2 + $0x108] sm:$0xff] %v3566
      %3603 = vst [vmem:[#allocation2 + $0x110] sm:$0xff] %v3567
      %3604 = vst [vmem:[#allocation2 + $0x118] sm:$0xff] %v3568
      %v3605 = vld [vmem:[%s261 + $0x10] sm:$0xc]
      %v3606 = vld [vmem:[%s261 + $0x14] sm:$0xf]
      %v3607 = vld [vmem:[%s261 + $0x18] sm:$0xf]
      %v3608 = vld [vmem:[%s261 + $0x1c] sm:$0xf]
      %v3609 = vld [vmem:[%s261 + $0x20] sm:$0xf]
      %v3610 = vld [vmem:[%s261 + $0x24] sm:$0xf]
      %v3611 = vld [vmem:[%s261 + $0x28] sm:$0xf]
      %v3612 = vld [vmem:[%s261 + $0x2c] sm:$0xf]
      %v3613 = vld [vmem:[%s261 + $0x30] sm:$0xf]
      %v3614 = vld [vmem:[%s261 + $0x34] sm:$0xf]
      %v3615 = vld [vmem:[%s261 + $0x38] sm:$0xf]
      %v3616 = vld [vmem:[%s261 + $0x3c] sm:$0xf]
      %v3617 = vld [vmem:[%s261 + $0x40] sm:$0xf]
      %v3618 = vld [vmem:[%s261 + $0x44] sm:$0xf]
      %v3619 = vld [vmem:[%s261 + $0x48] sm:$0xf]
      %v3620 = vld [vmem:[%s261 + $0x4c] sm:$0xf]
      %v3621 = vld [vmem:[%s261 + $0x50] sm:$0xf]
      %v3622 = vld [vmem:[%s261 + $0x54] sm:$0xf]
      %v3623 = vld [vmem:[%s261 + $0x58] sm:$0xf]
      %v3624 = vld [vmem:[%s261 + $0x5c] sm:$0xf]
      %v3625 = vld [vmem:[%s261 + $0x60] sm:$0xf]
      %v3626 = vld [vmem:[%s261 + $0x64] sm:$0xf]
      %v3627 = vld [vmem:[%s261 + $0x68] sm:$0xf]
      %v3628 = vld [vmem:[%s261 + $0x6c] sm:$0xf]
      %v3629 = vld [vmem:[%s261 + $0x70] sm:$0xf]
      %v3630 = vld [vmem:[%s261 + $0x74] sm:$0xf]
      %v3631 = vld [vmem:[%s261 + $0x78] sm:$0xf]
      %v3632 = vld [vmem:[%s261 + $0x7c] sm:$0xf]
      %v3633 = vld [vmem:[%s261 + $0x80] sm:$0xf]
      %v3634 = vld [vmem:[%s261 + $0x84] sm:$0xf]
      %v3635 = vld [vmem:[%s261 + $0x88] sm:$0xf]
      %v3636 = vld [vmem:[%s261 + $0x8c] sm:$0xf]
      %v3637 = vld [vmem:[%s261 + $0x90] sm:$0xf]
      %v3638 = vld [vmem:[%s261 + $0x94] sm:$0xf]
      %v3639 = vld [vmem:[%s261 + $0x98] sm:$0xf]
      %v3640 = vld [vmem:[%s261 + $0x9c] sm:$0xf]
      %v3641 = vld [vmem:[%s261 + $0xa0] sm:$0x7]
      %s3642 = scalar_lea.vmem %s2, 448
      %v3643 = vld [vmem:[%s3642] sm:$0xf]
      %v3644 = vld [vmem:[%s3642 + $0x4] sm:$0xf]
      %v3645 = vld [vmem:[%s3642 + $0x8] sm:$0xf]
      %v3646 = vld [vmem:[%s3642 + $0xc] sm:$0xf]
      %v3647 = vld [vmem:[%s3642 + $0x10] sm:$0xf]
      %v3648 = vld [vmem:[%s3642 + $0x14] sm:$0xf]
      %v3649 = vld [vmem:[%s3642 + $0x18] sm:$0xf]
      %v3650 = vld [vmem:[%s3642 + $0x1c] sm:$0xf]
      %v3651 = vld [vmem:[%s3642 + $0x20] sm:$0xf]
      %v3652 = vld [vmem:[%s3642 + $0x24] sm:$0xf]
      %v3653 = vld [vmem:[%s3642 + $0x28] sm:$0xf]
      %v3654 = vld [vmem:[%s3642 + $0x2c] sm:$0xf]
      %v3655 = vld [vmem:[%s3642 + $0x30] sm:$0xf]
      %v3656 = vld [vmem:[%s3642 + $0x34] sm:$0xf]
      %v3657 = vld [vmem:[%s3642 + $0x38] sm:$0xf]
      %v3658 = vld [vmem:[%s3642 + $0x3c] sm:$0xf]
      %v3696 = vunpack.c.l.b16 %v3605
      %v3697 = vunpack.c.l.b16 %v3606
      %v3698 = vunpack.c.l.b16 %v3607
      %v3699 = vunpack.c.l.b16 %v3608
      %v3700 = vunpack.c.l.b16 %v3609
      %v3701 = vunpack.c.l.b16 %v3610
      %v3702 = vunpack.c.l.b16 %v3611
      %v3703 = vunpack.c.l.b16 %v3612
      %v3704 = vunpack.c.l.b16 %v3613
      %v3705 = vunpack.c.l.b16 %v3614
      %v3706 = vunpack.c.l.b16 %v3615
      %v3707 = vunpack.c.l.b16 %v3616
      %v3708 = vunpack.c.l.b16 %v3617
      %v3709 = vunpack.c.l.b16 %v3618
      %v3710 = vunpack.c.l.b16 %v3619
      %v3711 = vunpack.c.l.b16 %v3620
      %v3712 = vunpack.c.l.b16 %v3621
      %v3713 = vunpack.c.l.b16 %v3622
      %v3714 = vunpack.c.l.b16 %v3623
      %v3715 = vunpack.c.l.b16 %v3624
      %v3716 = vunpack.c.l.b16 %v3625
      %v3717 = vunpack.c.l.b16 %v3626
      %v3718 = vunpack.c.l.b16 %v3627
      %v3719 = vunpack.c.l.b16 %v3628
      %v3720 = vunpack.c.l.b16 %v3629
      %v3721 = vunpack.c.l.b16 %v3630
      %v3722 = vunpack.c.l.b16 %v3631
      %v3723 = vunpack.c.l.b16 %v3632
      %v3724 = vunpack.c.l.b16 %v3633
      %v3725 = vunpack.c.l.b16 %v3634
      %v3726 = vunpack.c.l.b16 %v3635
      %v3727 = vunpack.c.l.b16 %v3636
      %v3728 = vunpack.c.l.b16 %v3637
      %v3729 = vunpack.c.l.b16 %v3638
      %v3730 = vunpack.c.l.b16 %v3639
      %v3731 = vunpack.c.l.b16 %v3640
      %v3732 = vunpack.c.l.b16 %v3641
      %v3733 = vpack.c.b16 %v3697, %v3696
      %v3734 = vpack.c.b16 %v3699, %v3698
      %v3735 = vpack.c.b16 %v3701, %v3700
      %v3736 = vpack.c.b16 %v3703, %v3702
      %v3737 = vpack.c.b16 %v3705, %v3704
      %v3738 = vpack.c.b16 %v3707, %v3706
      %v3739 = vpack.c.b16 %v3709, %v3708
      %v3740 = vpack.c.b16 %v3711, %v3710
      %v3741 = vpack.c.b16 %v3713, %v3712
      %v3742 = vpack.c.b16 %v3715, %v3714
      %v3743 = vpack.c.b16 %v3717, %v3716
      %v3744 = vpack.c.b16 %v3719, %v3718
      %v3745 = vpack.c.b16 %v3721, %v3720
      %v3746 = vpack.c.b16 %v3723, %v3722
      %v3747 = vpack.c.b16 %v3725, %v3724
      %v3748 = vpack.c.b16 %v3727, %v3726
      %v3749 = vpack.c.b16 %v3729, %v3728
      %v3750 = vpack.c.b16 %v3731, %v3730
      %v3751 = vpack.c.b16 %v3732, %v3732
      %vm3752 = vsmask.f32 5376
      %v3754 = vshrl.u32 %v3733, 16
      %v3756 = vrot.slane %v3754, 2
      %v3757 = vshll.u32 %v3733, 16
      %v3759 = vrot.slane %v3757, 3
      %v3760 = vor.u32 %v3756, %v3759
      %v3762 = vshrl.u32 %v3734, 16
      %v3764 = vrot.slane %v3762, 2
      %v3765 = vshll.u32 %v3734, 16
      %v3767 = vrot.slane %v3765, 3
      %v3768 = vor.u32 %v3764, %v3767
      %v3769 = vsel %vm3752, %v3760, %v3768
      %v3771 = vshrl.u32 %v3735, 16
      %v3773 = vrot.slane %v3771, 2
      %v3774 = vshll.u32 %v3735, 16
      %v3776 = vrot.slane %v3774, 3
      %v3777 = vor.u32 %v3773, %v3776
      %v3778 = vsel %vm3752, %v3768, %v3777
      %v3780 = vshrl.u32 %v3736, 16
      %v3782 = vrot.slane %v3780, 2
      %v3783 = vshll.u32 %v3736, 16
      %v3785 = vrot.slane %v3783, 3
      %v3786 = vor.u32 %v3782, %v3785
      %v3787 = vsel %vm3752, %v3777, %v3786
      %v3789 = vshrl.u32 %v3737, 16
      %v3791 = vrot.slane %v3789, 2
      %v3792 = vshll.u32 %v3737, 16
      %v3794 = vrot.slane %v3792, 3
      %v3795 = vor.u32 %v3791, %v3794
      %v3796 = vsel %vm3752, %v3786, %v3795
      %v3798 = vshrl.u32 %v3738, 16
      %v3800 = vrot.slane %v3798, 2
      %v3801 = vshll.u32 %v3738, 16
      %v3803 = vrot.slane %v3801, 3
      %v3804 = vor.u32 %v3800, %v3803
      %v3805 = vsel %vm3752, %v3795, %v3804
      %v3807 = vshrl.u32 %v3739, 16
      %v3809 = vrot.slane %v3807, 2
      %v3810 = vshll.u32 %v3739, 16
      %v3812 = vrot.slane %v3810, 3
      %v3813 = vor.u32 %v3809, %v3812
      %v3814 = vsel %vm3752, %v3804, %v3813
      %v3816 = vshrl.u32 %v3740, 16
      %v3818 = vrot.slane %v3816, 2
      %v3819 = vshll.u32 %v3740, 16
      %v3821 = vrot.slane %v3819, 3
      %v3822 = vor.u32 %v3818, %v3821
      %v3823 = vsel %vm3752, %v3813, %v3822
      %v3825 = vshrl.u32 %v3741, 16
      %v3827 = vrot.slane %v3825, 2
      %v3828 = vshll.u32 %v3741, 16
      %v3830 = vrot.slane %v3828, 3
      %v3831 = vor.u32 %v3827, %v3830
      %v3832 = vsel %vm3752, %v3822, %v3831
      %v3834 = vshrl.u32 %v3742, 16
      %v3836 = vrot.slane %v3834, 2
      %v3837 = vshll.u32 %v3742, 16
      %v3839 = vrot.slane %v3837, 3
      %v3840 = vor.u32 %v3836, %v3839
      %v3841 = vsel %vm3752, %v3831, %v3840
      %v3843 = vshrl.u32 %v3743, 16
      %v3845 = vrot.slane %v3843, 2
      %v3846 = vshll.u32 %v3743, 16
      %v3848 = vrot.slane %v3846, 3
      %v3849 = vor.u32 %v3845, %v3848
      %v3850 = vsel %vm3752, %v3840, %v3849
      %v3852 = vshrl.u32 %v3744, 16
      %v3854 = vrot.slane %v3852, 2
      %v3855 = vshll.u32 %v3744, 16
      %v3857 = vrot.slane %v3855, 3
      %v3858 = vor.u32 %v3854, %v3857
      %v3859 = vsel %vm3752, %v3849, %v3858
      %v3861 = vshrl.u32 %v3745, 16
      %v3863 = vrot.slane %v3861, 2
      %v3864 = vshll.u32 %v3745, 16
      %v3866 = vrot.slane %v3864, 3
      %v3867 = vor.u32 %v3863, %v3866
      %v3868 = vsel %vm3752, %v3858, %v3867
      %v3870 = vshrl.u32 %v3746, 16
      %v3872 = vrot.slane %v3870, 2
      %v3873 = vshll.u32 %v3746, 16
      %v3875 = vrot.slane %v3873, 3
      %v3876 = vor.u32 %v3872, %v3875
      %v3877 = vsel %vm3752, %v3867, %v3876
      %v3879 = vshrl.u32 %v3747, 16
      %v3881 = vrot.slane %v3879, 2
      %v3882 = vshll.u32 %v3747, 16
      %v3884 = vrot.slane %v3882, 3
      %v3885 = vor.u32 %v3881, %v3884
      %v3886 = vsel %vm3752, %v3876, %v3885
      %v3888 = vshrl.u32 %v3748, 16
      %v3890 = vrot.slane %v3888, 2
      %v3891 = vshll.u32 %v3748, 16
      %v3893 = vrot.slane %v3891, 3
      %v3894 = vor.u32 %v3890, %v3893
      %v3895 = vsel %vm3752, %v3885, %v3894
      %v3897 = vshrl.u32 %v3749, 16
      %v3899 = vrot.slane %v3897, 2
      %v3900 = vshll.u32 %v3749, 16
      %v3902 = vrot.slane %v3900, 3
      %v3903 = vor.u32 %v3899, %v3902
      %v3904 = vsel %vm3752, %v3894, %v3903
      %v3906 = vshrl.u32 %v3750, 16
      %v3908 = vrot.slane %v3906, 2
      %v3909 = vshll.u32 %v3750, 16
      %v3911 = vrot.slane %v3909, 3
      %v3912 = vor.u32 %v3908, %v3911
      %v3913 = vsel %vm3752, %v3903, %v3912
      %v3915 = vshrl.u32 %v3751, 16
      %v3917 = vrot.slane %v3915, 2
      %v3918 = vshll.u32 %v3751, 16
      %v3920 = vrot.slane %v3918, 3
      %v3921 = vor.u32 %v3917, %v3920
      %v3922 = vsel %vm3752, %v3912, %v3921
      %v3957 = vunpack.c.l.b16 %v3643
      %v3958 = vunpack.c.l.b16 %v3644
      %v3959 = vunpack.c.l.b16 %v3645
      %v3960 = vunpack.c.l.b16 %v3646
      %v3961 = vunpack.c.l.b16 %v3647
      %v3962 = vunpack.c.l.b16 %v3648
      %v3963 = vunpack.c.l.b16 %v3649
      %v3964 = vunpack.c.l.b16 %v3650
      %v3965 = vunpack.c.l.b16 %v3651
      %v3966 = vunpack.c.l.b16 %v3652
      %v3967 = vunpack.c.l.b16 %v3653
      %v3968 = vunpack.c.l.b16 %v3654
      %v3969 = vunpack.c.l.b16 %v3655
      %v3970 = vunpack.c.l.b16 %v3656
      %v3971 = vunpack.c.l.b16 %v3657
      %v3972 = vunpack.c.l.b16 %v3658
      %v3973 = vpack.c.b16 %v3958, %v3957
      %v3974 = vpack.c.b16 %v3960, %v3959
      %v3975 = vpack.c.b16 %v3962, %v3961
      %v3976 = vpack.c.b16 %v3964, %v3963
      %v3977 = vpack.c.b16 %v3966, %v3965
      %v3978 = vpack.c.b16 %v3968, %v3967
      %v3979 = vpack.c.b16 %v3970, %v3969
      %v3980 = vpack.c.b16 %v3972, %v3971
      %3989 = vmatpush.bf16.msra.mxu0 %v3980
      %3990 = vmatpush.bf16.msra.mxu0 %v3979
      %3991 = vmatpush.bf16.msra.mxu0 %v3978
      %3992 = vmatpush.bf16.msra.mxu0 %v3977
      %3993 = vmatpush.bf16.msra.mxu0 %v3976
      %3994 = vmatpush.bf16.msra.mxu0 %v3975
      %3995 = vmatpush.bf16.msra.mxu0 %v3974
      %3996 = vmatpush.bf16.msra.mxu0 %v3973
      %3997 = vmatmul.bf16.gmra.mxu0 %v3769
      %v3998 = vpop.f32.mrf.mxu0
      %v3999 = vadd.f32 0.0, %v3998
      %v4000 = vpop.f32.mrf.mxu0
      %v4001 = vadd.f32 0.0, %v4000
      %4002 = vmatmul.bf16.gmra.mxu0 %v3778
      %v4003 = vpop.f32.mrf.mxu0
      %v4004 = vadd.f32 0.0, %v4003
      %v4005 = vpop.f32.mrf.mxu0
      %v4006 = vadd.f32 0.0, %v4005
      %4007 = vmatmul.bf16.gmra.mxu0 %v3787
      %v4008 = vpop.f32.mrf.mxu0
      %v4009 = vadd.f32 0.0, %v4008
      %v4010 = vpop.f32.mrf.mxu0
      %v4011 = vadd.f32 0.0, %v4010
      %4012 = vmatmul.bf16.gmra.mxu0 %v3796
      %v4013 = vpop.f32.mrf.mxu0
      %v4014 = vadd.f32 0.0, %v4013
      %v4015 = vpop.f32.mrf.mxu0
      %v4016 = vadd.f32 0.0, %v4015
      %4017 = vmatmul.bf16.gmra.mxu0 %v3805
      %v4018 = vpop.f32.mrf.mxu0
      %v4019 = vadd.f32 0.0, %v4018
      %v4020 = vpop.f32.mrf.mxu0
      %v4021 = vadd.f32 0.0, %v4020
      %4022 = vmatmul.bf16.gmra.mxu0 %v3814
      %v4023 = vpop.f32.mrf.mxu0
      %v4024 = vadd.f32 0.0, %v4023
      %v4025 = vpop.f32.mrf.mxu0
      %v4026 = vadd.f32 0.0, %v4025
      %4027 = vmatmul.bf16.gmra.mxu0 %v3823
      %v4028 = vpop.f32.mrf.mxu0
      %v4029 = vadd.f32 0.0, %v4028
      %v4030 = vpop.f32.mrf.mxu0
      %v4031 = vadd.f32 0.0, %v4030
      %4032 = vmatmul.bf16.gmra.mxu0 %v3832
      %v4033 = vpop.f32.mrf.mxu0
      %v4034 = vadd.f32 0.0, %v4033
      %v4035 = vpop.f32.mrf.mxu0
      %v4036 = vadd.f32 0.0, %v4035
      %4037 = vmatmul.bf16.gmra.mxu0 %v3841
      %v4038 = vpop.f32.mrf.mxu0
      %v4039 = vadd.f32 0.0, %v4038
      %v4040 = vpop.f32.mrf.mxu0
      %v4041 = vadd.f32 0.0, %v4040
      %4042 = vmatmul.bf16.gmra.mxu0 %v3850
      %v4043 = vpop.f32.mrf.mxu0
      %v4044 = vadd.f32 0.0, %v4043
      %v4045 = vpop.f32.mrf.mxu0
      %v4046 = vadd.f32 0.0, %v4045
      %4047 = vmatmul.bf16.gmra.mxu0 %v3859
      %v4048 = vpop.f32.mrf.mxu0
      %v4049 = vadd.f32 0.0, %v4048
      %v4050 = vpop.f32.mrf.mxu0
      %v4051 = vadd.f32 0.0, %v4050
      %4052 = vmatmul.bf16.gmra.mxu0 %v3868
      %v4053 = vpop.f32.mrf.mxu0
      %v4054 = vadd.f32 0.0, %v4053
      %v4055 = vpop.f32.mrf.mxu0
      %v4056 = vadd.f32 0.0, %v4055
      %4057 = vmatmul.bf16.gmra.mxu0 %v3877
      %v4058 = vpop.f32.mrf.mxu0
      %v4059 = vadd.f32 0.0, %v4058
      %v4060 = vpop.f32.mrf.mxu0
      %v4061 = vadd.f32 0.0, %v4060
      %4062 = vmatmul.bf16.gmra.mxu0 %v3886
      %v4063 = vpop.f32.mrf.mxu0
      %v4064 = vadd.f32 0.0, %v4063
      %v4065 = vpop.f32.mrf.mxu0
      %v4066 = vadd.f32 0.0, %v4065
      %4067 = vmatmul.bf16.gmra.mxu0 %v3895
      %v4068 = vpop.f32.mrf.mxu0
      %v4069 = vadd.f32 0.0, %v4068
      %v4070 = vpop.f32.mrf.mxu0
      %v4071 = vadd.f32 0.0, %v4070
      %4072 = vmatmul.bf16.gmra.mxu0 %v3904
      %v4073 = vpop.f32.mrf.mxu0
      %v4074 = vadd.f32 0.0, %v4073
      %v4075 = vpop.f32.mrf.mxu0
      %v4076 = vadd.f32 0.0, %v4075
      %4077 = vmatmul.bf16.gmra.mxu0 %v3913
      %v4078 = vpop.f32.mrf.mxu0
      %v4079 = vadd.f32 0.0, %v4078
      %v4080 = vpop.f32.mrf.mxu0
      %v4081 = vadd.f32 0.0, %v4080
      %4082 = vmatmul.bf16.gmra.mxu0 %v3922
      %v4083 = vpop.f32.mrf.mxu0
      %v4084 = vadd.f32 0.0, %v4083
      %v4085 = vpop.f32.mrf.mxu0
      %v4086 = vadd.f32 0.0, %v4085
      %4087 = vdwg.mxu0
      %v4088 = vld [vmem:[#allocation2] sm:$0xff]
      %v4089 = vld [vmem:[#allocation2 + $0x8] sm:$0xff]
      %v4090 = vld [vmem:[#allocation2 + $0x10] sm:$0xff]
      %v4091 = vld [vmem:[#allocation2 + $0x18] sm:$0xff]
      %v4092 = vld [vmem:[#allocation2 + $0x20] sm:$0xff]
      %v4093 = vld [vmem:[#allocation2 + $0x28] sm:$0xff]
      %v4094 = vld [vmem:[#allocation2 + $0x30] sm:$0xff]
      %v4095 = vld [vmem:[#allocation2 + $0x38] sm:$0xff]
      %v4096 = vld [vmem:[#allocation2 + $0x40] sm:$0xff]
      %v4097 = vld [vmem:[#allocation2 + $0x48] sm:$0xff]
      %v4098 = vld [vmem:[#allocation2 + $0x50] sm:$0xff]
      %v4099 = vld [vmem:[#allocation2 + $0x58] sm:$0xff]
      %v4100 = vld [vmem:[#allocation2 + $0x60] sm:$0xff]
      %v4101 = vld [vmem:[#allocation2 + $0x68] sm:$0xff]
      %v4102 = vld [vmem:[#allocation2 + $0x70] sm:$0xff]
      %v4103 = vld [vmem:[#allocation2 + $0x78] sm:$0xff]
      %v4104 = vld [vmem:[#allocation2 + $0x80] sm:$0xff]
      %v4105 = vld [vmem:[#allocation2 + $0x88] sm:$0xff]
      %v4106 = vld [vmem:[#allocation2 + $0x90] sm:$0xff]
      %v4107 = vld [vmem:[#allocation2 + $0x98] sm:$0xff]
      %v4108 = vld [vmem:[#allocation2 + $0xa0] sm:$0xff]
      %v4109 = vld [vmem:[#allocation2 + $0xa8] sm:$0xff]
      %v4110 = vld [vmem:[#allocation2 + $0xb0] sm:$0xff]
      %v4111 = vld [vmem:[#allocation2 + $0xb8] sm:$0xff]
      %v4112 = vld [vmem:[#allocation2 + $0xc0] sm:$0xff]
      %v4113 = vld [vmem:[#allocation2 + $0xc8] sm:$0xff]
      %v4114 = vld [vmem:[#allocation2 + $0xd0] sm:$0xff]
      %v4115 = vld [vmem:[#allocation2 + $0xd8] sm:$0xff]
      %v4116 = vld [vmem:[#allocation2 + $0xe0] sm:$0xff]
      %v4117 = vld [vmem:[#allocation2 + $0xe8] sm:$0xff]
      %v4118 = vld [vmem:[#allocation2 + $0xf0] sm:$0xff]
      %v4119 = vld [vmem:[#allocation2 + $0xf8] sm:$0xff]
      %v4120 = vld [vmem:[#allocation2 + $0x100] sm:$0xff]
      %v4121 = vld [vmem:[#allocation2 + $0x108] sm:$0xff]
      %v4122 = vld [vmem:[#allocation2 + $0x110] sm:$0xff]
      %v4123 = vld [vmem:[#allocation2 + $0x118] sm:$0xff]
      %v4124 = vadd.f32 %v4088, %v3999
      %v4125 = vadd.f32 %v4089, %v4001
      %v4126 = vadd.f32 %v4090, %v4004
      %v4127 = vadd.f32 %v4091, %v4006
      %v4128 = vadd.f32 %v4092, %v4009
      %v4129 = vadd.f32 %v4093, %v4011
      %v4130 = vadd.f32 %v4094, %v4014
      %v4131 = vadd.f32 %v4095, %v4016
      %v4132 = vadd.f32 %v4096, %v4019
      %v4133 = vadd.f32 %v4097, %v4021
      %v4134 = vadd.f32 %v4098, %v4024
      %v4135 = vadd.f32 %v4099, %v4026
      %v4136 = vadd.f32 %v4100, %v4029
      %v4137 = vadd.f32 %v4101, %v4031
      %v4138 = vadd.f32 %v4102, %v4034
      %v4139 = vadd.f32 %v4103, %v4036
      %v4140 = vadd.f32 %v4104, %v4039
      %v4141 = vadd.f32 %v4105, %v4041
      %v4142 = vadd.f32 %v4106, %v4044
      %v4143 = vadd.f32 %v4107, %v4046
      %v4144 = vadd.f32 %v4108, %v4049
      %v4145 = vadd.f32 %v4109, %v4051
      %v4146 = vadd.f32 %v4110, %v4054
      %v4147 = vadd.f32 %v4111, %v4056
      %v4148 = vadd.f32 %v4112, %v4059
      %v4149 = vadd.f32 %v4113, %v4061
      %v4150 = vadd.f32 %v4114, %v4064
      %v4151 = vadd.f32 %v4115, %v4066
      %v4152 = vadd.f32 %v4116, %v4069
      %v4153 = vadd.f32 %v4117, %v4071
      %v4154 = vadd.f32 %v4118, %v4074
      %v4155 = vadd.f32 %v4119, %v4076
      %v4156 = vadd.f32 %v4120, %v4079
      %v4157 = vadd.f32 %v4121, %v4081
      %v4158 = vadd.f32 %v4122, %v4084
      %v4159 = vadd.f32 %v4123, %v4086
      %4160 = vst [vmem:[#allocation2] sm:$0xff] %v4124
      %4161 = vst [vmem:[#allocation2 + $0x8] sm:$0xff] %v4125
      %4162 = vst [vmem:[#allocation2 + $0x10] sm:$0xff] %v4126
      %4163 = vst [vmem:[#allocation2 + $0x18] sm:$0xff] %v4127
      %4164 = vst [vmem:[#allocation2 + $0x20] sm:$0xff] %v4128
      %4165 = vst [vmem:[#allocation2 + $0x28] sm:$0xff] %v4129
      %4166 = vst [vmem:[#allocation2 + $0x30] sm:$0xff] %v4130
      %4167 = vst [vmem:[#allocation2 + $0x38] sm:$0xff] %v4131
      %4168 = vst [vmem:[#allocation2 + $0x40] sm:$0xff] %v4132
      %4169 = vst [vmem:[#allocation2 + $0x48] sm:$0xff] %v4133
      %4170 = vst [vmem:[#allocation2 + $0x50] sm:$0xff] %v4134
      %4171 = vst [vmem:[#allocation2 + $0x58] sm:$0xff] %v4135
      %4172 = vst [vmem:[#allocation2 + $0x60] sm:$0xff] %v4136
      %4173 = vst [vmem:[#allocation2 + $0x68] sm:$0xff] %v4137
      %4174 = vst [vmem:[#allocation2 + $0x70] sm:$0xff] %v4138
      %4175 = vst [vmem:[#allocation2 + $0x78] sm:$0xff] %v4139
      %4176 = vst [vmem:[#allocation2 + $0x80] sm:$0xff] %v4140
      %4177 = vst [vmem:[#allocation2 + $0x88] sm:$0xff] %v4141
      %4178 = vst [vmem:[#allocation2 + $0x90] sm:$0xff] %v4142
      %4179 = vst [vmem:[#allocation2 + $0x98] sm:$0xff] %v4143
      %4180 = vst [vmem:[#allocation2 + $0xa0] sm:$0xff] %v4144
      %4181 = vst [vmem:[#allocation2 + $0xa8] sm:$0xff] %v4145
      %4182 = vst [vmem:[#allocation2 + $0xb0] sm:$0xff] %v4146
      %4183 = vst [vmem:[#allocation2 + $0xb8] sm:$0xff] %v4147
      %4184 = vst [vmem:[#allocation2 + $0xc0] sm:$0xff] %v4148
      %4185 = vst [vmem:[#allocation2 + $0xc8] sm:$0xff] %v4149
      %4186 = vst [vmem:[#allocation2 + $0xd0] sm:$0xff] %v4150
      %4187 = vst [vmem:[#allocation2 + $0xd8] sm:$0xff] %v4151
      %4188 = vst [vmem:[#allocation2 + $0xe0] sm:$0xff] %v4152
      %4189 = vst [vmem:[#allocation2 + $0xe8] sm:$0xff] %v4153
      %4190 = vst [vmem:[#allocation2 + $0xf0] sm:$0xff] %v4154
      %4191 = vst [vmem:[#allocation2 + $0xf8] sm:$0xff] %v4155
      %4192 = vst [vmem:[#allocation2 + $0x100] sm:$0xff] %v4156
      %4193 = vst [vmem:[#allocation2 + $0x108] sm:$0xff] %v4157
      %4194 = vst [vmem:[#allocation2 + $0x110] sm:$0xff] %v4158
      %4195 = vst [vmem:[#allocation2 + $0x118] sm:$0xff] %v4159
      %v4196 = vld [vmem:[%s261 + $0x10] sm:$0x8]
      %v4197 = vld [vmem:[%s261 + $0x14] sm:$0xf]
      %v4198 = vld [vmem:[%s261 + $0x18] sm:$0xf]
      %v4199 = vld [vmem:[%s261 + $0x1c] sm:$0xf]
      %v4200 = vld [vmem:[%s261 + $0x20] sm:$0xf]
      %v4201 = vld [vmem:[%s261 + $0x24] sm:$0xf]
      %v4202 = vld [vmem:[%s261 + $0x28] sm:$0xf]
      %v4203 = vld [vmem:[%s261 + $0x2c] sm:$0xf]
      %v4204 = vld [vmem:[%s261 + $0x30] sm:$0xf]
      %v4205 = vld [vmem:[%s261 + $0x34] sm:$0xf]
      %v4206 = vld [vmem:[%s261 + $0x38] sm:$0xf]
      %v4207 = vld [vmem:[%s261 + $0x3c] sm:$0xf]
      %v4208 = vld [vmem:[%s261 + $0x40] sm:$0xf]
      %v4209 = vld [vmem:[%s261 + $0x44] sm:$0xf]
      %v4210 = vld [vmem:[%s261 + $0x48] sm:$0xf]
      %v4211 = vld [vmem:[%s261 + $0x4c] sm:$0xf]
      %v4212 = vld [vmem:[%s261 + $0x50] sm:$0xf]
      %v4213 = vld [vmem:[%s261 + $0x54] sm:$0xf]
      %v4214 = vld [vmem:[%s261 + $0x58] sm:$0xf]
      %v4215 = vld [vmem:[%s261 + $0x5c] sm:$0xf]
      %v4216 = vld [vmem:[%s261 + $0x60] sm:$0xf]
      %v4217 = vld [vmem:[%s261 + $0x64] sm:$0xf]
      %v4218 = vld [vmem:[%s261 + $0x68] sm:$0xf]
      %v4219 = vld [vmem:[%s261 + $0x6c] sm:$0xf]
      %v4220 = vld [vmem:[%s261 + $0x70] sm:$0xf]
      %v4221 = vld [vmem:[%s261 + $0x74] sm:$0xf]
      %v4222 = vld [vmem:[%s261 + $0x78] sm:$0xf]
      %v4223 = vld [vmem:[%s261 + $0x7c] sm:$0xf]
      %v4224 = vld [vmem:[%s261 + $0x80] sm:$0xf]
      %v4225 = vld [vmem:[%s261 + $0x84] sm:$0xf]
      %v4226 = vld [vmem:[%s261 + $0x88] sm:$0xf]
      %v4227 = vld [vmem:[%s261 + $0x8c] sm:$0xf]
      %v4228 = vld [vmem:[%s261 + $0x90] sm:$0xf]
      %v4229 = vld [vmem:[%s261 + $0x94] sm:$0xf]
      %v4230 = vld [vmem:[%s261 + $0x98] sm:$0xf]
      %v4231 = vld [vmem:[%s261 + $0x9c] sm:$0xf]
      %v4232 = vld [vmem:[%s261 + $0xa0] sm:$0x7]
      %s4233 = scalar_lea.vmem %s2, 512
      %v4234 = vld [vmem:[%s4233] sm:$0xf]
      %v4235 = vld [vmem:[%s4233 + $0x4] sm:$0xf]
      %v4236 = vld [vmem:[%s4233 + $0x8] sm:$0xf]
      %v4237 = vld [vmem:[%s4233 + $0xc] sm:$0xf]
      %v4238 = vld [vmem:[%s4233 + $0x10] sm:$0xf]
      %v4239 = vld [vmem:[%s4233 + $0x14] sm:$0xf]
      %v4240 = vld [vmem:[%s4233 + $0x18] sm:$0xf]
      %v4241 = vld [vmem:[%s4233 + $0x1c] sm:$0xf]
      %v4242 = vld [vmem:[%s4233 + $0x20] sm:$0xf]
      %v4243 = vld [vmem:[%s4233 + $0x24] sm:$0xf]
      %v4244 = vld [vmem:[%s4233 + $0x28] sm:$0xf]
      %v4245 = vld [vmem:[%s4233 + $0x2c] sm:$0xf]
      %v4246 = vld [vmem:[%s4233 + $0x30] sm:$0xf]
      %v4247 = vld [vmem:[%s4233 + $0x34] sm:$0xf]
      %v4248 = vld [vmem:[%s4233 + $0x38] sm:$0xf]
      %v4249 = vld [vmem:[%s4233 + $0x3c] sm:$0xf]
      %v4287 = vunpack.c.l.b16 %v4196
      %v4288 = vunpack.c.l.b16 %v4197
      %v4289 = vunpack.c.l.b16 %v4198
      %v4290 = vunpack.c.l.b16 %v4199
      %v4291 = vunpack.c.l.b16 %v4200
      %v4292 = vunpack.c.l.b16 %v4201
      %v4293 = vunpack.c.l.b16 %v4202
      %v4294 = vunpack.c.l.b16 %v4203
      %v4295 = vunpack.c.l.b16 %v4204
      %v4296 = vunpack.c.l.b16 %v4205
      %v4297 = vunpack.c.l.b16 %v4206
      %v4298 = vunpack.c.l.b16 %v4207
      %v4299 = vunpack.c.l.b16 %v4208
      %v4300 = vunpack.c.l.b16 %v4209
      %v4301 = vunpack.c.l.b16 %v4210
      %v4302 = vunpack.c.l.b16 %v4211
      %v4303 = vunpack.c.l.b16 %v4212
      %v4304 = vunpack.c.l.b16 %v4213
      %v4305 = vunpack.c.l.b16 %v4214
      %v4306 = vunpack.c.l.b16 %v4215
      %v4307 = vunpack.c.l.b16 %v4216
      %v4308 = vunpack.c.l.b16 %v4217
      %v4309 = vunpack.c.l.b16 %v4218
      %v4310 = vunpack.c.l.b16 %v4219
      %v4311 = vunpack.c.l.b16 %v4220
      %v4312 = vunpack.c.l.b16 %v4221
      %v4313 = vunpack.c.l.b16 %v4222
      %v4314 = vunpack.c.l.b16 %v4223
      %v4315 = vunpack.c.l.b16 %v4224
      %v4316 = vunpack.c.l.b16 %v4225
      %v4317 = vunpack.c.l.b16 %v4226
      %v4318 = vunpack.c.l.b16 %v4227
      %v4319 = vunpack.c.l.b16 %v4228
      %v4320 = vunpack.c.l.b16 %v4229
      %v4321 = vunpack.c.l.b16 %v4230
      %v4322 = vunpack.c.l.b16 %v4231
      %v4323 = vunpack.c.l.b16 %v4232
      %v4324 = vpack.c.b16 %v4288, %v4287
      %v4325 = vpack.c.b16 %v4290, %v4289
      %v4326 = vpack.c.b16 %v4292, %v4291
      %v4327 = vpack.c.b16 %v4294, %v4293
      %v4328 = vpack.c.b16 %v4296, %v4295
      %v4329 = vpack.c.b16 %v4298, %v4297
      %v4330 = vpack.c.b16 %v4300, %v4299
      %v4331 = vpack.c.b16 %v4302, %v4301
      %v4332 = vpack.c.b16 %v4304, %v4303
      %v4333 = vpack.c.b16 %v4306, %v4305
      %v4334 = vpack.c.b16 %v4308, %v4307
      %v4335 = vpack.c.b16 %v4310, %v4309
      %v4336 = vpack.c.b16 %v4312, %v4311
      %v4337 = vpack.c.b16 %v4314, %v4313
      %v4338 = vpack.c.b16 %v4316, %v4315
      %v4339 = vpack.c.b16 %v4318, %v4317
      %v4340 = vpack.c.b16 %v4320, %v4319
      %v4341 = vpack.c.b16 %v4322, %v4321
      %v4342 = vpack.c.b16 %v4323, %v4323
      %vm4343 = vcmask 1044480
      %v4344 = vrot.slane %v4324, 3
      %v4345 = vrot.slane %v4325, 3
      %v4346 = vsel %vm4343, %v4344, %v4345
      %v4347 = vrot.slane %v4326, 3
      %v4348 = vsel %vm4343, %v4345, %v4347
      %v4349 = vrot.slane %v4327, 3
      %v4350 = vsel %vm4343, %v4347, %v4349
      %v4351 = vrot.slane %v4328, 3
      %v4352 = vsel %vm4343, %v4349, %v4351
      %v4353 = vrot.slane %v4329, 3
      %v4354 = vsel %vm4343, %v4351, %v4353
      %v4355 = vrot.slane %v4330, 3
      %v4356 = vsel %vm4343, %v4353, %v4355
      %v4357 = vrot.slane %v4331, 3
      %v4358 = vsel %vm4343, %v4355, %v4357
      %v4359 = vrot.slane %v4332, 3
      %v4360 = vsel %vm4343, %v4357, %v4359
      %v4361 = vrot.slane %v4333, 3
      %v4362 = vsel %vm4343, %v4359, %v4361
      %v4363 = vrot.slane %v4334, 3
      %v4364 = vsel %vm4343, %v4361, %v4363
      %v4365 = vrot.slane %v4335, 3
      %v4366 = vsel %vm4343, %v4363, %v4365
      %v4367 = vrot.slane %v4336, 3
      %v4368 = vsel %vm4343, %v4365, %v4367
      %v4369 = vrot.slane %v4337, 3
      %v4370 = vsel %vm4343, %v4367, %v4369
      %v4371 = vrot.slane %v4338, 3
      %v4372 = vsel %vm4343, %v4369, %v4371
      %v4373 = vrot.slane %v4339, 3
      %v4374 = vsel %vm4343, %v4371, %v4373
      %v4375 = vrot.slane %v4340, 3
      %v4376 = vsel %vm4343, %v4373, %v4375
      %v4377 = vrot.slane %v4341, 3
      %v4378 = vsel %vm4343, %v4375, %v4377
      %v4379 = vrot.slane %v4342, 3
      %v4380 = vsel %vm4343, %v4377, %v4379
      %v4415 = vunpack.c.l.b16 %v4234
      %v4416 = vunpack.c.l.b16 %v4235
      %v4417 = vunpack.c.l.b16 %v4236
      %v4418 = vunpack.c.l.b16 %v4237
      %v4419 = vunpack.c.l.b16 %v4238
      %v4420 = vunpack.c.l.b16 %v4239
      %v4421 = vunpack.c.l.b16 %v4240
      %v4422 = vunpack.c.l.b16 %v4241
      %v4423 = vunpack.c.l.b16 %v4242
      %v4424 = vunpack.c.l.b16 %v4243
      %v4425 = vunpack.c.l.b16 %v4244
      %v4426 = vunpack.c.l.b16 %v4245
      %v4427 = vunpack.c.l.b16 %v4246
      %v4428 = vunpack.c.l.b16 %v4247
      %v4429 = vunpack.c.l.b16 %v4248
      %v4430 = vunpack.c.l.b16 %v4249
      %v4431 = vpack.c.b16 %v4416, %v4415
      %v4432 = vpack.c.b16 %v4418, %v4417
      %v4433 = vpack.c.b16 %v4420, %v4419
      %v4434 = vpack.c.b16 %v4422, %v4421
      %v4435 = vpack.c.b16 %v4424, %v4423
      %v4436 = vpack.c.b16 %v4426, %v4425
      %v4437 = vpack.c.b16 %v4428, %v4427
      %v4438 = vpack.c.b16 %v4430, %v4429
      %4447 = vmatpush.bf16.msra.mxu0 %v4438
      %4448 = vmatpush.bf16.msra.mxu0 %v4437
      %4449 = vmatpush.bf16.msra.mxu0 %v4436
      %4450 = vmatpush.bf16.msra.mxu0 %v4435
      %4451 = vmatpush.bf16.msra.mxu0 %v4434
      %4452 = vmatpush.bf16.msra.mxu0 %v4433
      %4453 = vmatpush.bf16.msra.mxu0 %v4432
      %4454 = vmatpush.bf16.msra.mxu0 %v4431
      %4455 = vmatmul.bf16.gmra.mxu0 %v4346
      %v4456 = vpop.f32.mrf.mxu0
      %v4457 = vadd.f32 0.0, %v4456
      %v4458 = vpop.f32.mrf.mxu0
      %v4459 = vadd.f32 0.0, %v4458
      %4460 = vmatmul.bf16.gmra.mxu0 %v4348
      %v4461 = vpop.f32.mrf.mxu0
      %v4462 = vadd.f32 0.0, %v4461
      %v4463 = vpop.f32.mrf.mxu0
      %v4464 = vadd.f32 0.0, %v4463
      %4465 = vmatmul.bf16.gmra.mxu0 %v4350
      %v4466 = vpop.f32.mrf.mxu0
      %v4467 = vadd.f32 0.0, %v4466
      %v4468 = vpop.f32.mrf.mxu0
      %v4469 = vadd.f32 0.0, %v4468
      %4470 = vmatmul.bf16.gmra.mxu0 %v4352
      %v4471 = vpop.f32.mrf.mxu0
      %v4472 = vadd.f32 0.0, %v4471
      %v4473 = vpop.f32.mrf.mxu0
      %v4474 = vadd.f32 0.0, %v4473
      %4475 = vmatmul.bf16.gmra.mxu0 %v4354
      %v4476 = vpop.f32.mrf.mxu0
      %v4477 = vadd.f32 0.0, %v4476
      %v4478 = vpop.f32.mrf.mxu0
      %v4479 = vadd.f32 0.0, %v4478
      %4480 = vmatmul.bf16.gmra.mxu0 %v4356
      %v4481 = vpop.f32.mrf.mxu0
      %v4482 = vadd.f32 0.0, %v4481
      %v4483 = vpop.f32.mrf.mxu0
      %v4484 = vadd.f32 0.0, %v4483
      %4485 = vmatmul.bf16.gmra.mxu0 %v4358
      %v4486 = vpop.f32.mrf.mxu0
      %v4487 = vadd.f32 0.0, %v4486
      %v4488 = vpop.f32.mrf.mxu0
      %v4489 = vadd.f32 0.0, %v4488
      %4490 = vmatmul.bf16.gmra.mxu0 %v4360
      %v4491 = vpop.f32.mrf.mxu0
      %v4492 = vadd.f32 0.0, %v4491
      %v4493 = vpop.f32.mrf.mxu0
      %v4494 = vadd.f32 0.0, %v4493
      %4495 = vmatmul.bf16.gmra.mxu0 %v4362
      %v4496 = vpop.f32.mrf.mxu0
      %v4497 = vadd.f32 0.0, %v4496
      %v4498 = vpop.f32.mrf.mxu0
      %v4499 = vadd.f32 0.0, %v4498
      %4500 = vmatmul.bf16.gmra.mxu0 %v4364
      %v4501 = vpop.f32.mrf.mxu0
      %v4502 = vadd.f32 0.0, %v4501
      %v4503 = vpop.f32.mrf.mxu0
      %v4504 = vadd.f32 0.0, %v4503
      %4505 = vmatmul.bf16.gmra.mxu0 %v4366
      %v4506 = vpop.f32.mrf.mxu0
      %v4507 = vadd.f32 0.0, %v4506
      %v4508 = vpop.f32.mrf.mxu0
      %v4509 = vadd.f32 0.0, %v4508
      %4510 = vmatmul.bf16.gmra.mxu0 %v4368
      %v4511 = vpop.f32.mrf.mxu0
      %v4512 = vadd.f32 0.0, %v4511
      %v4513 = vpop.f32.mrf.mxu0
      %v4514 = vadd.f32 0.0, %v4513
      %4515 = vmatmul.bf16.gmra.mxu0 %v4370
      %v4516 = vpop.f32.mrf.mxu0
      %v4517 = vadd.f32 0.0, %v4516
      %v4518 = vpop.f32.mrf.mxu0
      %v4519 = vadd.f32 0.0, %v4518
      %4520 = vmatmul.bf16.gmra.mxu0 %v4372
      %v4521 = vpop.f32.mrf.mxu0
      %v4522 = vadd.f32 0.0, %v4521
      %v4523 = vpop.f32.mrf.mxu0
      %v4524 = vadd.f32 0.0, %v4523
      %4525 = vmatmul.bf16.gmra.mxu0 %v4374
      %v4526 = vpop.f32.mrf.mxu0
      %v4527 = vadd.f32 0.0, %v4526
      %v4528 = vpop.f32.mrf.mxu0
      %v4529 = vadd.f32 0.0, %v4528
      %4530 = vmatmul.bf16.gmra.mxu0 %v4376
      %v4531 = vpop.f32.mrf.mxu0
      %v4532 = vadd.f32 0.0, %v4531
      %v4533 = vpop.f32.mrf.mxu0
      %v4534 = vadd.f32 0.0, %v4533
      %4535 = vmatmul.bf16.gmra.mxu0 %v4378
      %v4536 = vpop.f32.mrf.mxu0
      %v4537 = vadd.f32 0.0, %v4536
      %v4538 = vpop.f32.mrf.mxu0
      %v4539 = vadd.f32 0.0, %v4538
      %4540 = vmatmul.bf16.gmra.mxu0 %v4380
      %v4541 = vpop.f32.mrf.mxu0
      %v4542 = vadd.f32 0.0, %v4541
      %v4543 = vpop.f32.mrf.mxu0
      %v4544 = vadd.f32 0.0, %v4543
      %4545 = vdwg.mxu0
      %v4546 = vld [vmem:[#allocation2] sm:$0xff]
      %v4547 = vld [vmem:[#allocation2 + $0x8] sm:$0xff]
      %v4548 = vld [vmem:[#allocation2 + $0x10] sm:$0xff]
      %v4549 = vld [vmem:[#allocation2 + $0x18] sm:$0xff]
      %v4550 = vld [vmem:[#allocation2 + $0x20] sm:$0xff]
      %v4551 = vld [vmem:[#allocation2 + $0x28] sm:$0xff]
      %v4552 = vld [vmem:[#allocation2 + $0x30] sm:$0xff]
      %v4553 = vld [vmem:[#allocation2 + $0x38] sm:$0xff]
      %v4554 = vld [vmem:[#allocation2 + $0x40] sm:$0xff]
      %v4555 = vld [vmem:[#allocation2 + $0x48] sm:$0xff]
      %v4556 = vld [vmem:[#allocation2 + $0x50] sm:$0xff]
      %v4557 = vld [vmem:[#allocation2 + $0x58] sm:$0xff]
      %v4558 = vld [vmem:[#allocation2 + $0x60] sm:$0xff]
      %v4559 = vld [vmem:[#allocation2 + $0x68] sm:$0xff]
      %v4560 = vld [vmem:[#allocation2 + $0x70] sm:$0xff]
      %v4561 = vld [vmem:[#allocation2 + $0x78] sm:$0xff]
      %v4562 = vld [vmem:[#allocation2 + $0x80] sm:$0xff]
      %v4563 = vld [vmem:[#allocation2 + $0x88] sm:$0xff]
      %v4564 = vld [vmem:[#allocation2 + $0x90] sm:$0xff]
      %v4565 = vld [vmem:[#allocation2 + $0x98] sm:$0xff]
      %v4566 = vld [vmem:[#allocation2 + $0xa0] sm:$0xff]
      %v4567 = vld [vmem:[#allocation2 + $0xa8] sm:$0xff]
      %v4568 = vld [vmem:[#allocation2 + $0xb0] sm:$0xff]
      %v4569 = vld [vmem:[#allocation2 + $0xb8] sm:$0xff]
      %v4570 = vld [vmem:[#allocation2 + $0xc0] sm:$0xff]
      %v4571 = vld [vmem:[#allocation2 + $0xc8] sm:$0xff]
      %v4572 = vld [vmem:[#allocation2 + $0xd0] sm:$0xff]
      %v4573 = vld [vmem:[#allocation2 + $0xd8] sm:$0xff]
      %v4574 = vld [vmem:[#allocation2 + $0xe0] sm:$0xff]
      %v4575 = vld [vmem:[#allocation2 + $0xe8] sm:$0xff]
      %v4576 = vld [vmem:[#allocation2 + $0xf0] sm:$0xff]
      %v4577 = vld [vmem:[#allocation2 + $0xf8] sm:$0xff]
      %v4578 = vld [vmem:[#allocation2 + $0x100] sm:$0xff]
      %v4579 = vld [vmem:[#allocation2 + $0x108] sm:$0xff]
      %v4580 = vld [vmem:[#allocation2 + $0x110] sm:$0xff]
      %v4581 = vld [vmem:[#allocation2 + $0x118] sm:$0xff]
      %v4582 = vadd.f32 %v4546, %v4457
      %v4583 = vadd.f32 %v4547, %v4459
      %v4584 = vadd.f32 %v4548, %v4462
      %v4585 = vadd.f32 %v4549, %v4464
      %v4586 = vadd.f32 %v4550, %v4467
      %v4587 = vadd.f32 %v4551, %v4469
      %v4588 = vadd.f32 %v4552, %v4472
      %v4589 = vadd.f32 %v4553, %v4474
      %v4590 = vadd.f32 %v4554, %v4477
      %v4591 = vadd.f32 %v4555, %v4479
      %v4592 = vadd.f32 %v4556, %v4482
      %v4593 = vadd.f32 %v4557, %v4484
      %v4594 = vadd.f32 %v4558, %v4487
      %v4595 = vadd.f32 %v4559, %v4489
      %v4596 = vadd.f32 %v4560, %v4492
      %v4597 = vadd.f32 %v4561, %v4494
      %v4598 = vadd.f32 %v4562, %v4497
      %v4599 = vadd.f32 %v4563, %v4499
      %v4600 = vadd.f32 %v4564, %v4502
      %v4601 = vadd.f32 %v4565, %v4504
      %v4602 = vadd.f32 %v4566, %v4507
      %v4603 = vadd.f32 %v4567, %v4509
      %v4604 = vadd.f32 %v4568, %v4512
      %v4605 = vadd.f32 %v4569, %v4514
      %v4606 = vadd.f32 %v4570, %v4517
      %v4607 = vadd.f32 %v4571, %v4519
      %v4608 = vadd.f32 %v4572, %v4522
      %v4609 = vadd.f32 %v4573, %v4524
      %v4610 = vadd.f32 %v4574, %v4527
      %v4611 = vadd.f32 %v4575, %v4529
      %v4612 = vadd.f32 %v4576, %v4532
      %v4613 = vadd.f32 %v4577, %v4534
      %v4614 = vadd.f32 %v4578, %v4537
      %v4615 = vadd.f32 %v4579, %v4539
      %v4616 = vadd.f32 %v4580, %v4542
      %v4617 = vadd.f32 %v4581, %v4544
      %4618 = vst [vmem:[#allocation2] sm:$0xff] %v4582
      %4619 = vst [vmem:[#allocation2 + $0x8] sm:$0xff] %v4583
      %4620 = vst [vmem:[#allocation2 + $0x10] sm:$0xff] %v4584
      %4621 = vst [vmem:[#allocation2 + $0x18] sm:$0xff] %v4585
      %4622 = vst [vmem:[#allocation2 + $0x20] sm:$0xff] %v4586
      %4623 = vst [vmem:[#allocation2 + $0x28] sm:$0xff] %v4587
      %4624 = vst [vmem:[#allocation2 + $0x30] sm:$0xff] %v4588
      %4625 = vst [vmem:[#allocation2 + $0x38] sm:$0xff] %v4589
      %4626 = vst [vmem:[#allocation2 + $0x40] sm:$0xff] %v4590
      %4627 = vst [vmem:[#allocation2 + $0x48] sm:$0xff] %v4591
      %4628 = vst [vmem:[#allocation2 + $0x50] sm:$0xff] %v4592
      %4629 = vst [vmem:[#allocation2 + $0x58] sm:$0xff] %v4593
      %4630 = vst [vmem:[#allocation2 + $0x60] sm:$0xff] %v4594
      %4631 = vst [vmem:[#allocation2 + $0x68] sm:$0xff] %v4595
      %4632 = vst [vmem:[#allocation2 + $0x70] sm:$0xff] %v4596
      %4633 = vst [vmem:[#allocation2 + $0x78] sm:$0xff] %v4597
      %4634 = vst [vmem:[#allocation2 + $0x80] sm:$0xff] %v4598
      %4635 = vst [vmem:[#allocation2 + $0x88] sm:$0xff] %v4599
      %4636 = vst [vmem:[#allocation2 + $0x90] sm:$0xff] %v4600
      %4637 = vst [vmem:[#allocation2 + $0x98] sm:$0xff] %v4601
      %4638 = vst [vmem:[#allocation2 + $0xa0] sm:$0xff] %v4602
      %4639 = vst [vmem:[#allocation2 + $0xa8] sm:$0xff] %v4603
      %4640 = vst [vmem:[#allocation2 + $0xb0] sm:$0xff] %v4604
      %4641 = vst [vmem:[#allocation2 + $0xb8] sm:$0xff] %v4605
      %4642 = vst [vmem:[#allocation2 + $0xc0] sm:$0xff] %v4606
      %4643 = vst [vmem:[#allocation2 + $0xc8] sm:$0xff] %v4607
      %4644 = vst [vmem:[#allocation2 + $0xd0] sm:$0xff] %v4608
      %4645 = vst [vmem:[#allocation2 + $0xd8] sm:$0xff] %v4609
      %4646 = vst [vmem:[#allocation2 + $0xe0] sm:$0xff] %v4610
      %4647 = vst [vmem:[#allocation2 + $0xe8] sm:$0xff] %v4611
      %4648 = vst [vmem:[#allocation2 + $0xf0] sm:$0xff] %v4612
      %4649 = vst [vmem:[#allocation2 + $0xf8] sm:$0xff] %v4613
      %4650 = vst [vmem:[#allocation2 + $0x100] sm:$0xff] %v4614
      %4651 = vst [vmem:[#allocation2 + $0x108] sm:$0xff] %v4615
      %4652 = vst [vmem:[#allocation2 + $0x110] sm:$0xff] %v4616
      %4653 = vst [vmem:[#allocation2 + $0x118] sm:$0xff] %v4617
      %v4654 = vld [vmem:[#allocation2] sm:$0xff]
      %v4655 = vld [vmem:[#allocation2 + $0x8] sm:$0xff]
      %v4656 = vld [vmem:[#allocation2 + $0x10] sm:$0xff]
      %v4657 = vld [vmem:[#allocation2 + $0x18] sm:$0xff]
      %v4658 = vld [vmem:[#allocation2 + $0x20] sm:$0xff]
      %v4659 = vld [vmem:[#allocation2 + $0x28] sm:$0xff]
      %v4660 = vld [vmem:[#allocation2 + $0x30] sm:$0xff]
      %v4661 = vld [vmem:[#allocation2 + $0x38] sm:$0xff]
      %v4662 = vld [vmem:[#allocation2 + $0x40] sm:$0xff]
      %v4663 = vld [vmem:[#allocation2 + $0x48] sm:$0xff]
      %v4664 = vld [vmem:[#allocation2 + $0x50] sm:$0xff]
      %v4665 = vld [vmem:[#allocation2 + $0x58] sm:$0xff]
      %v4666 = vld [vmem:[#allocation2 + $0x60] sm:$0xff]
      %v4667 = vld [vmem:[#allocation2 + $0x68] sm:$0xff]
      %v4668 = vld [vmem:[#allocation2 + $0x70] sm:$0xff]
      %v4669 = vld [vmem:[#allocation2 + $0x78] sm:$0xff]
      %v4670 = vld [vmem:[#allocation2 + $0x80] sm:$0xff]
      %v4671 = vld [vmem:[#allocation2 + $0x88] sm:$0xff]
      %v4672 = vld [vmem:[#allocation2 + $0x90] sm:$0xff]
      %v4673 = vld [vmem:[#allocation2 + $0x98] sm:$0xff]
      %v4674 = vld [vmem:[#allocation2 + $0xa0] sm:$0xff]
      %v4675 = vld [vmem:[#allocation2 + $0xa8] sm:$0xff]
      %v4676 = vld [vmem:[#allocation2 + $0xb0] sm:$0xff]
      %v4677 = vld [vmem:[#allocation2 + $0xb8] sm:$0xff]
      %v4678 = vld [vmem:[#allocation2 + $0xc0] sm:$0xff]
      %v4679 = vld [vmem:[#allocation2 + $0xc8] sm:$0xff]
      %v4680 = vld [vmem:[#allocation2 + $0xd0] sm:$0xff]
      %v4681 = vld [vmem:[#allocation2 + $0xd8] sm:$0xff]
      %v4682 = vld [vmem:[#allocation2 + $0xe0] sm:$0xff]
      %v4683 = vld [vmem:[#allocation2 + $0xe8] sm:$0xff]
      %v4684 = vld [vmem:[#allocation2 + $0xf0] sm:$0xff]
      %v4685 = vld [vmem:[#allocation2 + $0xf8] sm:$0xff]
      %v4686 = vld [vmem:[#allocation2 + $0x100] sm:$0xff]
      %v4687 = vld [vmem:[#allocation2 + $0x108] sm:$0xff]
      %v4688 = vld [vmem:[#allocation2 + $0x110] sm:$0xff]
      %v4689 = vld [vmem:[#allocation2 + $0x118] sm:$0xff]
      %v4690 = vld [vmem:[%s3] sm:$0x1]
      %v4692 = vperm.slane %v4690, 0
      %v4694 = vadd.f32 %v4654, %v4692
      %v4695 = vadd.f32 %v4655, %v4692
      %v4696 = vadd.f32 %v4656, %v4692
      %v4697 = vadd.f32 %v4657, %v4692
      %v4698 = vadd.f32 %v4658, %v4692
      %v4699 = vadd.f32 %v4659, %v4692
      %v4700 = vadd.f32 %v4660, %v4692
      %v4701 = vadd.f32 %v4661, %v4692
      %v4702 = vadd.f32 %v4662, %v4692
      %v4703 = vadd.f32 %v4663, %v4692
      %v4704 = vadd.f32 %v4664, %v4692
      %v4705 = vadd.f32 %v4665, %v4692
      %v4706 = vadd.f32 %v4666, %v4692
      %v4707 = vadd.f32 %v4667, %v4692
      %v4708 = vadd.f32 %v4668, %v4692
      %v4709 = vadd.f32 %v4669, %v4692
      %v4710 = vadd.f32 %v4670, %v4692
      %v4711 = vadd.f32 %v4671, %v4692
      %v4712 = vadd.f32 %v4672, %v4692
      %v4713 = vadd.f32 %v4673, %v4692
      %v4714 = vadd.f32 %v4674, %v4692
      %v4715 = vadd.f32 %v4675, %v4692
      %v4716 = vadd.f32 %v4676, %v4692
      %v4717 = vadd.f32 %v4677, %v4692
      %v4718 = vadd.f32 %v4678, %v4692
      %v4719 = vadd.f32 %v4679, %v4692
      %v4720 = vadd.f32 %v4680, %v4692
      %v4721 = vadd.f32 %v4681, %v4692
      %v4722 = vadd.f32 %v4682, %v4692
      %v4723 = vadd.f32 %v4683, %v4692
      %v4724 = vadd.f32 %v4684, %v4692
      %v4725 = vadd.f32 %v4685, %v4692
      %v4726 = vadd.f32 %v4686, %v4692
      %v4727 = vadd.f32 %v4687, %v4692
      %v4728 = vadd.f32 %v4688, %v4692
      %v4729 = vadd.f32 %v4689, %v4692
      %v4730 = vld [vmem:[%s266 + $0x8] sm:$0xe]
      %v4731 = vld [vmem:[%s266 + $0xc] sm:$0xf]
      %v4732 = vld [vmem:[%s266 + $0x10] sm:$0xf]
      %v4733 = vld [vmem:[%s266 + $0x14] sm:$0xf]
      %v4734 = vld [vmem:[%s266 + $0x18] sm:$0xf]
      %v4735 = vld [vmem:[%s266 + $0x1c] sm:$0xf]
      %v4736 = vld [vmem:[%s266 + $0x20] sm:$0xf]
      %v4737 = vld [vmem:[%s266 + $0x24] sm:$0xf]
      %v4738 = vld [vmem:[%s266 + $0x28] sm:$0xf]
      %v4739 = vld [vmem:[%s266 + $0x2c] sm:$0xf]
      %v4740 = vld [vmem:[%s266 + $0x30] sm:$0xf]
      %v4741 = vld [vmem:[%s266 + $0x34] sm:$0xf]
      %v4742 = vld [vmem:[%s266 + $0x38] sm:$0xf]
      %v4743 = vld [vmem:[%s266 + $0x3c] sm:$0xf]
      %v4744 = vld [vmem:[%s266 + $0x40] sm:$0xf]
      %v4745 = vld [vmem:[%s266 + $0x44] sm:$0xf]
      %v4746 = vld [vmem:[%s266 + $0x48] sm:$0xf]
      %v4747 = vld [vmem:[%s266 + $0x4c] sm:$0xf]
      %v4748 = vld [vmem:[%s266 + $0x50] sm:$0xf]
      %v4749 = vld [vmem:[%s266 + $0x54] sm:$0xf]
      %v4750 = vld [vmem:[%s266 + $0x58] sm:$0xf]
      %v4751 = vld [vmem:[%s266 + $0x5c] sm:$0xf]
      %v4752 = vld [vmem:[%s266 + $0x60] sm:$0xf]
      %v4753 = vld [vmem:[%s266 + $0x64] sm:$0xf]
      %v4754 = vld [vmem:[%s266 + $0x68] sm:$0xf]
      %v4755 = vld [vmem:[%s266 + $0x6c] sm:$0xf]
      %v4756 = vld [vmem:[%s266 + $0x70] sm:$0xf]
      %v4757 = vld [vmem:[%s266 + $0x74] sm:$0xf]
      %v4758 = vld [vmem:[%s266 + $0x78] sm:$0xf]
      %v4759 = vld [vmem:[%s266 + $0x7c] sm:$0xf]
      %v4760 = vld [vmem:[%s266 + $0x80] sm:$0xf]
      %v4761 = vld [vmem:[%s266 + $0x84] sm:$0xf]
      %v4762 = vld [vmem:[%s266 + $0x88] sm:$0xf]
      %v4763 = vld [vmem:[%s266 + $0x8c] sm:$0xf]
      %v4764 = vld [vmem:[%s266 + $0x90] sm:$0xf]
      %v4765 = vld [vmem:[%s266 + $0x94] sm:$0xf]
      %v4766 = vld [vmem:[%s266 + $0x98] sm:$0x3]
      %v4767 = vld [vmem:[%s4] sm:$0xf]
      %v4768 = vld [vmem:[%s4 + $0x4] sm:$0xf]
      %v4769 = vld [vmem:[%s4 + $0x8] sm:$0xf]
      %v4770 = vld [vmem:[%s4 + $0xc] sm:$0xf]
      %v4771 = vld [vmem:[%s4 + $0x10] sm:$0xf]
      %v4772 = vld [vmem:[%s4 + $0x14] sm:$0xf]
      %v4773 = vld [vmem:[%s4 + $0x18] sm:$0xf]
      %v4774 = vld [vmem:[%s4 + $0x1c] sm:$0xf]
      %v4775 = vld [vmem:[%s4 + $0x20] sm:$0xf]
      %v4776 = vld [vmem:[%s4 + $0x24] sm:$0xf]
      %v4777 = vld [vmem:[%s4 + $0x28] sm:$0xf]
      %v4778 = vld [vmem:[%s4 + $0x2c] sm:$0xf]
      %v4779 = vld [vmem:[%s4 + $0x30] sm:$0xf]
      %v4780 = vld [vmem:[%s4 + $0x34] sm:$0xf]
      %v4781 = vld [vmem:[%s4 + $0x38] sm:$0xf]
      %v4782 = vld [vmem:[%s4 + $0x3c] sm:$0xf]
      %v4783 = vld [vmem:[%s5] sm:$0x1]
      %v4785 = vperm.slane %v4783, 0
      %v4824 = vunpack.c.l.b16 %v4730
      %v4825 = vunpack.c.l.b16 %v4731
      %v4826 = vunpack.c.l.b16 %v4732
      %v4827 = vunpack.c.l.b16 %v4733
      %v4828 = vunpack.c.l.b16 %v4734
      %v4829 = vunpack.c.l.b16 %v4735
      %v4830 = vunpack.c.l.b16 %v4736
      %v4831 = vunpack.c.l.b16 %v4737
      %v4832 = vunpack.c.l.b16 %v4738
      %v4833 = vunpack.c.l.b16 %v4739
      %v4834 = vunpack.c.l.b16 %v4740
      %v4835 = vunpack.c.l.b16 %v4741
      %v4836 = vunpack.c.l.b16 %v4742
      %v4837 = vunpack.c.l.b16 %v4743
      %v4838 = vunpack.c.l.b16 %v4744
      %v4839 = vunpack.c.l.b16 %v4745
      %v4840 = vunpack.c.l.b16 %v4746
      %v4841 = vunpack.c.l.b16 %v4747
      %v4842 = vunpack.c.l.b16 %v4748
      %v4843 = vunpack.c.l.b16 %v4749
      %v4844 = vunpack.c.l.b16 %v4750
      %v4845 = vunpack.c.l.b16 %v4751
      %v4846 = vunpack.c.l.b16 %v4752
      %v4847 = vunpack.c.l.b16 %v4753
      %v4848 = vunpack.c.l.b16 %v4754
      %v4849 = vunpack.c.l.b16 %v4755
      %v4850 = vunpack.c.l.b16 %v4756
      %v4851 = vunpack.c.l.b16 %v4757
      %v4852 = vunpack.c.l.b16 %v4758
      %v4853 = vunpack.c.l.b16 %v4759
      %v4854 = vunpack.c.l.b16 %v4760
      %v4855 = vunpack.c.l.b16 %v4761
      %v4856 = vunpack.c.l.b16 %v4762
      %v4857 = vunpack.c.l.b16 %v4763
      %v4858 = vunpack.c.l.b16 %v4764
      %v4859 = vunpack.c.l.b16 %v4765
      %v4860 = vunpack.c.l.b16 %v4766
      %v4861 = vpack.c.b16 %v4825, %v4824
      %v4862 = vpack.c.b16 %v4827, %v4826
      %v4863 = vpack.c.b16 %v4829, %v4828
      %v4864 = vpack.c.b16 %v4831, %v4830
      %v4865 = vpack.c.b16 %v4833, %v4832
      %v4866 = vpack.c.b16 %v4835, %v4834
      %v4867 = vpack.c.b16 %v4837, %v4836
      %v4868 = vpack.c.b16 %v4839, %v4838
      %v4869 = vpack.c.b16 %v4841, %v4840
      %v4870 = vpack.c.b16 %v4843, %v4842
      %v4871 = vpack.c.b16 %v4845, %v4844
      %v4872 = vpack.c.b16 %v4847, %v4846
      %v4873 = vpack.c.b16 %v4849, %v4848
      %v4874 = vpack.c.b16 %v4851, %v4850
      %v4875 = vpack.c.b16 %v4853, %v4852
      %v4876 = vpack.c.b16 %v4855, %v4854
      %v4877 = vpack.c.b16 %v4857, %v4856
      %v4878 = vpack.c.b16 %v4859, %v4858
      %v4879 = vpack.c.b16 %v4860, %v4860
      %v4881 = vshrl.u32 %v4861, 16
      %v4883 = vrot.slane %v4881, 1
      %v4884 = vshll.u32 %v4861, 16
      %v4886 = vrot.slane %v4884, 2
      %v4887 = vor.u32 %v4883, %v4886
      %v4889 = vshrl.u32 %v4862, 16
      %v4891 = vrot.slane %v4889, 1
      %v4892 = vshll.u32 %v4862, 16
      %v4894 = vrot.slane %v4892, 2
      %v4895 = vor.u32 %v4891, %v4894
      %v4896 = vsel %vm2246, %v4887, %v4895
      %v4898 = vshrl.u32 %v4863, 16
      %v4900 = vrot.slane %v4898, 1
      %v4901 = vshll.u32 %v4863, 16
      %v4903 = vrot.slane %v4901, 2
      %v4904 = vor.u32 %v4900, %v4903
      %v4905 = vsel %vm2246, %v4895, %v4904
      %v4907 = vshrl.u32 %v4864, 16
      %v4909 = vrot.slane %v4907, 1
      %v4910 = vshll.u32 %v4864, 16
      %v4912 = vrot.slane %v4910, 2
      %v4913 = vor.u32 %v4909, %v4912
      %v4914 = vsel %vm2246, %v4904, %v4913
      %v4916 = vshrl.u32 %v4865, 16
      %v4918 = vrot.slane %v4916, 1
      %v4919 = vshll.u32 %v4865, 16
      %v4921 = vrot.slane %v4919, 2
      %v4922 = vor.u32 %v4918, %v4921
      %v4923 = vsel %vm2246, %v4913, %v4922
      %v4925 = vshrl.u32 %v4866, 16
      %v4927 = vrot.slane %v4925, 1
      %v4928 = vshll.u32 %v4866, 16
      %v4930 = vrot.slane %v4928, 2
      %v4931 = vor.u32 %v4927, %v4930
      %v4932 = vsel %vm2246, %v4922, %v4931
      %v4934 = vshrl.u32 %v4867, 16
      %v4936 = vrot.slane %v4934, 1
      %v4937 = vshll.u32 %v4867, 16
      %v4939 = vrot.slane %v4937, 2
      %v4940 = vor.u32 %v4936, %v4939
      %v4941 = vsel %vm2246, %v4931, %v4940
      %v4943 = vshrl.u32 %v4868, 16
      %v4945 = vrot.slane %v4943, 1
      %v4946 = vshll.u32 %v4868, 16
      %v4948 = vrot.slane %v4946, 2
      %v4949 = vor.u32 %v4945, %v4948
      %v4950 = vsel %vm2246, %v4940, %v4949
      %v4952 = vshrl.u32 %v4869, 16
      %v4954 = vrot.slane %v4952, 1
      %v4955 = vshll.u32 %v4869, 16
      %v4957 = vrot.slane %v4955, 2
      %v4958 = vor.u32 %v4954, %v4957
      %v4959 = vsel %vm2246, %v4949, %v4958
      %v4961 = vshrl.u32 %v4870, 16
      %v4963 = vrot.slane %v4961, 1
      %v4964 = vshll.u32 %v4870, 16
      %v4966 = vrot.slane %v4964, 2
      %v4967 = vor.u32 %v4963, %v4966
      %v4968 = vsel %vm2246, %v4958, %v4967
      %v4970 = vshrl.u32 %v4871, 16
      %v4972 = vrot.slane %v4970, 1
      %v4973 = vshll.u32 %v4871, 16
      %v4975 = vrot.slane %v4973, 2
      %v4976 = vor.u32 %v4972, %v4975
      %v4977 = vsel %vm2246, %v4967, %v4976
      %v4979 = vshrl.u32 %v4872, 16
      %v4981 = vrot.slane %v4979, 1
      %v4982 = vshll.u32 %v4872, 16
      %v4984 = vrot.slane %v4982, 2
      %v4985 = vor.u32 %v4981, %v4984
      %v4986 = vsel %vm2246, %v4976, %v4985
      %v4988 = vshrl.u32 %v4873, 16
      %v4990 = vrot.slane %v4988, 1
      %v4991 = vshll.u32 %v4873, 16
      %v4993 = vrot.slane %v4991, 2
      %v4994 = vor.u32 %v4990, %v4993
      %v4995 = vsel %vm2246, %v4985, %v4994
      %v4997 = vshrl.u32 %v4874, 16
      %v4999 = vrot.slane %v4997, 1
      %v5000 = vshll.u32 %v4874, 16
      %v5002 = vrot.slane %v5000, 2
      %v5003 = vor.u32 %v4999, %v5002
      %v5004 = vsel %vm2246, %v4994, %v5003
      %v5006 = vshrl.u32 %v4875, 16
      %v5008 = vrot.slane %v5006, 1
      %v5009 = vshll.u32 %v4875, 16
      %v5011 = vrot.slane %v5009, 2
      %v5012 = vor.u32 %v5008, %v5011
      %v5013 = vsel %vm2246, %v5003, %v5012
      %v5015 = vshrl.u32 %v4876, 16
      %v5017 = vrot.slane %v5015, 1
      %v5018 = vshll.u32 %v4876, 16
      %v5020 = vrot.slane %v5018, 2
      %v5021 = vor.u32 %v5017, %v5020
      %v5022 = vsel %vm2246, %v5012, %v5021
      %v5024 = vshrl.u32 %v4877, 16
      %v5026 = vrot.slane %v5024, 1
      %v5027 = vshll.u32 %v4877, 16
      %v5029 = vrot.slane %v5027, 2
      %v5030 = vor.u32 %v5026, %v5029
      %v5031 = vsel %vm2246, %v5021, %v5030
      %v5033 = vshrl.u32 %v4878, 16
      %v5035 = vrot.slane %v5033, 1
      %v5036 = vshll.u32 %v4878, 16
      %v5038 = vrot.slane %v5036, 2
      %v5039 = vor.u32 %v5035, %v5038
      %v5040 = vsel %vm2246, %v5030, %v5039
      %v5042 = vshrl.u32 %v4879, 16
      %v5044 = vrot.slane %v5042, 1
      %v5045 = vshll.u32 %v4879, 16
      %v5047 = vrot.slane %v5045, 2
      %v5048 = vor.u32 %v5044, %v5047
      %v5049 = vsel %vm2246, %v5039, %v5048
      %v5084 = vunpack.c.l.b16 %v4767
      %v5085 = vunpack.c.l.b16 %v4768
      %v5086 = vunpack.c.l.b16 %v4769
      %v5087 = vunpack.c.l.b16 %v4770
      %v5088 = vunpack.c.l.b16 %v4771
      %v5089 = vunpack.c.l.b16 %v4772
      %v5090 = vunpack.c.l.b16 %v4773
      %v5091 = vunpack.c.l.b16 %v4774
      %v5092 = vunpack.c.l.b16 %v4775
      %v5093 = vunpack.c.l.b16 %v4776
      %v5094 = vunpack.c.l.b16 %v4777
      %v5095 = vunpack.c.l.b16 %v4778
      %v5096 = vunpack.c.l.b16 %v4779
      %v5097 = vunpack.c.l.b16 %v4780
      %v5098 = vunpack.c.l.b16 %v4781
      %v5099 = vunpack.c.l.b16 %v4782
      %v5100 = vpack.c.b16 %v5085, %v5084
      %v5101 = vpack.c.b16 %v5087, %v5086
      %v5102 = vpack.c.b16 %v5089, %v5088
      %v5103 = vpack.c.b16 %v5091, %v5090
      %v5104 = vpack.c.b16 %v5093, %v5092
      %v5105 = vpack.c.b16 %v5095, %v5094
      %v5106 = vpack.c.b16 %v5097, %v5096
      %v5107 = vpack.c.b16 %v5099, %v5098
      %5116 = vmatpush.bf16.msra.mxu0 %v5107
      %5117 = vmatpush.bf16.msra.mxu0 %v5106
      %5118 = vmatpush.bf16.msra.mxu0 %v5105
      %5119 = vmatpush.bf16.msra.mxu0 %v5104
      %5120 = vmatpush.bf16.msra.mxu0 %v5103
      %5121 = vmatpush.bf16.msra.mxu0 %v5102
      %5122 = vmatpush.bf16.msra.mxu0 %v5101
      %5123 = vmatpush.bf16.msra.mxu0 %v5100
      %5124 = vmatmul.bf16.gmra.mxu0 %v4896
      %v5125 = vpop.f32.mrf.mxu0
      %v5126 = vadd.f32 %v4785, %v5125
      %v5127 = vpop.f32.mrf.mxu0
      %v5128 = vadd.f32 %v4785, %v5127
      %5129 = vmatmul.bf16.gmra.mxu0 %v4905
      %v5130 = vpop.f32.mrf.mxu0
      %v5131 = vadd.f32 %v4785, %v5130
      %v5132 = vpop.f32.mrf.mxu0
      %v5133 = vadd.f32 %v4785, %v5132
      %5134 = vmatmul.bf16.gmra.mxu0 %v4914
      %v5135 = vpop.f32.mrf.mxu0
      %v5136 = vadd.f32 %v4785, %v5135
      %v5137 = vpop.f32.mrf.mxu0
      %v5138 = vadd.f32 %v4785, %v5137
      %5139 = vmatmul.bf16.gmra.mxu0 %v4923
      %v5140 = vpop.f32.mrf.mxu0
      %v5141 = vadd.f32 %v4785, %v5140
      %v5142 = vpop.f32.mrf.mxu0
      %v5143 = vadd.f32 %v4785, %v5142
      %5144 = vmatmul.bf16.gmra.mxu0 %v4932
      %v5145 = vpop.f32.mrf.mxu0
      %v5146 = vadd.f32 %v4785, %v5145
      %v5147 = vpop.f32.mrf.mxu0
      %v5148 = vadd.f32 %v4785, %v5147
      %5149 = vmatmul.bf16.gmra.mxu0 %v4941
      %v5150 = vpop.f32.mrf.mxu0
      %v5151 = vadd.f32 %v4785, %v5150
      %v5152 = vpop.f32.mrf.mxu0
      %v5153 = vadd.f32 %v4785, %v5152
      %5154 = vmatmul.bf16.gmra.mxu0 %v4950
      %v5155 = vpop.f32.mrf.mxu0
      %v5156 = vadd.f32 %v4785, %v5155
      %v5157 = vpop.f32.mrf.mxu0
      %v5158 = vadd.f32 %v4785, %v5157
      %5159 = vmatmul.bf16.gmra.mxu0 %v4959
      %v5160 = vpop.f32.mrf.mxu0
      %v5161 = vadd.f32 %v4785, %v5160
      %v5162 = vpop.f32.mrf.mxu0
      %v5163 = vadd.f32 %v4785, %v5162
      %5164 = vmatmul.bf16.gmra.mxu0 %v4968
      %v5165 = vpop.f32.mrf.mxu0
      %v5166 = vadd.f32 %v4785, %v5165
      %v5167 = vpop.f32.mrf.mxu0
      %v5168 = vadd.f32 %v4785, %v5167
      %5169 = vmatmul.bf16.gmra.mxu0 %v4977
      %v5170 = vpop.f32.mrf.mxu0
      %v5171 = vadd.f32 %v4785, %v5170
      %v5172 = vpop.f32.mrf.mxu0
      %v5173 = vadd.f32 %v4785, %v5172
      %5174 = vmatmul.bf16.gmra.mxu0 %v4986
      %v5175 = vpop.f32.mrf.mxu0
      %v5176 = vadd.f32 %v4785, %v5175
      %v5177 = vpop.f32.mrf.mxu0
      %v5178 = vadd.f32 %v4785, %v5177
      %5179 = vmatmul.bf16.gmra.mxu0 %v4995
      %v5180 = vpop.f32.mrf.mxu0
      %v5181 = vadd.f32 %v4785, %v5180
      %v5182 = vpop.f32.mrf.mxu0
      %v5183 = vadd.f32 %v4785, %v5182
      %5184 = vmatmul.bf16.gmra.mxu0 %v5004
      %v5185 = vpop.f32.mrf.mxu0
      %v5186 = vadd.f32 %v4785, %v5185
      %v5187 = vpop.f32.mrf.mxu0
      %v5188 = vadd.f32 %v4785, %v5187
      %5189 = vmatmul.bf16.gmra.mxu0 %v5013
      %v5190 = vpop.f32.mrf.mxu0
      %v5191 = vadd.f32 %v4785, %v5190
      %v5192 = vpop.f32.mrf.mxu0
      %v5193 = vadd.f32 %v4785, %v5192
      %5194 = vmatmul.bf16.gmra.mxu0 %v5022
      %v5195 = vpop.f32.mrf.mxu0
      %v5196 = vadd.f32 %v4785, %v5195
      %v5197 = vpop.f32.mrf.mxu0
      %v5198 = vadd.f32 %v4785, %v5197
      %5199 = vmatmul.bf16.gmra.mxu0 %v5031
      %v5200 = vpop.f32.mrf.mxu0
      %v5201 = vadd.f32 %v4785, %v5200
      %v5202 = vpop.f32.mrf.mxu0
      %v5203 = vadd.f32 %v4785, %v5202
      %5204 = vmatmul.bf16.gmra.mxu0 %v5040
      %v5205 = vpop.f32.mrf.mxu0
      %v5206 = vadd.f32 %v4785, %v5205
      %v5207 = vpop.f32.mrf.mxu0
      %v5208 = vadd.f32 %v4785, %v5207
      %5209 = vmatmul.bf16.gmra.mxu0 %v5049
      %v5210 = vpop.f32.mrf.mxu0
      %v5211 = vadd.f32 %v4785, %v5210
      %v5212 = vpop.f32.mrf.mxu0
      %v5213 = vadd.f32 %v4785, %v5212
      %5214 = vdwg.mxu0
      %v5215 = vadd.f32 %v4694, %v5126
      %v5216 = vadd.f32 %v4695, %v5128
      %v5217 = vadd.f32 %v4696, %v5131
      %v5218 = vadd.f32 %v4697, %v5133
      %v5219 = vadd.f32 %v4698, %v5136
      %v5220 = vadd.f32 %v4699, %v5138
      %v5221 = vadd.f32 %v4700, %v5141
      %v5222 = vadd.f32 %v4701, %v5143
      %v5223 = vadd.f32 %v4702, %v5146
      %v5224 = vadd.f32 %v4703, %v5148
      %v5225 = vadd.f32 %v4704, %v5151
      %v5226 = vadd.f32 %v4705, %v5153
      %v5227 = vadd.f32 %v4706, %v5156
      %v5228 = vadd.f32 %v4707, %v5158
      %v5229 = vadd.f32 %v4708, %v5161
      %v5230 = vadd.f32 %v4709, %v5163
      %v5231 = vadd.f32 %v4710, %v5166
      %v5232 = vadd.f32 %v4711, %v5168
      %v5233 = vadd.f32 %v4712, %v5171
      %v5234 = vadd.f32 %v4713, %v5173
      %v5235 = vadd.f32 %v4714, %v5176
      %v5236 = vadd.f32 %v4715, %v5178
      %v5237 = vadd.f32 %v4716, %v5181
      %v5238 = vadd.f32 %v4717, %v5183
      %v5239 = vadd.f32 %v4718, %v5186
      %v5240 = vadd.f32 %v4719, %v5188
      %v5241 = vadd.f32 %v4720, %v5191
      %v5242 = vadd.f32 %v4721, %v5193
      %v5243 = vadd.f32 %v4722, %v5196
      %v5244 = vadd.f32 %v4723, %v5198
      %v5245 = vadd.f32 %v4724, %v5201
      %v5246 = vadd.f32 %v4725, %v5203
      %v5247 = vadd.f32 %v4726, %v5206
      %v5248 = vadd.f32 %v4727, %v5208
      %v5249 = vadd.f32 %v4728, %v5211
      %v5250 = vadd.f32 %v4729, %v5213
      %v5251 = vmax.f32 %v5215, 0.0
      %v5252 = vmax.f32 %v5216, 0.0
      %v5253 = vmax.f32 %v5217, 0.0
      %v5254 = vmax.f32 %v5218, 0.0
      %v5255 = vmax.f32 %v5219, 0.0
      %v5256 = vmax.f32 %v5220, 0.0
      %v5257 = vmax.f32 %v5221, 0.0
      %v5258 = vmax.f32 %v5222, 0.0
      %v5259 = vmax.f32 %v5223, 0.0
      %v5260 = vmax.f32 %v5224, 0.0
      %v5261 = vmax.f32 %v5225, 0.0
      %v5262 = vmax.f32 %v5226, 0.0
      %v5263 = vmax.f32 %v5227, 0.0
      %v5264 = vmax.f32 %v5228, 0.0
      %v5265 = vmax.f32 %v5229, 0.0
      %v5266 = vmax.f32 %v5230, 0.0
      %v5267 = vmax.f32 %v5231, 0.0
      %v5268 = vmax.f32 %v5232, 0.0
      %v5269 = vmax.f32 %v5233, 0.0
      %v5270 = vmax.f32 %v5234, 0.0
      %v5271 = vmax.f32 %v5235, 0.0
      %v5272 = vmax.f32 %v5236, 0.0
      %v5273 = vmax.f32 %v5237, 0.0
      %v5274 = vmax.f32 %v5238, 0.0
      %v5275 = vmax.f32 %v5239, 0.0
      %v5276 = vmax.f32 %v5240, 0.0
      %v5277 = vmax.f32 %v5241, 0.0
      %v5278 = vmax.f32 %v5242, 0.0
      %v5279 = vmax.f32 %v5243, 0.0
      %v5280 = vmax.f32 %v5244, 0.0
      %v5281 = vmax.f32 %v5245, 0.0
      %v5282 = vmax.f32 %v5246, 0.0
      %v5283 = vmax.f32 %v5247, 0.0
      %v5284 = vmax.f32 %v5248, 0.0
      %v5285 = vmax.f32 %v5249, 0.0
      %v5286 = vmax.f32 %v5250, 0.0
      %5287 = vst [vmem:[%s271] sm:$0xff] %v5251
      %5288 = vst [vmem:[%s271 + $0x8] sm:$0xff] %v5252
      %5289 = vst [vmem:[%s271 + $0x10] sm:$0xff] %v5253
      %5290 = vst [vmem:[%s271 + $0x18] sm:$0xff] %v5254
      %5291 = vst [vmem:[%s271 + $0x20] sm:$0xff] %v5255
      %5292 = vst [vmem:[%s271 + $0x28] sm:$0xff] %v5256
      %5293 = vst [vmem:[%s271 + $0x30] sm:$0xff] %v5257
      %5294 = vst [vmem:[%s271 + $0x38] sm:$0xff] %v5258
      %5295 = vst [vmem:[%s271 + $0x40] sm:$0xff] %v5259
      %5296 = vst [vmem:[%s271 + $0x48] sm:$0xff] %v5260
      %5297 = vst [vmem:[%s271 + $0x50] sm:$0xff] %v5261
      %5298 = vst [vmem:[%s271 + $0x58] sm:$0xff] %v5262
      %5299 = vst [vmem:[%s271 + $0x60] sm:$0xff] %v5263
      %5300 = vst [vmem:[%s271 + $0x68] sm:$0xff] %v5264
      %5301 = vst [vmem:[%s271 + $0x70] sm:$0xff] %v5265
      %5302 = vst [vmem:[%s271 + $0x78] sm:$0xff] %v5266
      %5303 = vst [vmem:[%s271 + $0x80] sm:$0xff] %v5267
      %5304 = vst [vmem:[%s271 + $0x88] sm:$0xff] %v5268
      %5305 = vst [vmem:[%s271 + $0x90] sm:$0xff] %v5269
      %5306 = vst [vmem:[%s271 + $0x98] sm:$0xff] %v5270
      %5307 = vst [vmem:[%s271 + $0xa0] sm:$0xff] %v5271
      %5308 = vst [vmem:[%s271 + $0xa8] sm:$0xff] %v5272
      %5309 = vst [vmem:[%s271 + $0xb0] sm:$0xff] %v5273
      %5310 = vst [vmem:[%s271 + $0xb8] sm:$0xff] %v5274
      %5311 = vst [vmem:[%s271 + $0xc0] sm:$0xff] %v5275
      %5312 = vst [vmem:[%s271 + $0xc8] sm:$0xff] %v5276
      %5313 = vst [vmem:[%s271 + $0xd0] sm:$0xff] %v5277
      %5314 = vst [vmem:[%s271 + $0xd8] sm:$0xff] %v5278
      %5315 = vst [vmem:[%s271 + $0xe0] sm:$0xff] %v5279
      %5316 = vst [vmem:[%s271 + $0xe8] sm:$0xff] %v5280
      %5317 = vst [vmem:[%s271 + $0xf0] sm:$0xff] %v5281
      %5318 = vst [vmem:[%s271 + $0xf8] sm:$0xff] %v5282
      %5319 = vst [vmem:[%s271 + $0x100] sm:$0xff] %v5283
      %5320 = vst [vmem:[%s271 + $0x108] sm:$0xff] %v5284
      %5321 = vst [vmem:[%s271 + $0x110] sm:$0xff] %v5285
      %5322 = vst [vmem:[%s271 + $0x118] sm:$0xff] %v5286
      %p5323 = scmp.lt.s32.totalorder %s17, 1
      %s5324 = scalar_select %p5323, %s17, 1
      %s5325 = smul.addr %s5324, 36
      %s5326 = smul.addr %s5325, 8
      %s5327 = scalar_lea.vmem %s6, %s5326
      // Predicated region
      $region45: #{basic_block_forward.3} parent=43 // pred_check
        %p5328 = pneg %p171
      $region46: #{basic_block_forward.3} parent=43 // pred_check_branch
        %5330 = sbr.rel (%p5328) target = $region48
      $region47: #{basic_block_forward.3} parent=43 // pred_region
        _
      $region48: #{basic_block_forward.3} parent=43 // pred_fallthru
        _
    $region44: #{basic_block_forward.3} parent=5 // pred_fallthru
      _
    %p5331 = scmp.le.s32.totalorder 2, %s12
    // Predicated region
    $region49: #{basic_block_forward.3} parent=5 // pred_check
      %p5332 = pneg %p5331
    $region50: #{basic_block_forward.3} parent=5 // pred_check_branch
      %5334 = sbr.rel (%p5332) target = $region52
    $region51: #{basic_block_forward.3} parent=5 // pred_region
      %s5335 = ssub.s32 %s12, 2
      // Predicated region
      $region53: #{basic_block_forward.3} parent=51 // pred_check
        %p5336 = pneg %p177
      $region54: #{basic_block_forward.3} parent=51 // pred_check_branch
        %5338 = sbr.rel (%p5336) target = $region56
      $region55: #{basic_block_forward.3} parent=51 // pred_region
        %p5339 = scmp.lt.s32.totalorder %s18, 1
        %s5340 = scalar_select %p5339, %s18, 1
        %s5341 = smul.addr %s5340, 36
        %s5342 = smul.addr %s5341, 8
        %s5343 = scalar_lea.vmem %s6, %s5342
      $region56: #{basic_block_forward.3} parent=51 // pred_fallthru
        _
    $region52: #{basic_block_forward.3} parent=5 // pred_fallthru
      _
  $region6: #{basic_block_forward.3} parent=0 // loop_footer
    %s16 = sadd.s32 1, %s12
  $region7: #{basic_block_forward.3} parent=0 // loop_footer_branch
    %11 = sbr.rel target = $region3
  $region8: #{basic_block_forward.3} parent=0 // loop_exit
    _

// kernel: basic_block_forward.2
$region0: #{basic_block_forward.2}
  #allocation0 [shape = 'u32[]', space=smem, size = 0x4, offset = 0x4, fixed_abs, tag = 'smem constant byte address 0x4 - core index']
  #allocation1 [shape = 'u32[72,128]{1,0:T(1,128)}', space=vmem, size = 0x9000, scoped, tag = 'internal scratch']
  #allocation2 [shape = 'f32[288,128]{1,0:T(8,128)}', space=vmem, size = 0x24000, scoped, tag = 'scratch operand']
  %s0 = inlined_call_operand.vmem [shape: bf16[2,342,128], index: 0, kind: input, shape index: {}]
  %s1 = inlined_call_operand.vmem [shape: bf16[9,128,128], index: 1, kind: input, shape index: {}]
  %s2 = inlined_call_operand.vmem [shape: f32[1,128], index: 2, kind: input, shape index: {}]
  %s3 = inlined_call_operand.vmem [shape: bf16[2,342,128], index: 3, kind: output, shape index: {}]
  %s4 = sld [smem:[#allocation0]]
  $region45: #{basic_block_forward.2} parent=0
    _
  %s6 = ssub.s32 1, %s4
  %s7 = scalar_select 0, %s6, %s4
  loop: start=0, step=1, limit=4
  $region2: #{basic_block_forward.2} parent=0 // loop_pre_header
    _
  $region3: #{basic_block_forward.2} parent=0 // loop_header
    %s9 = sphi 0, %s13
    %p10 = scmp.ge.s32.totalorder %s9, 4
    %s19 = sphi 0, %s21
    %s22 = sphi 0, %s19
    %s23 = sphi 0, %s22
    %s39 = sphi 0, %s23
    %s43 = sphi 0, %s43
    %s45 = sphi 0, %s43
    %s46 = sphi 0, %s45
    %s60 = sphi 0, %s46
    %s64 = sphi 0, %s64
    %s66 = sphi 0, %s64
    %s67 = sphi 0, %s66
    %s81 = sphi 0, %s67
    %s87 = sphi 0, %s89
    %s90 = sphi 0, %s87
    %s91 = sphi 0, %s90
    %s107 = sphi 0, %s91
  $region4: #{basic_block_forward.2} parent=0 // loop_header_branch
    %12 = sbr.rel (%p10) target = $region8
  $region5: #{basic_block_forward.2} parent=0 // loop_body
    %s14 = ssub.s32 %s9, 1
    %s15 = ssub.s32 %s9, 2
    %s16 = sadd.s32 %s9, 1
    %s17 = ssub.s32 %s9, %s16
    %p18 = scmp.eq.s32.totalorder %s17, 0
    %s20 = sadd.s32 %s19, 1
    %s21 = scalar_select %p18, %s19, %s20
    %p24 = pneg %p18
    %p25 = scmp.eq.s32.totalorder %s9, 1
    %p26 = por %p24, %p25
    %p27 = scmp.ne.s32.totalorder %s19, %s22
    %p28 = scmp.eq.s32.totalorder %s9, 0
    %p29 = por %p27, %p28
    %p30 = scmp.ne.s32.totalorder %s19, %s22
    %p31 = scmp.eq.s32.totalorder %s14, 1
    %p32 = por %p30, %p31
    %p33 = scmp.ne.s32.totalorder %s22, %s23
    %p34 = scmp.eq.s32.totalorder %s14, 0
    %p35 = por %p33, %p34
    %p36 = scmp.ne.s32.totalorder %s22, %s23
    %p37 = scmp.eq.s32.totalorder %s15, 1
    %p38 = por %p36, %p37
    %p40 = scmp.ne.s32.totalorder %s23, %s39
    %p41 = scmp.eq.s32.totalorder %s15, 0
    %p42 = por %p40, %p41
    %s44 = sadd.s32 %s43, 1
    %p47 = scmp.eq.s32.totalorder %s9, 1
    %p48 = scmp.ne.s32.totalorder %s43, %s45
    %p49 = scmp.eq.s32.totalorder %s9, 0
    %p50 = por %p48, %p49
    %p51 = scmp.ne.s32.totalorder %s43, %s45
    %p52 = scmp.eq.s32.totalorder %s14, 1
    %p53 = por %p51, %p52
    %p54 = scmp.ne.s32.totalorder %s45, %s46
    %p55 = scmp.eq.s32.totalorder %s14, 0
    %p56 = por %p54, %p55
    %p57 = scmp.ne.s32.totalorder %s45, %s46
    %p58 = scmp.eq.s32.totalorder %s15, 1
    %p59 = por %p57, %p58
    %p61 = scmp.ne.s32.totalorder %s46, %s60
    %p62 = scmp.eq.s32.totalorder %s15, 0
    %p63 = por %p61, %p62
    %s65 = sadd.s32 %s64, 1
    %p68 = scmp.eq.s32.totalorder %s9, 1
    %p69 = scmp.ne.s32.totalorder %s64, %s66
    %p70 = scmp.eq.s32.totalorder %s9, 0
    %p71 = por %p69, %p70
    %p72 = scmp.ne.s32.totalorder %s64, %s66
    %p73 = scmp.eq.s32.totalorder %s14, 1
    %p74 = por %p72, %p73
    %p75 = scmp.ne.s32.totalorder %s66, %s67
    %p76 = scmp.eq.s32.totalorder %s14, 0
    %p77 = por %p75, %p76
    %p78 = scmp.ne.s32.totalorder %s66, %s67
    %p79 = scmp.eq.s32.totalorder %s15, 1
    %p80 = por %p78, %p79
    %p82 = scmp.ne.s32.totalorder %s67, %s81
    %p83 = scmp.eq.s32.totalorder %s15, 0
    %p84 = por %p82, %p83
    %s85 = ssub.s32 %s9, %s16
    %p86 = scmp.eq.s32.totalorder %s85, 0
    %s88 = sadd.s32 %s87, 1
    %s89 = scalar_select %p86, %s87, %s88
    %p92 = pneg %p86
    %p93 = scmp.eq.s32.totalorder %s9, 1
    %p94 = por %p92, %p93
    %p95 = scmp.ne.s32.totalorder %s87, %s90
    %p96 = scmp.eq.s32.totalorder %s9, 0
    %p97 = por %p95, %p96
    %p98 = scmp.ne.s32.totalorder %s87, %s90
    %p99 = scmp.eq.s32.totalorder %s14, 1
    %p100 = por %p98, %p99
    %p101 = scmp.ne.s32.totalorder %s90, %s91
    %p102 = scmp.eq.s32.totalorder %s14, 0
    %p103 = por %p101, %p102
    %p104 = scmp.ne.s32.totalorder %s90, %s91
    %p105 = scmp.eq.s32.totalorder %s15, 1
    %p106 = por %p104, %p105
    %p108 = scmp.ne.s32.totalorder %s91, %s107
    %p109 = scmp.eq.s32.totalorder %s15, 0
    %p110 = por %p108, %p109
    %p111 = scmp.le.s32.totalorder 1, %s9
    %p112 = scmp.lt.s32.totalorder %s9, 3
    %p113 = pnand %p111, %p112
    %p114 = pneg %p113
    // Predicated region
    $region9: #{basic_block_forward.2} parent=5 // pred_check
      _
    $region10: #{basic_block_forward.2} parent=5 // pred_check_branch
      %116 = sbr.rel (%p113) target = $region12
    $region11: #{basic_block_forward.2} parent=5 // pred_region
      %s117 = ssub.s32 %s9, 1
      // Predicated region
      $region13: #{basic_block_forward.2} parent=11 // pred_check
        %p118 = pneg %p56
      $region14: #{basic_block_forward.2} parent=11 // pred_check_branch
        %120 = sbr.rel (%p118) target = $region16
      $region15: #{basic_block_forward.2} parent=11 // pred_region
        _
      $region16: #{basic_block_forward.2} parent=11 // pred_fallthru
        _
      // Predicated region
      $region17: #{basic_block_forward.2} parent=11 // pred_check
        %p121 = pneg %p77
      $region18: #{basic_block_forward.2} parent=11 // pred_check_branch
        %123 = sbr.rel (%p121) target = $region20
      $region19: #{basic_block_forward.2} parent=11 // pred_region
        _
      $region20: #{basic_block_forward.2} parent=11 // pred_fallthru
        _
    $region12: #{basic_block_forward.2} parent=5 // pred_fallthru
      _
    %p124 = scmp.lt.s32.totalorder %s9, 2
    // Predicated region
    $region21: #{basic_block_forward.2} parent=5 // pred_check
      %p125 = pneg %p124
    $region22: #{basic_block_forward.2} parent=5 // pred_check_branch
      %127 = sbr.rel (%p125) target = $region24
    $region23: #{basic_block_forward.2} parent=5 // pred_region
      // Predicated region
      $region25: #{basic_block_forward.2} parent=23 // pred_check
        %p128 = pneg %p29
      $region26: #{basic_block_forward.2} parent=23 // pred_check_branch
        %130 = sbr.rel (%p128) target = $region28
      $region27: #{basic_block_forward.2} parent=23 // pred_region
        %p131 = scmp.lt.s32.totalorder %s9, 1
        %s132 = scalar_select %p131, %s9, 1
        %s133 = smul.addr %s132, 43
        %s134 = smul.addr %s133, 4
        %s135 = scalar_lea.vmem %s0, %s134
      $region28: #{basic_block_forward.2} parent=23 // pred_fallthru
        _
    $region24: #{basic_block_forward.2} parent=5 // pred_fallthru
      _
    %p136 = scmp.le.s32.totalorder 1, %s9
    %p137 = scmp.lt.s32.totalorder %s9, 3
    %p138 = pnand %p136, %p137
    %p139 = pneg %p138
    // Predicated region
    $region29: #{basic_block_forward.2} parent=5 // pred_check
      _
    $region30: #{basic_block_forward.2} parent=5 // pred_check_branch
      %141 = sbr.rel (%p138) target = $region32
    $region31: #{basic_block_forward.2} parent=5 // pred_region
      %s142 = ssub.s32 %s9, 1
      %p143 = scmp.lt.s32.totalorder %s14, 1
      %s144 = scalar_select %p143, %s14, 1
      %s145 = smul.addr %s144, 43
      %s146 = smul.addr %s145, 4
      %s147 = scalar_lea.vmem %s0, %s146
      %p148 = pneg %p35
      %p149 = pneg %p32
      %p150 = pneg %p56
      %p151 = pneg %p53
      %p152 = pneg %p77
      %p153 = pneg %p74
      %p154 = pneg %p103
      %p155 = pneg %p100
      %p156 = scmp.lt.s32.totalorder %s14, 1
      %s157 = scalar_select %p156, %s14, 1
      %s158 = smul.addr %s157, 43
      %s159 = smul.addr %s158, 4
      %s160 = scalar_lea.vmem %s3, %s159
      %p161 = scmp.lt.s32.totalorder %s14, 1
      %s162 = scalar_select %p161, %s14, 1
      %s163 = smul.addr %s162, 43
      %s164 = smul.addr %s163, 4
      %s165 = scalar_lea.vmem %s0, %s164
      %p166 = scmp.lt.s32.totalorder %s14, 1
      %s167 = scalar_select %p166, %s14, 1
      %s168 = smul.addr %s167, 43
      %s169 = smul.addr %s168, 4
      %s170 = scalar_lea.vmem %s3, %s169
      %v172 = vld [vmem:[%s165] sm:$0xf]
      %v173 = vld [vmem:[%s165 + $0x4] sm:$0xf]
      %v174 = vld [vmem:[%s165 + $0x8] sm:$0xf]
      %v175 = vld [vmem:[%s165 + $0xc] sm:$0xf]
      %v176 = vld [vmem:[%s165 + $0x10] sm:$0xf]
      %v177 = vld [vmem:[%s165 + $0x14] sm:$0xf]
      %v178 = vld [vmem:[%s165 + $0x18] sm:$0xf]
      %v179 = vld [vmem:[%s165 + $0x1c] sm:$0xf]
      %v180 = vld [vmem:[%s165 + $0x20] sm:$0xf]
      %v181 = vld [vmem:[%s165 + $0x24] sm:$0xf]
      %v182 = vld [vmem:[%s165 + $0x28] sm:$0xf]
      %v183 = vld [vmem:[%s165 + $0x2c] sm:$0xf]
      %v184 = vld [vmem:[%s165 + $0x30] sm:$0xf]
      %v185 = vld [vmem:[%s165 + $0x34] sm:$0xf]
      %v186 = vld [vmem:[%s165 + $0x38] sm:$0xf]
      %v187 = vld [vmem:[%s165 + $0x3c] sm:$0xf]
      %v188 = vld [vmem:[%s165 + $0x40] sm:$0xf]
      %v189 = vld [vmem:[%s165 + $0x44] sm:$0xf]
      %v190 = vld [vmem:[%s165 + $0x48] sm:$0xf]
      %v191 = vld [vmem:[%s165 + $0x4c] sm:$0xf]
      %v192 = vld [vmem:[%s165 + $0x50] sm:$0xf]
      %v193 = vld [vmem:[%s165 + $0x54] sm:$0xf]
      %v194 = vld [vmem:[%s165 + $0x58] sm:$0xf]
      %v195 = vld [vmem:[%s165 + $0x5c] sm:$0xf]
      %v196 = vld [vmem:[%s165 + $0x60] sm:$0xf]
      %v197 = vld [vmem:[%s165 + $0x64] sm:$0xf]
      %v198 = vld [vmem:[%s165 + $0x68] sm:$0xf]
      %v199 = vld [vmem:[%s165 + $0x6c] sm:$0xf]
      %v200 = vld [vmem:[%s165 + $0x70] sm:$0xf]
      %v201 = vld [vmem:[%s165 + $0x74] sm:$0xf]
      %v202 = vld [vmem:[%s165 + $0x78] sm:$0xf]
      %v203 = vld [vmem:[%s165 + $0x7c] sm:$0xf]
      %v204 = vld [vmem:[%s165 + $0x80] sm:$0xf]
      %v205 = vld [vmem:[%s165 + $0x84] sm:$0xf]
      %v206 = vld [vmem:[%s165 + $0x88] sm:$0xf]
      %v207 = vld [vmem:[%s165 + $0x8c] sm:$0xf]
      %v208 = vld [vmem:[%s1] sm:$0xf]
      %v209 = vld [vmem:[%s1 + $0x4] sm:$0xf]
      %v210 = vld [vmem:[%s1 + $0x8] sm:$0xf]
      %v211 = vld [vmem:[%s1 + $0xc] sm:$0xf]
      %v212 = vld [vmem:[%s1 + $0x10] sm:$0xf]
      %v213 = vld [vmem:[%s1 + $0x14] sm:$0xf]
      %v214 = vld [vmem:[%s1 + $0x18] sm:$0xf]
      %v215 = vld [vmem:[%s1 + $0x1c] sm:$0xf]
      %v216 = vld [vmem:[%s1 + $0x20] sm:$0xf]
      %v217 = vld [vmem:[%s1 + $0x24] sm:$0xf]
      %v218 = vld [vmem:[%s1 + $0x28] sm:$0xf]
      %v219 = vld [vmem:[%s1 + $0x2c] sm:$0xf]
      %v220 = vld [vmem:[%s1 + $0x30] sm:$0xf]
      %v221 = vld [vmem:[%s1 + $0x34] sm:$0xf]
      %v222 = vld [vmem:[%s1 + $0x38] sm:$0xf]
      %v223 = vld [vmem:[%s1 + $0x3c] sm:$0xf]
      %v260 = vunpack.c.l.b16 %v172
      %v261 = vunpack.c.l.b16 %v173
      %v262 = vunpack.c.l.b16 %v174
      %v263 = vunpack.c.l.b16 %v175
      %v264 = vunpack.c.l.b16 %v176
      %v265 = vunpack.c.l.b16 %v177
      %v266 = vunpack.c.l.b16 %v178
      %v267 = vunpack.c.l.b16 %v179
      %v268 = vunpack.c.l.b16 %v180
      %v269 = vunpack.c.l.b16 %v181
      %v270 = vunpack.c.l.b16 %v182
      %v271 = vunpack.c.l.b16 %v183
      %v272 = vunpack.c.l.b16 %v184
      %v273 = vunpack.c.l.b16 %v185
      %v274 = vunpack.c.l.b16 %v186
      %v275 = vunpack.c.l.b16 %v187
      %v276 = vunpack.c.l.b16 %v188
      %v277 = vunpack.c.l.b16 %v189
      %v278 = vunpack.c.l.b16 %v190
      %v279 = vunpack.c.l.b16 %v191
      %v280 = vunpack.c.l.b16 %v192
      %v281 = vunpack.c.l.b16 %v193
      %v282 = vunpack.c.l.b16 %v194
      %v283 = vunpack.c.l.b16 %v195
      %v284 = vunpack.c.l.b16 %v196
      %v285 = vunpack.c.l.b16 %v197
      %v286 = vunpack.c.l.b16 %v198
      %v287 = vunpack.c.l.b16 %v199
      %v288 = vunpack.c.l.b16 %v200
      %v289 = vunpack.c.l.b16 %v201
      %v290 = vunpack.c.l.b16 %v202
      %v291 = vunpack.c.l.b16 %v203
      %v292 = vunpack.c.l.b16 %v204
      %v293 = vunpack.c.l.b16 %v205
      %v294 = vunpack.c.l.b16 %v206
      %v295 = vunpack.c.l.b16 %v207
      %v296 = vpack.c.b16 %v261, %v260
      %v297 = vpack.c.b16 %v263, %v262
      %v298 = vpack.c.b16 %v265, %v264
      %v299 = vpack.c.b16 %v267, %v266
      %v300 = vpack.c.b16 %v269, %v268
      %v301 = vpack.c.b16 %v271, %v270
      %v302 = vpack.c.b16 %v273, %v272
      %v303 = vpack.c.b16 %v275, %v274
      %v304 = vpack.c.b16 %v277, %v276
      %v305 = vpack.c.b16 %v279, %v278
      %v306 = vpack.c.b16 %v281, %v280
      %v307 = vpack.c.b16 %v283, %v282
      %v308 = vpack.c.b16 %v285, %v284
      %v309 = vpack.c.b16 %v287, %v286
      %v310 = vpack.c.b16 %v289, %v288
      %v311 = vpack.c.b16 %v291, %v290
      %v312 = vpack.c.b16 %v293, %v292
      %v313 = vpack.c.b16 %v295, %v294
      %v348 = vunpack.c.l.b16 %v208
      %v349 = vunpack.c.l.b16 %v209
      %v350 = vunpack.c.l.b16 %v210
      %v351 = vunpack.c.l.b16 %v211
      %v352 = vunpack.c.l.b16 %v212
      %v353 = vunpack.c.l.b16 %v213
      %v354 = vunpack.c.l.b16 %v214
      %v355 = vunpack.c.l.b16 %v215
      %v356 = vunpack.c.l.b16 %v216
      %v357 = vunpack.c.l.b16 %v217
      %v358 = vunpack.c.l.b16 %v218
      %v359 = vunpack.c.l.b16 %v219
      %v360 = vunpack.c.l.b16 %v220
      %v361 = vunpack.c.l.b16 %v221
      %v362 = vunpack.c.l.b16 %v222
      %v363 = vunpack.c.l.b16 %v223
      %v364 = vpack.c.b16 %v349, %v348
      %v365 = vpack.c.b16 %v351, %v350
      %v366 = vpack.c.b16 %v353, %v352
      %v367 = vpack.c.b16 %v355, %v354
      %v368 = vpack.c.b16 %v357, %v356
      %v369 = vpack.c.b16 %v359, %v358
      %v370 = vpack.c.b16 %v361, %v360
      %v371 = vpack.c.b16 %v363, %v362
      %380 = vmatpush.bf16.msra.mxu0 %v371
      %381 = vmatpush.bf16.msra.mxu0 %v370
      %382 = vmatpush.bf16.msra.mxu0 %v369
      %383 = vmatpush.bf16.msra.mxu0 %v368
      %384 = vmatpush.bf16.msra.mxu0 %v367
      %385 = vmatpush.bf16.msra.mxu0 %v366
      %386 = vmatpush.bf16.msra.mxu0 %v365
      %387 = vmatpush.bf16.msra.mxu0 %v364
      %388 = vmatmul.bf16.gmra.mxu0 %v296
      %v389 = vpop.f32.mrf.mxu0
      %v390 = vadd.f32 0.0, %v389
      %v391 = vpop.f32.mrf.mxu0
      %v392 = vadd.f32 0.0, %v391
      %393 = vmatmul.bf16.gmra.mxu0 %v297
      %v394 = vpop.f32.mrf.mxu0
      %v395 = vadd.f32 0.0, %v394
      %v396 = vpop.f32.mrf.mxu0
      %v397 = vadd.f32 0.0, %v396
      %398 = vmatmul.bf16.gmra.mxu0 %v298
      %v399 = vpop.f32.mrf.mxu0
      %v400 = vadd.f32 0.0, %v399
      %v401 = vpop.f32.mrf.mxu0
      %v402 = vadd.f32 0.0, %v401
      %403 = vmatmul.bf16.gmra.mxu0 %v299
      %v404 = vpop.f32.mrf.mxu0
      %v405 = vadd.f32 0.0, %v404
      %v406 = vpop.f32.mrf.mxu0
      %v407 = vadd.f32 0.0, %v406
      %408 = vmatmul.bf16.gmra.mxu0 %v300
      %v409 = vpop.f32.mrf.mxu0
      %v410 = vadd.f32 0.0, %v409
      %v411 = vpop.f32.mrf.mxu0
      %v412 = vadd.f32 0.0, %v411
      %413 = vmatmul.bf16.gmra.mxu0 %v301
      %v414 = vpop.f32.mrf.mxu0
      %v415 = vadd.f32 0.0, %v414
      %v416 = vpop.f32.mrf.mxu0
      %v417 = vadd.f32 0.0, %v416
      %418 = vmatmul.bf16.gmra.mxu0 %v302
      %v419 = vpop.f32.mrf.mxu0
      %v420 = vadd.f32 0.0, %v419
      %v421 = vpop.f32.mrf.mxu0
      %v422 = vadd.f32 0.0, %v421
      %423 = vmatmul.bf16.gmra.mxu0 %v303
      %v424 = vpop.f32.mrf.mxu0
      %v425 = vadd.f32 0.0, %v424
      %v426 = vpop.f32.mrf.mxu0
      %v427 = vadd.f32 0.0, %v426
      %428 = vmatmul.bf16.gmra.mxu0 %v304
      %v429 = vpop.f32.mrf.mxu0
      %v430 = vadd.f32 0.0, %v429
      %v431 = vpop.f32.mrf.mxu0
      %v432 = vadd.f32 0.0, %v431
      %433 = vmatmul.bf16.gmra.mxu0 %v305
      %v434 = vpop.f32.mrf.mxu0
      %v435 = vadd.f32 0.0, %v434
      %v436 = vpop.f32.mrf.mxu0
      %v437 = vadd.f32 0.0, %v436
      %438 = vmatmul.bf16.gmra.mxu0 %v306
      %v439 = vpop.f32.mrf.mxu0
      %v440 = vadd.f32 0.0, %v439
      %v441 = vpop.f32.mrf.mxu0
      %v442 = vadd.f32 0.0, %v441
      %443 = vmatmul.bf16.gmra.mxu0 %v307
      %v444 = vpop.f32.mrf.mxu0
      %v445 = vadd.f32 0.0, %v444
      %v446 = vpop.f32.mrf.mxu0
      %v447 = vadd.f32 0.0, %v446
      %448 = vmatmul.bf16.gmra.mxu0 %v308
      %v449 = vpop.f32.mrf.mxu0
      %v450 = vadd.f32 0.0, %v449
      %v451 = vpop.f32.mrf.mxu0
      %v452 = vadd.f32 0.0, %v451
      %453 = vmatmul.bf16.gmra.mxu0 %v309
      %v454 = vpop.f32.mrf.mxu0
      %v455 = vadd.f32 0.0, %v454
      %v456 = vpop.f32.mrf.mxu0
      %v457 = vadd.f32 0.0, %v456
      %458 = vmatmul.bf16.gmra.mxu0 %v310
      %v459 = vpop.f32.mrf.mxu0
      %v460 = vadd.f32 0.0, %v459
      %v461 = vpop.f32.mrf.mxu0
      %v462 = vadd.f32 0.0, %v461
      %463 = vmatmul.bf16.gmra.mxu0 %v311
      %v464 = vpop.f32.mrf.mxu0
      %v465 = vadd.f32 0.0, %v464
      %v466 = vpop.f32.mrf.mxu0
      %v467 = vadd.f32 0.0, %v466
      %468 = vmatmul.bf16.gmra.mxu0 %v312
      %v469 = vpop.f32.mrf.mxu0
      %v470 = vadd.f32 0.0, %v469
      %v471 = vpop.f32.mrf.mxu0
      %v472 = vadd.f32 0.0, %v471
      %473 = vmatmul.bf16.gmra.mxu0 %v313
      %v474 = vpop.f32.mrf.mxu0
      %v475 = vadd.f32 0.0, %v474
      %v476 = vpop.f32.mrf.mxu0
      %v477 = vadd.f32 0.0, %v476
      %478 = vdwg.mxu0
      %479 = vst [vmem:[#allocation2] sm:$0xff] %v390
      %480 = vst [vmem:[#allocation2 + $0x8] sm:$0xff] %v392
      %481 = vst [vmem:[#allocation2 + $0x10] sm:$0xff] %v395
      %482 = vst [vmem:[#allocation2 + $0x18] sm:$0xff] %v397
      %483 = vst [vmem:[#allocation2 + $0x20] sm:$0xff] %v400
      %484 = vst [vmem:[#allocation2 + $0x28] sm:$0xff] %v402
      %485 = vst [vmem:[#allocation2 + $0x30] sm:$0xff] %v405
      %486 = vst [vmem:[#allocation2 + $0x38] sm:$0xff] %v407
      %487 = vst [vmem:[#allocation2 + $0x40] sm:$0xff] %v410
      %488 = vst [vmem:[#allocation2 + $0x48] sm:$0xff] %v412
      %489 = vst [vmem:[#allocation2 + $0x50] sm:$0xff] %v415
      %490 = vst [vmem:[#allocation2 + $0x58] sm:$0xff] %v417
      %491 = vst [vmem:[#allocation2 + $0x60] sm:$0xff] %v420
      %492 = vst [vmem:[#allocation2 + $0x68] sm:$0xff] %v422
      %493 = vst [vmem:[#allocation2 + $0x70] sm:$0xff] %v425
      %494 = vst [vmem:[#allocation2 + $0x78] sm:$0xff] %v427
      %495 = vst [vmem:[#allocation2 + $0x80] sm:$0xff] %v430
      %496 = vst [vmem:[#allocation2 + $0x88] sm:$0xff] %v432
      %497 = vst [vmem:[#allocation2 + $0x90] sm:$0xff] %v435
      %498 = vst [vmem:[#allocation2 + $0x98] sm:$0xff] %v437
      %499 = vst [vmem:[#allocation2 + $0xa0] sm:$0xff] %v440
      %500 = vst [vmem:[#allocation2 + $0xa8] sm:$0xff] %v442
      %501 = vst [vmem:[#allocation2 + $0xb0] sm:$0xff] %v445
      %502 = vst [vmem:[#allocation2 + $0xb8] sm:$0xff] %v447
      %503 = vst [vmem:[#allocation2 + $0xc0] sm:$0xff] %v450
      %504 = vst [vmem:[#allocation2 + $0xc8] sm:$0xff] %v452
      %505 = vst [vmem:[#allocation2 + $0xd0] sm:$0xff] %v455
      %506 = vst [vmem:[#allocation2 + $0xd8] sm:$0xff] %v457
      %507 = vst [vmem:[#allocation2 + $0xe0] sm:$0xff] %v460
      %508 = vst [vmem:[#allocation2 + $0xe8] sm:$0xff] %v462
      %509 = vst [vmem:[#allocation2 + $0xf0] sm:$0xff] %v465
      %510 = vst [vmem:[#allocation2 + $0xf8] sm:$0xff] %v467
      %511 = vst [vmem:[#allocation2 + $0x100] sm:$0xff] %v470
      %512 = vst [vmem:[#allocation2 + $0x108] sm:$0xff] %v472
      %513 = vst [vmem:[#allocation2 + $0x110] sm:$0xff] %v475
      %514 = vst [vmem:[#allocation2 + $0x118] sm:$0xff] %v477
      %v515 = vld [vmem:[%s165] sm:$0xf]
      %v516 = vld [vmem:[%s165 + $0x4] sm:$0xf]
      %v517 = vld [vmem:[%s165 + $0x8] sm:$0xf]
      %v518 = vld [vmem:[%s165 + $0xc] sm:$0xf]
      %v519 = vld [vmem:[%s165 + $0x10] sm:$0xf]
      %v520 = vld [vmem:[%s165 + $0x14] sm:$0xf]
      %v521 = vld [vmem:[%s165 + $0x18] sm:$0xf]
      %v522 = vld [vmem:[%s165 + $0x1c] sm:$0xf]
      %v523 = vld [vmem:[%s165 + $0x20] sm:$0xf]
      %v524 = vld [vmem:[%s165 + $0x24] sm:$0xf]
      %v525 = vld [vmem:[%s165 + $0x28] sm:$0xf]
      %v526 = vld [vmem:[%s165 + $0x2c] sm:$0xf]
      %v527 = vld [vmem:[%s165 + $0x30] sm:$0xf]
      %v528 = vld [vmem:[%s165 + $0x34] sm:$0xf]
      %v529 = vld [vmem:[%s165 + $0x38] sm:$0xf]
      %v530 = vld [vmem:[%s165 + $0x3c] sm:$0xf]
      %v531 = vld [vmem:[%s165 + $0x40] sm:$0xf]
      %v532 = vld [vmem:[%s165 + $0x44] sm:$0xf]
      %v533 = vld [vmem:[%s165 + $0x48] sm:$0xf]
      %v534 = vld [vmem:[%s165 + $0x4c] sm:$0xf]
      %v535 = vld [vmem:[%s165 + $0x50] sm:$0xf]
      %v536 = vld [vmem:[%s165 + $0x54] sm:$0xf]
      %v537 = vld [vmem:[%s165 + $0x58] sm:$0xf]
      %v538 = vld [vmem:[%s165 + $0x5c] sm:$0xf]
      %v539 = vld [vmem:[%s165 + $0x60] sm:$0xf]
      %v540 = vld [vmem:[%s165 + $0x64] sm:$0xf]
      %v541 = vld [vmem:[%s165 + $0x68] sm:$0xf]
      %v542 = vld [vmem:[%s165 + $0x6c] sm:$0xf]
      %v543 = vld [vmem:[%s165 + $0x70] sm:$0xf]
      %v544 = vld [vmem:[%s165 + $0x74] sm:$0xf]
      %v545 = vld [vmem:[%s165 + $0x78] sm:$0xf]
      %v546 = vld [vmem:[%s165 + $0x7c] sm:$0xf]
      %v547 = vld [vmem:[%s165 + $0x80] sm:$0xf]
      %v548 = vld [vmem:[%s165 + $0x84] sm:$0xf]
      %v549 = vld [vmem:[%s165 + $0x88] sm:$0xf]
      %v550 = vld [vmem:[%s165 + $0x8c] sm:$0xf]
      %v551 = vld [vmem:[%s165 + $0x90] sm:$0x1]
      %s552 = scalar_lea.vmem %s1, 64
      %v553 = vld [vmem:[%s552] sm:$0xf]
      %v554 = vld [vmem:[%s552 + $0x4] sm:$0xf]
      %v555 = vld [vmem:[%s552 + $0x8] sm:$0xf]
      %v556 = vld [vmem:[%s552 + $0xc] sm:$0xf]
      %v557 = vld [vmem:[%s552 + $0x10] sm:$0xf]
      %v558 = vld [vmem:[%s552 + $0x14] sm:$0xf]
      %v559 = vld [vmem:[%s552 + $0x18] sm:$0xf]
      %v560 = vld [vmem:[%s552 + $0x1c] sm:$0xf]
      %v561 = vld [vmem:[%s552 + $0x20] sm:$0xf]
      %v562 = vld [vmem:[%s552 + $0x24] sm:$0xf]
      %v563 = vld [vmem:[%s552 + $0x28] sm:$0xf]
      %v564 = vld [vmem:[%s552 + $0x2c] sm:$0xf]
      %v565 = vld [vmem:[%s552 + $0x30] sm:$0xf]
      %v566 = vld [vmem:[%s552 + $0x34] sm:$0xf]
      %v567 = vld [vmem:[%s552 + $0x38] sm:$0xf]
      %v568 = vld [vmem:[%s552 + $0x3c] sm:$0xf]
      %v606 = vunpack.c.l.b16 %v515
      %v607 = vunpack.c.l.b16 %v516
      %v608 = vunpack.c.l.b16 %v517
      %v609 = vunpack.c.l.b16 %v518
      %v610 = vunpack.c.l.b16 %v519
      %v611 = vunpack.c.l.b16 %v520
      %v612 = vunpack.c.l.b16 %v521
      %v613 = vunpack.c.l.b16 %v522
      %v614 = vunpack.c.l.b16 %v523
      %v615 = vunpack.c.l.b16 %v524
      %v616 = vunpack.c.l.b16 %v525
      %v617 = vunpack.c.l.b16 %v526
      %v618 = vunpack.c.l.b16 %v527
      %v619 = vunpack.c.l.b16 %v528
      %v620 = vunpack.c.l.b16 %v529
      %v621 = vunpack.c.l.b16 %v530
      %v622 = vunpack.c.l.b16 %v531
      %v623 = vunpack.c.l.b16 %v532
      %v624 = vunpack.c.l.b16 %v533
      %v625 = vunpack.c.l.b16 %v534
      %v626 = vunpack.c.l.b16 %v535
      %v627 = vunpack.c.l.b16 %v536
      %v628 = vunpack.c.l.b16 %v537
      %v629 = vunpack.c.l.b16 %v538
      %v630 = vunpack.c.l.b16 %v539
      %v631 = vunpack.c.l.b16 %v540
      %v632 = vunpack.c.l.b16 %v541
      %v633 = vunpack.c.l.b16 %v542
      %v634 = vunpack.c.l.b16 %v543
      %v635 = vunpack.c.l.b16 %v544
      %v636 = vunpack.c.l.b16 %v545
      %v637 = vunpack.c.l.b16 %v546
      %v638 = vunpack.c.l.b16 %v547
      %v639 = vunpack.c.l.b16 %v548
      %v640 = vunpack.c.l.b16 %v549
      %v641 = vunpack.c.l.b16 %v550
      %v642 = vunpack.c.l.b16 %v551
      %v643 = vpack.c.b16 %v607, %v606
      %v644 = vpack.c.b16 %v609, %v608
      %v645 = vpack.c.b16 %v611, %v610
      %v646 = vpack.c.b16 %v613, %v612
      %v647 = vpack.c.b16 %v615, %v614
      %v648 = vpack.c.b16 %v617, %v616
      %v649 = vpack.c.b16 %v619, %v618
      %v650 = vpack.c.b16 %v621, %v620
      %v651 = vpack.c.b16 %v623, %v622
      %v652 = vpack.c.b16 %v625, %v624
      %v653 = vpack.c.b16 %v627, %v626
      %v654 = vpack.c.b16 %v629, %v628
      %v655 = vpack.c.b16 %v631, %v630
      %v656 = vpack.c.b16 %v633, %v632
      %v657 = vpack.c.b16 %v635, %v634
      %v658 = vpack.c.b16 %v637, %v636
      %v659 = vpack.c.b16 %v639, %v638
      %v660 = vpack.c.b16 %v641, %v640
      %v661 = vpack.c.b16 %v642, %v642
      %vm662 = vsmask.f32 7424
      %v664 = vshrl.u32 %v643, 16
      %v666 = vshll.u32 %v643, 16
      %v668 = vrot.slane %v666, 1
      %v669 = vor.u32 %v664, %v668
      %v671 = vshll.u32 %v644, 16
      %v673 = vrot.slane %v671, 1
      %v674 = vsel %vm662, %v669, %v673
      %v675 = vshrl.u32 %v644, 16
      %v677 = vor.u32 %v675, %v673
      %v679 = vshll.u32 %v645, 16
      %v681 = vrot.slane %v679, 1
      %v682 = vsel %vm662, %v677, %v681
      %v683 = vshrl.u32 %v645, 16
      %v685 = vor.u32 %v683, %v681
      %v687 = vshll.u32 %v646, 16
      %v689 = vrot.slane %v687, 1
      %v690 = vsel %vm662, %v685, %v689
      %v691 = vshrl.u32 %v646, 16
      %v693 = vor.u32 %v691, %v689
      %v695 = vshll.u32 %v647, 16
      %v697 = vrot.slane %v695, 1
      %v698 = vsel %vm662, %v693, %v697
      %v699 = vshrl.u32 %v647, 16
      %v701 = vor.u32 %v699, %v697
      %v703 = vshll.u32 %v648, 16
      %v705 = vrot.slane %v703, 1
      %v706 = vsel %vm662, %v701, %v705
      %v707 = vshrl.u32 %v648, 16
      %v709 = vor.u32 %v707, %v705
      %v711 = vshll.u32 %v649, 16
      %v713 = vrot.slane %v711, 1
      %v714 = vsel %vm662, %v709, %v713
      %v715 = vshrl.u32 %v649, 16
      %v717 = vor.u32 %v715, %v713
      %v719 = vshll.u32 %v650, 16
      %v721 = vrot.slane %v719, 1
      %v722 = vsel %vm662, %v717, %v721
      %v723 = vshrl.u32 %v650, 16
      %v725 = vor.u32 %v723, %v721
      %v727 = vshll.u32 %v651, 16
      %v729 = vrot.slane %v727, 1
      %v730 = vsel %vm662, %v725, %v729
      %v731 = vshrl.u32 %v651, 16
      %v733 = vor.u32 %v731, %v729
      %v735 = vshll.u32 %v652, 16
      %v737 = vrot.slane %v735, 1
      %v738 = vsel %vm662, %v733, %v737
      %v739 = vshrl.u32 %v652, 16
      %v741 = vor.u32 %v739, %v737
      %v743 = vshll.u32 %v653, 16
      %v745 = vrot.slane %v743, 1
      %v746 = vsel %vm662, %v741, %v745
      %v747 = vshrl.u32 %v653, 16
      %v749 = vor.u32 %v747, %v745
      %v751 = vshll.u32 %v654, 16
      %v753 = vrot.slane %v751, 1
      %v754 = vsel %vm662, %v749, %v753
      %v755 = vshrl.u32 %v654, 16
      %v757 = vor.u32 %v755, %v753
      %v759 = vshll.u32 %v655, 16
      %v761 = vrot.slane %v759, 1
      %v762 = vsel %vm662, %v757, %v761
      %v763 = vshrl.u32 %v655, 16
      %v765 = vor.u32 %v763, %v761
      %v767 = vshll.u32 %v656, 16
      %v769 = vrot.slane %v767, 1
      %v770 = vsel %vm662, %v765, %v769
      %v771 = vshrl.u32 %v656, 16
      %v773 = vor.u32 %v771, %v769
      %v775 = vshll.u32 %v657, 16
      %v777 = vrot.slane %v775, 1
      %v778 = vsel %vm662, %v773, %v777
      %v779 = vshrl.u32 %v657, 16
      %v781 = vor.u32 %v779, %v777
      %v783 = vshll.u32 %v658, 16
      %v785 = vrot.slane %v783, 1
      %v786 = vsel %vm662, %v781, %v785
      %v787 = vshrl.u32 %v658, 16
      %v789 = vor.u32 %v787, %v785
      %v791 = vshll.u32 %v659, 16
      %v793 = vrot.slane %v791, 1
      %v794 = vsel %vm662, %v789, %v793
      %v795 = vshrl.u32 %v659, 16
      %v797 = vor.u32 %v795, %v793
      %v799 = vshll.u32 %v660, 16
      %v801 = vrot.slane %v799, 1
      %v802 = vsel %vm662, %v797, %v801
      %v803 = vshrl.u32 %v660, 16
      %v805 = vor.u32 %v803, %v801
      %v807 = vshll.u32 %v661, 16
      %v809 = vrot.slane %v807, 1
      %v810 = vsel %vm662, %v805, %v809
      %v845 = vunpack.c.l.b16 %v553
      %v846 = vunpack.c.l.b16 %v554
      %v847 = vunpack.c.l.b16 %v555
      %v848 = vunpack.c.l.b16 %v556
      %v849 = vunpack.c.l.b16 %v557
      %v850 = vunpack.c.l.b16 %v558
      %v851 = vunpack.c.l.b16 %v559
      %v852 = vunpack.c.l.b16 %v560
      %v853 = vunpack.c.l.b16 %v561
      %v854 = vunpack.c.l.b16 %v562
      %v855 = vunpack.c.l.b16 %v563
      %v856 = vunpack.c.l.b16 %v564
      %v857 = vunpack.c.l.b16 %v565
      %v858 = vunpack.c.l.b16 %v566
      %v859 = vunpack.c.l.b16 %v567
      %v860 = vunpack.c.l.b16 %v568
      %v861 = vpack.c.b16 %v846, %v845
      %v862 = vpack.c.b16 %v848, %v847
      %v863 = vpack.c.b16 %v850, %v849
      %v864 = vpack.c.b16 %v852, %v851
      %v865 = vpack.c.b16 %v854, %v853
      %v866 = vpack.c.b16 %v856, %v855
      %v867 = vpack.c.b16 %v858, %v857
      %v868 = vpack.c.b16 %v860, %v859
      %877 = vmatpush.bf16.msra.mxu0 %v868
      %878 = vmatpush.bf16.msra.mxu0 %v867
      %879 = vmatpush.bf16.msra.mxu0 %v866
      %880 = vmatpush.bf16.msra.mxu0 %v865
      %881 = vmatpush.bf16.msra.mxu0 %v864
      %882 = vmatpush.bf16.msra.mxu0 %v863
      %883 = vmatpush.bf16.msra.mxu0 %v862
      %884 = vmatpush.bf16.msra.mxu0 %v861
      %885 = vmatmul.bf16.gmra.mxu0 %v674
      %v886 = vpop.f32.mrf.mxu0
      %v887 = vadd.f32 0.0, %v886
      %v888 = vpop.f32.mrf.mxu0
      %v889 = vadd.f32 0.0, %v888
      %890 = vmatmul.bf16.gmra.mxu0 %v682
      %v891 = vpop.f32.mrf.mxu0
      %v892 = vadd.f32 0.0, %v891
      %v893 = vpop.f32.mrf.mxu0
      %v894 = vadd.f32 0.0, %v893
      %895 = vmatmul.bf16.gmra.mxu0 %v690
      %v896 = vpop.f32.mrf.mxu0
      %v897 = vadd.f32 0.0, %v896
      %v898 = vpop.f32.mrf.mxu0
      %v899 = vadd.f32 0.0, %v898
      %900 = vmatmul.bf16.gmra.mxu0 %v698
      %v901 = vpop.f32.mrf.mxu0
      %v902 = vadd.f32 0.0, %v901
      %v903 = vpop.f32.mrf.mxu0
      %v904 = vadd.f32 0.0, %v903
      %905 = vmatmul.bf16.gmra.mxu0 %v706
      %v906 = vpop.f32.mrf.mxu0
      %v907 = vadd.f32 0.0, %v906
      %v908 = vpop.f32.mrf.mxu0
      %v909 = vadd.f32 0.0, %v908
      %910 = vmatmul.bf16.gmra.mxu0 %v714
      %v911 = vpop.f32.mrf.mxu0
      %v912 = vadd.f32 0.0, %v911
      %v913 = vpop.f32.mrf.mxu0
      %v914 = vadd.f32 0.0, %v913
      %915 = vmatmul.bf16.gmra.mxu0 %v722
      %v916 = vpop.f32.mrf.mxu0
      %v917 = vadd.f32 0.0, %v916
      %v918 = vpop.f32.mrf.mxu0
      %v919 = vadd.f32 0.0, %v918
      %920 = vmatmul.bf16.gmra.mxu0 %v730
      %v921 = vpop.f32.mrf.mxu0
      %v922 = vadd.f32 0.0, %v921
      %v923 = vpop.f32.mrf.mxu0
      %v924 = vadd.f32 0.0, %v923
      %925 = vmatmul.bf16.gmra.mxu0 %v738
      %v926 = vpop.f32.mrf.mxu0
      %v927 = vadd.f32 0.0, %v926
      %v928 = vpop.f32.mrf.mxu0
      %v929 = vadd.f32 0.0, %v928
      %930 = vmatmul.bf16.gmra.mxu0 %v746
      %v931 = vpop.f32.mrf.mxu0
      %v932 = vadd.f32 0.0, %v931
      %v933 = vpop.f32.mrf.mxu0
      %v934 = vadd.f32 0.0, %v933
      %935 = vmatmul.bf16.gmra.mxu0 %v754
      %v936 = vpop.f32.mrf.mxu0
      %v937 = vadd.f32 0.0, %v936
      %v938 = vpop.f32.mrf.mxu0
      %v939 = vadd.f32 0.0, %v938
      %940 = vmatmul.bf16.gmra.mxu0 %v762
      %v941 = vpop.f32.mrf.mxu0
      %v942 = vadd.f32 0.0, %v941
      %v943 = vpop.f32.mrf.mxu0
      %v944 = vadd.f32 0.0, %v943
      %945 = vmatmul.bf16.gmra.mxu0 %v770
      %v946 = vpop.f32.mrf.mxu0
      %v947 = vadd.f32 0.0, %v946
      %v948 = vpop.f32.mrf.mxu0
      %v949 = vadd.f32 0.0, %v948
      %950 = vmatmul.bf16.gmra.mxu0 %v778
      %v951 = vpop.f32.mrf.mxu0
      %v952 = vadd.f32 0.0, %v951
      %v953 = vpop.f32.mrf.mxu0
      %v954 = vadd.f32 0.0, %v953
      %955 = vmatmul.bf16.gmra.mxu0 %v786
      %v956 = vpop.f32.mrf.mxu0
      %v957 = vadd.f32 0.0, %v956
      %v958 = vpop.f32.mrf.mxu0
      %v959 = vadd.f32 0.0, %v958
      %960 = vmatmul.bf16.gmra.mxu0 %v794
      %v961 = vpop.f32.mrf.mxu0
      %v962 = vadd.f32 0.0, %v961
      %v963 = vpop.f32.mrf.mxu0
      %v964 = vadd.f32 0.0, %v963
      %965 = vmatmul.bf16.gmra.mxu0 %v802
      %v966 = vpop.f32.mrf.mxu0
      %v967 = vadd.f32 0.0, %v966
      %v968 = vpop.f32.mrf.mxu0
      %v969 = vadd.f32 0.0, %v968
      %970 = vmatmul.bf16.gmra.mxu0 %v810
      %v971 = vpop.f32.mrf.mxu0
      %v972 = vadd.f32 0.0, %v971
      %v973 = vpop.f32.mrf.mxu0
      %v974 = vadd.f32 0.0, %v973
      %975 = vdwg.mxu0
      %v976 = vld [vmem:[#allocation2] sm:$0xff]
      %v977 = vld [vmem:[#allocation2 + $0x8] sm:$0xff]
      %v978 = vld [vmem:[#allocation2 + $0x10] sm:$0xff]
      %v979 = vld [vmem:[#allocation2 + $0x18] sm:$0xff]
      %v980 = vld [vmem:[#allocation2 + $0x20] sm:$0xff]
      %v981 = vld [vmem:[#allocation2 + $0x28] sm:$0xff]
      %v982 = vld [vmem:[#allocation2 + $0x30] sm:$0xff]
      %v983 = vld [vmem:[#allocation2 + $0x38] sm:$0xff]
      %v984 = vld [vmem:[#allocation2 + $0x40] sm:$0xff]
      %v985 = vld [vmem:[#allocation2 + $0x48] sm:$0xff]
      %v986 = vld [vmem:[#allocation2 + $0x50] sm:$0xff]
      %v987 = vld [vmem:[#allocation2 + $0x58] sm:$0xff]
      %v988 = vld [vmem:[#allocation2 + $0x60] sm:$0xff]
      %v989 = vld [vmem:[#allocation2 + $0x68] sm:$0xff]
      %v990 = vld [vmem:[#allocation2 + $0x70] sm:$0xff]
      %v991 = vld [vmem:[#allocation2 + $0x78] sm:$0xff]
      %v992 = vld [vmem:[#allocation2 + $0x80] sm:$0xff]
      %v993 = vld [vmem:[#allocation2 + $0x88] sm:$0xff]
      %v994 = vld [vmem:[#allocation2 + $0x90] sm:$0xff]
      %v995 = vld [vmem:[#allocation2 + $0x98] sm:$0xff]
      %v996 = vld [vmem:[#allocation2 + $0xa0] sm:$0xff]
      %v997 = vld [vmem:[#allocation2 + $0xa8] sm:$0xff]
      %v998 = vld [vmem:[#allocation2 + $0xb0] sm:$0xff]
      %v999 = vld [vmem:[#allocation2 + $0xb8] sm:$0xff]
      %v1000 = vld [vmem:[#allocation2 + $0xc0] sm:$0xff]
      %v1001 = vld [vmem:[#allocation2 + $0xc8] sm:$0xff]
      %v1002 = vld [vmem:[#allocation2 + $0xd0] sm:$0xff]
      %v1003 = vld [vmem:[#allocation2 + $0xd8] sm:$0xff]
      %v1004 = vld [vmem:[#allocation2 + $0xe0] sm:$0xff]
      %v1005 = vld [vmem:[#allocation2 + $0xe8] sm:$0xff]
      %v1006 = vld [vmem:[#allocation2 + $0xf0] sm:$0xff]
      %v1007 = vld [vmem:[#allocation2 + $0xf8] sm:$0xff]
      %v1008 = vld [vmem:[#allocation2 + $0x100] sm:$0xff]
      %v1009 = vld [vmem:[#allocation2 + $0x108] sm:$0xff]
      %v1010 = vld [vmem:[#allocation2 + $0x110] sm:$0xff]
      %v1011 = vld [vmem:[#allocation2 + $0x118] sm:$0xff]
      %v1012 = vadd.f32 %v976, %v887
      %v1013 = vadd.f32 %v977, %v889
      %v1014 = vadd.f32 %v978, %v892
      %v1015 = vadd.f32 %v979, %v894
      %v1016 = vadd.f32 %v980, %v897
      %v1017 = vadd.f32 %v981, %v899
      %v1018 = vadd.f32 %v982, %v902
      %v1019 = vadd.f32 %v983, %v904
      %v1020 = vadd.f32 %v984, %v907
      %v1021 = vadd.f32 %v985, %v909
      %v1022 = vadd.f32 %v986, %v912
      %v1023 = vadd.f32 %v987, %v914
      %v1024 = vadd.f32 %v988, %v917
      %v1025 = vadd.f32 %v989, %v919
      %v1026 = vadd.f32 %v990, %v922
      %v1027 = vadd.f32 %v991, %v924
      %v1028 = vadd.f32 %v992, %v927
      %v1029 = vadd.f32 %v993, %v929
      %v1030 = vadd.f32 %v994, %v932
      %v1031 = vadd.f32 %v995, %v934
      %v1032 = vadd.f32 %v996, %v937
      %v1033 = vadd.f32 %v997, %v939
      %v1034 = vadd.f32 %v998, %v942
      %v1035 = vadd.f32 %v999, %v944
      %v1036 = vadd.f32 %v1000, %v947
      %v1037 = vadd.f32 %v1001, %v949
      %v1038 = vadd.f32 %v1002, %v952
      %v1039 = vadd.f32 %v1003, %v954
      %v1040 = vadd.f32 %v1004, %v957
      %v1041 = vadd.f32 %v1005, %v959
      %v1042 = vadd.f32 %v1006, %v962
      %v1043 = vadd.f32 %v1007, %v964
      %v1044 = vadd.f32 %v1008, %v967
      %v1045 = vadd.f32 %v1009, %v969
      %v1046 = vadd.f32 %v1010, %v972
      %v1047 = vadd.f32 %v1011, %v974
      %1048 = vst [vmem:[#allocation2] sm:$0xff] %v1012
      %1049 = vst [vmem:[#allocation2 + $0x8] sm:$0xff] %v1013
      %1050 = vst [vmem:[#allocation2 + $0x10] sm:$0xff] %v1014
      %1051 = vst [vmem:[#allocation2 + $0x18] sm:$0xff] %v1015
      %1052 = vst [vmem:[#allocation2 + $0x20] sm:$0xff] %v1016
      %1053 = vst [vmem:[#allocation2 + $0x28] sm:$0xff] %v1017
      %1054 = vst [vmem:[#allocation2 + $0x30] sm:$0xff] %v1018
      %1055 = vst [vmem:[#allocation2 + $0x38] sm:$0xff] %v1019
      %1056 = vst [vmem:[#allocation2 + $0x40] sm:$0xff] %v1020
      %1057 = vst [vmem:[#allocation2 + $0x48] sm:$0xff] %v1021
      %1058 = vst [vmem:[#allocation2 + $0x50] sm:$0xff] %v1022
      %1059 = vst [vmem:[#allocation2 + $0x58] sm:$0xff] %v1023
      %1060 = vst [vmem:[#allocation2 + $0x60] sm:$0xff] %v1024
      %1061 = vst [vmem:[#allocation2 + $0x68] sm:$0xff] %v1025
      %1062 = vst [vmem:[#allocation2 + $0x70] sm:$0xff] %v1026
      %1063 = vst [vmem:[#allocation2 + $0x78] sm:$0xff] %v1027
      %1064 = vst [vmem:[#allocation2 + $0x80] sm:$0xff] %v1028
      %1065 = vst [vmem:[#allocation2 + $0x88] sm:$0xff] %v1029
      %1066 = vst [vmem:[#allocation2 + $0x90] sm:$0xff] %v1030
      %1067 = vst [vmem:[#allocation2 + $0x98] sm:$0xff] %v1031
      %1068 = vst [vmem:[#allocation2 + $0xa0] sm:$0xff] %v1032
      %1069 = vst [vmem:[#allocation2 + $0xa8] sm:$0xff] %v1033
      %1070 = vst [vmem:[#allocation2 + $0xb0] sm:$0xff] %v1034
      %1071 = vst [vmem:[#allocation2 + $0xb8] sm:$0xff] %v1035
      %1072 = vst [vmem:[#allocation2 + $0xc0] sm:$0xff] %v1036
      %1073 = vst [vmem:[#allocation2 + $0xc8] sm:$0xff] %v1037
      %1074 = vst [vmem:[#allocation2 + $0xd0] sm:$0xff] %v1038
      %1075 = vst [vmem:[#allocation2 + $0xd8] sm:$0xff] %v1039
      %1076 = vst [vmem:[#allocation2 + $0xe0] sm:$0xff] %v1040
      %1077 = vst [vmem:[#allocation2 + $0xe8] sm:$0xff] %v1041
      %1078 = vst [vmem:[#allocation2 + $0xf0] sm:$0xff] %v1042
      %1079 = vst [vmem:[#allocation2 + $0xf8] sm:$0xff] %v1043
      %1080 = vst [vmem:[#allocation2 + $0x100] sm:$0xff] %v1044
      %1081 = vst [vmem:[#allocation2 + $0x108] sm:$0xff] %v1045
      %1082 = vst [vmem:[#allocation2 + $0x110] sm:$0xff] %v1046
      %1083 = vst [vmem:[#allocation2 + $0x118] sm:$0xff] %v1047
      %v1084 = vld [vmem:[%s165] sm:$0xe]
      %v1085 = vld [vmem:[%s165 + $0x4] sm:$0xf]
      %v1086 = vld [vmem:[%s165 + $0x8] sm:$0xf]
      %v1087 = vld [vmem:[%s165 + $0xc] sm:$0xf]
      %v1088 = vld [vmem:[%s165 + $0x10] sm:$0xf]
      %v1089 = vld [vmem:[%s165 + $0x14] sm:$0xf]
      %v1090 = vld [vmem:[%s165 + $0x18] sm:$0xf]
      %v1091 = vld [vmem:[%s165 + $0x1c] sm:$0xf]
      %v1092 = vld [vmem:[%s165 + $0x20] sm:$0xf]
      %v1093 = vld [vmem:[%s165 + $0x24] sm:$0xf]
      %v1094 = vld [vmem:[%s165 + $0x28] sm:$0xf]
      %v1095 = vld [vmem:[%s165 + $0x2c] sm:$0xf]
      %v1096 = vld [vmem:[%s165 + $0x30] sm:$0xf]
      %v1097 = vld [vmem:[%s165 + $0x34] sm:$0xf]
      %v1098 = vld [vmem:[%s165 + $0x38] sm:$0xf]
      %v1099 = vld [vmem:[%s165 + $0x3c] sm:$0xf]
      %v1100 = vld [vmem:[%s165 + $0x40] sm:$0xf]
      %v1101 = vld [vmem:[%s165 + $0x44] sm:$0xf]
      %v1102 = vld [vmem:[%s165 + $0x48] sm:$0xf]
      %v1103 = vld [vmem:[%s165 + $0x4c] sm:$0xf]
      %v1104 = vld [vmem:[%s165 + $0x50] sm:$0xf]
      %v1105 = vld [vmem:[%s165 + $0x54] sm:$0xf]
      %v1106 = vld [vmem:[%s165 + $0x58] sm:$0xf]
      %v1107 = vld [vmem:[%s165 + $0x5c] sm:$0xf]
      %v1108 = vld [vmem:[%s165 + $0x60] sm:$0xf]
      %v1109 = vld [vmem:[%s165 + $0x64] sm:$0xf]
      %v1110 = vld [vmem:[%s165 + $0x68] sm:$0xf]
      %v1111 = vld [vmem:[%s165 + $0x6c] sm:$0xf]
      %v1112 = vld [vmem:[%s165 + $0x70] sm:$0xf]
      %v1113 = vld [vmem:[%s165 + $0x74] sm:$0xf]
      %v1114 = vld [vmem:[%s165 + $0x78] sm:$0xf]
      %v1115 = vld [vmem:[%s165 + $0x7c] sm:$0xf]
      %v1116 = vld [vmem:[%s165 + $0x80] sm:$0xf]
      %v1117 = vld [vmem:[%s165 + $0x84] sm:$0xf]
      %v1118 = vld [vmem:[%s165 + $0x88] sm:$0xf]
      %v1119 = vld [vmem:[%s165 + $0x8c] sm:$0xf]
      %v1120 = vld [vmem:[%s165 + $0x90] sm:$0x1]
      %s1121 = scalar_lea.vmem %s1, 128
      %v1122 = vld [vmem:[%s1121] sm:$0xf]
      %v1123 = vld [vmem:[%s1121 + $0x4] sm:$0xf]
      %v1124 = vld [vmem:[%s1121 + $0x8] sm:$0xf]
      %v1125 = vld [vmem:[%s1121 + $0xc] sm:$0xf]
      %v1126 = vld [vmem:[%s1121 + $0x10] sm:$0xf]
      %v1127 = vld [vmem:[%s1121 + $0x14] sm:$0xf]
      %v1128 = vld [vmem:[%s1121 + $0x18] sm:$0xf]
      %v1129 = vld [vmem:[%s1121 + $0x1c] sm:$0xf]
      %v1130 = vld [vmem:[%s1121 + $0x20] sm:$0xf]
      %v1131 = vld [vmem:[%s1121 + $0x24] sm:$0xf]
      %v1132 = vld [vmem:[%s1121 + $0x28] sm:$0xf]
      %v1133 = vld [vmem:[%s1121 + $0x2c] sm:$0xf]
      %v1134 = vld [vmem:[%s1121 + $0x30] sm:$0xf]
      %v1135 = vld [vmem:[%s1121 + $0x34] sm:$0xf]
      %v1136 = vld [vmem:[%s1121 + $0x38] sm:$0xf]
      %v1137 = vld [vmem:[%s1121 + $0x3c] sm:$0xf]
      %v1175 = vunpack.c.l.b16 %v1084
      %v1176 = vunpack.c.l.b16 %v1085
      %v1177 = vunpack.c.l.b16 %v1086
      %v1178 = vunpack.c.l.b16 %v1087
      %v1179 = vunpack.c.l.b16 %v1088
      %v1180 = vunpack.c.l.b16 %v1089
      %v1181 = vunpack.c.l.b16 %v1090
      %v1182 = vunpack.c.l.b16 %v1091
      %v1183 = vunpack.c.l.b16 %v1092
      %v1184 = vunpack.c.l.b16 %v1093
      %v1185 = vunpack.c.l.b16 %v1094
      %v1186 = vunpack.c.l.b16 %v1095
      %v1187 = vunpack.c.l.b16 %v1096
      %v1188 = vunpack.c.l.b16 %v1097
      %v1189 = vunpack.c.l.b16 %v1098
      %v1190 = vunpack.c.l.b16 %v1099
      %v1191 = vunpack.c.l.b16 %v1100
      %v1192 = vunpack.c.l.b16 %v1101
      %v1193 = vunpack.c.l.b16 %v1102
      %v1194 = vunpack.c.l.b16 %v1103
      %v1195 = vunpack.c.l.b16 %v1104
      %v1196 = vunpack.c.l.b16 %v1105
      %v1197 = vunpack.c.l.b16 %v1106
      %v1198 = vunpack.c.l.b16 %v1107
      %v1199 = vunpack.c.l.b16 %v1108
      %v1200 = vunpack.c.l.b16 %v1109
      %v1201 = vunpack.c.l.b16 %v1110
      %v1202 = vunpack.c.l.b16 %v1111
      %v1203 = vunpack.c.l.b16 %v1112
      %v1204 = vunpack.c.l.b16 %v1113
      %v1205 = vunpack.c.l.b16 %v1114
      %v1206 = vunpack.c.l.b16 %v1115
      %v1207 = vunpack.c.l.b16 %v1116
      %v1208 = vunpack.c.l.b16 %v1117
      %v1209 = vunpack.c.l.b16 %v1118
      %v1210 = vunpack.c.l.b16 %v1119
      %v1211 = vunpack.c.l.b16 %v1120
      %v1212 = vpack.c.b16 %v1176, %v1175
      %v1213 = vpack.c.b16 %v1178, %v1177
      %v1214 = vpack.c.b16 %v1180, %v1179
      %v1215 = vpack.c.b16 %v1182, %v1181
      %v1216 = vpack.c.b16 %v1184, %v1183
      %v1217 = vpack.c.b16 %v1186, %v1185
      %v1218 = vpack.c.b16 %v1188, %v1187
      %v1219 = vpack.c.b16 %v1190, %v1189
      %v1220 = vpack.c.b16 %v1192, %v1191
      %v1221 = vpack.c.b16 %v1194, %v1193
      %v1222 = vpack.c.b16 %v1196, %v1195
      %v1223 = vpack.c.b16 %v1198, %v1197
      %v1224 = vpack.c.b16 %v1200, %v1199
      %v1225 = vpack.c.b16 %v1202, %v1201
      %v1226 = vpack.c.b16 %v1204, %v1203
      %v1227 = vpack.c.b16 %v1206, %v1205
      %v1228 = vpack.c.b16 %v1208, %v1207
      %v1229 = vpack.c.b16 %v1210, %v1209
      %v1230 = vpack.c.b16 %v1211, %v1211
      %vm1231 = vcmask 1046528
      %v1232 = vrot.slane %v1212, 1
      %v1233 = vrot.slane %v1213, 1
      %v1234 = vsel %vm1231, %v1232, %v1233
      %v1235 = vrot.slane %v1214, 1
      %v1236 = vsel %vm1231, %v1233, %v1235
      %v1237 = vrot.slane %v1215, 1
      %v1238 = vsel %vm1231, %v1235, %v1237
      %v1239 = vrot.slane %v1216, 1
      %v1240 = vsel %vm1231, %v1237, %v1239
      %v1241 = vrot.slane %v1217, 1
      %v1242 = vsel %vm1231, %v1239, %v1241
      %v1243 = vrot.slane %v1218, 1
      %v1244 = vsel %vm1231, %v1241, %v1243
      %v1245 = vrot.slane %v1219, 1
      %v1246 = vsel %vm1231, %v1243, %v1245
      %v1247 = vrot.slane %v1220, 1
      %v1248 = vsel %vm1231, %v1245, %v1247
      %v1249 = vrot.slane %v1221, 1
      %v1250 = vsel %vm1231, %v1247, %v1249
      %v1251 = vrot.slane %v1222, 1
      %v1252 = vsel %vm1231, %v1249, %v1251
      %v1253 = vrot.slane %v1223, 1
      %v1254 = vsel %vm1231, %v1251, %v1253
      %v1255 = vrot.slane %v1224, 1
      %v1256 = vsel %vm1231, %v1253, %v1255
      %v1257 = vrot.slane %v1225, 1
      %v1258 = vsel %vm1231, %v1255, %v1257
      %v1259 = vrot.slane %v1226, 1
      %v1260 = vsel %vm1231, %v1257, %v1259
      %v1261 = vrot.slane %v1227, 1
      %v1262 = vsel %vm1231, %v1259, %v1261
      %v1263 = vrot.slane %v1228, 1
      %v1264 = vsel %vm1231, %v1261, %v1263
      %v1265 = vrot.slane %v1229, 1
      %v1266 = vsel %vm1231, %v1263, %v1265
      %v1267 = vrot.slane %v1230, 1
      %v1268 = vsel %vm1231, %v1265, %v1267
      %v1303 = vunpack.c.l.b16 %v1122
      %v1304 = vunpack.c.l.b16 %v1123
      %v1305 = vunpack.c.l.b16 %v1124
      %v1306 = vunpack.c.l.b16 %v1125
      %v1307 = vunpack.c.l.b16 %v1126
      %v1308 = vunpack.c.l.b16 %v1127
      %v1309 = vunpack.c.l.b16 %v1128
      %v1310 = vunpack.c.l.b16 %v1129
      %v1311 = vunpack.c.l.b16 %v1130
      %v1312 = vunpack.c.l.b16 %v1131
      %v1313 = vunpack.c.l.b16 %v1132
      %v1314 = vunpack.c.l.b16 %v1133
      %v1315 = vunpack.c.l.b16 %v1134
      %v1316 = vunpack.c.l.b16 %v1135
      %v1317 = vunpack.c.l.b16 %v1136
      %v1318 = vunpack.c.l.b16 %v1137
      %v1319 = vpack.c.b16 %v1304, %v1303
      %v1320 = vpack.c.b16 %v1306, %v1305
      %v1321 = vpack.c.b16 %v1308, %v1307
      %v1322 = vpack.c.b16 %v1310, %v1309
      %v1323 = vpack.c.b16 %v1312, %v1311
      %v1324 = vpack.c.b16 %v1314, %v1313
      %v1325 = vpack.c.b16 %v1316, %v1315
      %v1326 = vpack.c.b16 %v1318, %v1317
      %1335 = vmatpush.bf16.msra.mxu0 %v1326
      %1336 = vmatpush.bf16.msra.mxu0 %v1325
      %1337 = vmatpush.bf16.msra.mxu0 %v1324
      %1338 = vmatpush.bf16.msra.mxu0 %v1323
      %1339 = vmatpush.bf16.msra.mxu0 %v1322
      %1340 = vmatpush.bf16.msra.mxu0 %v1321
      %1341 = vmatpush.bf16.msra.mxu0 %v1320
      %1342 = vmatpush.bf16.msra.mxu0 %v1319
      %1343 = vmatmul.bf16.gmra.mxu0 %v1234
      %v1344 = vpop.f32.mrf.mxu0
      %v1345 = vadd.f32 0.0, %v1344
      %v1346 = vpop.f32.mrf.mxu0
      %v1347 = vadd.f32 0.0, %v1346
      %1348 = vmatmul.bf16.gmra.mxu0 %v1236
      %v1349 = vpop.f32.mrf.mxu0
      %v1350 = vadd.f32 0.0, %v1349
      %v1351 = vpop.f32.mrf.mxu0
      %v1352 = vadd.f32 0.0, %v1351
      %1353 = vmatmul.bf16.gmra.mxu0 %v1238
      %v1354 = vpop.f32.mrf.mxu0
      %v1355 = vadd.f32 0.0, %v1354
      %v1356 = vpop.f32.mrf.mxu0
      %v1357 = vadd.f32 0.0, %v1356
      %1358 = vmatmul.bf16.gmra.mxu0 %v1240
      %v1359 = vpop.f32.mrf.mxu0
      %v1360 = vadd.f32 0.0, %v1359
      %v1361 = vpop.f32.mrf.mxu0
      %v1362 = vadd.f32 0.0, %v1361
      %1363 = vmatmul.bf16.gmra.mxu0 %v1242
      %v1364 = vpop.f32.mrf.mxu0
      %v1365 = vadd.f32 0.0, %v1364
      %v1366 = vpop.f32.mrf.mxu0
      %v1367 = vadd.f32 0.0, %v1366
      %1368 = vmatmul.bf16.gmra.mxu0 %v1244
      %v1369 = vpop.f32.mrf.mxu0
      %v1370 = vadd.f32 0.0, %v1369
      %v1371 = vpop.f32.mrf.mxu0
      %v1372 = vadd.f32 0.0, %v1371
      %1373 = vmatmul.bf16.gmra.mxu0 %v1246
      %v1374 = vpop.f32.mrf.mxu0
      %v1375 = vadd.f32 0.0, %v1374
      %v1376 = vpop.f32.mrf.mxu0
      %v1377 = vadd.f32 0.0, %v1376
      %1378 = vmatmul.bf16.gmra.mxu0 %v1248
      %v1379 = vpop.f32.mrf.mxu0
      %v1380 = vadd.f32 0.0, %v1379
      %v1381 = vpop.f32.mrf.mxu0
      %v1382 = vadd.f32 0.0, %v1381
      %1383 = vmatmul.bf16.gmra.mxu0 %v1250
      %v1384 = vpop.f32.mrf.mxu0
      %v1385 = vadd.f32 0.0, %v1384
      %v1386 = vpop.f32.mrf.mxu0
      %v1387 = vadd.f32 0.0, %v1386
      %1388 = vmatmul.bf16.gmra.mxu0 %v1252
      %v1389 = vpop.f32.mrf.mxu0
      %v1390 = vadd.f32 0.0, %v1389
      %v1391 = vpop.f32.mrf.mxu0
      %v1392 = vadd.f32 0.0, %v1391
      %1393 = vmatmul.bf16.gmra.mxu0 %v1254
      %v1394 = vpop.f32.mrf.mxu0
      %v1395 = vadd.f32 0.0, %v1394
      %v1396 = vpop.f32.mrf.mxu0
      %v1397 = vadd.f32 0.0, %v1396
      %1398 = vmatmul.bf16.gmra.mxu0 %v1256
      %v1399 = vpop.f32.mrf.mxu0
      %v1400 = vadd.f32 0.0, %v1399
      %v1401 = vpop.f32.mrf.mxu0
      %v1402 = vadd.f32 0.0, %v1401
      %1403 = vmatmul.bf16.gmra.mxu0 %v1258
      %v1404 = vpop.f32.mrf.mxu0
      %v1405 = vadd.f32 0.0, %v1404
      %v1406 = vpop.f32.mrf.mxu0
      %v1407 = vadd.f32 0.0, %v1406
      %1408 = vmatmul.bf16.gmra.mxu0 %v1260
      %v1409 = vpop.f32.mrf.mxu0
      %v1410 = vadd.f32 0.0, %v1409
      %v1411 = vpop.f32.mrf.mxu0
      %v1412 = vadd.f32 0.0, %v1411
      %1413 = vmatmul.bf16.gmra.mxu0 %v1262
      %v1414 = vpop.f32.mrf.mxu0
      %v1415 = vadd.f32 0.0, %v1414
      %v1416 = vpop.f32.mrf.mxu0
      %v1417 = vadd.f32 0.0, %v1416
      %1418 = vmatmul.bf16.gmra.mxu0 %v1264
      %v1419 = vpop.f32.mrf.mxu0
      %v1420 = vadd.f32 0.0, %v1419
      %v1421 = vpop.f32.mrf.mxu0
      %v1422 = vadd.f32 0.0, %v1421
      %1423 = vmatmul.bf16.gmra.mxu0 %v1266
      %v1424 = vpop.f32.mrf.mxu0
      %v1425 = vadd.f32 0.0, %v1424
      %v1426 = vpop.f32.mrf.mxu0
      %v1427 = vadd.f32 0.0, %v1426
      %1428 = vmatmul.bf16.gmra.mxu0 %v1268
      %v1429 = vpop.f32.mrf.mxu0
      %v1430 = vadd.f32 0.0, %v1429
      %v1431 = vpop.f32.mrf.mxu0
      %v1432 = vadd.f32 0.0, %v1431
      %1433 = vdwg.mxu0
      %v1434 = vld [vmem:[#allocation2] sm:$0xff]
      %v1435 = vld [vmem:[#allocation2 + $0x8] sm:$0xff]
      %v1436 = vld [vmem:[#allocation2 + $0x10] sm:$0xff]
      %v1437 = vld [vmem:[#allocation2 + $0x18] sm:$0xff]
      %v1438 = vld [vmem:[#allocation2 + $0x20] sm:$0xff]
      %v1439 = vld [vmem:[#allocation2 + $0x28] sm:$0xff]
      %v1440 = vld [vmem:[#allocation2 + $0x30] sm:$0xff]
      %v1441 = vld [vmem:[#allocation2 + $0x38] sm:$0xff]
      %v1442 = vld [vmem:[#allocation2 + $0x40] sm:$0xff]
      %v1443 = vld [vmem:[#allocation2 + $0x48] sm:$0xff]
      %v1444 = vld [vmem:[#allocation2 + $0x50] sm:$0xff]
      %v1445 = vld [vmem:[#allocation2 + $0x58] sm:$0xff]
      %v1446 = vld [vmem:[#allocation2 + $0x60] sm:$0xff]
      %v1447 = vld [vmem:[#allocation2 + $0x68] sm:$0xff]
      %v1448 = vld [vmem:[#allocation2 + $0x70] sm:$0xff]
      %v1449 = vld [vmem:[#allocation2 + $0x78] sm:$0xff]
      %v1450 = vld [vmem:[#allocation2 + $0x80] sm:$0xff]
      %v1451 = vld [vmem:[#allocation2 + $0x88] sm:$0xff]
      %v1452 = vld [vmem:[#allocation2 + $0x90] sm:$0xff]
      %v1453 = vld [vmem:[#allocation2 + $0x98] sm:$0xff]
      %v1454 = vld [vmem:[#allocation2 + $0xa0] sm:$0xff]
      %v1455 = vld [vmem:[#allocation2 + $0xa8] sm:$0xff]
      %v1456 = vld [vmem:[#allocation2 + $0xb0] sm:$0xff]
      %v1457 = vld [vmem:[#allocation2 + $0xb8] sm:$0xff]
      %v1458 = vld [vmem:[#allocation2 + $0xc0] sm:$0xff]
      %v1459 = vld [vmem:[#allocation2 + $0xc8] sm:$0xff]
      %v1460 = vld [vmem:[#allocation2 + $0xd0] sm:$0xff]
      %v1461 = vld [vmem:[#allocation2 + $0xd8] sm:$0xff]
      %v1462 = vld [vmem:[#allocation2 + $0xe0] sm:$0xff]
      %v1463 = vld [vmem:[#allocation2 + $0xe8] sm:$0xff]
      %v1464 = vld [vmem:[#allocation2 + $0xf0] sm:$0xff]
      %v1465 = vld [vmem:[#allocation2 + $0xf8] sm:$0xff]
      %v1466 = vld [vmem:[#allocation2 + $0x100] sm:$0xff]
      %v1467 = vld [vmem:[#allocation2 + $0x108] sm:$0xff]
      %v1468 = vld [vmem:[#allocation2 + $0x110] sm:$0xff]
      %v1469 = vld [vmem:[#allocation2 + $0x118] sm:$0xff]
      %v1470 = vadd.f32 %v1434, %v1345
      %v1471 = vadd.f32 %v1435, %v1347
      %v1472 = vadd.f32 %v1436, %v1350
      %v1473 = vadd.f32 %v1437, %v1352
      %v1474 = vadd.f32 %v1438, %v1355
      %v1475 = vadd.f32 %v1439, %v1357
      %v1476 = vadd.f32 %v1440, %v1360
      %v1477 = vadd.f32 %v1441, %v1362
      %v1478 = vadd.f32 %v1442, %v1365
      %v1479 = vadd.f32 %v1443, %v1367
      %v1480 = vadd.f32 %v1444, %v1370
      %v1481 = vadd.f32 %v1445, %v1372
      %v1482 = vadd.f32 %v1446, %v1375
      %v1483 = vadd.f32 %v1447, %v1377
      %v1484 = vadd.f32 %v1448, %v1380
      %v1485 = vadd.f32 %v1449, %v1382
      %v1486 = vadd.f32 %v1450, %v1385
      %v1487 = vadd.f32 %v1451, %v1387
      %v1488 = vadd.f32 %v1452, %v1390
      %v1489 = vadd.f32 %v1453, %v1392
      %v1490 = vadd.f32 %v1454, %v1395
      %v1491 = vadd.f32 %v1455, %v1397
      %v1492 = vadd.f32 %v1456, %v1400
      %v1493 = vadd.f32 %v1457, %v1402
      %v1494 = vadd.f32 %v1458, %v1405
      %v1495 = vadd.f32 %v1459, %v1407
      %v1496 = vadd.f32 %v1460, %v1410
      %v1497 = vadd.f32 %v1461, %v1412
      %v1498 = vadd.f32 %v1462, %v1415
      %v1499 = vadd.f32 %v1463, %v1417
      %v1500 = vadd.f32 %v1464, %v1420
      %v1501 = vadd.f32 %v1465, %v1422
      %v1502 = vadd.f32 %v1466, %v1425
      %v1503 = vadd.f32 %v1467, %v1427
      %v1504 = vadd.f32 %v1468, %v1430
      %v1505 = vadd.f32 %v1469, %v1432
      %1506 = vst [vmem:[#allocation2] sm:$0xff] %v1470
      %1507 = vst [vmem:[#allocation2 + $0x8] sm:$0xff] %v1471
      %1508 = vst [vmem:[#allocation2 + $0x10] sm:$0xff] %v1472
      %1509 = vst [vmem:[#allocation2 + $0x18] sm:$0xff] %v1473
      %1510 = vst [vmem:[#allocation2 + $0x20] sm:$0xff] %v1474
      %1511 = vst [vmem:[#allocation2 + $0x28] sm:$0xff] %v1475
      %1512 = vst [vmem:[#allocation2 + $0x30] sm:$0xff] %v1476
      %1513 = vst [vmem:[#allocation2 + $0x38] sm:$0xff] %v1477
      %1514 = vst [vmem:[#allocation2 + $0x40] sm:$0xff] %v1478
      %1515 = vst [vmem:[#allocation2 + $0x48] sm:$0xff] %v1479
      %1516 = vst [vmem:[#allocation2 + $0x50] sm:$0xff] %v1480
      %1517 = vst [vmem:[#allocation2 + $0x58] sm:$0xff] %v1481
      %1518 = vst [vmem:[#allocation2 + $0x60] sm:$0xff] %v1482
      %1519 = vst [vmem:[#allocation2 + $0x68] sm:$0xff] %v1483
      %1520 = vst [vmem:[#allocation2 + $0x70] sm:$0xff] %v1484
      %1521 = vst [vmem:[#allocation2 + $0x78] sm:$0xff] %v1485
      %1522 = vst [vmem:[#allocation2 + $0x80] sm:$0xff] %v1486
      %1523 = vst [vmem:[#allocation2 + $0x88] sm:$0xff] %v1487
      %1524 = vst [vmem:[#allocation2 + $0x90] sm:$0xff] %v1488
      %1525 = vst [vmem:[#allocation2 + $0x98] sm:$0xff] %v1489
      %1526 = vst [vmem:[#allocation2 + $0xa0] sm:$0xff] %v1490
      %1527 = vst [vmem:[#allocation2 + $0xa8] sm:$0xff] %v1491
      %1528 = vst [vmem:[#allocation2 + $0xb0] sm:$0xff] %v1492
      %1529 = vst [vmem:[#allocation2 + $0xb8] sm:$0xff] %v1493
      %1530 = vst [vmem:[#allocation2 + $0xc0] sm:$0xff] %v1494
      %1531 = vst [vmem:[#allocation2 + $0xc8] sm:$0xff] %v1495
      %1532 = vst [vmem:[#allocation2 + $0xd0] sm:$0xff] %v1496
      %1533 = vst [vmem:[#allocation2 + $0xd8] sm:$0xff] %v1497
      %1534 = vst [vmem:[#allocation2 + $0xe0] sm:$0xff] %v1498
      %1535 = vst [vmem:[#allocation2 + $0xe8] sm:$0xff] %v1499
      %1536 = vst [vmem:[#allocation2 + $0xf0] sm:$0xff] %v1500
      %1537 = vst [vmem:[#allocation2 + $0xf8] sm:$0xff] %v1501
      %1538 = vst [vmem:[#allocation2 + $0x100] sm:$0xff] %v1502
      %1539 = vst [vmem:[#allocation2 + $0x108] sm:$0xff] %v1503
      %1540 = vst [vmem:[#allocation2 + $0x110] sm:$0xff] %v1504
      %1541 = vst [vmem:[#allocation2 + $0x118] sm:$0xff] %v1505
      %v1542 = vld [vmem:[%s165 + $0x8] sm:$0xe]
      %v1543 = vld [vmem:[%s165 + $0xc] sm:$0xf]
      %v1544 = vld [vmem:[%s165 + $0x10] sm:$0xf]
      %v1545 = vld [vmem:[%s165 + $0x14] sm:$0xf]
      %v1546 = vld [vmem:[%s165 + $0x18] sm:$0xf]
      %v1547 = vld [vmem:[%s165 + $0x1c] sm:$0xf]
      %v1548 = vld [vmem:[%s165 + $0x20] sm:$0xf]
      %v1549 = vld [vmem:[%s165 + $0x24] sm:$0xf]
      %v1550 = vld [vmem:[%s165 + $0x28] sm:$0xf]
      %v1551 = vld [vmem:[%s165 + $0x2c] sm:$0xf]
      %v1552 = vld [vmem:[%s165 + $0x30] sm:$0xf]
      %v1553 = vld [vmem:[%s165 + $0x34] sm:$0xf]
      %v1554 = vld [vmem:[%s165 + $0x38] sm:$0xf]
      %v1555 = vld [vmem:[%s165 + $0x3c] sm:$0xf]
      %v1556 = vld [vmem:[%s165 + $0x40] sm:$0xf]
      %v1557 = vld [vmem:[%s165 + $0x44] sm:$0xf]
      %v1558 = vld [vmem:[%s165 + $0x48] sm:$0xf]
      %v1559 = vld [vmem:[%s165 + $0x4c] sm:$0xf]
      %v1560 = vld [vmem:[%s165 + $0x50] sm:$0xf]
      %v1561 = vld [vmem:[%s165 + $0x54] sm:$0xf]
      %v1562 = vld [vmem:[%s165 + $0x58] sm:$0xf]
      %v1563 = vld [vmem:[%s165 + $0x5c] sm:$0xf]
      %v1564 = vld [vmem:[%s165 + $0x60] sm:$0xf]
      %v1565 = vld [vmem:[%s165 + $0x64] sm:$0xf]
      %v1566 = vld [vmem:[%s165 + $0x68] sm:$0xf]
      %v1567 = vld [vmem:[%s165 + $0x6c] sm:$0xf]
      %v1568 = vld [vmem:[%s165 + $0x70] sm:$0xf]
      %v1569 = vld [vmem:[%s165 + $0x74] sm:$0xf]
      %v1570 = vld [vmem:[%s165 + $0x78] sm:$0xf]
      %v1571 = vld [vmem:[%s165 + $0x7c] sm:$0xf]
      %v1572 = vld [vmem:[%s165 + $0x80] sm:$0xf]
      %v1573 = vld [vmem:[%s165 + $0x84] sm:$0xf]
      %v1574 = vld [vmem:[%s165 + $0x88] sm:$0xf]
      %v1575 = vld [vmem:[%s165 + $0x8c] sm:$0xf]
      %v1576 = vld [vmem:[%s165 + $0x90] sm:$0xf]
      %v1577 = vld [vmem:[%s165 + $0x94] sm:$0xf]
      %v1578 = vld [vmem:[%s165 + $0x98] sm:$0x1]
      %s1579 = scalar_lea.vmem %s1, 192
      %v1580 = vld [vmem:[%s1579] sm:$0xf]
      %v1581 = vld [vmem:[%s1579 + $0x4] sm:$0xf]
      %v1582 = vld [vmem:[%s1579 + $0x8] sm:$0xf]
      %v1583 = vld [vmem:[%s1579 + $0xc] sm:$0xf]
      %v1584 = vld [vmem:[%s1579 + $0x10] sm:$0xf]
      %v1585 = vld [vmem:[%s1579 + $0x14] sm:$0xf]
      %v1586 = vld [vmem:[%s1579 + $0x18] sm:$0xf]
      %v1587 = vld [vmem:[%s1579 + $0x1c] sm:$0xf]
      %v1588 = vld [vmem:[%s1579 + $0x20] sm:$0xf]
      %v1589 = vld [vmem:[%s1579 + $0x24] sm:$0xf]
      %v1590 = vld [vmem:[%s1579 + $0x28] sm:$0xf]
      %v1591 = vld [vmem:[%s1579 + $0x2c] sm:$0xf]
      %v1592 = vld [vmem:[%s1579 + $0x30] sm:$0xf]
      %v1593 = vld [vmem:[%s1579 + $0x34] sm:$0xf]
      %v1594 = vld [vmem:[%s1579 + $0x38] sm:$0xf]
      %v1595 = vld [vmem:[%s1579 + $0x3c] sm:$0xf]
      %v1633 = vunpack.c.l.b16 %v1542
      %v1634 = vunpack.c.l.b16 %v1543
      %v1635 = vunpack.c.l.b16 %v1544
      %v1636 = vunpack.c.l.b16 %v1545
      %v1637 = vunpack.c.l.b16 %v1546
      %v1638 = vunpack.c.l.b16 %v1547
      %v1639 = vunpack.c.l.b16 %v1548
      %v1640 = vunpack.c.l.b16 %v1549
      %v1641 = vunpack.c.l.b16 %v1550
      %v1642 = vunpack.c.l.b16 %v1551
      %v1643 = vunpack.c.l.b16 %v1552
      %v1644 = vunpack.c.l.b16 %v1553
      %v1645 = vunpack.c.l.b16 %v1554
      %v1646 = vunpack.c.l.b16 %v1555
      %v1647 = vunpack.c.l.b16 %v1556
      %v1648 = vunpack.c.l.b16 %v1557
      %v1649 = vunpack.c.l.b16 %v1558
      %v1650 = vunpack.c.l.b16 %v1559
      %v1651 = vunpack.c.l.b16 %v1560
      %v1652 = vunpack.c.l.b16 %v1561
      %v1653 = vunpack.c.l.b16 %v1562
      %v1654 = vunpack.c.l.b16 %v1563
      %v1655 = vunpack.c.l.b16 %v1564
      %v1656 = vunpack.c.l.b16 %v1565
      %v1657 = vunpack.c.l.b16 %v1566
      %v1658 = vunpack.c.l.b16 %v1567
      %v1659 = vunpack.c.l.b16 %v1568
      %v1660 = vunpack.c.l.b16 %v1569
      %v1661 = vunpack.c.l.b16 %v1570
      %v1662 = vunpack.c.l.b16 %v1571
      %v1663 = vunpack.c.l.b16 %v1572
      %v1664 = vunpack.c.l.b16 %v1573
      %v1665 = vunpack.c.l.b16 %v1574
      %v1666 = vunpack.c.l.b16 %v1575
      %v1667 = vunpack.c.l.b16 %v1576
      %v1668 = vunpack.c.l.b16 %v1577
      %v1669 = vunpack.c.l.b16 %v1578
      %v1670 = vpack.c.b16 %v1634, %v1633
      %v1671 = vpack.c.b16 %v1636, %v1635
      %v1672 = vpack.c.b16 %v1638, %v1637
      %v1673 = vpack.c.b16 %v1640, %v1639
      %v1674 = vpack.c.b16 %v1642, %v1641
      %v1675 = vpack.c.b16 %v1644, %v1643
      %v1676 = vpack.c.b16 %v1646, %v1645
      %v1677 = vpack.c.b16 %v1648, %v1647
      %v1678 = vpack.c.b16 %v1650, %v1649
      %v1679 = vpack.c.b16 %v1652, %v1651
      %v1680 = vpack.c.b16 %v1654, %v1653
      %v1681 = vpack.c.b16 %v1656, %v1655
      %v1682 = vpack.c.b16 %v1658, %v1657
      %v1683 = vpack.c.b16 %v1660, %v1659
      %v1684 = vpack.c.b16 %v1662, %v1661
      %v1685 = vpack.c.b16 %v1664, %v1663
      %v1686 = vpack.c.b16 %v1666, %v1665
      %v1687 = vpack.c.b16 %v1668, %v1667
      %v1688 = vpack.c.b16 %v1669, %v1669
      %v1689 = vrot.slane %v1670, 1
      %v1690 = vrot.slane %v1671, 1
      %v1691 = vsel %vm1231, %v1689, %v1690
      %v1692 = vrot.slane %v1672, 1
      %v1693 = vsel %vm1231, %v1690, %v1692
      %v1694 = vrot.slane %v1673, 1
      %v1695 = vsel %vm1231, %v1692, %v1694
      %v1696 = vrot.slane %v1674, 1
      %v1697 = vsel %vm1231, %v1694, %v1696
      %v1698 = vrot.slane %v1675, 1
      %v1699 = vsel %vm1231, %v1696, %v1698
      %v1700 = vrot.slane %v1676, 1
      %v1701 = vsel %vm1231, %v1698, %v1700
      %v1702 = vrot.slane %v1677, 1
      %v1703 = vsel %vm1231, %v1700, %v1702
      %v1704 = vrot.slane %v1678, 1
      %v1705 = vsel %vm1231, %v1702, %v1704
      %v1706 = vrot.slane %v1679, 1
      %v1707 = vsel %vm1231, %v1704, %v1706
      %v1708 = vrot.slane %v1680, 1
      %v1709 = vsel %vm1231, %v1706, %v1708
      %v1710 = vrot.slane %v1681, 1
      %v1711 = vsel %vm1231, %v1708, %v1710
      %v1712 = vrot.slane %v1682, 1
      %v1713 = vsel %vm1231, %v1710, %v1712
      %v1714 = vrot.slane %v1683, 1
      %v1715 = vsel %vm1231, %v1712, %v1714
      %v1716 = vrot.slane %v1684, 1
      %v1717 = vsel %vm1231, %v1714, %v1716
      %v1718 = vrot.slane %v1685, 1
      %v1719 = vsel %vm1231, %v1716, %v1718
      %v1720 = vrot.slane %v1686, 1
      %v1721 = vsel %vm1231, %v1718, %v1720
      %v1722 = vrot.slane %v1687, 1
      %v1723 = vsel %vm1231, %v1720, %v1722
      %v1724 = vrot.slane %v1688, 1
      %v1725 = vsel %vm1231, %v1722, %v1724
      %v1760 = vunpack.c.l.b16 %v1580
      %v1761 = vunpack.c.l.b16 %v1581
      %v1762 = vunpack.c.l.b16 %v1582
      %v1763 = vunpack.c.l.b16 %v1583
      %v1764 = vunpack.c.l.b16 %v1584
      %v1765 = vunpack.c.l.b16 %v1585
      %v1766 = vunpack.c.l.b16 %v1586
      %v1767 = vunpack.c.l.b16 %v1587
      %v1768 = vunpack.c.l.b16 %v1588
      %v1769 = vunpack.c.l.b16 %v1589
      %v1770 = vunpack.c.l.b16 %v1590
      %v1771 = vunpack.c.l.b16 %v1591
      %v1772 = vunpack.c.l.b16 %v1592
      %v1773 = vunpack.c.l.b16 %v1593
      %v1774 = vunpack.c.l.b16 %v1594
      %v1775 = vunpack.c.l.b16 %v1595
      %v1776 = vpack.c.b16 %v1761, %v1760
      %v1777 = vpack.c.b16 %v1763, %v1762
      %v1778 = vpack.c.b16 %v1765, %v1764
      %v1779 = vpack.c.b16 %v1767, %v1766
      %v1780 = vpack.c.b16 %v1769, %v1768
      %v1781 = vpack.c.b16 %v1771, %v1770
      %v1782 = vpack.c.b16 %v1773, %v1772
      %v1783 = vpack.c.b16 %v1775, %v1774
      %1792 = vmatpush.bf16.msra.mxu0 %v1783
      %1793 = vmatpush.bf16.msra.mxu0 %v1782
      %1794 = vmatpush.bf16.msra.mxu0 %v1781
      %1795 = vmatpush.bf16.msra.mxu0 %v1780
      %1796 = vmatpush.bf16.msra.mxu0 %v1779
      %1797 = vmatpush.bf16.msra.mxu0 %v1778
      %1798 = vmatpush.bf16.msra.mxu0 %v1777
      %1799 = vmatpush.bf16.msra.mxu0 %v1776
      %1800 = vmatmul.bf16.gmra.mxu0 %v1691
      %v1801 = vpop.f32.mrf.mxu0
      %v1802 = vadd.f32 0.0, %v1801
      %v1803 = vpop.f32.mrf.mxu0
      %v1804 = vadd.f32 0.0, %v1803
      %1805 = vmatmul.bf16.gmra.mxu0 %v1693
      %v1806 = vpop.f32.mrf.mxu0
      %v1807 = vadd.f32 0.0, %v1806
      %v1808 = vpop.f32.mrf.mxu0
      %v1809 = vadd.f32 0.0, %v1808
      %1810 = vmatmul.bf16.gmra.mxu0 %v1695
      %v1811 = vpop.f32.mrf.mxu0
      %v1812 = vadd.f32 0.0, %v1811
      %v1813 = vpop.f32.mrf.mxu0
      %v1814 = vadd.f32 0.0, %v1813
      %1815 = vmatmul.bf16.gmra.mxu0 %v1697
      %v1816 = vpop.f32.mrf.mxu0
      %v1817 = vadd.f32 0.0, %v1816
      %v1818 = vpop.f32.mrf.mxu0
      %v1819 = vadd.f32 0.0, %v1818
      %1820 = vmatmul.bf16.gmra.mxu0 %v1699
      %v1821 = vpop.f32.mrf.mxu0
      %v1822 = vadd.f32 0.0, %v1821
      %v1823 = vpop.f32.mrf.mxu0
      %v1824 = vadd.f32 0.0, %v1823
      %1825 = vmatmul.bf16.gmra.mxu0 %v1701
      %v1826 = vpop.f32.mrf.mxu0
      %v1827 = vadd.f32 0.0, %v1826
      %v1828 = vpop.f32.mrf.mxu0
      %v1829 = vadd.f32 0.0, %v1828
      %1830 = vmatmul.bf16.gmra.mxu0 %v1703
      %v1831 = vpop.f32.mrf.mxu0
      %v1832 = vadd.f32 0.0, %v1831
      %v1833 = vpop.f32.mrf.mxu0
      %v1834 = vadd.f32 0.0, %v1833
      %1835 = vmatmul.bf16.gmra.mxu0 %v1705
      %v1836 = vpop.f32.mrf.mxu0
      %v1837 = vadd.f32 0.0, %v1836
      %v1838 = vpop.f32.mrf.mxu0
      %v1839 = vadd.f32 0.0, %v1838
      %1840 = vmatmul.bf16.gmra.mxu0 %v1707
      %v1841 = vpop.f32.mrf.mxu0
      %v1842 = vadd.f32 0.0, %v1841
      %v1843 = vpop.f32.mrf.mxu0
      %v1844 = vadd.f32 0.0, %v1843
      %1845 = vmatmul.bf16.gmra.mxu0 %v1709
      %v1846 = vpop.f32.mrf.mxu0
      %v1847 = vadd.f32 0.0, %v1846
      %v1848 = vpop.f32.mrf.mxu0
      %v1849 = vadd.f32 0.0, %v1848
      %1850 = vmatmul.bf16.gmra.mxu0 %v1711
      %v1851 = vpop.f32.mrf.mxu0
      %v1852 = vadd.f32 0.0, %v1851
      %v1853 = vpop.f32.mrf.mxu0
      %v1854 = vadd.f32 0.0, %v1853
      %1855 = vmatmul.bf16.gmra.mxu0 %v1713
      %v1856 = vpop.f32.mrf.mxu0
      %v1857 = vadd.f32 0.0, %v1856
      %v1858 = vpop.f32.mrf.mxu0
      %v1859 = vadd.f32 0.0, %v1858
      %1860 = vmatmul.bf16.gmra.mxu0 %v1715
      %v1861 = vpop.f32.mrf.mxu0
      %v1862 = vadd.f32 0.0, %v1861
      %v1863 = vpop.f32.mrf.mxu0
      %v1864 = vadd.f32 0.0, %v1863
      %1865 = vmatmul.bf16.gmra.mxu0 %v1717
      %v1866 = vpop.f32.mrf.mxu0
      %v1867 = vadd.f32 0.0, %v1866
      %v1868 = vpop.f32.mrf.mxu0
      %v1869 = vadd.f32 0.0, %v1868
      %1870 = vmatmul.bf16.gmra.mxu0 %v1719
      %v1871 = vpop.f32.mrf.mxu0
      %v1872 = vadd.f32 0.0, %v1871
      %v1873 = vpop.f32.mrf.mxu0
      %v1874 = vadd.f32 0.0, %v1873
      %1875 = vmatmul.bf16.gmra.mxu0 %v1721
      %v1876 = vpop.f32.mrf.mxu0
      %v1877 = vadd.f32 0.0, %v1876
      %v1878 = vpop.f32.mrf.mxu0
      %v1879 = vadd.f32 0.0, %v1878
      %1880 = vmatmul.bf16.gmra.mxu0 %v1723
      %v1881 = vpop.f32.mrf.mxu0
      %v1882 = vadd.f32 0.0, %v1881
      %v1883 = vpop.f32.mrf.mxu0
      %v1884 = vadd.f32 0.0, %v1883
      %1885 = vmatmul.bf16.gmra.mxu0 %v1725
      %v1886 = vpop.f32.mrf.mxu0
      %v1887 = vadd.f32 0.0, %v1886
      %v1888 = vpop.f32.mrf.mxu0
      %v1889 = vadd.f32 0.0, %v1888
      %1890 = vdwg.mxu0
      %v1891 = vld [vmem:[#allocation2] sm:$0xff]
      %v1892 = vld [vmem:[#allocation2 + $0x8] sm:$0xff]
      %v1893 = vld [vmem:[#allocation2 + $0x10] sm:$0xff]
      %v1894 = vld [vmem:[#allocation2 + $0x18] sm:$0xff]
      %v1895 = vld [vmem:[#allocation2 + $0x20] sm:$0xff]
      %v1896 = vld [vmem:[#allocation2 + $0x28] sm:$0xff]
      %v1897 = vld [vmem:[#allocation2 + $0x30] sm:$0xff]
      %v1898 = vld [vmem:[#allocation2 + $0x38] sm:$0xff]
      %v1899 = vld [vmem:[#allocation2 + $0x40] sm:$0xff]
      %v1900 = vld [vmem:[#allocation2 + $0x48] sm:$0xff]
      %v1901 = vld [vmem:[#allocation2 + $0x50] sm:$0xff]
      %v1902 = vld [vmem:[#allocation2 + $0x58] sm:$0xff]
      %v1903 = vld [vmem:[#allocation2 + $0x60] sm:$0xff]
      %v1904 = vld [vmem:[#allocation2 + $0x68] sm:$0xff]
      %v1905 = vld [vmem:[#allocation2 + $0x70] sm:$0xff]
      %v1906 = vld [vmem:[#allocation2 + $0x78] sm:$0xff]
      %v1907 = vld [vmem:[#allocation2 + $0x80] sm:$0xff]
      %v1908 = vld [vmem:[#allocation2 + $0x88] sm:$0xff]
      %v1909 = vld [vmem:[#allocation2 + $0x90] sm:$0xff]
      %v1910 = vld [vmem:[#allocation2 + $0x98] sm:$0xff]
      %v1911 = vld [vmem:[#allocation2 + $0xa0] sm:$0xff]
      %v1912 = vld [vmem:[#allocation2 + $0xa8] sm:$0xff]
      %v1913 = vld [vmem:[#allocation2 + $0xb0] sm:$0xff]
      %v1914 = vld [vmem:[#allocation2 + $0xb8] sm:$0xff]
      %v1915 = vld [vmem:[#allocation2 + $0xc0] sm:$0xff]
      %v1916 = vld [vmem:[#allocation2 + $0xc8] sm:$0xff]
      %v1917 = vld [vmem:[#allocation2 + $0xd0] sm:$0xff]
      %v1918 = vld [vmem:[#allocation2 + $0xd8] sm:$0xff]
      %v1919 = vld [vmem:[#allocation2 + $0xe0] sm:$0xff]
      %v1920 = vld [vmem:[#allocation2 + $0xe8] sm:$0xff]
      %v1921 = vld [vmem:[#allocation2 + $0xf0] sm:$0xff]
      %v1922 = vld [vmem:[#allocation2 + $0xf8] sm:$0xff]
      %v1923 = vld [vmem:[#allocation2 + $0x100] sm:$0xff]
      %v1924 = vld [vmem:[#allocation2 + $0x108] sm:$0xff]
      %v1925 = vld [vmem:[#allocation2 + $0x110] sm:$0xff]
      %v1926 = vld [vmem:[#allocation2 + $0x118] sm:$0xff]
      %v1927 = vadd.f32 %v1891, %v1802
      %v1928 = vadd.f32 %v1892, %v1804
      %v1929 = vadd.f32 %v1893, %v1807
      %v1930 = vadd.f32 %v1894, %v1809
      %v1931 = vadd.f32 %v1895, %v1812
      %v1932 = vadd.f32 %v1896, %v1814
      %v1933 = vadd.f32 %v1897, %v1817
      %v1934 = vadd.f32 %v1898, %v1819
      %v1935 = vadd.f32 %v1899, %v1822
      %v1936 = vadd.f32 %v1900, %v1824
      %v1937 = vadd.f32 %v1901, %v1827
      %v1938 = vadd.f32 %v1902, %v1829
      %v1939 = vadd.f32 %v1903, %v1832
      %v1940 = vadd.f32 %v1904, %v1834
      %v1941 = vadd.f32 %v1905, %v1837
      %v1942 = vadd.f32 %v1906, %v1839
      %v1943 = vadd.f32 %v1907, %v1842
      %v1944 = vadd.f32 %v1908, %v1844
      %v1945 = vadd.f32 %v1909, %v1847
      %v1946 = vadd.f32 %v1910, %v1849
      %v1947 = vadd.f32 %v1911, %v1852
      %v1948 = vadd.f32 %v1912, %v1854
      %v1949 = vadd.f32 %v1913, %v1857
      %v1950 = vadd.f32 %v1914, %v1859
      %v1951 = vadd.f32 %v1915, %v1862
      %v1952 = vadd.f32 %v1916, %v1864
      %v1953 = vadd.f32 %v1917, %v1867
      %v1954 = vadd.f32 %v1918, %v1869
      %v1955 = vadd.f32 %v1919, %v1872
      %v1956 = vadd.f32 %v1920, %v1874
      %v1957 = vadd.f32 %v1921, %v1877
      %v1958 = vadd.f32 %v1922, %v1879
      %v1959 = vadd.f32 %v1923, %v1882
      %v1960 = vadd.f32 %v1924, %v1884
      %v1961 = vadd.f32 %v1925, %v1887
      %v1962 = vadd.f32 %v1926, %v1889
      %1963 = vst [vmem:[#allocation2] sm:$0xff] %v1927
      %1964 = vst [vmem:[#allocation2 + $0x8] sm:$0xff] %v1928
      %1965 = vst [vmem:[#allocation2 + $0x10] sm:$0xff] %v1929
      %1966 = vst [vmem:[#allocation2 + $0x18] sm:$0xff] %v1930
      %1967 = vst [vmem:[#allocation2 + $0x20] sm:$0xff] %v1931
      %1968 = vst [vmem:[#allocation2 + $0x28] sm:$0xff] %v1932
      %1969 = vst [vmem:[#allocation2 + $0x30] sm:$0xff] %v1933
      %1970 = vst [vmem:[#allocation2 + $0x38] sm:$0xff] %v1934
      %1971 = vst [vmem:[#allocation2 + $0x40] sm:$0xff] %v1935
      %1972 = vst [vmem:[#allocation2 + $0x48] sm:$0xff] %v1936
      %1973 = vst [vmem:[#allocation2 + $0x50] sm:$0xff] %v1937
      %1974 = vst [vmem:[#allocation2 + $0x58] sm:$0xff] %v1938
      %1975 = vst [vmem:[#allocation2 + $0x60] sm:$0xff] %v1939
      %1976 = vst [vmem:[#allocation2 + $0x68] sm:$0xff] %v1940
      %1977 = vst [vmem:[#allocation2 + $0x70] sm:$0xff] %v1941
      %1978 = vst [vmem:[#allocation2 + $0x78] sm:$0xff] %v1942
      %1979 = vst [vmem:[#allocation2 + $0x80] sm:$0xff] %v1943
      %1980 = vst [vmem:[#allocation2 + $0x88] sm:$0xff] %v1944
      %1981 = vst [vmem:[#allocation2 + $0x90] sm:$0xff] %v1945
      %1982 = vst [vmem:[#allocation2 + $0x98] sm:$0xff] %v1946
      %1983 = vst [vmem:[#allocation2 + $0xa0] sm:$0xff] %v1947
      %1984 = vst [vmem:[#allocation2 + $0xa8] sm:$0xff] %v1948
      %1985 = vst [vmem:[#allocation2 + $0xb0] sm:$0xff] %v1949
      %1986 = vst [vmem:[#allocation2 + $0xb8] sm:$0xff] %v1950
      %1987 = vst [vmem:[#allocation2 + $0xc0] sm:$0xff] %v1951
      %1988 = vst [vmem:[#allocation2 + $0xc8] sm:$0xff] %v1952
      %1989 = vst [vmem:[#allocation2 + $0xd0] sm:$0xff] %v1953
      %1990 = vst [vmem:[#allocation2 + $0xd8] sm:$0xff] %v1954
      %1991 = vst [vmem:[#allocation2 + $0xe0] sm:$0xff] %v1955
      %1992 = vst [vmem:[#allocation2 + $0xe8] sm:$0xff] %v1956
      %1993 = vst [vmem:[#allocation2 + $0xf0] sm:$0xff] %v1957
      %1994 = vst [vmem:[#allocation2 + $0xf8] sm:$0xff] %v1958
      %1995 = vst [vmem:[#allocation2 + $0x100] sm:$0xff] %v1959
      %1996 = vst [vmem:[#allocation2 + $0x108] sm:$0xff] %v1960
      %1997 = vst [vmem:[#allocation2 + $0x110] sm:$0xff] %v1961
      %1998 = vst [vmem:[#allocation2 + $0x118] sm:$0xff] %v1962
      %v1999 = vld [vmem:[%s165 + $0x8] sm:$0xe]
      %v2000 = vld [vmem:[%s165 + $0xc] sm:$0xf]
      %v2001 = vld [vmem:[%s165 + $0x10] sm:$0xf]
      %v2002 = vld [vmem:[%s165 + $0x14] sm:$0xf]
      %v2003 = vld [vmem:[%s165 + $0x18] sm:$0xf]
      %v2004 = vld [vmem:[%s165 + $0x1c] sm:$0xf]
      %v2005 = vld [vmem:[%s165 + $0x20] sm:$0xf]
      %v2006 = vld [vmem:[%s165 + $0x24] sm:$0xf]
      %v2007 = vld [vmem:[%s165 + $0x28] sm:$0xf]
      %v2008 = vld [vmem:[%s165 + $0x2c] sm:$0xf]
      %v2009 = vld [vmem:[%s165 + $0x30] sm:$0xf]
      %v2010 = vld [vmem:[%s165 + $0x34] sm:$0xf]
      %v2011 = vld [vmem:[%s165 + $0x38] sm:$0xf]
      %v2012 = vld [vmem:[%s165 + $0x3c] sm:$0xf]
      %v2013 = vld [vmem:[%s165 + $0x40] sm:$0xf]
      %v2014 = vld [vmem:[%s165 + $0x44] sm:$0xf]
      %v2015 = vld [vmem:[%s165 + $0x48] sm:$0xf]
      %v2016 = vld [vmem:[%s165 + $0x4c] sm:$0xf]
      %v2017 = vld [vmem:[%s165 + $0x50] sm:$0xf]
      %v2018 = vld [vmem:[%s165 + $0x54] sm:$0xf]
      %v2019 = vld [vmem:[%s165 + $0x58] sm:$0xf]
      %v2020 = vld [vmem:[%s165 + $0x5c] sm:$0xf]
      %v2021 = vld [vmem:[%s165 + $0x60] sm:$0xf]
      %v2022 = vld [vmem:[%s165 + $0x64] sm:$0xf]
      %v2023 = vld [vmem:[%s165 + $0x68] sm:$0xf]
      %v2024 = vld [vmem:[%s165 + $0x6c] sm:$0xf]
      %v2025 = vld [vmem:[%s165 + $0x70] sm:$0xf]
      %v2026 = vld [vmem:[%s165 + $0x74] sm:$0xf]
      %v2027 = vld [vmem:[%s165 + $0x78] sm:$0xf]
      %v2028 = vld [vmem:[%s165 + $0x7c] sm:$0xf]
      %v2029 = vld [vmem:[%s165 + $0x80] sm:$0xf]
      %v2030 = vld [vmem:[%s165 + $0x84] sm:$0xf]
      %v2031 = vld [vmem:[%s165 + $0x88] sm:$0xf]
      %v2032 = vld [vmem:[%s165 + $0x8c] sm:$0xf]
      %v2033 = vld [vmem:[%s165 + $0x90] sm:$0xf]
      %v2034 = vld [vmem:[%s165 + $0x94] sm:$0xf]
      %v2035 = vld [vmem:[%s165 + $0x98] sm:$0x3]
      %s2036 = scalar_lea.vmem %s1, 256
      %v2037 = vld [vmem:[%s2036] sm:$0xf]
      %v2038 = vld [vmem:[%s2036 + $0x4] sm:$0xf]
      %v2039 = vld [vmem:[%s2036 + $0x8] sm:$0xf]
      %v2040 = vld [vmem:[%s2036 + $0xc] sm:$0xf]
      %v2041 = vld [vmem:[%s2036 + $0x10] sm:$0xf]
      %v2042 = vld [vmem:[%s2036 + $0x14] sm:$0xf]
      %v2043 = vld [vmem:[%s2036 + $0x18] sm:$0xf]
      %v2044 = vld [vmem:[%s2036 + $0x1c] sm:$0xf]
      %v2045 = vld [vmem:[%s2036 + $0x20] sm:$0xf]
      %v2046 = vld [vmem:[%s2036 + $0x24] sm:$0xf]
      %v2047 = vld [vmem:[%s2036 + $0x28] sm:$0xf]
      %v2048 = vld [vmem:[%s2036 + $0x2c] sm:$0xf]
      %v2049 = vld [vmem:[%s2036 + $0x30] sm:$0xf]
      %v2050 = vld [vmem:[%s2036 + $0x34] sm:$0xf]
      %v2051 = vld [vmem:[%s2036 + $0x38] sm:$0xf]
      %v2052 = vld [vmem:[%s2036 + $0x3c] sm:$0xf]
      %v2090 = vunpack.c.l.b16 %v1999
      %v2091 = vunpack.c.l.b16 %v2000
      %v2092 = vunpack.c.l.b16 %v2001
      %v2093 = vunpack.c.l.b16 %v2002
      %v2094 = vunpack.c.l.b16 %v2003
      %v2095 = vunpack.c.l.b16 %v2004
      %v2096 = vunpack.c.l.b16 %v2005
      %v2097 = vunpack.c.l.b16 %v2006
      %v2098 = vunpack.c.l.b16 %v2007
      %v2099 = vunpack.c.l.b16 %v2008
      %v2100 = vunpack.c.l.b16 %v2009
      %v2101 = vunpack.c.l.b16 %v2010
      %v2102 = vunpack.c.l.b16 %v2011
      %v2103 = vunpack.c.l.b16 %v2012
      %v2104 = vunpack.c.l.b16 %v2013
      %v2105 = vunpack.c.l.b16 %v2014
      %v2106 = vunpack.c.l.b16 %v2015
      %v2107 = vunpack.c.l.b16 %v2016
      %v2108 = vunpack.c.l.b16 %v2017
      %v2109 = vunpack.c.l.b16 %v2018
      %v2110 = vunpack.c.l.b16 %v2019
      %v2111 = vunpack.c.l.b16 %v2020
      %v2112 = vunpack.c.l.b16 %v2021
      %v2113 = vunpack.c.l.b16 %v2022
      %v2114 = vunpack.c.l.b16 %v2023
      %v2115 = vunpack.c.l.b16 %v2024
      %v2116 = vunpack.c.l.b16 %v2025
      %v2117 = vunpack.c.l.b16 %v2026
      %v2118 = vunpack.c.l.b16 %v2027
      %v2119 = vunpack.c.l.b16 %v2028
      %v2120 = vunpack.c.l.b16 %v2029
      %v2121 = vunpack.c.l.b16 %v2030
      %v2122 = vunpack.c.l.b16 %v2031
      %v2123 = vunpack.c.l.b16 %v2032
      %v2124 = vunpack.c.l.b16 %v2033
      %v2125 = vunpack.c.l.b16 %v2034
      %v2126 = vunpack.c.l.b16 %v2035
      %v2127 = vpack.c.b16 %v2091, %v2090
      %v2128 = vpack.c.b16 %v2093, %v2092
      %v2129 = vpack.c.b16 %v2095, %v2094
      %v2130 = vpack.c.b16 %v2097, %v2096
      %v2131 = vpack.c.b16 %v2099, %v2098
      %v2132 = vpack.c.b16 %v2101, %v2100
      %v2133 = vpack.c.b16 %v2103, %v2102
      %v2134 = vpack.c.b16 %v2105, %v2104
      %v2135 = vpack.c.b16 %v2107, %v2106
      %v2136 = vpack.c.b16 %v2109, %v2108
      %v2137 = vpack.c.b16 %v2111, %v2110
      %v2138 = vpack.c.b16 %v2113, %v2112
      %v2139 = vpack.c.b16 %v2115, %v2114
      %v2140 = vpack.c.b16 %v2117, %v2116
      %v2141 = vpack.c.b16 %v2119, %v2118
      %v2142 = vpack.c.b16 %v2121, %v2120
      %v2143 = vpack.c.b16 %v2123, %v2122
      %v2144 = vpack.c.b16 %v2125, %v2124
      %v2145 = vpack.c.b16 %v2126, %v2126
      %vm2146 = vsmask.f32 6400
      %v2148 = vshrl.u32 %v2127, 16
      %v2150 = vrot.slane %v2148, 1
      %v2151 = vshll.u32 %v2127, 16
      %v2153 = vrot.slane %v2151, 2
      %v2154 = vor.u32 %v2150, %v2153
      %v2156 = vshrl.u32 %v2128, 16
      %v2158 = vrot.slane %v2156, 1
      %v2159 = vshll.u32 %v2128, 16
      %v2161 = vrot.slane %v2159, 2
      %v2162 = vor.u32 %v2158, %v2161
      %v2163 = vsel %vm2146, %v2154, %v2162
      %v2165 = vshrl.u32 %v2129, 16
      %v2167 = vrot.slane %v2165, 1
      %v2168 = vshll.u32 %v2129, 16
      %v2170 = vrot.slane %v2168, 2
      %v2171 = vor.u32 %v2167, %v2170
      %v2172 = vsel %vm2146, %v2162, %v2171
      %v2174 = vshrl.u32 %v2130, 16
      %v2176 = vrot.slane %v2174, 1
      %v2177 = vshll.u32 %v2130, 16
      %v2179 = vrot.slane %v2177, 2
      %v2180 = vor.u32 %v2176, %v2179
      %v2181 = vsel %vm2146, %v2171, %v2180
      %v2183 = vshrl.u32 %v2131, 16
      %v2185 = vrot.slane %v2183, 1
      %v2186 = vshll.u32 %v2131, 16
      %v2188 = vrot.slane %v2186, 2
      %v2189 = vor.u32 %v2185, %v2188
      %v2190 = vsel %vm2146, %v2180, %v2189
      %v2192 = vshrl.u32 %v2132, 16
      %v2194 = vrot.slane %v2192, 1
      %v2195 = vshll.u32 %v2132, 16
      %v2197 = vrot.slane %v2195, 2
      %v2198 = vor.u32 %v2194, %v2197
      %v2199 = vsel %vm2146, %v2189, %v2198
      %v2201 = vshrl.u32 %v2133, 16
      %v2203 = vrot.slane %v2201, 1
      %v2204 = vshll.u32 %v2133, 16
      %v2206 = vrot.slane %v2204, 2
      %v2207 = vor.u32 %v2203, %v2206
      %v2208 = vsel %vm2146, %v2198, %v2207
      %v2210 = vshrl.u32 %v2134, 16
      %v2212 = vrot.slane %v2210, 1
      %v2213 = vshll.u32 %v2134, 16
      %v2215 = vrot.slane %v2213, 2
      %v2216 = vor.u32 %v2212, %v2215
      %v2217 = vsel %vm2146, %v2207, %v2216
      %v2219 = vshrl.u32 %v2135, 16
      %v2221 = vrot.slane %v2219, 1
      %v2222 = vshll.u32 %v2135, 16
      %v2224 = vrot.slane %v2222, 2
      %v2225 = vor.u32 %v2221, %v2224
      %v2226 = vsel %vm2146, %v2216, %v2225
      %v2228 = vshrl.u32 %v2136, 16
      %v2230 = vrot.slane %v2228, 1
      %v2231 = vshll.u32 %v2136, 16
      %v2233 = vrot.slane %v2231, 2
      %v2234 = vor.u32 %v2230, %v2233
      %v2235 = vsel %vm2146, %v2225, %v2234
      %v2237 = vshrl.u32 %v2137, 16
      %v2239 = vrot.slane %v2237, 1
      %v2240 = vshll.u32 %v2137, 16
      %v2242 = vrot.slane %v2240, 2
      %v2243 = vor.u32 %v2239, %v2242
      %v2244 = vsel %vm2146, %v2234, %v2243
      %v2246 = vshrl.u32 %v2138, 16
      %v2248 = vrot.slane %v2246, 1
      %v2249 = vshll.u32 %v2138, 16
      %v2251 = vrot.slane %v2249, 2
      %v2252 = vor.u32 %v2248, %v2251
      %v2253 = vsel %vm2146, %v2243, %v2252
      %v2255 = vshrl.u32 %v2139, 16
      %v2257 = vrot.slane %v2255, 1
      %v2258 = vshll.u32 %v2139, 16
      %v2260 = vrot.slane %v2258, 2
      %v2261 = vor.u32 %v2257, %v2260
      %v2262 = vsel %vm2146, %v2252, %v2261
      %v2264 = vshrl.u32 %v2140, 16
      %v2266 = vrot.slane %v2264, 1
      %v2267 = vshll.u32 %v2140, 16
      %v2269 = vrot.slane %v2267, 2
      %v2270 = vor.u32 %v2266, %v2269
      %v2271 = vsel %vm2146, %v2261, %v2270
      %v2273 = vshrl.u32 %v2141, 16
      %v2275 = vrot.slane %v2273, 1
      %v2276 = vshll.u32 %v2141, 16
      %v2278 = vrot.slane %v2276, 2
      %v2279 = vor.u32 %v2275, %v2278
      %v2280 = vsel %vm2146, %v2270, %v2279
      %v2282 = vshrl.u32 %v2142, 16
      %v2284 = vrot.slane %v2282, 1
      %v2285 = vshll.u32 %v2142, 16
      %v2287 = vrot.slane %v2285, 2
      %v2288 = vor.u32 %v2284, %v2287
      %v2289 = vsel %vm2146, %v2279, %v2288
      %v2291 = vshrl.u32 %v2143, 16
      %v2293 = vrot.slane %v2291, 1
      %v2294 = vshll.u32 %v2143, 16
      %v2296 = vrot.slane %v2294, 2
      %v2297 = vor.u32 %v2293, %v2296
      %v2298 = vsel %vm2146, %v2288, %v2297
      %v2300 = vshrl.u32 %v2144, 16
      %v2302 = vrot.slane %v2300, 1
      %v2303 = vshll.u32 %v2144, 16
      %v2305 = vrot.slane %v2303, 2
      %v2306 = vor.u32 %v2302, %v2305
      %v2307 = vsel %vm2146, %v2297, %v2306
      %v2309 = vshrl.u32 %v2145, 16
      %v2311 = vrot.slane %v2309, 1
      %v2312 = vshll.u32 %v2145, 16
      %v2314 = vrot.slane %v2312, 2
      %v2315 = vor.u32 %v2311, %v2314
      %v2316 = vsel %vm2146, %v2306, %v2315
      %v2351 = vunpack.c.l.b16 %v2037
      %v2352 = vunpack.c.l.b16 %v2038
      %v2353 = vunpack.c.l.b16 %v2039
      %v2354 = vunpack.c.l.b16 %v2040
      %v2355 = vunpack.c.l.b16 %v2041
      %v2356 = vunpack.c.l.b16 %v2042
      %v2357 = vunpack.c.l.b16 %v2043
      %v2358 = vunpack.c.l.b16 %v2044
      %v2359 = vunpack.c.l.b16 %v2045
      %v2360 = vunpack.c.l.b16 %v2046
      %v2361 = vunpack.c.l.b16 %v2047
      %v2362 = vunpack.c.l.b16 %v2048
      %v2363 = vunpack.c.l.b16 %v2049
      %v2364 = vunpack.c.l.b16 %v2050
      %v2365 = vunpack.c.l.b16 %v2051
      %v2366 = vunpack.c.l.b16 %v2052
      %v2367 = vpack.c.b16 %v2352, %v2351
      %v2368 = vpack.c.b16 %v2354, %v2353
      %v2369 = vpack.c.b16 %v2356, %v2355
      %v2370 = vpack.c.b16 %v2358, %v2357
      %v2371 = vpack.c.b16 %v2360, %v2359
      %v2372 = vpack.c.b16 %v2362, %v2361
      %v2373 = vpack.c.b16 %v2364, %v2363
      %v2374 = vpack.c.b16 %v2366, %v2365
      %2383 = vmatpush.bf16.msra.mxu0 %v2374
      %2384 = vmatpush.bf16.msra.mxu0 %v2373
      %2385 = vmatpush.bf16.msra.mxu0 %v2372
      %2386 = vmatpush.bf16.msra.mxu0 %v2371
      %2387 = vmatpush.bf16.msra.mxu0 %v2370
      %2388 = vmatpush.bf16.msra.mxu0 %v2369
      %2389 = vmatpush.bf16.msra.mxu0 %v2368
      %2390 = vmatpush.bf16.msra.mxu0 %v2367
      %2391 = vmatmul.bf16.gmra.mxu0 %v2163
      %v2392 = vpop.f32.mrf.mxu0
      %v2393 = vadd.f32 0.0, %v2392
      %v2394 = vpop.f32.mrf.mxu0
      %v2395 = vadd.f32 0.0, %v2394
      %2396 = vmatmul.bf16.gmra.mxu0 %v2172
      %v2397 = vpop.f32.mrf.mxu0
      %v2398 = vadd.f32 0.0, %v2397
      %v2399 = vpop.f32.mrf.mxu0
      %v2400 = vadd.f32 0.0, %v2399
      %2401 = vmatmul.bf16.gmra.mxu0 %v2181
      %v2402 = vpop.f32.mrf.mxu0
      %v2403 = vadd.f32 0.0, %v2402
      %v2404 = vpop.f32.mrf.mxu0
      %v2405 = vadd.f32 0.0, %v2404
      %2406 = vmatmul.bf16.gmra.mxu0 %v2190
      %v2407 = vpop.f32.mrf.mxu0
      %v2408 = vadd.f32 0.0, %v2407
      %v2409 = vpop.f32.mrf.mxu0
      %v2410 = vadd.f32 0.0, %v2409
      %2411 = vmatmul.bf16.gmra.mxu0 %v2199
      %v2412 = vpop.f32.mrf.mxu0
      %v2413 = vadd.f32 0.0, %v2412
      %v2414 = vpop.f32.mrf.mxu0
      %v2415 = vadd.f32 0.0, %v2414
      %2416 = vmatmul.bf16.gmra.mxu0 %v2208
      %v2417 = vpop.f32.mrf.mxu0
      %v2418 = vadd.f32 0.0, %v2417
      %v2419 = vpop.f32.mrf.mxu0
      %v2420 = vadd.f32 0.0, %v2419
      %2421 = vmatmul.bf16.gmra.mxu0 %v2217
      %v2422 = vpop.f32.mrf.mxu0
      %v2423 = vadd.f32 0.0, %v2422
      %v2424 = vpop.f32.mrf.mxu0
      %v2425 = vadd.f32 0.0, %v2424
      %2426 = vmatmul.bf16.gmra.mxu0 %v2226
      %v2427 = vpop.f32.mrf.mxu0
      %v2428 = vadd.f32 0.0, %v2427
      %v2429 = vpop.f32.mrf.mxu0
      %v2430 = vadd.f32 0.0, %v2429
      %2431 = vmatmul.bf16.gmra.mxu0 %v2235
      %v2432 = vpop.f32.mrf.mxu0
      %v2433 = vadd.f32 0.0, %v2432
      %v2434 = vpop.f32.mrf.mxu0
      %v2435 = vadd.f32 0.0, %v2434
      %2436 = vmatmul.bf16.gmra.mxu0 %v2244
      %v2437 = vpop.f32.mrf.mxu0
      %v2438 = vadd.f32 0.0, %v2437
      %v2439 = vpop.f32.mrf.mxu0
      %v2440 = vadd.f32 0.0, %v2439
      %2441 = vmatmul.bf16.gmra.mxu0 %v2253
      %v2442 = vpop.f32.mrf.mxu0
      %v2443 = vadd.f32 0.0, %v2442
      %v2444 = vpop.f32.mrf.mxu0
      %v2445 = vadd.f32 0.0, %v2444
      %2446 = vmatmul.bf16.gmra.mxu0 %v2262
      %v2447 = vpop.f32.mrf.mxu0
      %v2448 = vadd.f32 0.0, %v2447
      %v2449 = vpop.f32.mrf.mxu0
      %v2450 = vadd.f32 0.0, %v2449
      %2451 = vmatmul.bf16.gmra.mxu0 %v2271
      %v2452 = vpop.f32.mrf.mxu0
      %v2453 = vadd.f32 0.0, %v2452
      %v2454 = vpop.f32.mrf.mxu0
      %v2455 = vadd.f32 0.0, %v2454
      %2456 = vmatmul.bf16.gmra.mxu0 %v2280
      %v2457 = vpop.f32.mrf.mxu0
      %v2458 = vadd.f32 0.0, %v2457
      %v2459 = vpop.f32.mrf.mxu0
      %v2460 = vadd.f32 0.0, %v2459
      %2461 = vmatmul.bf16.gmra.mxu0 %v2289
      %v2462 = vpop.f32.mrf.mxu0
      %v2463 = vadd.f32 0.0, %v2462
      %v2464 = vpop.f32.mrf.mxu0
      %v2465 = vadd.f32 0.0, %v2464
      %2466 = vmatmul.bf16.gmra.mxu0 %v2298
      %v2467 = vpop.f32.mrf.mxu0
      %v2468 = vadd.f32 0.0, %v2467
      %v2469 = vpop.f32.mrf.mxu0
      %v2470 = vadd.f32 0.0, %v2469
      %2471 = vmatmul.bf16.gmra.mxu0 %v2307
      %v2472 = vpop.f32.mrf.mxu0
      %v2473 = vadd.f32 0.0, %v2472
      %v2474 = vpop.f32.mrf.mxu0
      %v2475 = vadd.f32 0.0, %v2474
      %2476 = vmatmul.bf16.gmra.mxu0 %v2316
      %v2477 = vpop.f32.mrf.mxu0
      %v2478 = vadd.f32 0.0, %v2477
      %v2479 = vpop.f32.mrf.mxu0
      %v2480 = vadd.f32 0.0, %v2479
      %2481 = vdwg.mxu0
      %v2482 = vld [vmem:[#allocation2] sm:$0xff]
      %v2483 = vld [vmem:[#allocation2 + $0x8] sm:$0xff]
      %v2484 = vld [vmem:[#allocation2 + $0x10] sm:$0xff]
      %v2485 = vld [vmem:[#allocation2 + $0x18] sm:$0xff]
      %v2486 = vld [vmem:[#allocation2 + $0x20] sm:$0xff]
      %v2487 = vld [vmem:[#allocation2 + $0x28] sm:$0xff]
      %v2488 = vld [vmem:[#allocation2 + $0x30] sm:$0xff]
      %v2489 = vld [vmem:[#allocation2 + $0x38] sm:$0xff]
      %v2490 = vld [vmem:[#allocation2 + $0x40] sm:$0xff]
      %v2491 = vld [vmem:[#allocation2 + $0x48] sm:$0xff]
      %v2492 = vld [vmem:[#allocation2 + $0x50] sm:$0xff]
      %v2493 = vld [vmem:[#allocation2 + $0x58] sm:$0xff]
      %v2494 = vld [vmem:[#allocation2 + $0x60] sm:$0xff]
      %v2495 = vld [vmem:[#allocation2 + $0x68] sm:$0xff]
      %v2496 = vld [vmem:[#allocation2 + $0x70] sm:$0xff]
      %v2497 = vld [vmem:[#allocation2 + $0x78] sm:$0xff]
      %v2498 = vld [vmem:[#allocation2 + $0x80] sm:$0xff]
      %v2499 = vld [vmem:[#allocation2 + $0x88] sm:$0xff]
      %v2500 = vld [vmem:[#allocation2 + $0x90] sm:$0xff]
      %v2501 = vld [vmem:[#allocation2 + $0x98] sm:$0xff]
      %v2502 = vld [vmem:[#allocation2 + $0xa0] sm:$0xff]
      %v2503 = vld [vmem:[#allocation2 + $0xa8] sm:$0xff]
      %v2504 = vld [vmem:[#allocation2 + $0xb0] sm:$0xff]
      %v2505 = vld [vmem:[#allocation2 + $0xb8] sm:$0xff]
      %v2506 = vld [vmem:[#allocation2 + $0xc0] sm:$0xff]
      %v2507 = vld [vmem:[#allocation2 + $0xc8] sm:$0xff]
      %v2508 = vld [vmem:[#allocation2 + $0xd0] sm:$0xff]
      %v2509 = vld [vmem:[#allocation2 + $0xd8] sm:$0xff]
      %v2510 = vld [vmem:[#allocation2 + $0xe0] sm:$0xff]
      %v2511 = vld [vmem:[#allocation2 + $0xe8] sm:$0xff]
      %v2512 = vld [vmem:[#allocation2 + $0xf0] sm:$0xff]
      %v2513 = vld [vmem:[#allocation2 + $0xf8] sm:$0xff]
      %v2514 = vld [vmem:[#allocation2 + $0x100] sm:$0xff]
      %v2515 = vld [vmem:[#allocation2 + $0x108] sm:$0xff]
      %v2516 = vld [vmem:[#allocation2 + $0x110] sm:$0xff]
      %v2517 = vld [vmem:[#allocation2 + $0x118] sm:$0xff]
      %v2518 = vadd.f32 %v2482, %v2393
      %v2519 = vadd.f32 %v2483, %v2395
      %v2520 = vadd.f32 %v2484, %v2398
      %v2521 = vadd.f32 %v2485, %v2400
      %v2522 = vadd.f32 %v2486, %v2403
      %v2523 = vadd.f32 %v2487, %v2405
      %v2524 = vadd.f32 %v2488, %v2408
      %v2525 = vadd.f32 %v2489, %v2410
      %v2526 = vadd.f32 %v2490, %v2413
      %v2527 = vadd.f32 %v2491, %v2415
      %v2528 = vadd.f32 %v2492, %v2418
      %v2529 = vadd.f32 %v2493, %v2420
      %v2530 = vadd.f32 %v2494, %v2423
      %v2531 = vadd.f32 %v2495, %v2425
      %v2532 = vadd.f32 %v2496, %v2428
      %v2533 = vadd.f32 %v2497, %v2430
      %v2534 = vadd.f32 %v2498, %v2433
      %v2535 = vadd.f32 %v2499, %v2435
      %v2536 = vadd.f32 %v2500, %v2438
      %v2537 = vadd.f32 %v2501, %v2440
      %v2538 = vadd.f32 %v2502, %v2443
      %v2539 = vadd.f32 %v2503, %v2445
      %v2540 = vadd.f32 %v2504, %v2448
      %v2541 = vadd.f32 %v2505, %v2450
      %v2542 = vadd.f32 %v2506, %v2453
      %v2543 = vadd.f32 %v2507, %v2455
      %v2544 = vadd.f32 %v2508, %v2458
      %v2545 = vadd.f32 %v2509, %v2460
      %v2546 = vadd.f32 %v2510, %v2463
      %v2547 = vadd.f32 %v2511, %v2465
      %v2548 = vadd.f32 %v2512, %v2468
      %v2549 = vadd.f32 %v2513, %v2470
      %v2550 = vadd.f32 %v2514, %v2473
      %v2551 = vadd.f32 %v2515, %v2475
      %v2552 = vadd.f32 %v2516, %v2478
      %v2553 = vadd.f32 %v2517, %v2480
      %2554 = vst [vmem:[#allocation2] sm:$0xff] %v2518
      %2555 = vst [vmem:[#allocation2 + $0x8] sm:$0xff] %v2519
      %2556 = vst [vmem:[#allocation2 + $0x10] sm:$0xff] %v2520
      %2557 = vst [vmem:[#allocation2 + $0x18] sm:$0xff] %v2521
      %2558 = vst [vmem:[#allocation2 + $0x20] sm:$0xff] %v2522
      %2559 = vst [vmem:[#allocation2 + $0x28] sm:$0xff] %v2523
      %2560 = vst [vmem:[#allocation2 + $0x30] sm:$0xff] %v2524
      %2561 = vst [vmem:[#allocation2 + $0x38] sm:$0xff] %v2525
      %2562 = vst [vmem:[#allocation2 + $0x40] sm:$0xff] %v2526
      %2563 = vst [vmem:[#allocation2 + $0x48] sm:$0xff] %v2527
      %2564 = vst [vmem:[#allocation2 + $0x50] sm:$0xff] %v2528
      %2565 = vst [vmem:[#allocation2 + $0x58] sm:$0xff] %v2529
      %2566 = vst [vmem:[#allocation2 + $0x60] sm:$0xff] %v2530
      %2567 = vst [vmem:[#allocation2 + $0x68] sm:$0xff] %v2531
      %2568 = vst [vmem:[#allocation2 + $0x70] sm:$0xff] %v2532
      %2569 = vst [vmem:[#allocation2 + $0x78] sm:$0xff] %v2533
      %2570 = vst [vmem:[#allocation2 + $0x80] sm:$0xff] %v2534
      %2571 = vst [vmem:[#allocation2 + $0x88] sm:$0xff] %v2535
      %2572 = vst [vmem:[#allocation2 + $0x90] sm:$0xff] %v2536
      %2573 = vst [vmem:[#allocation2 + $0x98] sm:$0xff] %v2537
      %2574 = vst [vmem:[#allocation2 + $0xa0] sm:$0xff] %v2538
      %2575 = vst [vmem:[#allocation2 + $0xa8] sm:$0xff] %v2539
      %2576 = vst [vmem:[#allocation2 + $0xb0] sm:$0xff] %v2540
      %2577 = vst [vmem:[#allocation2 + $0xb8] sm:$0xff] %v2541
      %2578 = vst [vmem:[#allocation2 + $0xc0] sm:$0xff] %v2542
      %2579 = vst [vmem:[#allocation2 + $0xc8] sm:$0xff] %v2543
      %2580 = vst [vmem:[#allocation2 + $0xd0] sm:$0xff] %v2544
      %2581 = vst [vmem:[#allocation2 + $0xd8] sm:$0xff] %v2545
      %2582 = vst [vmem:[#allocation2 + $0xe0] sm:$0xff] %v2546
      %2583 = vst [vmem:[#allocation2 + $0xe8] sm:$0xff] %v2547
      %2584 = vst [vmem:[#allocation2 + $0xf0] sm:$0xff] %v2548
      %2585 = vst [vmem:[#allocation2 + $0xf8] sm:$0xff] %v2549
      %2586 = vst [vmem:[#allocation2 + $0x100] sm:$0xff] %v2550
      %2587 = vst [vmem:[#allocation2 + $0x108] sm:$0xff] %v2551
      %2588 = vst [vmem:[#allocation2 + $0x110] sm:$0xff] %v2552
      %2589 = vst [vmem:[#allocation2 + $0x118] sm:$0xff] %v2553
      %v2590 = vld [vmem:[%s165 + $0x8] sm:$0xc]
      %v2591 = vld [vmem:[%s165 + $0xc] sm:$0xf]
      %v2592 = vld [vmem:[%s165 + $0x10] sm:$0xf]
      %v2593 = vld [vmem:[%s165 + $0x14] sm:$0xf]
      %v2594 = vld [vmem:[%s165 + $0x18] sm:$0xf]
      %v2595 = vld [vmem:[%s165 + $0x1c] sm:$0xf]
      %v2596 = vld [vmem:[%s165 + $0x20] sm:$0xf]
      %v2597 = vld [vmem:[%s165 + $0x24] sm:$0xf]
      %v2598 = vld [vmem:[%s165 + $0x28] sm:$0xf]
      %v2599 = vld [vmem:[%s165 + $0x2c] sm:$0xf]
      %v2600 = vld [vmem:[%s165 + $0x30] sm:$0xf]
      %v2601 = vld [vmem:[%s165 + $0x34] sm:$0xf]
      %v2602 = vld [vmem:[%s165 + $0x38] sm:$0xf]
      %v2603 = vld [vmem:[%s165 + $0x3c] sm:$0xf]
      %v2604 = vld [vmem:[%s165 + $0x40] sm:$0xf]
      %v2605 = vld [vmem:[%s165 + $0x44] sm:$0xf]
      %v2606 = vld [vmem:[%s165 + $0x48] sm:$0xf]
      %v2607 = vld [vmem:[%s165 + $0x4c] sm:$0xf]
      %v2608 = vld [vmem:[%s165 + $0x50] sm:$0xf]
      %v2609 = vld [vmem:[%s165 + $0x54] sm:$0xf]
      %v2610 = vld [vmem:[%s165 + $0x58] sm:$0xf]
      %v2611 = vld [vmem:[%s165 + $0x5c] sm:$0xf]
      %v2612 = vld [vmem:[%s165 + $0x60] sm:$0xf]
      %v2613 = vld [vmem:[%s165 + $0x64] sm:$0xf]
      %v2614 = vld [vmem:[%s165 + $0x68] sm:$0xf]
      %v2615 = vld [vmem:[%s165 + $0x6c] sm:$0xf]
      %v2616 = vld [vmem:[%s165 + $0x70] sm:$0xf]
      %v2617 = vld [vmem:[%s165 + $0x74] sm:$0xf]
      %v2618 = vld [vmem:[%s165 + $0x78] sm:$0xf]
      %v2619 = vld [vmem:[%s165 + $0x7c] sm:$0xf]
      %v2620 = vld [vmem:[%s165 + $0x80] sm:$0xf]
      %v2621 = vld [vmem:[%s165 + $0x84] sm:$0xf]
      %v2622 = vld [vmem:[%s165 + $0x88] sm:$0xf]
      %v2623 = vld [vmem:[%s165 + $0x8c] sm:$0xf]
      %v2624 = vld [vmem:[%s165 + $0x90] sm:$0xf]
      %v2625 = vld [vmem:[%s165 + $0x94] sm:$0xf]
      %v2626 = vld [vmem:[%s165 + $0x98] sm:$0x3]
      %s2627 = scalar_lea.vmem %s1, 320
      %v2628 = vld [vmem:[%s2627] sm:$0xf]
      %v2629 = vld [vmem:[%s2627 + $0x4] sm:$0xf]
      %v2630 = vld [vmem:[%s2627 + $0x8] sm:$0xf]
      %v2631 = vld [vmem:[%s2627 + $0xc] sm:$0xf]
      %v2632 = vld [vmem:[%s2627 + $0x10] sm:$0xf]
      %v2633 = vld [vmem:[%s2627 + $0x14] sm:$0xf]
      %v2634 = vld [vmem:[%s2627 + $0x18] sm:$0xf]
      %v2635 = vld [vmem:[%s2627 + $0x1c] sm:$0xf]
      %v2636 = vld [vmem:[%s2627 + $0x20] sm:$0xf]
      %v2637 = vld [vmem:[%s2627 + $0x24] sm:$0xf]
      %v2638 = vld [vmem:[%s2627 + $0x28] sm:$0xf]
      %v2639 = vld [vmem:[%s2627 + $0x2c] sm:$0xf]
      %v2640 = vld [vmem:[%s2627 + $0x30] sm:$0xf]
      %v2641 = vld [vmem:[%s2627 + $0x34] sm:$0xf]
      %v2642 = vld [vmem:[%s2627 + $0x38] sm:$0xf]
      %v2643 = vld [vmem:[%s2627 + $0x3c] sm:$0xf]
      %v2681 = vunpack.c.l.b16 %v2590
      %v2682 = vunpack.c.l.b16 %v2591
      %v2683 = vunpack.c.l.b16 %v2592
      %v2684 = vunpack.c.l.b16 %v2593
      %v2685 = vunpack.c.l.b16 %v2594
      %v2686 = vunpack.c.l.b16 %v2595
      %v2687 = vunpack.c.l.b16 %v2596
      %v2688 = vunpack.c.l.b16 %v2597
      %v2689 = vunpack.c.l.b16 %v2598
      %v2690 = vunpack.c.l.b16 %v2599
      %v2691 = vunpack.c.l.b16 %v2600
      %v2692 = vunpack.c.l.b16 %v2601
      %v2693 = vunpack.c.l.b16 %v2602
      %v2694 = vunpack.c.l.b16 %v2603
      %v2695 = vunpack.c.l.b16 %v2604
      %v2696 = vunpack.c.l.b16 %v2605
      %v2697 = vunpack.c.l.b16 %v2606
      %v2698 = vunpack.c.l.b16 %v2607
      %v2699 = vunpack.c.l.b16 %v2608
      %v2700 = vunpack.c.l.b16 %v2609
      %v2701 = vunpack.c.l.b16 %v2610
      %v2702 = vunpack.c.l.b16 %v2611
      %v2703 = vunpack.c.l.b16 %v2612
      %v2704 = vunpack.c.l.b16 %v2613
      %v2705 = vunpack.c.l.b16 %v2614
      %v2706 = vunpack.c.l.b16 %v2615
      %v2707 = vunpack.c.l.b16 %v2616
      %v2708 = vunpack.c.l.b16 %v2617
      %v2709 = vunpack.c.l.b16 %v2618
      %v2710 = vunpack.c.l.b16 %v2619
      %v2711 = vunpack.c.l.b16 %v2620
      %v2712 = vunpack.c.l.b16 %v2621
      %v2713 = vunpack.c.l.b16 %v2622
      %v2714 = vunpack.c.l.b16 %v2623
      %v2715 = vunpack.c.l.b16 %v2624
      %v2716 = vunpack.c.l.b16 %v2625
      %v2717 = vunpack.c.l.b16 %v2626
      %v2718 = vpack.c.b16 %v2682, %v2681
      %v2719 = vpack.c.b16 %v2684, %v2683
      %v2720 = vpack.c.b16 %v2686, %v2685
      %v2721 = vpack.c.b16 %v2688, %v2687
      %v2722 = vpack.c.b16 %v2690, %v2689
      %v2723 = vpack.c.b16 %v2692, %v2691
      %v2724 = vpack.c.b16 %v2694, %v2693
      %v2725 = vpack.c.b16 %v2696, %v2695
      %v2726 = vpack.c.b16 %v2698, %v2697
      %v2727 = vpack.c.b16 %v2700, %v2699
      %v2728 = vpack.c.b16 %v2702, %v2701
      %v2729 = vpack.c.b16 %v2704, %v2703
      %v2730 = vpack.c.b16 %v2706, %v2705
      %v2731 = vpack.c.b16 %v2708, %v2707
      %v2732 = vpack.c.b16 %v2710, %v2709
      %v2733 = vpack.c.b16 %v2712, %v2711
      %v2734 = vpack.c.b16 %v2714, %v2713
      %v2735 = vpack.c.b16 %v2716, %v2715
      %v2736 = vpack.c.b16 %v2717, %v2717
      %vm2737 = vcmask 1045504
      %v2738 = vrot.slane %v2718, 2
      %v2739 = vrot.slane %v2719, 2
      %v2740 = vsel %vm2737, %v2738, %v2739
      %v2741 = vrot.slane %v2720, 2
      %v2742 = vsel %vm2737, %v2739, %v2741
      %v2743 = vrot.slane %v2721, 2
      %v2744 = vsel %vm2737, %v2741, %v2743
      %v2745 = vrot.slane %v2722, 2
      %v2746 = vsel %vm2737, %v2743, %v2745
      %v2747 = vrot.slane %v2723, 2
      %v2748 = vsel %vm2737, %v2745, %v2747
      %v2749 = vrot.slane %v2724, 2
      %v2750 = vsel %vm2737, %v2747, %v2749
      %v2751 = vrot.slane %v2725, 2
      %v2752 = vsel %vm2737, %v2749, %v2751
      %v2753 = vrot.slane %v2726, 2
      %v2754 = vsel %vm2737, %v2751, %v2753
      %v2755 = vrot.slane %v2727, 2
      %v2756 = vsel %vm2737, %v2753, %v2755
      %v2757 = vrot.slane %v2728, 2
      %v2758 = vsel %vm2737, %v2755, %v2757
      %v2759 = vrot.slane %v2729, 2
      %v2760 = vsel %vm2737, %v2757, %v2759
      %v2761 = vrot.slane %v2730, 2
      %v2762 = vsel %vm2737, %v2759, %v2761
      %v2763 = vrot.slane %v2731, 2
      %v2764 = vsel %vm2737, %v2761, %v2763
      %v2765 = vrot.slane %v2732, 2
      %v2766 = vsel %vm2737, %v2763, %v2765
      %v2767 = vrot.slane %v2733, 2
      %v2768 = vsel %vm2737, %v2765, %v2767
      %v2769 = vrot.slane %v2734, 2
      %v2770 = vsel %vm2737, %v2767, %v2769
      %v2771 = vrot.slane %v2735, 2
      %v2772 = vsel %vm2737, %v2769, %v2771
      %v2773 = vrot.slane %v2736, 2
      %v2774 = vsel %vm2737, %v2771, %v2773
      %v2809 = vunpack.c.l.b16 %v2628
      %v2810 = vunpack.c.l.b16 %v2629
      %v2811 = vunpack.c.l.b16 %v2630
      %v2812 = vunpack.c.l.b16 %v2631
      %v2813 = vunpack.c.l.b16 %v2632
      %v2814 = vunpack.c.l.b16 %v2633
      %v2815 = vunpack.c.l.b16 %v2634
      %v2816 = vunpack.c.l.b16 %v2635
      %v2817 = vunpack.c.l.b16 %v2636
      %v2818 = vunpack.c.l.b16 %v2637
      %v2819 = vunpack.c.l.b16 %v2638
      %v2820 = vunpack.c.l.b16 %v2639
      %v2821 = vunpack.c.l.b16 %v2640
      %v2822 = vunpack.c.l.b16 %v2641
      %v2823 = vunpack.c.l.b16 %v2642
      %v2824 = vunpack.c.l.b16 %v2643
      %v2825 = vpack.c.b16 %v2810, %v2809
      %v2826 = vpack.c.b16 %v2812, %v2811
      %v2827 = vpack.c.b16 %v2814, %v2813
      %v2828 = vpack.c.b16 %v2816, %v2815
      %v2829 = vpack.c.b16 %v2818, %v2817
      %v2830 = vpack.c.b16 %v2820, %v2819
      %v2831 = vpack.c.b16 %v2822, %v2821
      %v2832 = vpack.c.b16 %v2824, %v2823
      %2841 = vmatpush.bf16.msra.mxu0 %v2832
      %2842 = vmatpush.bf16.msra.mxu0 %v2831
      %2843 = vmatpush.bf16.msra.mxu0 %v2830
      %2844 = vmatpush.bf16.msra.mxu0 %v2829
      %2845 = vmatpush.bf16.msra.mxu0 %v2828
      %2846 = vmatpush.bf16.msra.mxu0 %v2827
      %2847 = vmatpush.bf16.msra.mxu0 %v2826
      %2848 = vmatpush.bf16.msra.mxu0 %v2825
      %2849 = vmatmul.bf16.gmra.mxu0 %v2740
      %v2850 = vpop.f32.mrf.mxu0
      %v2851 = vadd.f32 0.0, %v2850
      %v2852 = vpop.f32.mrf.mxu0
      %v2853 = vadd.f32 0.0, %v2852
      %2854 = vmatmul.bf16.gmra.mxu0 %v2742
      %v2855 = vpop.f32.mrf.mxu0
      %v2856 = vadd.f32 0.0, %v2855
      %v2857 = vpop.f32.mrf.mxu0
      %v2858 = vadd.f32 0.0, %v2857
      %2859 = vmatmul.bf16.gmra.mxu0 %v2744
      %v2860 = vpop.f32.mrf.mxu0
      %v2861 = vadd.f32 0.0, %v2860
      %v2862 = vpop.f32.mrf.mxu0
      %v2863 = vadd.f32 0.0, %v2862
      %2864 = vmatmul.bf16.gmra.mxu0 %v2746
      %v2865 = vpop.f32.mrf.mxu0
      %v2866 = vadd.f32 0.0, %v2865
      %v2867 = vpop.f32.mrf.mxu0
      %v2868 = vadd.f32 0.0, %v2867
      %2869 = vmatmul.bf16.gmra.mxu0 %v2748
      %v2870 = vpop.f32.mrf.mxu0
      %v2871 = vadd.f32 0.0, %v2870
      %v2872 = vpop.f32.mrf.mxu0
      %v2873 = vadd.f32 0.0, %v2872
      %2874 = vmatmul.bf16.gmra.mxu0 %v2750
      %v2875 = vpop.f32.mrf.mxu0
      %v2876 = vadd.f32 0.0, %v2875
      %v2877 = vpop.f32.mrf.mxu0
      %v2878 = vadd.f32 0.0, %v2877
      %2879 = vmatmul.bf16.gmra.mxu0 %v2752
      %v2880 = vpop.f32.mrf.mxu0
      %v2881 = vadd.f32 0.0, %v2880
      %v2882 = vpop.f32.mrf.mxu0
      %v2883 = vadd.f32 0.0, %v2882
      %2884 = vmatmul.bf16.gmra.mxu0 %v2754
      %v2885 = vpop.f32.mrf.mxu0
      %v2886 = vadd.f32 0.0, %v2885
      %v2887 = vpop.f32.mrf.mxu0
      %v2888 = vadd.f32 0.0, %v2887
      %2889 = vmatmul.bf16.gmra.mxu0 %v2756
      %v2890 = vpop.f32.mrf.mxu0
      %v2891 = vadd.f32 0.0, %v2890
      %v2892 = vpop.f32.mrf.mxu0
      %v2893 = vadd.f32 0.0, %v2892
      %2894 = vmatmul.bf16.gmra.mxu0 %v2758
      %v2895 = vpop.f32.mrf.mxu0
      %v2896 = vadd.f32 0.0, %v2895
      %v2897 = vpop.f32.mrf.mxu0
      %v2898 = vadd.f32 0.0, %v2897
      %2899 = vmatmul.bf16.gmra.mxu0 %v2760
      %v2900 = vpop.f32.mrf.mxu0
      %v2901 = vadd.f32 0.0, %v2900
      %v2902 = vpop.f32.mrf.mxu0
      %v2903 = vadd.f32 0.0, %v2902
      %2904 = vmatmul.bf16.gmra.mxu0 %v2762
      %v2905 = vpop.f32.mrf.mxu0
      %v2906 = vadd.f32 0.0, %v2905
      %v2907 = vpop.f32.mrf.mxu0
      %v2908 = vadd.f32 0.0, %v2907
      %2909 = vmatmul.bf16.gmra.mxu0 %v2764
      %v2910 = vpop.f32.mrf.mxu0
      %v2911 = vadd.f32 0.0, %v2910
      %v2912 = vpop.f32.mrf.mxu0
      %v2913 = vadd.f32 0.0, %v2912
      %2914 = vmatmul.bf16.gmra.mxu0 %v2766
      %v2915 = vpop.f32.mrf.mxu0
      %v2916 = vadd.f32 0.0, %v2915
      %v2917 = vpop.f32.mrf.mxu0
      %v2918 = vadd.f32 0.0, %v2917
      %2919 = vmatmul.bf16.gmra.mxu0 %v2768
      %v2920 = vpop.f32.mrf.mxu0
      %v2921 = vadd.f32 0.0, %v2920
      %v2922 = vpop.f32.mrf.mxu0
      %v2923 = vadd.f32 0.0, %v2922
      %2924 = vmatmul.bf16.gmra.mxu0 %v2770
      %v2925 = vpop.f32.mrf.mxu0
      %v2926 = vadd.f32 0.0, %v2925
      %v2927 = vpop.f32.mrf.mxu0
      %v2928 = vadd.f32 0.0, %v2927
      %2929 = vmatmul.bf16.gmra.mxu0 %v2772
      %v2930 = vpop.f32.mrf.mxu0
      %v2931 = vadd.f32 0.0, %v2930
      %v2932 = vpop.f32.mrf.mxu0
      %v2933 = vadd.f32 0.0, %v2932
      %2934 = vmatmul.bf16.gmra.mxu0 %v2774
      %v2935 = vpop.f32.mrf.mxu0
      %v2936 = vadd.f32 0.0, %v2935
      %v2937 = vpop.f32.mrf.mxu0
      %v2938 = vadd.f32 0.0, %v2937
      %2939 = vdwg.mxu0
      %v2940 = vld [vmem:[#allocation2] sm:$0xff]
      %v2941 = vld [vmem:[#allocation2 + $0x8] sm:$0xff]
      %v2942 = vld [vmem:[#allocation2 + $0x10] sm:$0xff]
      %v2943 = vld [vmem:[#allocation2 + $0x18] sm:$0xff]
      %v2944 = vld [vmem:[#allocation2 + $0x20] sm:$0xff]
      %v2945 = vld [vmem:[#allocation2 + $0x28] sm:$0xff]
      %v2946 = vld [vmem:[#allocation2 + $0x30] sm:$0xff]
      %v2947 = vld [vmem:[#allocation2 + $0x38] sm:$0xff]
      %v2948 = vld [vmem:[#allocation2 + $0x40] sm:$0xff]
      %v2949 = vld [vmem:[#allocation2 + $0x48] sm:$0xff]
      %v2950 = vld [vmem:[#allocation2 + $0x50] sm:$0xff]
      %v2951 = vld [vmem:[#allocation2 + $0x58] sm:$0xff]
      %v2952 = vld [vmem:[#allocation2 + $0x60] sm:$0xff]
      %v2953 = vld [vmem:[#allocation2 + $0x68] sm:$0xff]
      %v2954 = vld [vmem:[#allocation2 + $0x70] sm:$0xff]
      %v2955 = vld [vmem:[#allocation2 + $0x78] sm:$0xff]
      %v2956 = vld [vmem:[#allocation2 + $0x80] sm:$0xff]
      %v2957 = vld [vmem:[#allocation2 + $0x88] sm:$0xff]
      %v2958 = vld [vmem:[#allocation2 + $0x90] sm:$0xff]
      %v2959 = vld [vmem:[#allocation2 + $0x98] sm:$0xff]
      %v2960 = vld [vmem:[#allocation2 + $0xa0] sm:$0xff]
      %v2961 = vld [vmem:[#allocation2 + $0xa8] sm:$0xff]
      %v2962 = vld [vmem:[#allocation2 + $0xb0] sm:$0xff]
      %v2963 = vld [vmem:[#allocation2 + $0xb8] sm:$0xff]
      %v2964 = vld [vmem:[#allocation2 + $0xc0] sm:$0xff]
      %v2965 = vld [vmem:[#allocation2 + $0xc8] sm:$0xff]
      %v2966 = vld [vmem:[#allocation2 + $0xd0] sm:$0xff]
      %v2967 = vld [vmem:[#allocation2 + $0xd8] sm:$0xff]
      %v2968 = vld [vmem:[#allocation2 + $0xe0] sm:$0xff]
      %v2969 = vld [vmem:[#allocation2 + $0xe8] sm:$0xff]
      %v2970 = vld [vmem:[#allocation2 + $0xf0] sm:$0xff]
      %v2971 = vld [vmem:[#allocation2 + $0xf8] sm:$0xff]
      %v2972 = vld [vmem:[#allocation2 + $0x100] sm:$0xff]
      %v2973 = vld [vmem:[#allocation2 + $0x108] sm:$0xff]
      %v2974 = vld [vmem:[#allocation2 + $0x110] sm:$0xff]
      %v2975 = vld [vmem:[#allocation2 + $0x118] sm:$0xff]
      %v2976 = vadd.f32 %v2940, %v2851
      %v2977 = vadd.f32 %v2941, %v2853
      %v2978 = vadd.f32 %v2942, %v2856
      %v2979 = vadd.f32 %v2943, %v2858
      %v2980 = vadd.f32 %v2944, %v2861
      %v2981 = vadd.f32 %v2945, %v2863
      %v2982 = vadd.f32 %v2946, %v2866
      %v2983 = vadd.f32 %v2947, %v2868
      %v2984 = vadd.f32 %v2948, %v2871
      %v2985 = vadd.f32 %v2949, %v2873
      %v2986 = vadd.f32 %v2950, %v2876
      %v2987 = vadd.f32 %v2951, %v2878
      %v2988 = vadd.f32 %v2952, %v2881
      %v2989 = vadd.f32 %v2953, %v2883
      %v2990 = vadd.f32 %v2954, %v2886
      %v2991 = vadd.f32 %v2955, %v2888
      %v2992 = vadd.f32 %v2956, %v2891
      %v2993 = vadd.f32 %v2957, %v2893
      %v2994 = vadd.f32 %v2958, %v2896
      %v2995 = vadd.f32 %v2959, %v2898
      %v2996 = vadd.f32 %v2960, %v2901
      %v2997 = vadd.f32 %v2961, %v2903
      %v2998 = vadd.f32 %v2962, %v2906
      %v2999 = vadd.f32 %v2963, %v2908
      %v3000 = vadd.f32 %v2964, %v2911
      %v3001 = vadd.f32 %v2965, %v2913
      %v3002 = vadd.f32 %v2966, %v2916
      %v3003 = vadd.f32 %v2967, %v2918
      %v3004 = vadd.f32 %v2968, %v2921
      %v3005 = vadd.f32 %v2969, %v2923
      %v3006 = vadd.f32 %v2970, %v2926
      %v3007 = vadd.f32 %v2971, %v2928
      %v3008 = vadd.f32 %v2972, %v2931
      %v3009 = vadd.f32 %v2973, %v2933
      %v3010 = vadd.f32 %v2974, %v2936
      %v3011 = vadd.f32 %v2975, %v2938
      %3012 = vst [vmem:[#allocation2] sm:$0xff] %v2976
      %3013 = vst [vmem:[#allocation2 + $0x8] sm:$0xff] %v2977
      %3014 = vst [vmem:[#allocation2 + $0x10] sm:$0xff] %v2978
      %3015 = vst [vmem:[#allocation2 + $0x18] sm:$0xff] %v2979
      %3016 = vst [vmem:[#allocation2 + $0x20] sm:$0xff] %v2980
      %3017 = vst [vmem:[#allocation2 + $0x28] sm:$0xff] %v2981
      %3018 = vst [vmem:[#allocation2 + $0x30] sm:$0xff] %v2982
      %3019 = vst [vmem:[#allocation2 + $0x38] sm:$0xff] %v2983
      %3020 = vst [vmem:[#allocation2 + $0x40] sm:$0xff] %v2984
      %3021 = vst [vmem:[#allocation2 + $0x48] sm:$0xff] %v2985
      %3022 = vst [vmem:[#allocation2 + $0x50] sm:$0xff] %v2986
      %3023 = vst [vmem:[#allocation2 + $0x58] sm:$0xff] %v2987
      %3024 = vst [vmem:[#allocation2 + $0x60] sm:$0xff] %v2988
      %3025 = vst [vmem:[#allocation2 + $0x68] sm:$0xff] %v2989
      %3026 = vst [vmem:[#allocation2 + $0x70] sm:$0xff] %v2990
      %3027 = vst [vmem:[#allocation2 + $0x78] sm:$0xff] %v2991
      %3028 = vst [vmem:[#allocation2 + $0x80] sm:$0xff] %v2992
      %3029 = vst [vmem:[#allocation2 + $0x88] sm:$0xff] %v2993
      %3030 = vst [vmem:[#allocation2 + $0x90] sm:$0xff] %v2994
      %3031 = vst [vmem:[#allocation2 + $0x98] sm:$0xff] %v2995
      %3032 = vst [vmem:[#allocation2 + $0xa0] sm:$0xff] %v2996
      %3033 = vst [vmem:[#allocation2 + $0xa8] sm:$0xff] %v2997
      %3034 = vst [vmem:[#allocation2 + $0xb0] sm:$0xff] %v2998
      %3035 = vst [vmem:[#allocation2 + $0xb8] sm:$0xff] %v2999
      %3036 = vst [vmem:[#allocation2 + $0xc0] sm:$0xff] %v3000
      %3037 = vst [vmem:[#allocation2 + $0xc8] sm:$0xff] %v3001
      %3038 = vst [vmem:[#allocation2 + $0xd0] sm:$0xff] %v3002
      %3039 = vst [vmem:[#allocation2 + $0xd8] sm:$0xff] %v3003
      %3040 = vst [vmem:[#allocation2 + $0xe0] sm:$0xff] %v3004
      %3041 = vst [vmem:[#allocation2 + $0xe8] sm:$0xff] %v3005
      %3042 = vst [vmem:[#allocation2 + $0xf0] sm:$0xff] %v3006
      %3043 = vst [vmem:[#allocation2 + $0xf8] sm:$0xff] %v3007
      %3044 = vst [vmem:[#allocation2 + $0x100] sm:$0xff] %v3008
      %3045 = vst [vmem:[#allocation2 + $0x108] sm:$0xff] %v3009
      %3046 = vst [vmem:[#allocation2 + $0x110] sm:$0xff] %v3010
      %3047 = vst [vmem:[#allocation2 + $0x118] sm:$0xff] %v3011
      %v3048 = vld [vmem:[%s165 + $0x10] sm:$0xc]
      %v3049 = vld [vmem:[%s165 + $0x14] sm:$0xf]
      %v3050 = vld [vmem:[%s165 + $0x18] sm:$0xf]
      %v3051 = vld [vmem:[%s165 + $0x1c] sm:$0xf]
      %v3052 = vld [vmem:[%s165 + $0x20] sm:$0xf]
      %v3053 = vld [vmem:[%s165 + $0x24] sm:$0xf]
      %v3054 = vld [vmem:[%s165 + $0x28] sm:$0xf]
      %v3055 = vld [vmem:[%s165 + $0x2c] sm:$0xf]
      %v3056 = vld [vmem:[%s165 + $0x30] sm:$0xf]
      %v3057 = vld [vmem:[%s165 + $0x34] sm:$0xf]
      %v3058 = vld [vmem:[%s165 + $0x38] sm:$0xf]
      %v3059 = vld [vmem:[%s165 + $0x3c] sm:$0xf]
      %v3060 = vld [vmem:[%s165 + $0x40] sm:$0xf]
      %v3061 = vld [vmem:[%s165 + $0x44] sm:$0xf]
      %v3062 = vld [vmem:[%s165 + $0x48] sm:$0xf]
      %v3063 = vld [vmem:[%s165 + $0x4c] sm:$0xf]
      %v3064 = vld [vmem:[%s165 + $0x50] sm:$0xf]
      %v3065 = vld [vmem:[%s165 + $0x54] sm:$0xf]
      %v3066 = vld [vmem:[%s165 + $0x58] sm:$0xf]
      %v3067 = vld [vmem:[%s165 + $0x5c] sm:$0xf]
      %v3068 = vld [vmem:[%s165 + $0x60] sm:$0xf]
      %v3069 = vld [vmem:[%s165 + $0x64] sm:$0xf]
      %v3070 = vld [vmem:[%s165 + $0x68] sm:$0xf]
      %v3071 = vld [vmem:[%s165 + $0x6c] sm:$0xf]
      %v3072 = vld [vmem:[%s165 + $0x70] sm:$0xf]
      %v3073 = vld [vmem:[%s165 + $0x74] sm:$0xf]
      %v3074 = vld [vmem:[%s165 + $0x78] sm:$0xf]
      %v3075 = vld [vmem:[%s165 + $0x7c] sm:$0xf]
      %v3076 = vld [vmem:[%s165 + $0x80] sm:$0xf]
      %v3077 = vld [vmem:[%s165 + $0x84] sm:$0xf]
      %v3078 = vld [vmem:[%s165 + $0x88] sm:$0xf]
      %v3079 = vld [vmem:[%s165 + $0x8c] sm:$0xf]
      %v3080 = vld [vmem:[%s165 + $0x90] sm:$0xf]
      %v3081 = vld [vmem:[%s165 + $0x94] sm:$0xf]
      %v3082 = vld [vmem:[%s165 + $0x98] sm:$0xf]
      %v3083 = vld [vmem:[%s165 + $0x9c] sm:$0xf]
      %v3084 = vld [vmem:[%s165 + $0xa0] sm:$0x3]
      %s3085 = scalar_lea.vmem %s1, 384
      %v3086 = vld [vmem:[%s3085] sm:$0xf]
      %v3087 = vld [vmem:[%s3085 + $0x4] sm:$0xf]
      %v3088 = vld [vmem:[%s3085 + $0x8] sm:$0xf]
      %v3089 = vld [vmem:[%s3085 + $0xc] sm:$0xf]
      %v3090 = vld [vmem:[%s3085 + $0x10] sm:$0xf]
      %v3091 = vld [vmem:[%s3085 + $0x14] sm:$0xf]
      %v3092 = vld [vmem:[%s3085 + $0x18] sm:$0xf]
      %v3093 = vld [vmem:[%s3085 + $0x1c] sm:$0xf]
      %v3094 = vld [vmem:[%s3085 + $0x20] sm:$0xf]
      %v3095 = vld [vmem:[%s3085 + $0x24] sm:$0xf]
      %v3096 = vld [vmem:[%s3085 + $0x28] sm:$0xf]
      %v3097 = vld [vmem:[%s3085 + $0x2c] sm:$0xf]
      %v3098 = vld [vmem:[%s3085 + $0x30] sm:$0xf]
      %v3099 = vld [vmem:[%s3085 + $0x34] sm:$0xf]
      %v3100 = vld [vmem:[%s3085 + $0x38] sm:$0xf]
      %v3101 = vld [vmem:[%s3085 + $0x3c] sm:$0xf]
      %v3139 = vunpack.c.l.b16 %v3048
      %v3140 = vunpack.c.l.b16 %v3049
      %v3141 = vunpack.c.l.b16 %v3050
      %v3142 = vunpack.c.l.b16 %v3051
      %v3143 = vunpack.c.l.b16 %v3052
      %v3144 = vunpack.c.l.b16 %v3053
      %v3145 = vunpack.c.l.b16 %v3054
      %v3146 = vunpack.c.l.b16 %v3055
      %v3147 = vunpack.c.l.b16 %v3056
      %v3148 = vunpack.c.l.b16 %v3057
      %v3149 = vunpack.c.l.b16 %v3058
      %v3150 = vunpack.c.l.b16 %v3059
      %v3151 = vunpack.c.l.b16 %v3060
      %v3152 = vunpack.c.l.b16 %v3061
      %v3153 = vunpack.c.l.b16 %v3062
      %v3154 = vunpack.c.l.b16 %v3063
      %v3155 = vunpack.c.l.b16 %v3064
      %v3156 = vunpack.c.l.b16 %v3065
      %v3157 = vunpack.c.l.b16 %v3066
      %v3158 = vunpack.c.l.b16 %v3067
      %v3159 = vunpack.c.l.b16 %v3068
      %v3160 = vunpack.c.l.b16 %v3069
      %v3161 = vunpack.c.l.b16 %v3070
      %v3162 = vunpack.c.l.b16 %v3071
      %v3163 = vunpack.c.l.b16 %v3072
      %v3164 = vunpack.c.l.b16 %v3073
      %v3165 = vunpack.c.l.b16 %v3074
      %v3166 = vunpack.c.l.b16 %v3075
      %v3167 = vunpack.c.l.b16 %v3076
      %v3168 = vunpack.c.l.b16 %v3077
      %v3169 = vunpack.c.l.b16 %v3078
      %v3170 = vunpack.c.l.b16 %v3079
      %v3171 = vunpack.c.l.b16 %v3080
      %v3172 = vunpack.c.l.b16 %v3081
      %v3173 = vunpack.c.l.b16 %v3082
      %v3174 = vunpack.c.l.b16 %v3083
      %v3175 = vunpack.c.l.b16 %v3084
      %v3176 = vpack.c.b16 %v3140, %v3139
      %v3177 = vpack.c.b16 %v3142, %v3141
      %v3178 = vpack.c.b16 %v3144, %v3143
      %v3179 = vpack.c.b16 %v3146, %v3145
      %v3180 = vpack.c.b16 %v3148, %v3147
      %v3181 = vpack.c.b16 %v3150, %v3149
      %v3182 = vpack.c.b16 %v3152, %v3151
      %v3183 = vpack.c.b16 %v3154, %v3153
      %v3184 = vpack.c.b16 %v3156, %v3155
      %v3185 = vpack.c.b16 %v3158, %v3157
      %v3186 = vpack.c.b16 %v3160, %v3159
      %v3187 = vpack.c.b16 %v3162, %v3161
      %v3188 = vpack.c.b16 %v3164, %v3163
      %v3189 = vpack.c.b16 %v3166, %v3165
      %v3190 = vpack.c.b16 %v3168, %v3167
      %v3191 = vpack.c.b16 %v3170, %v3169
      %v3192 = vpack.c.b16 %v3172, %v3171
      %v3193 = vpack.c.b16 %v3174, %v3173
      %v3194 = vpack.c.b16 %v3175, %v3175
      %v3195 = vrot.slane %v3176, 2
      %v3196 = vrot.slane %v3177, 2
      %v3197 = vsel %vm2737, %v3195, %v3196
      %v3198 = vrot.slane %v3178, 2
      %v3199 = vsel %vm2737, %v3196, %v3198
      %v3200 = vrot.slane %v3179, 2
      %v3201 = vsel %vm2737, %v3198, %v3200
      %v3202 = vrot.slane %v3180, 2
      %v3203 = vsel %vm2737, %v3200, %v3202
      %v3204 = vrot.slane %v3181, 2
      %v3205 = vsel %vm2737, %v3202, %v3204
      %v3206 = vrot.slane %v3182, 2
      %v3207 = vsel %vm2737, %v3204, %v3206
      %v3208 = vrot.slane %v3183, 2
      %v3209 = vsel %vm2737, %v3206, %v3208
      %v3210 = vrot.slane %v3184, 2
      %v3211 = vsel %vm2737, %v3208, %v3210
      %v3212 = vrot.slane %v3185, 2
      %v3213 = vsel %vm2737, %v3210, %v3212
      %v3214 = vrot.slane %v3186, 2
      %v3215 = vsel %vm2737, %v3212, %v3214
      %v3216 = vrot.slane %v3187, 2
      %v3217 = vsel %vm2737, %v3214, %v3216
      %v3218 = vrot.slane %v3188, 2
      %v3219 = vsel %vm2737, %v3216, %v3218
      %v3220 = vrot.slane %v3189, 2
      %v3221 = vsel %vm2737, %v3218, %v3220
      %v3222 = vrot.slane %v3190, 2
      %v3223 = vsel %vm2737, %v3220, %v3222
      %v3224 = vrot.slane %v3191, 2
      %v3225 = vsel %vm2737, %v3222, %v3224
      %v3226 = vrot.slane %v3192, 2
      %v3227 = vsel %vm2737, %v3224, %v3226
      %v3228 = vrot.slane %v3193, 2
      %v3229 = vsel %vm2737, %v3226, %v3228
      %v3230 = vrot.slane %v3194, 2
      %v3231 = vsel %vm2737, %v3228, %v3230
      %v3266 = vunpack.c.l.b16 %v3086
      %v3267 = vunpack.c.l.b16 %v3087
      %v3268 = vunpack.c.l.b16 %v3088
      %v3269 = vunpack.c.l.b16 %v3089
      %v3270 = vunpack.c.l.b16 %v3090
      %v3271 = vunpack.c.l.b16 %v3091
      %v3272 = vunpack.c.l.b16 %v3092
      %v3273 = vunpack.c.l.b16 %v3093
      %v3274 = vunpack.c.l.b16 %v3094
      %v3275 = vunpack.c.l.b16 %v3095
      %v3276 = vunpack.c.l.b16 %v3096
      %v3277 = vunpack.c.l.b16 %v3097
      %v3278 = vunpack.c.l.b16 %v3098
      %v3279 = vunpack.c.l.b16 %v3099
      %v3280 = vunpack.c.l.b16 %v3100
      %v3281 = vunpack.c.l.b16 %v3101
      %v3282 = vpack.c.b16 %v3267, %v3266
      %v3283 = vpack.c.b16 %v3269, %v3268
      %v3284 = vpack.c.b16 %v3271, %v3270
      %v3285 = vpack.c.b16 %v3273, %v3272
      %v3286 = vpack.c.b16 %v3275, %v3274
      %v3287 = vpack.c.b16 %v3277, %v3276
      %v3288 = vpack.c.b16 %v3279, %v3278
      %v3289 = vpack.c.b16 %v3281, %v3280
      %3298 = vmatpush.bf16.msra.mxu0 %v3289
      %3299 = vmatpush.bf16.msra.mxu0 %v3288
      %3300 = vmatpush.bf16.msra.mxu0 %v3287
      %3301 = vmatpush.bf16.msra.mxu0 %v3286
      %3302 = vmatpush.bf16.msra.mxu0 %v3285
      %3303 = vmatpush.bf16.msra.mxu0 %v3284
      %3304 = vmatpush.bf16.msra.mxu0 %v3283
      %3305 = vmatpush.bf16.msra.mxu0 %v3282
      %3306 = vmatmul.bf16.gmra.mxu0 %v3197
      %v3307 = vpop.f32.mrf.mxu0
      %v3308 = vadd.f32 0.0, %v3307
      %v3309 = vpop.f32.mrf.mxu0
      %v3310 = vadd.f32 0.0, %v3309
      %3311 = vmatmul.bf16.gmra.mxu0 %v3199
      %v3312 = vpop.f32.mrf.mxu0
      %v3313 = vadd.f32 0.0, %v3312
      %v3314 = vpop.f32.mrf.mxu0
      %v3315 = vadd.f32 0.0, %v3314
      %3316 = vmatmul.bf16.gmra.mxu0 %v3201
      %v3317 = vpop.f32.mrf.mxu0
      %v3318 = vadd.f32 0.0, %v3317
      %v3319 = vpop.f32.mrf.mxu0
      %v3320 = vadd.f32 0.0, %v3319
      %3321 = vmatmul.bf16.gmra.mxu0 %v3203
      %v3322 = vpop.f32.mrf.mxu0
      %v3323 = vadd.f32 0.0, %v3322
      %v3324 = vpop.f32.mrf.mxu0
      %v3325 = vadd.f32 0.0, %v3324
      %3326 = vmatmul.bf16.gmra.mxu0 %v3205
      %v3327 = vpop.f32.mrf.mxu0
      %v3328 = vadd.f32 0.0, %v3327
      %v3329 = vpop.f32.mrf.mxu0
      %v3330 = vadd.f32 0.0, %v3329
      %3331 = vmatmul.bf16.gmra.mxu0 %v3207
      %v3332 = vpop.f32.mrf.mxu0
      %v3333 = vadd.f32 0.0, %v3332
      %v3334 = vpop.f32.mrf.mxu0
      %v3335 = vadd.f32 0.0, %v3334
      %3336 = vmatmul.bf16.gmra.mxu0 %v3209
      %v3337 = vpop.f32.mrf.mxu0
      %v3338 = vadd.f32 0.0, %v3337
      %v3339 = vpop.f32.mrf.mxu0
      %v3340 = vadd.f32 0.0, %v3339
      %3341 = vmatmul.bf16.gmra.mxu0 %v3211
      %v3342 = vpop.f32.mrf.mxu0
      %v3343 = vadd.f32 0.0, %v3342
      %v3344 = vpop.f32.mrf.mxu0
      %v3345 = vadd.f32 0.0, %v3344
      %3346 = vmatmul.bf16.gmra.mxu0 %v3213
      %v3347 = vpop.f32.mrf.mxu0
      %v3348 = vadd.f32 0.0, %v3347
      %v3349 = vpop.f32.mrf.mxu0
      %v3350 = vadd.f32 0.0, %v3349
      %3351 = vmatmul.bf16.gmra.mxu0 %v3215
      %v3352 = vpop.f32.mrf.mxu0
      %v3353 = vadd.f32 0.0, %v3352
      %v3354 = vpop.f32.mrf.mxu0
      %v3355 = vadd.f32 0.0, %v3354
      %3356 = vmatmul.bf16.gmra.mxu0 %v3217
      %v3357 = vpop.f32.mrf.mxu0
      %v3358 = vadd.f32 0.0, %v3357
      %v3359 = vpop.f32.mrf.mxu0
      %v3360 = vadd.f32 0.0, %v3359
      %3361 = vmatmul.bf16.gmra.mxu0 %v3219
      %v3362 = vpop.f32.mrf.mxu0
      %v3363 = vadd.f32 0.0, %v3362
      %v3364 = vpop.f32.mrf.mxu0
      %v3365 = vadd.f32 0.0, %v3364
      %3366 = vmatmul.bf16.gmra.mxu0 %v3221
      %v3367 = vpop.f32.mrf.mxu0
      %v3368 = vadd.f32 0.0, %v3367
      %v3369 = vpop.f32.mrf.mxu0
      %v3370 = vadd.f32 0.0, %v3369
      %3371 = vmatmul.bf16.gmra.mxu0 %v3223
      %v3372 = vpop.f32.mrf.mxu0
      %v3373 = vadd.f32 0.0, %v3372
      %v3374 = vpop.f32.mrf.mxu0
      %v3375 = vadd.f32 0.0, %v3374
      %3376 = vmatmul.bf16.gmra.mxu0 %v3225
      %v3377 = vpop.f32.mrf.mxu0
      %v3378 = vadd.f32 0.0, %v3377
      %v3379 = vpop.f32.mrf.mxu0
      %v3380 = vadd.f32 0.0, %v3379
      %3381 = vmatmul.bf16.gmra.mxu0 %v3227
      %v3382 = vpop.f32.mrf.mxu0
      %v3383 = vadd.f32 0.0, %v3382
      %v3384 = vpop.f32.mrf.mxu0
      %v3385 = vadd.f32 0.0, %v3384
      %3386 = vmatmul.bf16.gmra.mxu0 %v3229
      %v3387 = vpop.f32.mrf.mxu0
      %v3388 = vadd.f32 0.0, %v3387
      %v3389 = vpop.f32.mrf.mxu0
      %v3390 = vadd.f32 0.0, %v3389
      %3391 = vmatmul.bf16.gmra.mxu0 %v3231
      %v3392 = vpop.f32.mrf.mxu0
      %v3393 = vadd.f32 0.0, %v3392
      %v3394 = vpop.f32.mrf.mxu0
      %v3395 = vadd.f32 0.0, %v3394
      %3396 = vdwg.mxu0
      %v3397 = vld [vmem:[#allocation2] sm:$0xff]
      %v3398 = vld [vmem:[#allocation2 + $0x8] sm:$0xff]
      %v3399 = vld [vmem:[#allocation2 + $0x10] sm:$0xff]
      %v3400 = vld [vmem:[#allocation2 + $0x18] sm:$0xff]
      %v3401 = vld [vmem:[#allocation2 + $0x20] sm:$0xff]
      %v3402 = vld [vmem:[#allocation2 + $0x28] sm:$0xff]
      %v3403 = vld [vmem:[#allocation2 + $0x30] sm:$0xff]
      %v3404 = vld [vmem:[#allocation2 + $0x38] sm:$0xff]
      %v3405 = vld [vmem:[#allocation2 + $0x40] sm:$0xff]
      %v3406 = vld [vmem:[#allocation2 + $0x48] sm:$0xff]
      %v3407 = vld [vmem:[#allocation2 + $0x50] sm:$0xff]
      %v3408 = vld [vmem:[#allocation2 + $0x58] sm:$0xff]
      %v3409 = vld [vmem:[#allocation2 + $0x60] sm:$0xff]
      %v3410 = vld [vmem:[#allocation2 + $0x68] sm:$0xff]
      %v3411 = vld [vmem:[#allocation2 + $0x70] sm:$0xff]
      %v3412 = vld [vmem:[#allocation2 + $0x78] sm:$0xff]
      %v3413 = vld [vmem:[#allocation2 + $0x80] sm:$0xff]
      %v3414 = vld [vmem:[#allocation2 + $0x88] sm:$0xff]
      %v3415 = vld [vmem:[#allocation2 + $0x90] sm:$0xff]
      %v3416 = vld [vmem:[#allocation2 + $0x98] sm:$0xff]
      %v3417 = vld [vmem:[#allocation2 + $0xa0] sm:$0xff]
      %v3418 = vld [vmem:[#allocation2 + $0xa8] sm:$0xff]
      %v3419 = vld [vmem:[#allocation2 + $0xb0] sm:$0xff]
      %v3420 = vld [vmem:[#allocation2 + $0xb8] sm:$0xff]
      %v3421 = vld [vmem:[#allocation2 + $0xc0] sm:$0xff]
      %v3422 = vld [vmem:[#allocation2 + $0xc8] sm:$0xff]
      %v3423 = vld [vmem:[#allocation2 + $0xd0] sm:$0xff]
      %v3424 = vld [vmem:[#allocation2 + $0xd8] sm:$0xff]
      %v3425 = vld [vmem:[#allocation2 + $0xe0] sm:$0xff]
      %v3426 = vld [vmem:[#allocation2 + $0xe8] sm:$0xff]
      %v3427 = vld [vmem:[#allocation2 + $0xf0] sm:$0xff]
      %v3428 = vld [vmem:[#allocation2 + $0xf8] sm:$0xff]
      %v3429 = vld [vmem:[#allocation2 + $0x100] sm:$0xff]
      %v3430 = vld [vmem:[#allocation2 + $0x108] sm:$0xff]
      %v3431 = vld [vmem:[#allocation2 + $0x110] sm:$0xff]
      %v3432 = vld [vmem:[#allocation2 + $0x118] sm:$0xff]
      %v3433 = vadd.f32 %v3397, %v3308
      %v3434 = vadd.f32 %v3398, %v3310
      %v3435 = vadd.f32 %v3399, %v3313
      %v3436 = vadd.f32 %v3400, %v3315
      %v3437 = vadd.f32 %v3401, %v3318
      %v3438 = vadd.f32 %v3402, %v3320
      %v3439 = vadd.f32 %v3403, %v3323
      %v3440 = vadd.f32 %v3404, %v3325
      %v3441 = vadd.f32 %v3405, %v3328
      %v3442 = vadd.f32 %v3406, %v3330
      %v3443 = vadd.f32 %v3407, %v3333
      %v3444 = vadd.f32 %v3408, %v3335
      %v3445 = vadd.f32 %v3409, %v3338
      %v3446 = vadd.f32 %v3410, %v3340
      %v3447 = vadd.f32 %v3411, %v3343
      %v3448 = vadd.f32 %v3412, %v3345
      %v3449 = vadd.f32 %v3413, %v3348
      %v3450 = vadd.f32 %v3414, %v3350
      %v3451 = vadd.f32 %v3415, %v3353
      %v3452 = vadd.f32 %v3416, %v3355
      %v3453 = vadd.f32 %v3417, %v3358
      %v3454 = vadd.f32 %v3418, %v3360
      %v3455 = vadd.f32 %v3419, %v3363
      %v3456 = vadd.f32 %v3420, %v3365
      %v3457 = vadd.f32 %v3421, %v3368
      %v3458 = vadd.f32 %v3422, %v3370
      %v3459 = vadd.f32 %v3423, %v3373
      %v3460 = vadd.f32 %v3424, %v3375
      %v3461 = vadd.f32 %v3425, %v3378
      %v3462 = vadd.f32 %v3426, %v3380
      %v3463 = vadd.f32 %v3427, %v3383
      %v3464 = vadd.f32 %v3428, %v3385
      %v3465 = vadd.f32 %v3429, %v3388
      %v3466 = vadd.f32 %v3430, %v3390
      %v3467 = vadd.f32 %v3431, %v3393
      %v3468 = vadd.f32 %v3432, %v3395
      %3469 = vst [vmem:[#allocation2] sm:$0xff] %v3433
      %3470 = vst [vmem:[#allocation2 + $0x8] sm:$0xff] %v3434
      %3471 = vst [vmem:[#allocation2 + $0x10] sm:$0xff] %v3435
      %3472 = vst [vmem:[#allocation2 + $0x18] sm:$0xff] %v3436
      %3473 = vst [vmem:[#allocation2 + $0x20] sm:$0xff] %v3437
      %3474 = vst [vmem:[#allocation2 + $0x28] sm:$0xff] %v3438
      %3475 = vst [vmem:[#allocation2 + $0x30] sm:$0xff] %v3439
      %3476 = vst [vmem:[#allocation2 + $0x38] sm:$0xff] %v3440
      %3477 = vst [vmem:[#allocation2 + $0x40] sm:$0xff] %v3441
      %3478 = vst [vmem:[#allocation2 + $0x48] sm:$0xff] %v3442
      %3479 = vst [vmem:[#allocation2 + $0x50] sm:$0xff] %v3443
      %3480 = vst [vmem:[#allocation2 + $0x58] sm:$0xff] %v3444
      %3481 = vst [vmem:[#allocation2 + $0x60] sm:$0xff] %v3445
      %3482 = vst [vmem:[#allocation2 + $0x68] sm:$0xff] %v3446
      %3483 = vst [vmem:[#allocation2 + $0x70] sm:$0xff] %v3447
      %3484 = vst [vmem:[#allocation2 + $0x78] sm:$0xff] %v3448
      %3485 = vst [vmem:[#allocation2 + $0x80] sm:$0xff] %v3449
      %3486 = vst [vmem:[#allocation2 + $0x88] sm:$0xff] %v3450
      %3487 = vst [vmem:[#allocation2 + $0x90] sm:$0xff] %v3451
      %3488 = vst [vmem:[#allocation2 + $0x98] sm:$0xff] %v3452
      %3489 = vst [vmem:[#allocation2 + $0xa0] sm:$0xff] %v3453
      %3490 = vst [vmem:[#allocation2 + $0xa8] sm:$0xff] %v3454
      %3491 = vst [vmem:[#allocation2 + $0xb0] sm:$0xff] %v3455
      %3492 = vst [vmem:[#allocation2 + $0xb8] sm:$0xff] %v3456
      %3493 = vst [vmem:[#allocation2 + $0xc0] sm:$0xff] %v3457
      %3494 = vst [vmem:[#allocation2 + $0xc8] sm:$0xff] %v3458
      %3495 = vst [vmem:[#allocation2 + $0xd0] sm:$0xff] %v3459
      %3496 = vst [vmem:[#allocation2 + $0xd8] sm:$0xff] %v3460
      %3497 = vst [vmem:[#allocation2 + $0xe0] sm:$0xff] %v3461
      %3498 = vst [vmem:[#allocation2 + $0xe8] sm:$0xff] %v3462
      %3499 = vst [vmem:[#allocation2 + $0xf0] sm:$0xff] %v3463
      %3500 = vst [vmem:[#allocation2 + $0xf8] sm:$0xff] %v3464
      %3501 = vst [vmem:[#allocation2 + $0x100] sm:$0xff] %v3465
      %3502 = vst [vmem:[#allocation2 + $0x108] sm:$0xff] %v3466
      %3503 = vst [vmem:[#allocation2 + $0x110] sm:$0xff] %v3467
      %3504 = vst [vmem:[#allocation2 + $0x118] sm:$0xff] %v3468
      %v3505 = vld [vmem:[%s165 + $0x10] sm:$0xc]
      %v3506 = vld [vmem:[%s165 + $0x14] sm:$0xf]
      %v3507 = vld [vmem:[%s165 + $0x18] sm:$0xf]
      %v3508 = vld [vmem:[%s165 + $0x1c] sm:$0xf]
      %v3509 = vld [vmem:[%s165 + $0x20] sm:$0xf]
      %v3510 = vld [vmem:[%s165 + $0x24] sm:$0xf]
      %v3511 = vld [vmem:[%s165 + $0x28] sm:$0xf]
      %v3512 = vld [vmem:[%s165 + $0x2c] sm:$0xf]
      %v3513 = vld [vmem:[%s165 + $0x30] sm:$0xf]
      %v3514 = vld [vmem:[%s165 + $0x34] sm:$0xf]
      %v3515 = vld [vmem:[%s165 + $0x38] sm:$0xf]
      %v3516 = vld [vmem:[%s165 + $0x3c] sm:$0xf]
      %v3517 = vld [vmem:[%s165 + $0x40] sm:$0xf]
      %v3518 = vld [vmem:[%s165 + $0x44] sm:$0xf]
      %v3519 = vld [vmem:[%s165 + $0x48] sm:$0xf]
      %v3520 = vld [vmem:[%s165 + $0x4c] sm:$0xf]
      %v3521 = vld [vmem:[%s165 + $0x50] sm:$0xf]
      %v3522 = vld [vmem:[%s165 + $0x54] sm:$0xf]
      %v3523 = vld [vmem:[%s165 + $0x58] sm:$0xf]
      %v3524 = vld [vmem:[%s165 + $0x5c] sm:$0xf]
      %v3525 = vld [vmem:[%s165 + $0x60] sm:$0xf]
      %v3526 = vld [vmem:[%s165 + $0x64] sm:$0xf]
      %v3527 = vld [vmem:[%s165 + $0x68] sm:$0xf]
      %v3528 = vld [vmem:[%s165 + $0x6c] sm:$0xf]
      %v3529 = vld [vmem:[%s165 + $0x70] sm:$0xf]
      %v3530 = vld [vmem:[%s165 + $0x74] sm:$0xf]
      %v3531 = vld [vmem:[%s165 + $0x78] sm:$0xf]
      %v3532 = vld [vmem:[%s165 + $0x7c] sm:$0xf]
      %v3533 = vld [vmem:[%s165 + $0x80] sm:$0xf]
      %v3534 = vld [vmem:[%s165 + $0x84] sm:$0xf]
      %v3535 = vld [vmem:[%s165 + $0x88] sm:$0xf]
      %v3536 = vld [vmem:[%s165 + $0x8c] sm:$0xf]
      %v3537 = vld [vmem:[%s165 + $0x90] sm:$0xf]
      %v3538 = vld [vmem:[%s165 + $0x94] sm:$0xf]
      %v3539 = vld [vmem:[%s165 + $0x98] sm:$0xf]
      %v3540 = vld [vmem:[%s165 + $0x9c] sm:$0xf]
      %v3541 = vld [vmem:[%s165 + $0xa0] sm:$0x7]
      %s3542 = scalar_lea.vmem %s1, 448
      %v3543 = vld [vmem:[%s3542] sm:$0xf]
      %v3544 = vld [vmem:[%s3542 + $0x4] sm:$0xf]
      %v3545 = vld [vmem:[%s3542 + $0x8] sm:$0xf]
      %v3546 = vld [vmem:[%s3542 + $0xc] sm:$0xf]
      %v3547 = vld [vmem:[%s3542 + $0x10] sm:$0xf]
      %v3548 = vld [vmem:[%s3542 + $0x14] sm:$0xf]
      %v3549 = vld [vmem:[%s3542 + $0x18] sm:$0xf]
      %v3550 = vld [vmem:[%s3542 + $0x1c] sm:$0xf]
      %v3551 = vld [vmem:[%s3542 + $0x20] sm:$0xf]
      %v3552 = vld [vmem:[%s3542 + $0x24] sm:$0xf]
      %v3553 = vld [vmem:[%s3542 + $0x28] sm:$0xf]
      %v3554 = vld [vmem:[%s3542 + $0x2c] sm:$0xf]
      %v3555 = vld [vmem:[%s3542 + $0x30] sm:$0xf]
      %v3556 = vld [vmem:[%s3542 + $0x34] sm:$0xf]
      %v3557 = vld [vmem:[%s3542 + $0x38] sm:$0xf]
      %v3558 = vld [vmem:[%s3542 + $0x3c] sm:$0xf]
      %v3596 = vunpack.c.l.b16 %v3505
      %v3597 = vunpack.c.l.b16 %v3506
      %v3598 = vunpack.c.l.b16 %v3507
      %v3599 = vunpack.c.l.b16 %v3508
      %v3600 = vunpack.c.l.b16 %v3509
      %v3601 = vunpack.c.l.b16 %v3510
      %v3602 = vunpack.c.l.b16 %v3511
      %v3603 = vunpack.c.l.b16 %v3512
      %v3604 = vunpack.c.l.b16 %v3513
      %v3605 = vunpack.c.l.b16 %v3514
      %v3606 = vunpack.c.l.b16 %v3515
      %v3607 = vunpack.c.l.b16 %v3516
      %v3608 = vunpack.c.l.b16 %v3517
      %v3609 = vunpack.c.l.b16 %v3518
      %v3610 = vunpack.c.l.b16 %v3519
      %v3611 = vunpack.c.l.b16 %v3520
      %v3612 = vunpack.c.l.b16 %v3521
      %v3613 = vunpack.c.l.b16 %v3522
      %v3614 = vunpack.c.l.b16 %v3523
      %v3615 = vunpack.c.l.b16 %v3524
      %v3616 = vunpack.c.l.b16 %v3525
      %v3617 = vunpack.c.l.b16 %v3526
      %v3618 = vunpack.c.l.b16 %v3527
      %v3619 = vunpack.c.l.b16 %v3528
      %v3620 = vunpack.c.l.b16 %v3529
      %v3621 = vunpack.c.l.b16 %v3530
      %v3622 = vunpack.c.l.b16 %v3531
      %v3623 = vunpack.c.l.b16 %v3532
      %v3624 = vunpack.c.l.b16 %v3533
      %v3625 = vunpack.c.l.b16 %v3534
      %v3626 = vunpack.c.l.b16 %v3535
      %v3627 = vunpack.c.l.b16 %v3536
      %v3628 = vunpack.c.l.b16 %v3537
      %v3629 = vunpack.c.l.b16 %v3538
      %v3630 = vunpack.c.l.b16 %v3539
      %v3631 = vunpack.c.l.b16 %v3540
      %v3632 = vunpack.c.l.b16 %v3541
      %v3633 = vpack.c.b16 %v3597, %v3596
      %v3634 = vpack.c.b16 %v3599, %v3598
      %v3635 = vpack.c.b16 %v3601, %v3600
      %v3636 = vpack.c.b16 %v3603, %v3602
      %v3637 = vpack.c.b16 %v3605, %v3604
      %v3638 = vpack.c.b16 %v3607, %v3606
      %v3639 = vpack.c.b16 %v3609, %v3608
      %v3640 = vpack.c.b16 %v3611, %v3610
      %v3641 = vpack.c.b16 %v3613, %v3612
      %v3642 = vpack.c.b16 %v3615, %v3614
      %v3643 = vpack.c.b16 %v3617, %v3616
      %v3644 = vpack.c.b16 %v3619, %v3618
      %v3645 = vpack.c.b16 %v3621, %v3620
      %v3646 = vpack.c.b16 %v3623, %v3622
      %v3647 = vpack.c.b16 %v3625, %v3624
      %v3648 = vpack.c.b16 %v3627, %v3626
      %v3649 = vpack.c.b16 %v3629, %v3628
      %v3650 = vpack.c.b16 %v3631, %v3630
      %v3651 = vpack.c.b16 %v3632, %v3632
      %vm3652 = vsmask.f32 5376
      %v3654 = vshrl.u32 %v3633, 16
      %v3656 = vrot.slane %v3654, 2
      %v3657 = vshll.u32 %v3633, 16
      %v3659 = vrot.slane %v3657, 3
      %v3660 = vor.u32 %v3656, %v3659
      %v3662 = vshrl.u32 %v3634, 16
      %v3664 = vrot.slane %v3662, 2
      %v3665 = vshll.u32 %v3634, 16
      %v3667 = vrot.slane %v3665, 3
      %v3668 = vor.u32 %v3664, %v3667
      %v3669 = vsel %vm3652, %v3660, %v3668
      %v3671 = vshrl.u32 %v3635, 16
      %v3673 = vrot.slane %v3671, 2
      %v3674 = vshll.u32 %v3635, 16
      %v3676 = vrot.slane %v3674, 3
      %v3677 = vor.u32 %v3673, %v3676
      %v3678 = vsel %vm3652, %v3668, %v3677
      %v3680 = vshrl.u32 %v3636, 16
      %v3682 = vrot.slane %v3680, 2
      %v3683 = vshll.u32 %v3636, 16
      %v3685 = vrot.slane %v3683, 3
      %v3686 = vor.u32 %v3682, %v3685
      %v3687 = vsel %vm3652, %v3677, %v3686
      %v3689 = vshrl.u32 %v3637, 16
      %v3691 = vrot.slane %v3689, 2
      %v3692 = vshll.u32 %v3637, 16
      %v3694 = vrot.slane %v3692, 3
      %v3695 = vor.u32 %v3691, %v3694
      %v3696 = vsel %vm3652, %v3686, %v3695
      %v3698 = vshrl.u32 %v3638, 16
      %v3700 = vrot.slane %v3698, 2
      %v3701 = vshll.u32 %v3638, 16
      %v3703 = vrot.slane %v3701, 3
      %v3704 = vor.u32 %v3700, %v3703
      %v3705 = vsel %vm3652, %v3695, %v3704
      %v3707 = vshrl.u32 %v3639, 16
      %v3709 = vrot.slane %v3707, 2
      %v3710 = vshll.u32 %v3639, 16
      %v3712 = vrot.slane %v3710, 3
      %v3713 = vor.u32 %v3709, %v3712
      %v3714 = vsel %vm3652, %v3704, %v3713
      %v3716 = vshrl.u32 %v3640, 16
      %v3718 = vrot.slane %v3716, 2
      %v3719 = vshll.u32 %v3640, 16
      %v3721 = vrot.slane %v3719, 3
      %v3722 = vor.u32 %v3718, %v3721
      %v3723 = vsel %vm3652, %v3713, %v3722
      %v3725 = vshrl.u32 %v3641, 16
      %v3727 = vrot.slane %v3725, 2
      %v3728 = vshll.u32 %v3641, 16
      %v3730 = vrot.slane %v3728, 3
      %v3731 = vor.u32 %v3727, %v3730
      %v3732 = vsel %vm3652, %v3722, %v3731
      %v3734 = vshrl.u32 %v3642, 16
      %v3736 = vrot.slane %v3734, 2
      %v3737 = vshll.u32 %v3642, 16
      %v3739 = vrot.slane %v3737, 3
      %v3740 = vor.u32 %v3736, %v3739
      %v3741 = vsel %vm3652, %v3731, %v3740
      %v3743 = vshrl.u32 %v3643, 16
      %v3745 = vrot.slane %v3743, 2
      %v3746 = vshll.u32 %v3643, 16
      %v3748 = vrot.slane %v3746, 3
      %v3749 = vor.u32 %v3745, %v3748
      %v3750 = vsel %vm3652, %v3740, %v3749
      %v3752 = vshrl.u32 %v3644, 16
      %v3754 = vrot.slane %v3752, 2
      %v3755 = vshll.u32 %v3644, 16
      %v3757 = vrot.slane %v3755, 3
      %v3758 = vor.u32 %v3754, %v3757
      %v3759 = vsel %vm3652, %v3749, %v3758
      %v3761 = vshrl.u32 %v3645, 16
      %v3763 = vrot.slane %v3761, 2
      %v3764 = vshll.u32 %v3645, 16
      %v3766 = vrot.slane %v3764, 3
      %v3767 = vor.u32 %v3763, %v3766
      %v3768 = vsel %vm3652, %v3758, %v3767
      %v3770 = vshrl.u32 %v3646, 16
      %v3772 = vrot.slane %v3770, 2
      %v3773 = vshll.u32 %v3646, 16
      %v3775 = vrot.slane %v3773, 3
      %v3776 = vor.u32 %v3772, %v3775
      %v3777 = vsel %vm3652, %v3767, %v3776
      %v3779 = vshrl.u32 %v3647, 16
      %v3781 = vrot.slane %v3779, 2
      %v3782 = vshll.u32 %v3647, 16
      %v3784 = vrot.slane %v3782, 3
      %v3785 = vor.u32 %v3781, %v3784
      %v3786 = vsel %vm3652, %v3776, %v3785
      %v3788 = vshrl.u32 %v3648, 16
      %v3790 = vrot.slane %v3788, 2
      %v3791 = vshll.u32 %v3648, 16
      %v3793 = vrot.slane %v3791, 3
      %v3794 = vor.u32 %v3790, %v3793
      %v3795 = vsel %vm3652, %v3785, %v3794
      %v3797 = vshrl.u32 %v3649, 16
      %v3799 = vrot.slane %v3797, 2
      %v3800 = vshll.u32 %v3649, 16
      %v3802 = vrot.slane %v3800, 3
      %v3803 = vor.u32 %v3799, %v3802
      %v3804 = vsel %vm3652, %v3794, %v3803
      %v3806 = vshrl.u32 %v3650, 16
      %v3808 = vrot.slane %v3806, 2
      %v3809 = vshll.u32 %v3650, 16
      %v3811 = vrot.slane %v3809, 3
      %v3812 = vor.u32 %v3808, %v3811
      %v3813 = vsel %vm3652, %v3803, %v3812
      %v3815 = vshrl.u32 %v3651, 16
      %v3817 = vrot.slane %v3815, 2
      %v3818 = vshll.u32 %v3651, 16
      %v3820 = vrot.slane %v3818, 3
      %v3821 = vor.u32 %v3817, %v3820
      %v3822 = vsel %vm3652, %v3812, %v3821
      %v3857 = vunpack.c.l.b16 %v3543
      %v3858 = vunpack.c.l.b16 %v3544
      %v3859 = vunpack.c.l.b16 %v3545
      %v3860 = vunpack.c.l.b16 %v3546
      %v3861 = vunpack.c.l.b16 %v3547
      %v3862 = vunpack.c.l.b16 %v3548
      %v3863 = vunpack.c.l.b16 %v3549
      %v3864 = vunpack.c.l.b16 %v3550
      %v3865 = vunpack.c.l.b16 %v3551
      %v3866 = vunpack.c.l.b16 %v3552
      %v3867 = vunpack.c.l.b16 %v3553
      %v3868 = vunpack.c.l.b16 %v3554
      %v3869 = vunpack.c.l.b16 %v3555
      %v3870 = vunpack.c.l.b16 %v3556
      %v3871 = vunpack.c.l.b16 %v3557
      %v3872 = vunpack.c.l.b16 %v3558
      %v3873 = vpack.c.b16 %v3858, %v3857
      %v3874 = vpack.c.b16 %v3860, %v3859
      %v3875 = vpack.c.b16 %v3862, %v3861
      %v3876 = vpack.c.b16 %v3864, %v3863
      %v3877 = vpack.c.b16 %v3866, %v3865
      %v3878 = vpack.c.b16 %v3868, %v3867
      %v3879 = vpack.c.b16 %v3870, %v3869
      %v3880 = vpack.c.b16 %v3872, %v3871
      %3889 = vmatpush.bf16.msra.mxu0 %v3880
      %3890 = vmatpush.bf16.msra.mxu0 %v3879
      %3891 = vmatpush.bf16.msra.mxu0 %v3878
      %3892 = vmatpush.bf16.msra.mxu0 %v3877
      %3893 = vmatpush.bf16.msra.mxu0 %v3876
      %3894 = vmatpush.bf16.msra.mxu0 %v3875
      %3895 = vmatpush.bf16.msra.mxu0 %v3874
      %3896 = vmatpush.bf16.msra.mxu0 %v3873
      %3897 = vmatmul.bf16.gmra.mxu0 %v3669
      %v3898 = vpop.f32.mrf.mxu0
      %v3899 = vadd.f32 0.0, %v3898
      %v3900 = vpop.f32.mrf.mxu0
      %v3901 = vadd.f32 0.0, %v3900
      %3902 = vmatmul.bf16.gmra.mxu0 %v3678
      %v3903 = vpop.f32.mrf.mxu0
      %v3904 = vadd.f32 0.0, %v3903
      %v3905 = vpop.f32.mrf.mxu0
      %v3906 = vadd.f32 0.0, %v3905
      %3907 = vmatmul.bf16.gmra.mxu0 %v3687
      %v3908 = vpop.f32.mrf.mxu0
      %v3909 = vadd.f32 0.0, %v3908
      %v3910 = vpop.f32.mrf.mxu0
      %v3911 = vadd.f32 0.0, %v3910
      %3912 = vmatmul.bf16.gmra.mxu0 %v3696
      %v3913 = vpop.f32.mrf.mxu0
      %v3914 = vadd.f32 0.0, %v3913
      %v3915 = vpop.f32.mrf.mxu0
      %v3916 = vadd.f32 0.0, %v3915
      %3917 = vmatmul.bf16.gmra.mxu0 %v3705
      %v3918 = vpop.f32.mrf.mxu0
      %v3919 = vadd.f32 0.0, %v3918
      %v3920 = vpop.f32.mrf.mxu0
      %v3921 = vadd.f32 0.0, %v3920
      %3922 = vmatmul.bf16.gmra.mxu0 %v3714
      %v3923 = vpop.f32.mrf.mxu0
      %v3924 = vadd.f32 0.0, %v3923
      %v3925 = vpop.f32.mrf.mxu0
      %v3926 = vadd.f32 0.0, %v3925
      %3927 = vmatmul.bf16.gmra.mxu0 %v3723
      %v3928 = vpop.f32.mrf.mxu0
      %v3929 = vadd.f32 0.0, %v3928
      %v3930 = vpop.f32.mrf.mxu0
      %v3931 = vadd.f32 0.0, %v3930
      %3932 = vmatmul.bf16.gmra.mxu0 %v3732
      %v3933 = vpop.f32.mrf.mxu0
      %v3934 = vadd.f32 0.0, %v3933
      %v3935 = vpop.f32.mrf.mxu0
      %v3936 = vadd.f32 0.0, %v3935
      %3937 = vmatmul.bf16.gmra.mxu0 %v3741
      %v3938 = vpop.f32.mrf.mxu0
      %v3939 = vadd.f32 0.0, %v3938
      %v3940 = vpop.f32.mrf.mxu0
      %v3941 = vadd.f32 0.0, %v3940
      %3942 = vmatmul.bf16.gmra.mxu0 %v3750
      %v3943 = vpop.f32.mrf.mxu0
      %v3944 = vadd.f32 0.0, %v3943
      %v3945 = vpop.f32.mrf.mxu0
      %v3946 = vadd.f32 0.0, %v3945
      %3947 = vmatmul.bf16.gmra.mxu0 %v3759
      %v3948 = vpop.f32.mrf.mxu0
      %v3949 = vadd.f32 0.0, %v3948
      %v3950 = vpop.f32.mrf.mxu0
      %v3951 = vadd.f32 0.0, %v3950
      %3952 = vmatmul.bf16.gmra.mxu0 %v3768
      %v3953 = vpop.f32.mrf.mxu0
      %v3954 = vadd.f32 0.0, %v3953
      %v3955 = vpop.f32.mrf.mxu0
      %v3956 = vadd.f32 0.0, %v3955
      %3957 = vmatmul.bf16.gmra.mxu0 %v3777
      %v3958 = vpop.f32.mrf.mxu0
      %v3959 = vadd.f32 0.0, %v3958
      %v3960 = vpop.f32.mrf.mxu0
      %v3961 = vadd.f32 0.0, %v3960
      %3962 = vmatmul.bf16.gmra.mxu0 %v3786
      %v3963 = vpop.f32.mrf.mxu0
      %v3964 = vadd.f32 0.0, %v3963
      %v3965 = vpop.f32.mrf.mxu0
      %v3966 = vadd.f32 0.0, %v3965
      %3967 = vmatmul.bf16.gmra.mxu0 %v3795
      %v3968 = vpop.f32.mrf.mxu0
      %v3969 = vadd.f32 0.0, %v3968
      %v3970 = vpop.f32.mrf.mxu0
      %v3971 = vadd.f32 0.0, %v3970
      %3972 = vmatmul.bf16.gmra.mxu0 %v3804
      %v3973 = vpop.f32.mrf.mxu0
      %v3974 = vadd.f32 0.0, %v3973
      %v3975 = vpop.f32.mrf.mxu0
      %v3976 = vadd.f32 0.0, %v3975
      %3977 = vmatmul.bf16.gmra.mxu0 %v3813
      %v3978 = vpop.f32.mrf.mxu0
      %v3979 = vadd.f32 0.0, %v3978
      %v3980 = vpop.f32.mrf.mxu0
      %v3981 = vadd.f32 0.0, %v3980
      %3982 = vmatmul.bf16.gmra.mxu0 %v3822
      %v3983 = vpop.f32.mrf.mxu0
      %v3984 = vadd.f32 0.0, %v3983
      %v3985 = vpop.f32.mrf.mxu0
      %v3986 = vadd.f32 0.0, %v3985
      %3987 = vdwg.mxu0
      %v3988 = vld [vmem:[#allocation2] sm:$0xff]
      %v3989 = vld [vmem:[#allocation2 + $0x8] sm:$0xff]
      %v3990 = vld [vmem:[#allocation2 + $0x10] sm:$0xff]
      %v3991 = vld [vmem:[#allocation2 + $0x18] sm:$0xff]
      %v3992 = vld [vmem:[#allocation2 + $0x20] sm:$0xff]
      %v3993 = vld [vmem:[#allocation2 + $0x28] sm:$0xff]
      %v3994 = vld [vmem:[#allocation2 + $0x30] sm:$0xff]
      %v3995 = vld [vmem:[#allocation2 + $0x38] sm:$0xff]
      %v3996 = vld [vmem:[#allocation2 + $0x40] sm:$0xff]
      %v3997 = vld [vmem:[#allocation2 + $0x48] sm:$0xff]
      %v3998 = vld [vmem:[#allocation2 + $0x50] sm:$0xff]
      %v3999 = vld [vmem:[#allocation2 + $0x58] sm:$0xff]
      %v4000 = vld [vmem:[#allocation2 + $0x60] sm:$0xff]
      %v4001 = vld [vmem:[#allocation2 + $0x68] sm:$0xff]
      %v4002 = vld [vmem:[#allocation2 + $0x70] sm:$0xff]
      %v4003 = vld [vmem:[#allocation2 + $0x78] sm:$0xff]
      %v4004 = vld [vmem:[#allocation2 + $0x80] sm:$0xff]
      %v4005 = vld [vmem:[#allocation2 + $0x88] sm:$0xff]
      %v4006 = vld [vmem:[#allocation2 + $0x90] sm:$0xff]
      %v4007 = vld [vmem:[#allocation2 + $0x98] sm:$0xff]
      %v4008 = vld [vmem:[#allocation2 + $0xa0] sm:$0xff]
      %v4009 = vld [vmem:[#allocation2 + $0xa8] sm:$0xff]
      %v4010 = vld [vmem:[#allocation2 + $0xb0] sm:$0xff]
      %v4011 = vld [vmem:[#allocation2 + $0xb8] sm:$0xff]
      %v4012 = vld [vmem:[#allocation2 + $0xc0] sm:$0xff]
      %v4013 = vld [vmem:[#allocation2 + $0xc8] sm:$0xff]
      %v4014 = vld [vmem:[#allocation2 + $0xd0] sm:$0xff]
      %v4015 = vld [vmem:[#allocation2 + $0xd8] sm:$0xff]
      %v4016 = vld [vmem:[#allocation2 + $0xe0] sm:$0xff]
      %v4017 = vld [vmem:[#allocation2 + $0xe8] sm:$0xff]
      %v4018 = vld [vmem:[#allocation2 + $0xf0] sm:$0xff]
      %v4019 = vld [vmem:[#allocation2 + $0xf8] sm:$0xff]
      %v4020 = vld [vmem:[#allocation2 + $0x100] sm:$0xff]
      %v4021 = vld [vmem:[#allocation2 + $0x108] sm:$0xff]
      %v4022 = vld [vmem:[#allocation2 + $0x110] sm:$0xff]
      %v4023 = vld [vmem:[#allocation2 + $0x118] sm:$0xff]
      %v4024 = vadd.f32 %v3988, %v3899
      %v4025 = vadd.f32 %v3989, %v3901
      %v4026 = vadd.f32 %v3990, %v3904
      %v4027 = vadd.f32 %v3991, %v3906
      %v4028 = vadd.f32 %v3992, %v3909
      %v4029 = vadd.f32 %v3993, %v3911
      %v4030 = vadd.f32 %v3994, %v3914
      %v4031 = vadd.f32 %v3995, %v3916
      %v4032 = vadd.f32 %v3996, %v3919
      %v4033 = vadd.f32 %v3997, %v3921
      %v4034 = vadd.f32 %v3998, %v3924
      %v4035 = vadd.f32 %v3999, %v3926
      %v4036 = vadd.f32 %v4000, %v3929
      %v4037 = vadd.f32 %v4001, %v3931
      %v4038 = vadd.f32 %v4002, %v3934
      %v4039 = vadd.f32 %v4003, %v3936
      %v4040 = vadd.f32 %v4004, %v3939
      %v4041 = vadd.f32 %v4005, %v3941
      %v4042 = vadd.f32 %v4006, %v3944
      %v4043 = vadd.f32 %v4007, %v3946
      %v4044 = vadd.f32 %v4008, %v3949
      %v4045 = vadd.f32 %v4009, %v3951
      %v4046 = vadd.f32 %v4010, %v3954
      %v4047 = vadd.f32 %v4011, %v3956
      %v4048 = vadd.f32 %v4012, %v3959
      %v4049 = vadd.f32 %v4013, %v3961
      %v4050 = vadd.f32 %v4014, %v3964
      %v4051 = vadd.f32 %v4015, %v3966
      %v4052 = vadd.f32 %v4016, %v3969
      %v4053 = vadd.f32 %v4017, %v3971
      %v4054 = vadd.f32 %v4018, %v3974
      %v4055 = vadd.f32 %v4019, %v3976
      %v4056 = vadd.f32 %v4020, %v3979
      %v4057 = vadd.f32 %v4021, %v3981
      %v4058 = vadd.f32 %v4022, %v3984
      %v4059 = vadd.f32 %v4023, %v3986
      %4060 = vst [vmem:[#allocation2] sm:$0xff] %v4024
      %4061 = vst [vmem:[#allocation2 + $0x8] sm:$0xff] %v4025
      %4062 = vst [vmem:[#allocation2 + $0x10] sm:$0xff] %v4026
      %4063 = vst [vmem:[#allocation2 + $0x18] sm:$0xff] %v4027
      %4064 = vst [vmem:[#allocation2 + $0x20] sm:$0xff] %v4028
      %4065 = vst [vmem:[#allocation2 + $0x28] sm:$0xff] %v4029
      %4066 = vst [vmem:[#allocation2 + $0x30] sm:$0xff] %v4030
      %4067 = vst [vmem:[#allocation2 + $0x38] sm:$0xff] %v4031
      %4068 = vst [vmem:[#allocation2 + $0x40] sm:$0xff] %v4032
      %4069 = vst [vmem:[#allocation2 + $0x48] sm:$0xff] %v4033
      %4070 = vst [vmem:[#allocation2 + $0x50] sm:$0xff] %v4034
      %4071 = vst [vmem:[#allocation2 + $0x58] sm:$0xff] %v4035
      %4072 = vst [vmem:[#allocation2 + $0x60] sm:$0xff] %v4036
      %4073 = vst [vmem:[#allocation2 + $0x68] sm:$0xff] %v4037
      %4074 = vst [vmem:[#allocation2 + $0x70] sm:$0xff] %v4038
      %4075 = vst [vmem:[#allocation2 + $0x78] sm:$0xff] %v4039
      %4076 = vst [vmem:[#allocation2 + $0x80] sm:$0xff] %v4040
      %4077 = vst [vmem:[#allocation2 + $0x88] sm:$0xff] %v4041
      %4078 = vst [vmem:[#allocation2 + $0x90] sm:$0xff] %v4042
      %4079 = vst [vmem:[#allocation2 + $0x98] sm:$0xff] %v4043
      %4080 = vst [vmem:[#allocation2 + $0xa0] sm:$0xff] %v4044
      %4081 = vst [vmem:[#allocation2 + $0xa8] sm:$0xff] %v4045
      %4082 = vst [vmem:[#allocation2 + $0xb0] sm:$0xff] %v4046
      %4083 = vst [vmem:[#allocation2 + $0xb8] sm:$0xff] %v4047
      %4084 = vst [vmem:[#allocation2 + $0xc0] sm:$0xff] %v4048
      %4085 = vst [vmem:[#allocation2 + $0xc8] sm:$0xff] %v4049
      %4086 = vst [vmem:[#allocation2 + $0xd0] sm:$0xff] %v4050
      %4087 = vst [vmem:[#allocation2 + $0xd8] sm:$0xff] %v4051
      %4088 = vst [vmem:[#allocation2 + $0xe0] sm:$0xff] %v4052
      %4089 = vst [vmem:[#allocation2 + $0xe8] sm:$0xff] %v4053
      %4090 = vst [vmem:[#allocation2 + $0xf0] sm:$0xff] %v4054
      %4091 = vst [vmem:[#allocation2 + $0xf8] sm:$0xff] %v4055
      %4092 = vst [vmem:[#allocation2 + $0x100] sm:$0xff] %v4056
      %4093 = vst [vmem:[#allocation2 + $0x108] sm:$0xff] %v4057
      %4094 = vst [vmem:[#allocation2 + $0x110] sm:$0xff] %v4058
      %4095 = vst [vmem:[#allocation2 + $0x118] sm:$0xff] %v4059
      %v4096 = vld [vmem:[%s165 + $0x10] sm:$0x8]
      %v4097 = vld [vmem:[%s165 + $0x14] sm:$0xf]
      %v4098 = vld [vmem:[%s165 + $0x18] sm:$0xf]
      %v4099 = vld [vmem:[%s165 + $0x1c] sm:$0xf]
      %v4100 = vld [vmem:[%s165 + $0x20] sm:$0xf]
      %v4101 = vld [vmem:[%s165 + $0x24] sm:$0xf]
      %v4102 = vld [vmem:[%s165 + $0x28] sm:$0xf]
      %v4103 = vld [vmem:[%s165 + $0x2c] sm:$0xf]
      %v4104 = vld [vmem:[%s165 + $0x30] sm:$0xf]
      %v4105 = vld [vmem:[%s165 + $0x34] sm:$0xf]
      %v4106 = vld [vmem:[%s165 + $0x38] sm:$0xf]
      %v4107 = vld [vmem:[%s165 + $0x3c] sm:$0xf]
      %v4108 = vld [vmem:[%s165 + $0x40] sm:$0xf]
      %v4109 = vld [vmem:[%s165 + $0x44] sm:$0xf]
      %v4110 = vld [vmem:[%s165 + $0x48] sm:$0xf]
      %v4111 = vld [vmem:[%s165 + $0x4c] sm:$0xf]
      %v4112 = vld [vmem:[%s165 + $0x50] sm:$0xf]
      %v4113 = vld [vmem:[%s165 + $0x54] sm:$0xf]
      %v4114 = vld [vmem:[%s165 + $0x58] sm:$0xf]
      %v4115 = vld [vmem:[%s165 + $0x5c] sm:$0xf]
      %v4116 = vld [vmem:[%s165 + $0x60] sm:$0xf]
      %v4117 = vld [vmem:[%s165 + $0x64] sm:$0xf]
      %v4118 = vld [vmem:[%s165 + $0x68] sm:$0xf]
      %v4119 = vld [vmem:[%s165 + $0x6c] sm:$0xf]
      %v4120 = vld [vmem:[%s165 + $0x70] sm:$0xf]
      %v4121 = vld [vmem:[%s165 + $0x74] sm:$0xf]
      %v4122 = vld [vmem:[%s165 + $0x78] sm:$0xf]
      %v4123 = vld [vmem:[%s165 + $0x7c] sm:$0xf]
      %v4124 = vld [vmem:[%s165 + $0x80] sm:$0xf]
      %v4125 = vld [vmem:[%s165 + $0x84] sm:$0xf]
      %v4126 = vld [vmem:[%s165 + $0x88] sm:$0xf]
      %v4127 = vld [vmem:[%s165 + $0x8c] sm:$0xf]
      %v4128 = vld [vmem:[%s165 + $0x90] sm:$0xf]
      %v4129 = vld [vmem:[%s165 + $0x94] sm:$0xf]
      %v4130 = vld [vmem:[%s165 + $0x98] sm:$0xf]
      %v4131 = vld [vmem:[%s165 + $0x9c] sm:$0xf]
      %v4132 = vld [vmem:[%s165 + $0xa0] sm:$0x7]
      %s4133 = scalar_lea.vmem %s1, 512
      %v4134 = vld [vmem:[%s4133] sm:$0xf]
      %v4135 = vld [vmem:[%s4133 + $0x4] sm:$0xf]
      %v4136 = vld [vmem:[%s4133 + $0x8] sm:$0xf]
      %v4137 = vld [vmem:[%s4133 + $0xc] sm:$0xf]
      %v4138 = vld [vmem:[%s4133 + $0x10] sm:$0xf]
      %v4139 = vld [vmem:[%s4133 + $0x14] sm:$0xf]
      %v4140 = vld [vmem:[%s4133 + $0x18] sm:$0xf]
      %v4141 = vld [vmem:[%s4133 + $0x1c] sm:$0xf]
      %v4142 = vld [vmem:[%s4133 + $0x20] sm:$0xf]
      %v4143 = vld [vmem:[%s4133 + $0x24] sm:$0xf]
      %v4144 = vld [vmem:[%s4133 + $0x28] sm:$0xf]
      %v4145 = vld [vmem:[%s4133 + $0x2c] sm:$0xf]
      %v4146 = vld [vmem:[%s4133 + $0x30] sm:$0xf]
      %v4147 = vld [vmem:[%s4133 + $0x34] sm:$0xf]
      %v4148 = vld [vmem:[%s4133 + $0x38] sm:$0xf]
      %v4149 = vld [vmem:[%s4133 + $0x3c] sm:$0xf]
      %v4187 = vunpack.c.l.b16 %v4096
      %v4188 = vunpack.c.l.b16 %v4097
      %v4189 = vunpack.c.l.b16 %v4098
      %v4190 = vunpack.c.l.b16 %v4099
      %v4191 = vunpack.c.l.b16 %v4100
      %v4192 = vunpack.c.l.b16 %v4101
      %v4193 = vunpack.c.l.b16 %v4102
      %v4194 = vunpack.c.l.b16 %v4103
      %v4195 = vunpack.c.l.b16 %v4104
      %v4196 = vunpack.c.l.b16 %v4105
      %v4197 = vunpack.c.l.b16 %v4106
      %v4198 = vunpack.c.l.b16 %v4107
      %v4199 = vunpack.c.l.b16 %v4108
      %v4200 = vunpack.c.l.b16 %v4109
      %v4201 = vunpack.c.l.b16 %v4110
      %v4202 = vunpack.c.l.b16 %v4111
      %v4203 = vunpack.c.l.b16 %v4112
      %v4204 = vunpack.c.l.b16 %v4113
      %v4205 = vunpack.c.l.b16 %v4114
      %v4206 = vunpack.c.l.b16 %v4115
      %v4207 = vunpack.c.l.b16 %v4116
      %v4208 = vunpack.c.l.b16 %v4117
      %v4209 = vunpack.c.l.b16 %v4118
      %v4210 = vunpack.c.l.b16 %v4119
      %v4211 = vunpack.c.l.b16 %v4120
      %v4212 = vunpack.c.l.b16 %v4121
      %v4213 = vunpack.c.l.b16 %v4122
      %v4214 = vunpack.c.l.b16 %v4123
      %v4215 = vunpack.c.l.b16 %v4124
      %v4216 = vunpack.c.l.b16 %v4125
      %v4217 = vunpack.c.l.b16 %v4126
      %v4218 = vunpack.c.l.b16 %v4127
      %v4219 = vunpack.c.l.b16 %v4128
      %v4220 = vunpack.c.l.b16 %v4129
      %v4221 = vunpack.c.l.b16 %v4130
      %v4222 = vunpack.c.l.b16 %v4131
      %v4223 = vunpack.c.l.b16 %v4132
      %v4224 = vpack.c.b16 %v4188, %v4187
      %v4225 = vpack.c.b16 %v4190, %v4189
      %v4226 = vpack.c.b16 %v4192, %v4191
      %v4227 = vpack.c.b16 %v4194, %v4193
      %v4228 = vpack.c.b16 %v4196, %v4195
      %v4229 = vpack.c.b16 %v4198, %v4197
      %v4230 = vpack.c.b16 %v4200, %v4199
      %v4231 = vpack.c.b16 %v4202, %v4201
      %v4232 = vpack.c.b16 %v4204, %v4203
      %v4233 = vpack.c.b16 %v4206, %v4205
      %v4234 = vpack.c.b16 %v4208, %v4207
      %v4235 = vpack.c.b16 %v4210, %v4209
      %v4236 = vpack.c.b16 %v4212, %v4211
      %v4237 = vpack.c.b16 %v4214, %v4213
      %v4238 = vpack.c.b16 %v4216, %v4215
      %v4239 = vpack.c.b16 %v4218, %v4217
      %v4240 = vpack.c.b16 %v4220, %v4219
      %v4241 = vpack.c.b16 %v4222, %v4221
      %v4242 = vpack.c.b16 %v4223, %v4223
      %vm4243 = vcmask 1044480
      %v4244 = vrot.slane %v4224, 3
      %v4245 = vrot.slane %v4225, 3
      %v4246 = vsel %vm4243, %v4244, %v4245
      %v4247 = vrot.slane %v4226, 3
      %v4248 = vsel %vm4243, %v4245, %v4247
      %v4249 = vrot.slane %v4227, 3
      %v4250 = vsel %vm4243, %v4247, %v4249
      %v4251 = vrot.slane %v4228, 3
      %v4252 = vsel %vm4243, %v4249, %v4251
      %v4253 = vrot.slane %v4229, 3
      %v4254 = vsel %vm4243, %v4251, %v4253
      %v4255 = vrot.slane %v4230, 3
      %v4256 = vsel %vm4243, %v4253, %v4255
      %v4257 = vrot.slane %v4231, 3
      %v4258 = vsel %vm4243, %v4255, %v4257
      %v4259 = vrot.slane %v4232, 3
      %v4260 = vsel %vm4243, %v4257, %v4259
      %v4261 = vrot.slane %v4233, 3
      %v4262 = vsel %vm4243, %v4259, %v4261
      %v4263 = vrot.slane %v4234, 3
      %v4264 = vsel %vm4243, %v4261, %v4263
      %v4265 = vrot.slane %v4235, 3
      %v4266 = vsel %vm4243, %v4263, %v4265
      %v4267 = vrot.slane %v4236, 3
      %v4268 = vsel %vm4243, %v4265, %v4267
      %v4269 = vrot.slane %v4237, 3
      %v4270 = vsel %vm4243, %v4267, %v4269
      %v4271 = vrot.slane %v4238, 3
      %v4272 = vsel %vm4243, %v4269, %v4271
      %v4273 = vrot.slane %v4239, 3
      %v4274 = vsel %vm4243, %v4271, %v4273
      %v4275 = vrot.slane %v4240, 3
      %v4276 = vsel %vm4243, %v4273, %v4275
      %v4277 = vrot.slane %v4241, 3
      %v4278 = vsel %vm4243, %v4275, %v4277
      %v4279 = vrot.slane %v4242, 3
      %v4280 = vsel %vm4243, %v4277, %v4279
      %v4315 = vunpack.c.l.b16 %v4134
      %v4316 = vunpack.c.l.b16 %v4135
      %v4317 = vunpack.c.l.b16 %v4136
      %v4318 = vunpack.c.l.b16 %v4137
      %v4319 = vunpack.c.l.b16 %v4138
      %v4320 = vunpack.c.l.b16 %v4139
      %v4321 = vunpack.c.l.b16 %v4140
      %v4322 = vunpack.c.l.b16 %v4141
      %v4323 = vunpack.c.l.b16 %v4142
      %v4324 = vunpack.c.l.b16 %v4143
      %v4325 = vunpack.c.l.b16 %v4144
      %v4326 = vunpack.c.l.b16 %v4145
      %v4327 = vunpack.c.l.b16 %v4146
      %v4328 = vunpack.c.l.b16 %v4147
      %v4329 = vunpack.c.l.b16 %v4148
      %v4330 = vunpack.c.l.b16 %v4149
      %v4331 = vpack.c.b16 %v4316, %v4315
      %v4332 = vpack.c.b16 %v4318, %v4317
      %v4333 = vpack.c.b16 %v4320, %v4319
      %v4334 = vpack.c.b16 %v4322, %v4321
      %v4335 = vpack.c.b16 %v4324, %v4323
      %v4336 = vpack.c.b16 %v4326, %v4325
      %v4337 = vpack.c.b16 %v4328, %v4327
      %v4338 = vpack.c.b16 %v4330, %v4329
      %4347 = vmatpush.bf16.msra.mxu0 %v4338
      %4348 = vmatpush.bf16.msra.mxu0 %v4337
      %4349 = vmatpush.bf16.msra.mxu0 %v4336
      %4350 = vmatpush.bf16.msra.mxu0 %v4335
      %4351 = vmatpush.bf16.msra.mxu0 %v4334
      %4352 = vmatpush.bf16.msra.mxu0 %v4333
      %4353 = vmatpush.bf16.msra.mxu0 %v4332
      %4354 = vmatpush.bf16.msra.mxu0 %v4331
      %4355 = vmatmul.bf16.gmra.mxu0 %v4246
      %v4356 = vpop.f32.mrf.mxu0
      %v4357 = vadd.f32 0.0, %v4356
      %v4358 = vpop.f32.mrf.mxu0
      %v4359 = vadd.f32 0.0, %v4358
      %4360 = vmatmul.bf16.gmra.mxu0 %v4248
      %v4361 = vpop.f32.mrf.mxu0
      %v4362 = vadd.f32 0.0, %v4361
      %v4363 = vpop.f32.mrf.mxu0
      %v4364 = vadd.f32 0.0, %v4363
      %4365 = vmatmul.bf16.gmra.mxu0 %v4250
      %v4366 = vpop.f32.mrf.mxu0
      %v4367 = vadd.f32 0.0, %v4366
      %v4368 = vpop.f32.mrf.mxu0
      %v4369 = vadd.f32 0.0, %v4368
      %4370 = vmatmul.bf16.gmra.mxu0 %v4252
      %v4371 = vpop.f32.mrf.mxu0
      %v4372 = vadd.f32 0.0, %v4371
      %v4373 = vpop.f32.mrf.mxu0
      %v4374 = vadd.f32 0.0, %v4373
      %4375 = vmatmul.bf16.gmra.mxu0 %v4254
      %v4376 = vpop.f32.mrf.mxu0
      %v4377 = vadd.f32 0.0, %v4376
      %v4378 = vpop.f32.mrf.mxu0
      %v4379 = vadd.f32 0.0, %v4378
      %4380 = vmatmul.bf16.gmra.mxu0 %v4256
      %v4381 = vpop.f32.mrf.mxu0
      %v4382 = vadd.f32 0.0, %v4381
      %v4383 = vpop.f32.mrf.mxu0
      %v4384 = vadd.f32 0.0, %v4383
      %4385 = vmatmul.bf16.gmra.mxu0 %v4258
      %v4386 = vpop.f32.mrf.mxu0
      %v4387 = vadd.f32 0.0, %v4386
      %v4388 = vpop.f32.mrf.mxu0
      %v4389 = vadd.f32 0.0, %v4388
      %4390 = vmatmul.bf16.gmra.mxu0 %v4260
      %v4391 = vpop.f32.mrf.mxu0
      %v4392 = vadd.f32 0.0, %v4391
      %v4393 = vpop.f32.mrf.mxu0
      %v4394 = vadd.f32 0.0, %v4393
      %4395 = vmatmul.bf16.gmra.mxu0 %v4262
      %v4396 = vpop.f32.mrf.mxu0
      %v4397 = vadd.f32 0.0, %v4396
      %v4398 = vpop.f32.mrf.mxu0
      %v4399 = vadd.f32 0.0, %v4398
      %4400 = vmatmul.bf16.gmra.mxu0 %v4264
      %v4401 = vpop.f32.mrf.mxu0
      %v4402 = vadd.f32 0.0, %v4401
      %v4403 = vpop.f32.mrf.mxu0
      %v4404 = vadd.f32 0.0, %v4403
      %4405 = vmatmul.bf16.gmra.mxu0 %v4266
      %v4406 = vpop.f32.mrf.mxu0
      %v4407 = vadd.f32 0.0, %v4406
      %v4408 = vpop.f32.mrf.mxu0
      %v4409 = vadd.f32 0.0, %v4408
      %4410 = vmatmul.bf16.gmra.mxu0 %v4268
      %v4411 = vpop.f32.mrf.mxu0
      %v4412 = vadd.f32 0.0, %v4411
      %v4413 = vpop.f32.mrf.mxu0
      %v4414 = vadd.f32 0.0, %v4413
      %4415 = vmatmul.bf16.gmra.mxu0 %v4270
      %v4416 = vpop.f32.mrf.mxu0
      %v4417 = vadd.f32 0.0, %v4416
      %v4418 = vpop.f32.mrf.mxu0
      %v4419 = vadd.f32 0.0, %v4418
      %4420 = vmatmul.bf16.gmra.mxu0 %v4272
      %v4421 = vpop.f32.mrf.mxu0
      %v4422 = vadd.f32 0.0, %v4421
      %v4423 = vpop.f32.mrf.mxu0
      %v4424 = vadd.f32 0.0, %v4423
      %4425 = vmatmul.bf16.gmra.mxu0 %v4274
      %v4426 = vpop.f32.mrf.mxu0
      %v4427 = vadd.f32 0.0, %v4426
      %v4428 = vpop.f32.mrf.mxu0
      %v4429 = vadd.f32 0.0, %v4428
      %4430 = vmatmul.bf16.gmra.mxu0 %v4276
      %v4431 = vpop.f32.mrf.mxu0
      %v4432 = vadd.f32 0.0, %v4431
      %v4433 = vpop.f32.mrf.mxu0
      %v4434 = vadd.f32 0.0, %v4433
      %4435 = vmatmul.bf16.gmra.mxu0 %v4278
      %v4436 = vpop.f32.mrf.mxu0
      %v4437 = vadd.f32 0.0, %v4436
      %v4438 = vpop.f32.mrf.mxu0
      %v4439 = vadd.f32 0.0, %v4438
      %4440 = vmatmul.bf16.gmra.mxu0 %v4280
      %v4441 = vpop.f32.mrf.mxu0
      %v4442 = vadd.f32 0.0, %v4441
      %v4443 = vpop.f32.mrf.mxu0
      %v4444 = vadd.f32 0.0, %v4443
      %4445 = vdwg.mxu0
      %v4446 = vld [vmem:[#allocation2] sm:$0xff]
      %v4447 = vld [vmem:[#allocation2 + $0x8] sm:$0xff]
      %v4448 = vld [vmem:[#allocation2 + $0x10] sm:$0xff]
      %v4449 = vld [vmem:[#allocation2 + $0x18] sm:$0xff]
      %v4450 = vld [vmem:[#allocation2 + $0x20] sm:$0xff]
      %v4451 = vld [vmem:[#allocation2 + $0x28] sm:$0xff]
      %v4452 = vld [vmem:[#allocation2 + $0x30] sm:$0xff]
      %v4453 = vld [vmem:[#allocation2 + $0x38] sm:$0xff]
      %v4454 = vld [vmem:[#allocation2 + $0x40] sm:$0xff]
      %v4455 = vld [vmem:[#allocation2 + $0x48] sm:$0xff]
      %v4456 = vld [vmem:[#allocation2 + $0x50] sm:$0xff]
      %v4457 = vld [vmem:[#allocation2 + $0x58] sm:$0xff]
      %v4458 = vld [vmem:[#allocation2 + $0x60] sm:$0xff]
      %v4459 = vld [vmem:[#allocation2 + $0x68] sm:$0xff]
      %v4460 = vld [vmem:[#allocation2 + $0x70] sm:$0xff]
      %v4461 = vld [vmem:[#allocation2 + $0x78] sm:$0xff]
      %v4462 = vld [vmem:[#allocation2 + $0x80] sm:$0xff]
      %v4463 = vld [vmem:[#allocation2 + $0x88] sm:$0xff]
      %v4464 = vld [vmem:[#allocation2 + $0x90] sm:$0xff]
      %v4465 = vld [vmem:[#allocation2 + $0x98] sm:$0xff]
      %v4466 = vld [vmem:[#allocation2 + $0xa0] sm:$0xff]
      %v4467 = vld [vmem:[#allocation2 + $0xa8] sm:$0xff]
      %v4468 = vld [vmem:[#allocation2 + $0xb0] sm:$0xff]
      %v4469 = vld [vmem:[#allocation2 + $0xb8] sm:$0xff]
      %v4470 = vld [vmem:[#allocation2 + $0xc0] sm:$0xff]
      %v4471 = vld [vmem:[#allocation2 + $0xc8] sm:$0xff]
      %v4472 = vld [vmem:[#allocation2 + $0xd0] sm:$0xff]
      %v4473 = vld [vmem:[#allocation2 + $0xd8] sm:$0xff]
      %v4474 = vld [vmem:[#allocation2 + $0xe0] sm:$0xff]
      %v4475 = vld [vmem:[#allocation2 + $0xe8] sm:$0xff]
      %v4476 = vld [vmem:[#allocation2 + $0xf0] sm:$0xff]
      %v4477 = vld [vmem:[#allocation2 + $0xf8] sm:$0xff]
      %v4478 = vld [vmem:[#allocation2 + $0x100] sm:$0xff]
      %v4479 = vld [vmem:[#allocation2 + $0x108] sm:$0xff]
      %v4480 = vld [vmem:[#allocation2 + $0x110] sm:$0xff]
      %v4481 = vld [vmem:[#allocation2 + $0x118] sm:$0xff]
      %v4482 = vadd.f32 %v4446, %v4357
      %v4483 = vadd.f32 %v4447, %v4359
      %v4484 = vadd.f32 %v4448, %v4362
      %v4485 = vadd.f32 %v4449, %v4364
      %v4486 = vadd.f32 %v4450, %v4367
      %v4487 = vadd.f32 %v4451, %v4369
      %v4488 = vadd.f32 %v4452, %v4372
      %v4489 = vadd.f32 %v4453, %v4374
      %v4490 = vadd.f32 %v4454, %v4377
      %v4491 = vadd.f32 %v4455, %v4379
      %v4492 = vadd.f32 %v4456, %v4382
      %v4493 = vadd.f32 %v4457, %v4384
      %v4494 = vadd.f32 %v4458, %v4387
      %v4495 = vadd.f32 %v4459, %v4389
      %v4496 = vadd.f32 %v4460, %v4392
      %v4497 = vadd.f32 %v4461, %v4394
      %v4498 = vadd.f32 %v4462, %v4397
      %v4499 = vadd.f32 %v4463, %v4399
      %v4500 = vadd.f32 %v4464, %v4402
      %v4501 = vadd.f32 %v4465, %v4404
      %v4502 = vadd.f32 %v4466, %v4407
      %v4503 = vadd.f32 %v4467, %v4409
      %v4504 = vadd.f32 %v4468, %v4412
      %v4505 = vadd.f32 %v4469, %v4414
      %v4506 = vadd.f32 %v4470, %v4417
      %v4507 = vadd.f32 %v4471, %v4419
      %v4508 = vadd.f32 %v4472, %v4422
      %v4509 = vadd.f32 %v4473, %v4424
      %v4510 = vadd.f32 %v4474, %v4427
      %v4511 = vadd.f32 %v4475, %v4429
      %v4512 = vadd.f32 %v4476, %v4432
      %v4513 = vadd.f32 %v4477, %v4434
      %v4514 = vadd.f32 %v4478, %v4437
      %v4515 = vadd.f32 %v4479, %v4439
      %v4516 = vadd.f32 %v4480, %v4442
      %v4517 = vadd.f32 %v4481, %v4444
      %4518 = vst [vmem:[#allocation2] sm:$0xff] %v4482
      %4519 = vst [vmem:[#allocation2 + $0x8] sm:$0xff] %v4483
      %4520 = vst [vmem:[#allocation2 + $0x10] sm:$0xff] %v4484
      %4521 = vst [vmem:[#allocation2 + $0x18] sm:$0xff] %v4485
      %4522 = vst [vmem:[#allocation2 + $0x20] sm:$0xff] %v4486
      %4523 = vst [vmem:[#allocation2 + $0x28] sm:$0xff] %v4487
      %4524 = vst [vmem:[#allocation2 + $0x30] sm:$0xff] %v4488
      %4525 = vst [vmem:[#allocation2 + $0x38] sm:$0xff] %v4489
      %4526 = vst [vmem:[#allocation2 + $0x40] sm:$0xff] %v4490
      %4527 = vst [vmem:[#allocation2 + $0x48] sm:$0xff] %v4491
      %4528 = vst [vmem:[#allocation2 + $0x50] sm:$0xff] %v4492
      %4529 = vst [vmem:[#allocation2 + $0x58] sm:$0xff] %v4493
      %4530 = vst [vmem:[#allocation2 + $0x60] sm:$0xff] %v4494
      %4531 = vst [vmem:[#allocation2 + $0x68] sm:$0xff] %v4495
      %4532 = vst [vmem:[#allocation2 + $0x70] sm:$0xff] %v4496
      %4533 = vst [vmem:[#allocation2 + $0x78] sm:$0xff] %v4497
      %4534 = vst [vmem:[#allocation2 + $0x80] sm:$0xff] %v4498
      %4535 = vst [vmem:[#allocation2 + $0x88] sm:$0xff] %v4499
      %4536 = vst [vmem:[#allocation2 + $0x90] sm:$0xff] %v4500
      %4537 = vst [vmem:[#allocation2 + $0x98] sm:$0xff] %v4501
      %4538 = vst [vmem:[#allocation2 + $0xa0] sm:$0xff] %v4502
      %4539 = vst [vmem:[#allocation2 + $0xa8] sm:$0xff] %v4503
      %4540 = vst [vmem:[#allocation2 + $0xb0] sm:$0xff] %v4504
      %4541 = vst [vmem:[#allocation2 + $0xb8] sm:$0xff] %v4505
      %4542 = vst [vmem:[#allocation2 + $0xc0] sm:$0xff] %v4506
      %4543 = vst [vmem:[#allocation2 + $0xc8] sm:$0xff] %v4507
      %4544 = vst [vmem:[#allocation2 + $0xd0] sm:$0xff] %v4508
      %4545 = vst [vmem:[#allocation2 + $0xd8] sm:$0xff] %v4509
      %4546 = vst [vmem:[#allocation2 + $0xe0] sm:$0xff] %v4510
      %4547 = vst [vmem:[#allocation2 + $0xe8] sm:$0xff] %v4511
      %4548 = vst [vmem:[#allocation2 + $0xf0] sm:$0xff] %v4512
      %4549 = vst [vmem:[#allocation2 + $0xf8] sm:$0xff] %v4513
      %4550 = vst [vmem:[#allocation2 + $0x100] sm:$0xff] %v4514
      %4551 = vst [vmem:[#allocation2 + $0x108] sm:$0xff] %v4515
      %4552 = vst [vmem:[#allocation2 + $0x110] sm:$0xff] %v4516
      %4553 = vst [vmem:[#allocation2 + $0x118] sm:$0xff] %v4517
      %v4554 = vld [vmem:[#allocation2] sm:$0xff]
      %v4555 = vld [vmem:[#allocation2 + $0x8] sm:$0xff]
      %v4556 = vld [vmem:[#allocation2 + $0x10] sm:$0xff]
      %v4557 = vld [vmem:[#allocation2 + $0x18] sm:$0xff]
      %v4558 = vld [vmem:[#allocation2 + $0x20] sm:$0xff]
      %v4559 = vld [vmem:[#allocation2 + $0x28] sm:$0xff]
      %v4560 = vld [vmem:[#allocation2 + $0x30] sm:$0xff]
      %v4561 = vld [vmem:[#allocation2 + $0x38] sm:$0xff]
      %v4562 = vld [vmem:[#allocation2 + $0x40] sm:$0xff]
      %v4563 = vld [vmem:[#allocation2 + $0x48] sm:$0xff]
      %v4564 = vld [vmem:[#allocation2 + $0x50] sm:$0xff]
      %v4565 = vld [vmem:[#allocation2 + $0x58] sm:$0xff]
      %v4566 = vld [vmem:[#allocation2 + $0x60] sm:$0xff]
      %v4567 = vld [vmem:[#allocation2 + $0x68] sm:$0xff]
      %v4568 = vld [vmem:[#allocation2 + $0x70] sm:$0xff]
      %v4569 = vld [vmem:[#allocation2 + $0x78] sm:$0xff]
      %v4570 = vld [vmem:[#allocation2 + $0x80] sm:$0xff]
      %v4571 = vld [vmem:[#allocation2 + $0x88] sm:$0xff]
      %v4572 = vld [vmem:[#allocation2 + $0x90] sm:$0xff]
      %v4573 = vld [vmem:[#allocation2 + $0x98] sm:$0xff]
      %v4574 = vld [vmem:[#allocation2 + $0xa0] sm:$0xff]
      %v4575 = vld [vmem:[#allocation2 + $0xa8] sm:$0xff]
      %v4576 = vld [vmem:[#allocation2 + $0xb0] sm:$0xff]
      %v4577 = vld [vmem:[#allocation2 + $0xb8] sm:$0xff]
      %v4578 = vld [vmem:[#allocation2 + $0xc0] sm:$0xff]
      %v4579 = vld [vmem:[#allocation2 + $0xc8] sm:$0xff]
      %v4580 = vld [vmem:[#allocation2 + $0xd0] sm:$0xff]
      %v4581 = vld [vmem:[#allocation2 + $0xd8] sm:$0xff]
      %v4582 = vld [vmem:[#allocation2 + $0xe0] sm:$0xff]
      %v4583 = vld [vmem:[#allocation2 + $0xe8] sm:$0xff]
      %v4584 = vld [vmem:[#allocation2 + $0xf0] sm:$0xff]
      %v4585 = vld [vmem:[#allocation2 + $0xf8] sm:$0xff]
      %v4586 = vld [vmem:[#allocation2 + $0x100] sm:$0xff]
      %v4587 = vld [vmem:[#allocation2 + $0x108] sm:$0xff]
      %v4588 = vld [vmem:[#allocation2 + $0x110] sm:$0xff]
      %v4589 = vld [vmem:[#allocation2 + $0x118] sm:$0xff]
      %v4590 = vld [vmem:[%s2] sm:$0x1]
      %v4592 = vperm.slane %v4590, 0
      %v4594 = vadd.f32 %v4554, %v4592
      %v4595 = vadd.f32 %v4555, %v4592
      %v4596 = vadd.f32 %v4556, %v4592
      %v4597 = vadd.f32 %v4557, %v4592
      %v4598 = vadd.f32 %v4558, %v4592
      %v4599 = vadd.f32 %v4559, %v4592
      %v4600 = vadd.f32 %v4560, %v4592
      %v4601 = vadd.f32 %v4561, %v4592
      %v4602 = vadd.f32 %v4562, %v4592
      %v4603 = vadd.f32 %v4563, %v4592
      %v4604 = vadd.f32 %v4564, %v4592
      %v4605 = vadd.f32 %v4565, %v4592
      %v4606 = vadd.f32 %v4566, %v4592
      %v4607 = vadd.f32 %v4567, %v4592
      %v4608 = vadd.f32 %v4568, %v4592
      %v4609 = vadd.f32 %v4569, %v4592
      %v4610 = vadd.f32 %v4570, %v4592
      %v4611 = vadd.f32 %v4571, %v4592
      %v4612 = vadd.f32 %v4572, %v4592
      %v4613 = vadd.f32 %v4573, %v4592
      %v4614 = vadd.f32 %v4574, %v4592
      %v4615 = vadd.f32 %v4575, %v4592
      %v4616 = vadd.f32 %v4576, %v4592
      %v4617 = vadd.f32 %v4577, %v4592
      %v4618 = vadd.f32 %v4578, %v4592
      %v4619 = vadd.f32 %v4579, %v4592
      %v4620 = vadd.f32 %v4580, %v4592
      %v4621 = vadd.f32 %v4581, %v4592
      %v4622 = vadd.f32 %v4582, %v4592
      %v4623 = vadd.f32 %v4583, %v4592
      %v4624 = vadd.f32 %v4584, %v4592
      %v4625 = vadd.f32 %v4585, %v4592
      %v4626 = vadd.f32 %v4586, %v4592
      %v4627 = vadd.f32 %v4587, %v4592
      %v4628 = vadd.f32 %v4588, %v4592
      %v4629 = vadd.f32 %v4589, %v4592
      %v4630 = vmax.f32 %v4594, 0.0
      %v4631 = vmax.f32 %v4595, 0.0
      %v4632 = vmax.f32 %v4596, 0.0
      %v4633 = vmax.f32 %v4597, 0.0
      %v4634 = vmax.f32 %v4598, 0.0
      %v4635 = vmax.f32 %v4599, 0.0
      %v4636 = vmax.f32 %v4600, 0.0
      %v4637 = vmax.f32 %v4601, 0.0
      %v4638 = vmax.f32 %v4602, 0.0
      %v4639 = vmax.f32 %v4603, 0.0
      %v4640 = vmax.f32 %v4604, 0.0
      %v4641 = vmax.f32 %v4605, 0.0
      %v4642 = vmax.f32 %v4606, 0.0
      %v4643 = vmax.f32 %v4607, 0.0
      %v4644 = vmax.f32 %v4608, 0.0
      %v4645 = vmax.f32 %v4609, 0.0
      %v4646 = vmax.f32 %v4610, 0.0
      %v4647 = vmax.f32 %v4611, 0.0
      %v4648 = vmax.f32 %v4612, 0.0
      %v4649 = vmax.f32 %v4613, 0.0
      %v4650 = vmax.f32 %v4614, 0.0
      %v4651 = vmax.f32 %v4615, 0.0
      %v4652 = vmax.f32 %v4616, 0.0
      %v4653 = vmax.f32 %v4617, 0.0
      %v4654 = vmax.f32 %v4618, 0.0
      %v4655 = vmax.f32 %v4619, 0.0
      %v4656 = vmax.f32 %v4620, 0.0
      %v4657 = vmax.f32 %v4621, 0.0
      %v4658 = vmax.f32 %v4622, 0.0
      %v4659 = vmax.f32 %v4623, 0.0
      %v4660 = vmax.f32 %v4624, 0.0
      %v4661 = vmax.f32 %v4625, 0.0
      %v4662 = vmax.f32 %v4626, 0.0
      %v4663 = vmax.f32 %v4627, 0.0
      %v4664 = vmax.f32 %v4628, 0.0
      %v4665 = vmax.f32 %v4629, 0.0
      %v4666 = vlaneseq
      %v4667 = vshrl.u32 %v4666, 7
      %v4668 = vadd.s32 %v4667, 8
      %v4669 = vadd.s32 %v4667, 16
      %v4670 = vadd.s32 %v4667, 24
      %v4671 = vadd.s32 %v4667, 32
      %v4672 = vadd.s32 %v4667, 40
      %v4673 = vadd.s32 %v4667, 48
      %v4674 = vadd.s32 %v4667, 56
      %v4675 = vadd.s32 %v4667, 64
      %v4676 = vadd.s32 %v4667, 72
      %v4677 = vadd.s32 %v4667, 80
      %v4678 = vadd.s32 %v4667, 88
      %v4679 = vadd.s32 %v4667, 96
      %v4680 = vadd.s32 %v4667, 104
      %v4681 = vadd.s32 %v4667, 112
      %v4682 = vadd.s32 %v4667, 120
      %v4683 = vadd.s32 %v4667, 128
      %v4684 = vadd.s32 %v4667, 136
      %v4685 = vadd.s32 %v4667, 144
      %v4686 = vadd.s32 %v4667, 152
      %v4687 = vadd.s32 %v4667, 160
      %v4688 = vadd.s32 %v4667, 168
      %v4689 = vadd.s32 %v4667, 176
      %v4690 = vadd.s32 %v4667, 184
      %v4691 = vadd.s32 %v4667, 192
      %v4692 = vadd.s32 %v4667, 200
      %v4693 = vadd.s32 %v4667, 208
      %v4694 = vadd.s32 %v4667, 216
      %v4695 = vadd.s32 %v4667, 224
      %v4696 = vadd.s32 %v4667, 232
      %v4697 = vadd.s32 %v4667, 240
      %v4698 = vadd.s32 %v4667, 248
      %v4699 = vadd.s32 %v4667, 256
      %v4700 = vadd.s32 %v4667, 264
      %v4701 = vadd.s32 %v4667, 272
      %v4702 = vadd.s32 %v4667, 280
      %vm4703 = vcmp.lt.s32.totalorder %v4667, 0
      %v4704 = vsub.s32 0, %v4667
      %v4705 = vsel %vm4703, %v4704, %v4667
      %v4706 = vand.u32 %v4705, 65535
      %v4707 = vshrl.u32 %v4705, 16
      %v4709 = vmul.u32 %v4706, 14564
      %v4710 = vmul.u32 %v4706, 58254
      %v4711 = vmul.u32 %v4707, 14564
      %v4712 = vmul.u32 %v4707, 58254
      %v4713 = vshll.u32 %v4710, 16
      %v4714 = vshrl.u32 %v4710, 16
      %v4715 = vshll.u32 %v4711, 16
      %v4716 = vshrl.u32 %v4711, 16
      %vm4717 = vc.u32 %v4709, %v4713
      %v4718 = vsel %vm4717, 1, 0
      %v4719 = vadd.s32 %v4709, %v4713
      %v4720 = vadd.s32 %v4712, %v4718
      %vm4721 = vc.u32 %v4719, %v4715
      %v4722 = vsel %vm4721, 1, 0
      %v4723 = vadd.s32 %v4719, %v4715
      %v4724 = vadd.s32 %v4720, %v4722
      %v4725 = vadd.s32 %v4724, %v4714
      %v4726 = vadd.s32 %v4725, %v4716
      %v4727 = vshrl.u32 %v4726, 4
      %v4728 = vmul.u32 %v4727, 18
      %v4729 = vsub.s32 %v4705, %v4728
      %v4730 = vsub.s32 0, %v4729
      %v4731 = vsel %vm4703, %v4730, %v4729
      %vm4732 = vcmp.lt.s32.totalorder %v4668, 0
      %v4733 = vsub.s32 0, %v4668
      %v4734 = vsel %vm4732, %v4733, %v4668
      %v4735 = vand.u32 %v4734, 65535
      %v4736 = vshrl.u32 %v4734, 16
      %v4738 = vmul.u32 %v4735, 14564
      %v4739 = vmul.u32 %v4735, 58254
      %v4740 = vmul.u32 %v4736, 14564
      %v4741 = vmul.u32 %v4736, 58254
      %v4742 = vshll.u32 %v4739, 16
      %v4743 = vshrl.u32 %v4739, 16
      %v4744 = vshll.u32 %v4740, 16
      %v4745 = vshrl.u32 %v4740, 16
      %vm4746 = vc.u32 %v4738, %v4742
      %v4747 = vsel %vm4746, 1, 0
      %v4748 = vadd.s32 %v4738, %v4742
      %v4749 = vadd.s32 %v4741, %v4747
      %vm4750 = vc.u32 %v4748, %v4744
      %v4751 = vsel %vm4750, 1, 0
      %v4752 = vadd.s32 %v4748, %v4744
      %v4753 = vadd.s32 %v4749, %v4751
      %v4754 = vadd.s32 %v4753, %v4743
      %v4755 = vadd.s32 %v4754, %v4745
      %v4756 = vshrl.u32 %v4755, 4
      %v4757 = vmul.u32 %v4756, 18
      %v4758 = vsub.s32 %v4734, %v4757
      %v4759 = vsub.s32 0, %v4758
      %v4760 = vsel %vm4732, %v4759, %v4758
      %vm4761 = vcmp.lt.s32.totalorder %v4669, 0
      %v4762 = vsub.s32 0, %v4669
      %v4763 = vsel %vm4761, %v4762, %v4669
      %v4764 = vand.u32 %v4763, 65535
      %v4765 = vshrl.u32 %v4763, 16
      %v4767 = vmul.u32 %v4764, 14564
      %v4768 = vmul.u32 %v4764, 58254
      %v4769 = vmul.u32 %v4765, 14564
      %v4770 = vmul.u32 %v4765, 58254
      %v4771 = vshll.u32 %v4768, 16
      %v4772 = vshrl.u32 %v4768, 16
      %v4773 = vshll.u32 %v4769, 16
      %v4774 = vshrl.u32 %v4769, 16
      %vm4775 = vc.u32 %v4767, %v4771
      %v4776 = vsel %vm4775, 1, 0
      %v4777 = vadd.s32 %v4767, %v4771
      %v4778 = vadd.s32 %v4770, %v4776
      %vm4779 = vc.u32 %v4777, %v4773
      %v4780 = vsel %vm4779, 1, 0
      %v4781 = vadd.s32 %v4777, %v4773
      %v4782 = vadd.s32 %v4778, %v4780
      %v4783 = vadd.s32 %v4782, %v4772
      %v4784 = vadd.s32 %v4783, %v4774
      %v4785 = vshrl.u32 %v4784, 4
      %v4786 = vmul.u32 %v4785, 18
      %v4787 = vsub.s32 %v4763, %v4786
      %v4788 = vsub.s32 0, %v4787
      %v4789 = vsel %vm4761, %v4788, %v4787
      %vm4790 = vcmp.lt.s32.totalorder %v4670, 0
      %v4791 = vsub.s32 0, %v4670
      %v4792 = vsel %vm4790, %v4791, %v4670
      %v4793 = vand.u32 %v4792, 65535
      %v4794 = vshrl.u32 %v4792, 16
      %v4796 = vmul.u32 %v4793, 14564
      %v4797 = vmul.u32 %v4793, 58254
      %v4798 = vmul.u32 %v4794, 14564
      %v4799 = vmul.u32 %v4794, 58254
      %v4800 = vshll.u32 %v4797, 16
      %v4801 = vshrl.u32 %v4797, 16
      %v4802 = vshll.u32 %v4798, 16
      %v4803 = vshrl.u32 %v4798, 16
      %vm4804 = vc.u32 %v4796, %v4800
      %v4805 = vsel %vm4804, 1, 0
      %v4806 = vadd.s32 %v4796, %v4800
      %v4807 = vadd.s32 %v4799, %v4805
      %vm4808 = vc.u32 %v4806, %v4802
      %v4809 = vsel %vm4808, 1, 0
      %v4810 = vadd.s32 %v4806, %v4802
      %v4811 = vadd.s32 %v4807, %v4809
      %v4812 = vadd.s32 %v4811, %v4801
      %v4813 = vadd.s32 %v4812, %v4803
      %v4814 = vshrl.u32 %v4813, 4
      %v4815 = vmul.u32 %v4814, 18
      %v4816 = vsub.s32 %v4792, %v4815
      %v4817 = vsub.s32 0, %v4816
      %v4818 = vsel %vm4790, %v4817, %v4816
      %vm4819 = vcmp.lt.s32.totalorder %v4671, 0
      %v4820 = vsub.s32 0, %v4671
      %v4821 = vsel %vm4819, %v4820, %v4671
      %v4822 = vand.u32 %v4821, 65535
      %v4823 = vshrl.u32 %v4821, 16
      %v4825 = vmul.u32 %v4822, 14564
      %v4826 = vmul.u32 %v4822, 58254
      %v4827 = vmul.u32 %v4823, 14564
      %v4828 = vmul.u32 %v4823, 58254
      %v4829 = vshll.u32 %v4826, 16
      %v4830 = vshrl.u32 %v4826, 16
      %v4831 = vshll.u32 %v4827, 16
      %v4832 = vshrl.u32 %v4827, 16
      %vm4833 = vc.u32 %v4825, %v4829
      %v4834 = vsel %vm4833, 1, 0
      %v4835 = vadd.s32 %v4825, %v4829
      %v4836 = vadd.s32 %v4828, %v4834
      %vm4837 = vc.u32 %v4835, %v4831
      %v4838 = vsel %vm4837, 1, 0
      %v4839 = vadd.s32 %v4835, %v4831
      %v4840 = vadd.s32 %v4836, %v4838
      %v4841 = vadd.s32 %v4840, %v4830
      %v4842 = vadd.s32 %v4841, %v4832
      %v4843 = vshrl.u32 %v4842, 4
      %v4844 = vmul.u32 %v4843, 18
      %v4845 = vsub.s32 %v4821, %v4844
      %v4846 = vsub.s32 0, %v4845
      %v4847 = vsel %vm4819, %v4846, %v4845
      %vm4848 = vcmp.lt.s32.totalorder %v4672, 0
      %v4849 = vsub.s32 0, %v4672
      %v4850 = vsel %vm4848, %v4849, %v4672
      %v4851 = vand.u32 %v4850, 65535
      %v4852 = vshrl.u32 %v4850, 16
      %v4854 = vmul.u32 %v4851, 14564
      %v4855 = vmul.u32 %v4851, 58254
      %v4856 = vmul.u32 %v4852, 14564
      %v4857 = vmul.u32 %v4852, 58254
      %v4858 = vshll.u32 %v4855, 16
      %v4859 = vshrl.u32 %v4855, 16
      %v4860 = vshll.u32 %v4856, 16
      %v4861 = vshrl.u32 %v4856, 16
      %vm4862 = vc.u32 %v4854, %v4858
      %v4863 = vsel %vm4862, 1, 0
      %v4864 = vadd.s32 %v4854, %v4858
      %v4865 = vadd.s32 %v4857, %v4863
      %vm4866 = vc.u32 %v4864, %v4860
      %v4867 = vsel %vm4866, 1, 0
      %v4868 = vadd.s32 %v4864, %v4860
      %v4869 = vadd.s32 %v4865, %v4867
      %v4870 = vadd.s32 %v4869, %v4859
      %v4871 = vadd.s32 %v4870, %v4861
      %v4872 = vshrl.u32 %v4871, 4
      %v4873 = vmul.u32 %v4872, 18
      %v4874 = vsub.s32 %v4850, %v4873
      %v4875 = vsub.s32 0, %v4874
      %v4876 = vsel %vm4848, %v4875, %v4874
      %vm4877 = vcmp.lt.s32.totalorder %v4673, 0
      %v4878 = vsub.s32 0, %v4673
      %v4879 = vsel %vm4877, %v4878, %v4673
      %v4880 = vand.u32 %v4879, 65535
      %v4881 = vshrl.u32 %v4879, 16
      %v4883 = vmul.u32 %v4880, 14564
      %v4884 = vmul.u32 %v4880, 58254
      %v4885 = vmul.u32 %v4881, 14564
      %v4886 = vmul.u32 %v4881, 58254
      %v4887 = vshll.u32 %v4884, 16
      %v4888 = vshrl.u32 %v4884, 16
      %v4889 = vshll.u32 %v4885, 16
      %v4890 = vshrl.u32 %v4885, 16
      %vm4891 = vc.u32 %v4883, %v4887
      %v4892 = vsel %vm4891, 1, 0
      %v4893 = vadd.s32 %v4883, %v4887
      %v4894 = vadd.s32 %v4886, %v4892
      %vm4895 = vc.u32 %v4893, %v4889
      %v4896 = vsel %vm4895, 1, 0
      %v4897 = vadd.s32 %v4893, %v4889
      %v4898 = vadd.s32 %v4894, %v4896
      %v4899 = vadd.s32 %v4898, %v4888
      %v4900 = vadd.s32 %v4899, %v4890
      %v4901 = vshrl.u32 %v4900, 4
      %v4902 = vmul.u32 %v4901, 18
      %v4903 = vsub.s32 %v4879, %v4902
      %v4904 = vsub.s32 0, %v4903
      %v4905 = vsel %vm4877, %v4904, %v4903
      %vm4906 = vcmp.lt.s32.totalorder %v4674, 0
      %v4907 = vsub.s32 0, %v4674
      %v4908 = vsel %vm4906, %v4907, %v4674
      %v4909 = vand.u32 %v4908, 65535
      %v4910 = vshrl.u32 %v4908, 16
      %v4912 = vmul.u32 %v4909, 14564
      %v4913 = vmul.u32 %v4909, 58254
      %v4914 = vmul.u32 %v4910, 14564
      %v4915 = vmul.u32 %v4910, 58254
      %v4916 = vshll.u32 %v4913, 16
      %v4917 = vshrl.u32 %v4913, 16
      %v4918 = vshll.u32 %v4914, 16
      %v4919 = vshrl.u32 %v4914, 16
      %vm4920 = vc.u32 %v4912, %v4916
      %v4921 = vsel %vm4920, 1, 0
      %v4922 = vadd.s32 %v4912, %v4916
      %v4923 = vadd.s32 %v4915, %v4921
      %vm4924 = vc.u32 %v4922, %v4918
      %v4925 = vsel %vm4924, 1, 0
      %v4926 = vadd.s32 %v4922, %v4918
      %v4927 = vadd.s32 %v4923, %v4925
      %v4928 = vadd.s32 %v4927, %v4917
      %v4929 = vadd.s32 %v4928, %v4919
      %v4930 = vshrl.u32 %v4929, 4
      %v4931 = vmul.u32 %v4930, 18
      %v4932 = vsub.s32 %v4908, %v4931
      %v4933 = vsub.s32 0, %v4932
      %v4934 = vsel %vm4906, %v4933, %v4932
      %vm4935 = vcmp.lt.s32.totalorder %v4675, 0
      %v4936 = vsub.s32 0, %v4675
      %v4937 = vsel %vm4935, %v4936, %v4675
      %v4938 = vand.u32 %v4937, 65535
      %v4939 = vshrl.u32 %v4937, 16
      %v4941 = vmul.u32 %v4938, 14564
      %v4942 = vmul.u32 %v4938, 58254
      %v4943 = vmul.u32 %v4939, 14564
      %v4944 = vmul.u32 %v4939, 58254
      %v4945 = vshll.u32 %v4942, 16
      %v4946 = vshrl.u32 %v4942, 16
      %v4947 = vshll.u32 %v4943, 16
      %v4948 = vshrl.u32 %v4943, 16
      %vm4949 = vc.u32 %v4941, %v4945
      %v4950 = vsel %vm4949, 1, 0
      %v4951 = vadd.s32 %v4941, %v4945
      %v4952 = vadd.s32 %v4944, %v4950
      %vm4953 = vc.u32 %v4951, %v4947
      %v4954 = vsel %vm4953, 1, 0
      %v4955 = vadd.s32 %v4951, %v4947
      %v4956 = vadd.s32 %v4952, %v4954
      %v4957 = vadd.s32 %v4956, %v4946
      %v4958 = vadd.s32 %v4957, %v4948
      %v4959 = vshrl.u32 %v4958, 4
      %v4960 = vmul.u32 %v4959, 18
      %v4961 = vsub.s32 %v4937, %v4960
      %v4962 = vsub.s32 0, %v4961
      %v4963 = vsel %vm4935, %v4962, %v4961
      %vm4964 = vcmp.lt.s32.totalorder %v4676, 0
      %v4965 = vsub.s32 0, %v4676
      %v4966 = vsel %vm4964, %v4965, %v4676
      %v4967 = vand.u32 %v4966, 65535
      %v4968 = vshrl.u32 %v4966, 16
      %v4970 = vmul.u32 %v4967, 14564
      %v4971 = vmul.u32 %v4967, 58254
      %v4972 = vmul.u32 %v4968, 14564
      %v4973 = vmul.u32 %v4968, 58254
      %v4974 = vshll.u32 %v4971, 16
      %v4975 = vshrl.u32 %v4971, 16
      %v4976 = vshll.u32 %v4972, 16
      %v4977 = vshrl.u32 %v4972, 16
      %vm4978 = vc.u32 %v4970, %v4974
      %v4979 = vsel %vm4978, 1, 0
      %v4980 = vadd.s32 %v4970, %v4974
      %v4981 = vadd.s32 %v4973, %v4979
      %vm4982 = vc.u32 %v4980, %v4976
      %v4983 = vsel %vm4982, 1, 0
      %v4984 = vadd.s32 %v4980, %v4976
      %v4985 = vadd.s32 %v4981, %v4983
      %v4986 = vadd.s32 %v4985, %v4975
      %v4987 = vadd.s32 %v4986, %v4977
      %v4988 = vshrl.u32 %v4987, 4
      %v4989 = vmul.u32 %v4988, 18
      %v4990 = vsub.s32 %v4966, %v4989
      %v4991 = vsub.s32 0, %v4990
      %v4992 = vsel %vm4964, %v4991, %v4990
      %vm4993 = vcmp.lt.s32.totalorder %v4677, 0
      %v4994 = vsub.s32 0, %v4677
      %v4995 = vsel %vm4993, %v4994, %v4677
      %v4996 = vand.u32 %v4995, 65535
      %v4997 = vshrl.u32 %v4995, 16
      %v4999 = vmul.u32 %v4996, 14564
      %v5000 = vmul.u32 %v4996, 58254
      %v5001 = vmul.u32 %v4997, 14564
      %v5002 = vmul.u32 %v4997, 58254
      %v5003 = vshll.u32 %v5000, 16
      %v5004 = vshrl.u32 %v5000, 16
      %v5005 = vshll.u32 %v5001, 16
      %v5006 = vshrl.u32 %v5001, 16
      %vm5007 = vc.u32 %v4999, %v5003
      %v5008 = vsel %vm5007, 1, 0
      %v5009 = vadd.s32 %v4999, %v5003
      %v5010 = vadd.s32 %v5002, %v5008
      %vm5011 = vc.u32 %v5009, %v5005
      %v5012 = vsel %vm5011, 1, 0
      %v5013 = vadd.s32 %v5009, %v5005
      %v5014 = vadd.s32 %v5010, %v5012
      %v5015 = vadd.s32 %v5014, %v5004
      %v5016 = vadd.s32 %v5015, %v5006
      %v5017 = vshrl.u32 %v5016, 4
      %v5018 = vmul.u32 %v5017, 18
      %v5019 = vsub.s32 %v4995, %v5018
      %v5020 = vsub.s32 0, %v5019
      %v5021 = vsel %vm4993, %v5020, %v5019
      %vm5022 = vcmp.lt.s32.totalorder %v4678, 0
      %v5023 = vsub.s32 0, %v4678
      %v5024 = vsel %vm5022, %v5023, %v4678
      %v5025 = vand.u32 %v5024, 65535
      %v5026 = vshrl.u32 %v5024, 16
      %v5028 = vmul.u32 %v5025, 14564
      %v5029 = vmul.u32 %v5025, 58254
      %v5030 = vmul.u32 %v5026, 14564
      %v5031 = vmul.u32 %v5026, 58254
      %v5032 = vshll.u32 %v5029, 16
      %v5033 = vshrl.u32 %v5029, 16
      %v5034 = vshll.u32 %v5030, 16
      %v5035 = vshrl.u32 %v5030, 16
      %vm5036 = vc.u32 %v5028, %v5032
      %v5037 = vsel %vm5036, 1, 0
      %v5038 = vadd.s32 %v5028, %v5032
      %v5039 = vadd.s32 %v5031, %v5037
      %vm5040 = vc.u32 %v5038, %v5034
      %v5041 = vsel %vm5040, 1, 0
      %v5042 = vadd.s32 %v5038, %v5034
      %v5043 = vadd.s32 %v5039, %v5041
      %v5044 = vadd.s32 %v5043, %v5033
      %v5045 = vadd.s32 %v5044, %v5035
      %v5046 = vshrl.u32 %v5045, 4
      %v5047 = vmul.u32 %v5046, 18
      %v5048 = vsub.s32 %v5024, %v5047
      %v5049 = vsub.s32 0, %v5048
      %v5050 = vsel %vm5022, %v5049, %v5048
      %vm5051 = vcmp.lt.s32.totalorder %v4679, 0
      %v5052 = vsub.s32 0, %v4679
      %v5053 = vsel %vm5051, %v5052, %v4679
      %v5054 = vand.u32 %v5053, 65535
      %v5055 = vshrl.u32 %v5053, 16
      %v5057 = vmul.u32 %v5054, 14564
      %v5058 = vmul.u32 %v5054, 58254
      %v5059 = vmul.u32 %v5055, 14564
      %v5060 = vmul.u32 %v5055, 58254
      %v5061 = vshll.u32 %v5058, 16
      %v5062 = vshrl.u32 %v5058, 16
      %v5063 = vshll.u32 %v5059, 16
      %v5064 = vshrl.u32 %v5059, 16
      %vm5065 = vc.u32 %v5057, %v5061
      %v5066 = vsel %vm5065, 1, 0
      %v5067 = vadd.s32 %v5057, %v5061
      %v5068 = vadd.s32 %v5060, %v5066
      %vm5069 = vc.u32 %v5067, %v5063
      %v5070 = vsel %vm5069, 1, 0
      %v5071 = vadd.s32 %v5067, %v5063
      %v5072 = vadd.s32 %v5068, %v5070
      %v5073 = vadd.s32 %v5072, %v5062
      %v5074 = vadd.s32 %v5073, %v5064
      %v5075 = vshrl.u32 %v5074, 4
      %v5076 = vmul.u32 %v5075, 18
      %v5077 = vsub.s32 %v5053, %v5076
      %v5078 = vsub.s32 0, %v5077
      %v5079 = vsel %vm5051, %v5078, %v5077
      %vm5080 = vcmp.lt.s32.totalorder %v4680, 0
      %v5081 = vsub.s32 0, %v4680
      %v5082 = vsel %vm5080, %v5081, %v4680
      %v5083 = vand.u32 %v5082, 65535
      %v5084 = vshrl.u32 %v5082, 16
      %v5086 = vmul.u32 %v5083, 14564
      %v5087 = vmul.u32 %v5083, 58254
      %v5088 = vmul.u32 %v5084, 14564
      %v5089 = vmul.u32 %v5084, 58254
      %v5090 = vshll.u32 %v5087, 16
      %v5091 = vshrl.u32 %v5087, 16
      %v5092 = vshll.u32 %v5088, 16
      %v5093 = vshrl.u32 %v5088, 16
      %vm5094 = vc.u32 %v5086, %v5090
      %v5095 = vsel %vm5094, 1, 0
      %v5096 = vadd.s32 %v5086, %v5090
      %v5097 = vadd.s32 %v5089, %v5095
      %vm5098 = vc.u32 %v5096, %v5092
      %v5099 = vsel %vm5098, 1, 0
      %v5100 = vadd.s32 %v5096, %v5092
      %v5101 = vadd.s32 %v5097, %v5099
      %v5102 = vadd.s32 %v5101, %v5091
      %v5103 = vadd.s32 %v5102, %v5093
      %v5104 = vshrl.u32 %v5103, 4
      %v5105 = vmul.u32 %v5104, 18
      %v5106 = vsub.s32 %v5082, %v5105
      %v5107 = vsub.s32 0, %v5106
      %v5108 = vsel %vm5080, %v5107, %v5106
      %vm5109 = vcmp.lt.s32.totalorder %v4681, 0
      %v5110 = vsub.s32 0, %v4681
      %v5111 = vsel %vm5109, %v5110, %v4681
      %v5112 = vand.u32 %v5111, 65535
      %v5113 = vshrl.u32 %v5111, 16
      %v5115 = vmul.u32 %v5112, 14564
      %v5116 = vmul.u32 %v5112, 58254
      %v5117 = vmul.u32 %v5113, 14564
      %v5118 = vmul.u32 %v5113, 58254
      %v5119 = vshll.u32 %v5116, 16
      %v5120 = vshrl.u32 %v5116, 16
      %v5121 = vshll.u32 %v5117, 16
      %v5122 = vshrl.u32 %v5117, 16
      %vm5123 = vc.u32 %v5115, %v5119
      %v5124 = vsel %vm5123, 1, 0
      %v5125 = vadd.s32 %v5115, %v5119
      %v5126 = vadd.s32 %v5118, %v5124
      %vm5127 = vc.u32 %v5125, %v5121
      %v5128 = vsel %vm5127, 1, 0
      %v5129 = vadd.s32 %v5125, %v5121
      %v5130 = vadd.s32 %v5126, %v5128
      %v5131 = vadd.s32 %v5130, %v5120
      %v5132 = vadd.s32 %v5131, %v5122
      %v5133 = vshrl.u32 %v5132, 4
      %v5134 = vmul.u32 %v5133, 18
      %v5135 = vsub.s32 %v5111, %v5134
      %v5136 = vsub.s32 0, %v5135
      %v5137 = vsel %vm5109, %v5136, %v5135
      %vm5138 = vcmp.lt.s32.totalorder %v4682, 0
      %v5139 = vsub.s32 0, %v4682
      %v5140 = vsel %vm5138, %v5139, %v4682
      %v5141 = vand.u32 %v5140, 65535
      %v5142 = vshrl.u32 %v5140, 16
      %v5144 = vmul.u32 %v5141, 14564
      %v5145 = vmul.u32 %v5141, 58254
      %v5146 = vmul.u32 %v5142, 14564
      %v5147 = vmul.u32 %v5142, 58254
      %v5148 = vshll.u32 %v5145, 16
      %v5149 = vshrl.u32 %v5145, 16
      %v5150 = vshll.u32 %v5146, 16
      %v5151 = vshrl.u32 %v5146, 16
      %vm5152 = vc.u32 %v5144, %v5148
      %v5153 = vsel %vm5152, 1, 0
      %v5154 = vadd.s32 %v5144, %v5148
      %v5155 = vadd.s32 %v5147, %v5153
      %vm5156 = vc.u32 %v5154, %v5150
      %v5157 = vsel %vm5156, 1, 0
      %v5158 = vadd.s32 %v5154, %v5150
      %v5159 = vadd.s32 %v5155, %v5157
      %v5160 = vadd.s32 %v5159, %v5149
      %v5161 = vadd.s32 %v5160, %v5151
      %v5162 = vshrl.u32 %v5161, 4
      %v5163 = vmul.u32 %v5162, 18
      %v5164 = vsub.s32 %v5140, %v5163
      %v5165 = vsub.s32 0, %v5164
      %v5166 = vsel %vm5138, %v5165, %v5164
      %vm5167 = vcmp.lt.s32.totalorder %v4683, 0
      %v5168 = vsub.s32 0, %v4683
      %v5169 = vsel %vm5167, %v5168, %v4683
      %v5170 = vand.u32 %v5169, 65535
      %v5171 = vshrl.u32 %v5169, 16
      %v5173 = vmul.u32 %v5170, 14564
      %v5174 = vmul.u32 %v5170, 58254
      %v5175 = vmul.u32 %v5171, 14564
      %v5176 = vmul.u32 %v5171, 58254
      %v5177 = vshll.u32 %v5174, 16
      %v5178 = vshrl.u32 %v5174, 16
      %v5179 = vshll.u32 %v5175, 16
      %v5180 = vshrl.u32 %v5175, 16
      %vm5181 = vc.u32 %v5173, %v5177
      %v5182 = vsel %vm5181, 1, 0
      %v5183 = vadd.s32 %v5173, %v5177
      %v5184 = vadd.s32 %v5176, %v5182
      %vm5185 = vc.u32 %v5183, %v5179
      %v5186 = vsel %vm5185, 1, 0
      %v5187 = vadd.s32 %v5183, %v5179
      %v5188 = vadd.s32 %v5184, %v5186
      %v5189 = vadd.s32 %v5188, %v5178
      %v5190 = vadd.s32 %v5189, %v5180
      %v5191 = vshrl.u32 %v5190, 4
      %v5192 = vmul.u32 %v5191, 18
      %v5193 = vsub.s32 %v5169, %v5192
      %v5194 = vsub.s32 0, %v5193
      %v5195 = vsel %vm5167, %v5194, %v5193
      %vm5196 = vcmp.lt.s32.totalorder %v4684, 0
      %v5197 = vsub.s32 0, %v4684
      %v5198 = vsel %vm5196, %v5197, %v4684
      %v5199 = vand.u32 %v5198, 65535
      %v5200 = vshrl.u32 %v5198, 16
      %v5202 = vmul.u32 %v5199, 14564
      %v5203 = vmul.u32 %v5199, 58254
      %v5204 = vmul.u32 %v5200, 14564
      %v5205 = vmul.u32 %v5200, 58254
      %v5206 = vshll.u32 %v5203, 16
      %v5207 = vshrl.u32 %v5203, 16
      %v5208 = vshll.u32 %v5204, 16
      %v5209 = vshrl.u32 %v5204, 16
      %vm5210 = vc.u32 %v5202, %v5206
      %v5211 = vsel %vm5210, 1, 0
      %v5212 = vadd.s32 %v5202, %v5206
      %v5213 = vadd.s32 %v5205, %v5211
      %vm5214 = vc.u32 %v5212, %v5208
      %v5215 = vsel %vm5214, 1, 0
      %v5216 = vadd.s32 %v5212, %v5208
      %v5217 = vadd.s32 %v5213, %v5215
      %v5218 = vadd.s32 %v5217, %v5207
      %v5219 = vadd.s32 %v5218, %v5209
      %v5220 = vshrl.u32 %v5219, 4
      %v5221 = vmul.u32 %v5220, 18
      %v5222 = vsub.s32 %v5198, %v5221
      %v5223 = vsub.s32 0, %v5222
      %v5224 = vsel %vm5196, %v5223, %v5222
      %vm5225 = vcmp.lt.s32.totalorder %v4685, 0
      %v5226 = vsub.s32 0, %v4685
      %v5227 = vsel %vm5225, %v5226, %v4685
      %v5228 = vand.u32 %v5227, 65535
      %v5229 = vshrl.u32 %v5227, 16
      %v5231 = vmul.u32 %v5228, 14564
      %v5232 = vmul.u32 %v5228, 58254
      %v5233 = vmul.u32 %v5229, 14564
      %v5234 = vmul.u32 %v5229, 58254
      %v5235 = vshll.u32 %v5232, 16
      %v5236 = vshrl.u32 %v5232, 16
      %v5237 = vshll.u32 %v5233, 16
      %v5238 = vshrl.u32 %v5233, 16
      %vm5239 = vc.u32 %v5231, %v5235
      %v5240 = vsel %vm5239, 1, 0
      %v5241 = vadd.s32 %v5231, %v5235
      %v5242 = vadd.s32 %v5234, %v5240
      %vm5243 = vc.u32 %v5241, %v5237
      %v5244 = vsel %vm5243, 1, 0
      %v5245 = vadd.s32 %v5241, %v5237
      %v5246 = vadd.s32 %v5242, %v5244
      %v5247 = vadd.s32 %v5246, %v5236
      %v5248 = vadd.s32 %v5247, %v5238
      %v5249 = vshrl.u32 %v5248, 4
      %v5250 = vmul.u32 %v5249, 18
      %v5251 = vsub.s32 %v5227, %v5250
      %v5252 = vsub.s32 0, %v5251
      %v5253 = vsel %vm5225, %v5252, %v5251
      %vm5254 = vcmp.lt.s32.totalorder %v4686, 0
      %v5255 = vsub.s32 0, %v4686
      %v5256 = vsel %vm5254, %v5255, %v4686
      %v5257 = vand.u32 %v5256, 65535
      %v5258 = vshrl.u32 %v5256, 16
      %v5260 = vmul.u32 %v5257, 14564
      %v5261 = vmul.u32 %v5257, 58254
      %v5262 = vmul.u32 %v5258, 14564
      %v5263 = vmul.u32 %v5258, 58254
      %v5264 = vshll.u32 %v5261, 16
      %v5265 = vshrl.u32 %v5261, 16
      %v5266 = vshll.u32 %v5262, 16
      %v5267 = vshrl.u32 %v5262, 16
      %vm5268 = vc.u32 %v5260, %v5264
      %v5269 = vsel %vm5268, 1, 0
      %v5270 = vadd.s32 %v5260, %v5264
      %v5271 = vadd.s32 %v5263, %v5269
      %vm5272 = vc.u32 %v5270, %v5266
      %v5273 = vsel %vm5272, 1, 0
      %v5274 = vadd.s32 %v5270, %v5266
      %v5275 = vadd.s32 %v5271, %v5273
      %v5276 = vadd.s32 %v5275, %v5265
      %v5277 = vadd.s32 %v5276, %v5267
      %v5278 = vshrl.u32 %v5277, 4
      %v5279 = vmul.u32 %v5278, 18
      %v5280 = vsub.s32 %v5256, %v5279
      %v5281 = vsub.s32 0, %v5280
      %v5282 = vsel %vm5254, %v5281, %v5280
      %vm5283 = vcmp.lt.s32.totalorder %v4687, 0
      %v5284 = vsub.s32 0, %v4687
      %v5285 = vsel %vm5283, %v5284, %v4687
      %v5286 = vand.u32 %v5285, 65535
      %v5287 = vshrl.u32 %v5285, 16
      %v5289 = vmul.u32 %v5286, 14564
      %v5290 = vmul.u32 %v5286, 58254
      %v5291 = vmul.u32 %v5287, 14564
      %v5292 = vmul.u32 %v5287, 58254
      %v5293 = vshll.u32 %v5290, 16
      %v5294 = vshrl.u32 %v5290, 16
      %v5295 = vshll.u32 %v5291, 16
      %v5296 = vshrl.u32 %v5291, 16
      %vm5297 = vc.u32 %v5289, %v5293
      %v5298 = vsel %vm5297, 1, 0
      %v5299 = vadd.s32 %v5289, %v5293
      %v5300 = vadd.s32 %v5292, %v5298
      %vm5301 = vc.u32 %v5299, %v5295
      %v5302 = vsel %vm5301, 1, 0
      %v5303 = vadd.s32 %v5299, %v5295
      %v5304 = vadd.s32 %v5300, %v5302
      %v5305 = vadd.s32 %v5304, %v5294
      %v5306 = vadd.s32 %v5305, %v5296
      %v5307 = vshrl.u32 %v5306, 4
      %v5308 = vmul.u32 %v5307, 18
      %v5309 = vsub.s32 %v5285, %v5308
      %v5310 = vsub.s32 0, %v5309
      %v5311 = vsel %vm5283, %v5310, %v5309
      %vm5312 = vcmp.lt.s32.totalorder %v4688, 0
      %v5313 = vsub.s32 0, %v4688
      %v5314 = vsel %vm5312, %v5313, %v4688
      %v5315 = vand.u32 %v5314, 65535
      %v5316 = vshrl.u32 %v5314, 16
      %v5318 = vmul.u32 %v5315, 14564
      %v5319 = vmul.u32 %v5315, 58254
      %v5320 = vmul.u32 %v5316, 14564
      %v5321 = vmul.u32 %v5316, 58254
      %v5322 = vshll.u32 %v5319, 16
      %v5323 = vshrl.u32 %v5319, 16
      %v5324 = vshll.u32 %v5320, 16
      %v5325 = vshrl.u32 %v5320, 16
      %vm5326 = vc.u32 %v5318, %v5322
      %v5327 = vsel %vm5326, 1, 0
      %v5328 = vadd.s32 %v5318, %v5322
      %v5329 = vadd.s32 %v5321, %v5327
      %vm5330 = vc.u32 %v5328, %v5324
      %v5331 = vsel %vm5330, 1, 0
      %v5332 = vadd.s32 %v5328, %v5324
      %v5333 = vadd.s32 %v5329, %v5331
      %v5334 = vadd.s32 %v5333, %v5323
      %v5335 = vadd.s32 %v5334, %v5325
      %v5336 = vshrl.u32 %v5335, 4
      %v5337 = vmul.u32 %v5336, 18
      %v5338 = vsub.s32 %v5314, %v5337
      %v5339 = vsub.s32 0, %v5338
      %v5340 = vsel %vm5312, %v5339, %v5338
      %vm5341 = vcmp.lt.s32.totalorder %v4689, 0
      %v5342 = vsub.s32 0, %v4689
      %v5343 = vsel %vm5341, %v5342, %v4689
      %v5344 = vand.u32 %v5343, 65535
      %v5345 = vshrl.u32 %v5343, 16
      %v5347 = vmul.u32 %v5344, 14564
      %v5348 = vmul.u32 %v5344, 58254
      %v5349 = vmul.u32 %v5345, 14564
      %v5350 = vmul.u32 %v5345, 58254
      %v5351 = vshll.u32 %v5348, 16
      %v5352 = vshrl.u32 %v5348, 16
      %v5353 = vshll.u32 %v5349, 16
      %v5354 = vshrl.u32 %v5349, 16
      %vm5355 = vc.u32 %v5347, %v5351
      %v5356 = vsel %vm5355, 1, 0
      %v5357 = vadd.s32 %v5347, %v5351
      %v5358 = vadd.s32 %v5350, %v5356
      %vm5359 = vc.u32 %v5357, %v5353
      %v5360 = vsel %vm5359, 1, 0
      %v5361 = vadd.s32 %v5357, %v5353
      %v5362 = vadd.s32 %v5358, %v5360
      %v5363 = vadd.s32 %v5362, %v5352
      %v5364 = vadd.s32 %v5363, %v5354
      %v5365 = vshrl.u32 %v5364, 4
      %v5366 = vmul.u32 %v5365, 18
      %v5367 = vsub.s32 %v5343, %v5366
      %v5368 = vsub.s32 0, %v5367
      %v5369 = vsel %vm5341, %v5368, %v5367
      %vm5370 = vcmp.lt.s32.totalorder %v4690, 0
      %v5371 = vsub.s32 0, %v4690
      %v5372 = vsel %vm5370, %v5371, %v4690
      %v5373 = vand.u32 %v5372, 65535
      %v5374 = vshrl.u32 %v5372, 16
      %v5376 = vmul.u32 %v5373, 14564
      %v5377 = vmul.u32 %v5373, 58254
      %v5378 = vmul.u32 %v5374, 14564
      %v5379 = vmul.u32 %v5374, 58254
      %v5380 = vshll.u32 %v5377, 16
      %v5381 = vshrl.u32 %v5377, 16
      %v5382 = vshll.u32 %v5378, 16
      %v5383 = vshrl.u32 %v5378, 16
      %vm5384 = vc.u32 %v5376, %v5380
      %v5385 = vsel %vm5384, 1, 0
      %v5386 = vadd.s32 %v5376, %v5380
      %v5387 = vadd.s32 %v5379, %v5385
      %vm5388 = vc.u32 %v5386, %v5382
      %v5389 = vsel %vm5388, 1, 0
      %v5390 = vadd.s32 %v5386, %v5382
      %v5391 = vadd.s32 %v5387, %v5389
      %v5392 = vadd.s32 %v5391, %v5381
      %v5393 = vadd.s32 %v5392, %v5383
      %v5394 = vshrl.u32 %v5393, 4
      %v5395 = vmul.u32 %v5394, 18
      %v5396 = vsub.s32 %v5372, %v5395
      %v5397 = vsub.s32 0, %v5396
      %v5398 = vsel %vm5370, %v5397, %v5396
      %vm5399 = vcmp.lt.s32.totalorder %v4691, 0
      %v5400 = vsub.s32 0, %v4691
      %v5401 = vsel %vm5399, %v5400, %v4691
      %v5402 = vand.u32 %v5401, 65535
      %v5403 = vshrl.u32 %v5401, 16
      %v5405 = vmul.u32 %v5402, 14564
      %v5406 = vmul.u32 %v5402, 58254
      %v5407 = vmul.u32 %v5403, 14564
      %v5408 = vmul.u32 %v5403, 58254
      %v5409 = vshll.u32 %v5406, 16
      %v5410 = vshrl.u32 %v5406, 16
      %v5411 = vshll.u32 %v5407, 16
      %v5412 = vshrl.u32 %v5407, 16
      %vm5413 = vc.u32 %v5405, %v5409
      %v5414 = vsel %vm5413, 1, 0
      %v5415 = vadd.s32 %v5405, %v5409
      %v5416 = vadd.s32 %v5408, %v5414
      %vm5417 = vc.u32 %v5415, %v5411
      %v5418 = vsel %vm5417, 1, 0
      %v5419 = vadd.s32 %v5415, %v5411
      %v5420 = vadd.s32 %v5416, %v5418
      %v5421 = vadd.s32 %v5420, %v5410
      %v5422 = vadd.s32 %v5421, %v5412
      %v5423 = vshrl.u32 %v5422, 4
      %v5424 = vmul.u32 %v5423, 18
      %v5425 = vsub.s32 %v5401, %v5424
      %v5426 = vsub.s32 0, %v5425
      %v5427 = vsel %vm5399, %v5426, %v5425
      %vm5428 = vcmp.lt.s32.totalorder %v4692, 0
      %v5429 = vsub.s32 0, %v4692
      %v5430 = vsel %vm5428, %v5429, %v4692
      %v5431 = vand.u32 %v5430, 65535
      %v5432 = vshrl.u32 %v5430, 16
      %v5434 = vmul.u32 %v5431, 14564
      %v5435 = vmul.u32 %v5431, 58254
      %v5436 = vmul.u32 %v5432, 14564
      %v5437 = vmul.u32 %v5432, 58254
      %v5438 = vshll.u32 %v5435, 16
      %v5439 = vshrl.u32 %v5435, 16
      %v5440 = vshll.u32 %v5436, 16
      %v5441 = vshrl.u32 %v5436, 16
      %vm5442 = vc.u32 %v5434, %v5438
      %v5443 = vsel %vm5442, 1, 0
      %v5444 = vadd.s32 %v5434, %v5438
      %v5445 = vadd.s32 %v5437, %v5443
      %vm5446 = vc.u32 %v5444, %v5440
      %v5447 = vsel %vm5446, 1, 0
      %v5448 = vadd.s32 %v5444, %v5440
      %v5449 = vadd.s32 %v5445, %v5447
      %v5450 = vadd.s32 %v5449, %v5439
      %v5451 = vadd.s32 %v5450, %v5441
      %v5452 = vshrl.u32 %v5451, 4
      %v5453 = vmul.u32 %v5452, 18
      %v5454 = vsub.s32 %v5430, %v5453
      %v5455 = vsub.s32 0, %v5454
      %v5456 = vsel %vm5428, %v5455, %v5454
      %vm5457 = vcmp.lt.s32.totalorder %v4693, 0
      %v5458 = vsub.s32 0, %v4693
      %v5459 = vsel %vm5457, %v5458, %v4693
      %v5460 = vand.u32 %v5459, 65535
      %v5461 = vshrl.u32 %v5459, 16
      %v5463 = vmul.u32 %v5460, 14564
      %v5464 = vmul.u32 %v5460, 58254
      %v5465 = vmul.u32 %v5461, 14564
      %v5466 = vmul.u32 %v5461, 58254
      %v5467 = vshll.u32 %v5464, 16
      %v5468 = vshrl.u32 %v5464, 16
      %v5469 = vshll.u32 %v5465, 16
      %v5470 = vshrl.u32 %v5465, 16
      %vm5471 = vc.u32 %v5463, %v5467
      %v5472 = vsel %vm5471, 1, 0
      %v5473 = vadd.s32 %v5463, %v5467
      %v5474 = vadd.s32 %v5466, %v5472
      %vm5475 = vc.u32 %v5473, %v5469
      %v5476 = vsel %vm5475, 1, 0
      %v5477 = vadd.s32 %v5473, %v5469
      %v5478 = vadd.s32 %v5474, %v5476
      %v5479 = vadd.s32 %v5478, %v5468
      %v5480 = vadd.s32 %v5479, %v5470
      %v5481 = vshrl.u32 %v5480, 4
      %v5482 = vmul.u32 %v5481, 18
      %v5483 = vsub.s32 %v5459, %v5482
      %v5484 = vsub.s32 0, %v5483
      %v5485 = vsel %vm5457, %v5484, %v5483
      %vm5486 = vcmp.lt.s32.totalorder %v4694, 0
      %v5487 = vsub.s32 0, %v4694
      %v5488 = vsel %vm5486, %v5487, %v4694
      %v5489 = vand.u32 %v5488, 65535
      %v5490 = vshrl.u32 %v5488, 16
      %v5492 = vmul.u32 %v5489, 14564
      %v5493 = vmul.u32 %v5489, 58254
      %v5494 = vmul.u32 %v5490, 14564
      %v5495 = vmul.u32 %v5490, 58254
      %v5496 = vshll.u32 %v5493, 16
      %v5497 = vshrl.u32 %v5493, 16
      %v5498 = vshll.u32 %v5494, 16
      %v5499 = vshrl.u32 %v5494, 16
      %vm5500 = vc.u32 %v5492, %v5496
      %v5501 = vsel %vm5500, 1, 0
      %v5502 = vadd.s32 %v5492, %v5496
      %v5503 = vadd.s32 %v5495, %v5501
      %vm5504 = vc.u32 %v5502, %v5498
      %v5505 = vsel %vm5504, 1, 0
      %v5506 = vadd.s32 %v5502, %v5498
      %v5507 = vadd.s32 %v5503, %v5505
      %v5508 = vadd.s32 %v5507, %v5497
      %v5509 = vadd.s32 %v5508, %v5499
      %v5510 = vshrl.u32 %v5509, 4
      %v5511 = vmul.u32 %v5510, 18
      %v5512 = vsub.s32 %v5488, %v5511
      %v5513 = vsub.s32 0, %v5512
      %v5514 = vsel %vm5486, %v5513, %v5512
      %vm5515 = vcmp.lt.s32.totalorder %v4695, 0
      %v5516 = vsub.s32 0, %v4695
      %v5517 = vsel %vm5515, %v5516, %v4695
      %v5518 = vand.u32 %v5517, 65535
      %v5519 = vshrl.u32 %v5517, 16
      %v5521 = vmul.u32 %v5518, 14564
      %v5522 = vmul.u32 %v5518, 58254
      %v5523 = vmul.u32 %v5519, 14564
      %v5524 = vmul.u32 %v5519, 58254
      %v5525 = vshll.u32 %v5522, 16
      %v5526 = vshrl.u32 %v5522, 16
      %v5527 = vshll.u32 %v5523, 16
      %v5528 = vshrl.u32 %v5523, 16
      %vm5529 = vc.u32 %v5521, %v5525
      %v5530 = vsel %vm5529, 1, 0
      %v5531 = vadd.s32 %v5521, %v5525
      %v5532 = vadd.s32 %v5524, %v5530
      %vm5533 = vc.u32 %v5531, %v5527
      %v5534 = vsel %vm5533, 1, 0
      %v5535 = vadd.s32 %v5531, %v5527
      %v5536 = vadd.s32 %v5532, %v5534
      %v5537 = vadd.s32 %v5536, %v5526
      %v5538 = vadd.s32 %v5537, %v5528
      %v5539 = vshrl.u32 %v5538, 4
      %v5540 = vmul.u32 %v5539, 18
      %v5541 = vsub.s32 %v5517, %v5540
      %v5542 = vsub.s32 0, %v5541
      %v5543 = vsel %vm5515, %v5542, %v5541
      %vm5544 = vcmp.lt.s32.totalorder %v4696, 0
      %v5545 = vsub.s32 0, %v4696
      %v5546 = vsel %vm5544, %v5545, %v4696
      %v5547 = vand.u32 %v5546, 65535
      %v5548 = vshrl.u32 %v5546, 16
      %v5550 = vmul.u32 %v5547, 14564
      %v5551 = vmul.u32 %v5547, 58254
      %v5552 = vmul.u32 %v5548, 14564
      %v5553 = vmul.u32 %v5548, 58254
      %v5554 = vshll.u32 %v5551, 16
      %v5555 = vshrl.u32 %v5551, 16
      %v5556 = vshll.u32 %v5552, 16
      %v5557 = vshrl.u32 %v5552, 16
      %vm5558 = vc.u32 %v5550, %v5554
      %v5559 = vsel %vm5558, 1, 0
      %v5560 = vadd.s32 %v5550, %v5554
      %v5561 = vadd.s32 %v5553, %v5559
      %vm5562 = vc.u32 %v5560, %v5556
      %v5563 = vsel %vm5562, 1, 0
      %v5564 = vadd.s32 %v5560, %v5556
      %v5565 = vadd.s32 %v5561, %v5563
      %v5566 = vadd.s32 %v5565, %v5555
      %v5567 = vadd.s32 %v5566, %v5557
      %v5568 = vshrl.u32 %v5567, 4
      %v5569 = vmul.u32 %v5568, 18
      %v5570 = vsub.s32 %v5546, %v5569
      %v5571 = vsub.s32 0, %v5570
      %v5572 = vsel %vm5544, %v5571, %v5570
      %vm5573 = vcmp.lt.s32.totalorder %v4697, 0
      %v5574 = vsub.s32 0, %v4697
      %v5575 = vsel %vm5573, %v5574, %v4697
      %v5576 = vand.u32 %v5575, 65535
      %v5577 = vshrl.u32 %v5575, 16
      %v5579 = vmul.u32 %v5576, 14564
      %v5580 = vmul.u32 %v5576, 58254
      %v5581 = vmul.u32 %v5577, 14564
      %v5582 = vmul.u32 %v5577, 58254
      %v5583 = vshll.u32 %v5580, 16
      %v5584 = vshrl.u32 %v5580, 16
      %v5585 = vshll.u32 %v5581, 16
      %v5586 = vshrl.u32 %v5581, 16
      %vm5587 = vc.u32 %v5579, %v5583
      %v5588 = vsel %vm5587, 1, 0
      %v5589 = vadd.s32 %v5579, %v5583
      %v5590 = vadd.s32 %v5582, %v5588
      %vm5591 = vc.u32 %v5589, %v5585
      %v5592 = vsel %vm5591, 1, 0
      %v5593 = vadd.s32 %v5589, %v5585
      %v5594 = vadd.s32 %v5590, %v5592
      %v5595 = vadd.s32 %v5594, %v5584
      %v5596 = vadd.s32 %v5595, %v5586
      %v5597 = vshrl.u32 %v5596, 4
      %v5598 = vmul.u32 %v5597, 18
      %v5599 = vsub.s32 %v5575, %v5598
      %v5600 = vsub.s32 0, %v5599
      %v5601 = vsel %vm5573, %v5600, %v5599
      %vm5602 = vcmp.lt.s32.totalorder %v4698, 0
      %v5603 = vsub.s32 0, %v4698
      %v5604 = vsel %vm5602, %v5603, %v4698
      %v5605 = vand.u32 %v5604, 65535
      %v5606 = vshrl.u32 %v5604, 16
      %v5608 = vmul.u32 %v5605, 14564
      %v5609 = vmul.u32 %v5605, 58254
      %v5610 = vmul.u32 %v5606, 14564
      %v5611 = vmul.u32 %v5606, 58254
      %v5612 = vshll.u32 %v5609, 16
      %v5613 = vshrl.u32 %v5609, 16
      %v5614 = vshll.u32 %v5610, 16
      %v5615 = vshrl.u32 %v5610, 16
      %vm5616 = vc.u32 %v5608, %v5612
      %v5617 = vsel %vm5616, 1, 0
      %v5618 = vadd.s32 %v5608, %v5612
      %v5619 = vadd.s32 %v5611, %v5617
      %vm5620 = vc.u32 %v5618, %v5614
      %v5621 = vsel %vm5620, 1, 0
      %v5622 = vadd.s32 %v5618, %v5614
      %v5623 = vadd.s32 %v5619, %v5621
      %v5624 = vadd.s32 %v5623, %v5613
      %v5625 = vadd.s32 %v5624, %v5615
      %v5626 = vshrl.u32 %v5625, 4
      %v5627 = vmul.u32 %v5626, 18
      %v5628 = vsub.s32 %v5604, %v5627
      %v5629 = vsub.s32 0, %v5628
      %v5630 = vsel %vm5602, %v5629, %v5628
      %vm5631 = vcmp.lt.s32.totalorder %v4699, 0
      %v5632 = vsub.s32 0, %v4699
      %v5633 = vsel %vm5631, %v5632, %v4699
      %v5634 = vand.u32 %v5633, 65535
      %v5635 = vshrl.u32 %v5633, 16
      %v5637 = vmul.u32 %v5634, 14564
      %v5638 = vmul.u32 %v5634, 58254
      %v5639 = vmul.u32 %v5635, 14564
      %v5640 = vmul.u32 %v5635, 58254
      %v5641 = vshll.u32 %v5638, 16
      %v5642 = vshrl.u32 %v5638, 16
      %v5643 = vshll.u32 %v5639, 16
      %v5644 = vshrl.u32 %v5639, 16
      %vm5645 = vc.u32 %v5637, %v5641
      %v5646 = vsel %vm5645, 1, 0
      %v5647 = vadd.s32 %v5637, %v5641
      %v5648 = vadd.s32 %v5640, %v5646
      %vm5649 = vc.u32 %v5647, %v5643
      %v5650 = vsel %vm5649, 1, 0
      %v5651 = vadd.s32 %v5647, %v5643
      %v5652 = vadd.s32 %v5648, %v5650
      %v5653 = vadd.s32 %v5652, %v5642
      %v5654 = vadd.s32 %v5653, %v5644
      %v5655 = vshrl.u32 %v5654, 4
      %v5656 = vmul.u32 %v5655, 18
      %v5657 = vsub.s32 %v5633, %v5656
      %v5658 = vsub.s32 0, %v5657
      %v5659 = vsel %vm5631, %v5658, %v5657
      %vm5660 = vcmp.lt.s32.totalorder %v4700, 0
      %v5661 = vsub.s32 0, %v4700
      %v5662 = vsel %vm5660, %v5661, %v4700
      %v5663 = vand.u32 %v5662, 65535
      %v5664 = vshrl.u32 %v5662, 16
      %v5666 = vmul.u32 %v5663, 14564
      %v5667 = vmul.u32 %v5663, 58254
      %v5668 = vmul.u32 %v5664, 14564
      %v5669 = vmul.u32 %v5664, 58254
      %v5670 = vshll.u32 %v5667, 16
      %v5671 = vshrl.u32 %v5667, 16
      %v5672 = vshll.u32 %v5668, 16
      %v5673 = vshrl.u32 %v5668, 16
      %vm5674 = vc.u32 %v5666, %v5670
      %v5675 = vsel %vm5674, 1, 0
      %v5676 = vadd.s32 %v5666, %v5670
      %v5677 = vadd.s32 %v5669, %v5675
      %vm5678 = vc.u32 %v5676, %v5672
      %v5679 = vsel %vm5678, 1, 0
      %v5680 = vadd.s32 %v5676, %v5672
      %v5681 = vadd.s32 %v5677, %v5679
      %v5682 = vadd.s32 %v5681, %v5671
      %v5683 = vadd.s32 %v5682, %v5673
      %v5684 = vshrl.u32 %v5683, 4
      %v5685 = vmul.u32 %v5684, 18
      %v5686 = vsub.s32 %v5662, %v5685
      %v5687 = vsub.s32 0, %v5686
      %v5688 = vsel %vm5660, %v5687, %v5686
      %vm5689 = vcmp.lt.s32.totalorder %v4701, 0
      %v5690 = vsub.s32 0, %v4701
      %v5691 = vsel %vm5689, %v5690, %v4701
      %v5692 = vand.u32 %v5691, 65535
      %v5693 = vshrl.u32 %v5691, 16
      %v5695 = vmul.u32 %v5692, 14564
      %v5696 = vmul.u32 %v5692, 58254
      %v5697 = vmul.u32 %v5693, 14564
      %v5698 = vmul.u32 %v5693, 58254
      %v5699 = vshll.u32 %v5696, 16
      %v5700 = vshrl.u32 %v5696, 16
      %v5701 = vshll.u32 %v5697, 16
      %v5702 = vshrl.u32 %v5697, 16
      %vm5703 = vc.u32 %v5695, %v5699
      %v5704 = vsel %vm5703, 1, 0
      %v5705 = vadd.s32 %v5695, %v5699
      %v5706 = vadd.s32 %v5698, %v5704
      %vm5707 = vc.u32 %v5705, %v5701
      %v5708 = vsel %vm5707, 1, 0
      %v5709 = vadd.s32 %v5705, %v5701
      %v5710 = vadd.s32 %v5706, %v5708
      %v5711 = vadd.s32 %v5710, %v5700
      %v5712 = vadd.s32 %v5711, %v5702
      %v5713 = vshrl.u32 %v5712, 4
      %v5714 = vmul.u32 %v5713, 18
      %v5715 = vsub.s32 %v5691, %v5714
      %v5716 = vsub.s32 0, %v5715
      %v5717 = vsel %vm5689, %v5716, %v5715
      %vm5718 = vcmp.lt.s32.totalorder %v4702, 0
      %v5719 = vsub.s32 0, %v4702
      %v5720 = vsel %vm5718, %v5719, %v4702
      %v5721 = vand.u32 %v5720, 65535
      %v5722 = vshrl.u32 %v5720, 16
      %v5724 = vmul.u32 %v5721, 14564
      %v5725 = vmul.u32 %v5721, 58254
      %v5726 = vmul.u32 %v5722, 14564
      %v5727 = vmul.u32 %v5722, 58254
      %v5728 = vshll.u32 %v5725, 16
      %v5729 = vshrl.u32 %v5725, 16
      %v5730 = vshll.u32 %v5726, 16
      %v5731 = vshrl.u32 %v5726, 16
      %vm5732 = vc.u32 %v5724, %v5728
      %v5733 = vsel %vm5732, 1, 0
      %v5734 = vadd.s32 %v5724, %v5728
      %v5735 = vadd.s32 %v5727, %v5733
      %vm5736 = vc.u32 %v5734, %v5730
      %v5737 = vsel %vm5736, 1, 0
      %v5738 = vadd.s32 %v5734, %v5730
      %v5739 = vadd.s32 %v5735, %v5737
      %v5740 = vadd.s32 %v5739, %v5729
      %v5741 = vadd.s32 %v5740, %v5731
      %v5742 = vshrl.u32 %v5741, 4
      %v5743 = vmul.u32 %v5742, 18
      %v5744 = vsub.s32 %v5720, %v5743
      %v5745 = vsub.s32 0, %v5744
      %v5746 = vsel %vm5718, %v5745, %v5744
      %vm5747 = vcmp.ne.s32.totalorder %v4731, 0
      %vm5748 = vcmp.ne.s32.totalorder %v4760, 0
      %vm5749 = vcmp.ne.s32.totalorder %v4789, 0
      %vm5750 = vcmp.ne.s32.totalorder %v4818, 0
      %vm5751 = vcmp.ne.s32.totalorder %v4847, 0
      %vm5752 = vcmp.ne.s32.totalorder %v4876, 0
      %vm5753 = vcmp.ne.s32.totalorder %v4905, 0
      %vm5754 = vcmp.ne.s32.totalorder %v4934, 0
      %vm5755 = vcmp.ne.s32.totalorder %v4963, 0
      %vm5756 = vcmp.ne.s32.totalorder %v4992, 0
      %vm5757 = vcmp.ne.s32.totalorder %v5021, 0
      %vm5758 = vcmp.ne.s32.totalorder %v5050, 0
      %vm5759 = vcmp.ne.s32.totalorder %v5079, 0
      %vm5760 = vcmp.ne.s32.totalorder %v5108, 0
      %vm5761 = vcmp.ne.s32.totalorder %v5137, 0
      %vm5762 = vcmp.ne.s32.totalorder %v5166, 0
      %vm5763 = vcmp.ne.s32.totalorder %v5195, 0
      %vm5764 = vcmp.ne.s32.totalorder %v5224, 0
      %vm5765 = vcmp.ne.s32.totalorder %v5253, 0
      %vm5766 = vcmp.ne.s32.totalorder %v5282, 0
      %vm5767 = vcmp.ne.s32.totalorder %v5311, 0
      %vm5768 = vcmp.ne.s32.totalorder %v5340, 0
      %vm5769 = vcmp.ne.s32.totalorder %v5369, 0
      %vm5770 = vcmp.ne.s32.totalorder %v5398, 0
      %vm5771 = vcmp.ne.s32.totalorder %v5427, 0
      %vm5772 = vcmp.ne.s32.totalorder %v5456, 0
      %vm5773 = vcmp.ne.s32.totalorder %v5485, 0
      %vm5774 = vcmp.ne.s32.totalorder %v5514, 0
      %vm5775 = vcmp.ne.s32.totalorder %v5543, 0
      %vm5776 = vcmp.ne.s32.totalorder %v5572, 0
      %vm5777 = vcmp.ne.s32.totalorder %v5601, 0
      %vm5778 = vcmp.ne.s32.totalorder %v5630, 0
      %vm5779 = vcmp.ne.s32.totalorder %v5659, 0
      %vm5780 = vcmp.ne.s32.totalorder %v5688, 0
      %vm5781 = vcmp.ne.s32.totalorder %v5717, 0
      %vm5782 = vcmp.ne.s32.totalorder %v5746, 0
      %vm5783 = vcmp.lt.s32.totalorder %v4731, 0
      %vm5784 = vcmp.lt.s32.totalorder %v4760, 0
      %vm5785 = vcmp.lt.s32.totalorder %v4789, 0
      %vm5786 = vcmp.lt.s32.totalorder %v4818, 0
      %vm5787 = vcmp.lt.s32.totalorder %v4847, 0
      %vm5788 = vcmp.lt.s32.totalorder %v4876, 0
      %vm5789 = vcmp.lt.s32.totalorder %v4905, 0
      %vm5790 = vcmp.lt.s32.totalorder %v4934, 0
      %vm5791 = vcmp.lt.s32.totalorder %v4963, 0
      %vm5792 = vcmp.lt.s32.totalorder %v4992, 0
      %vm5793 = vcmp.lt.s32.totalorder %v5021, 0
      %vm5794 = vcmp.lt.s32.totalorder %v5050, 0
      %vm5795 = vcmp.lt.s32.totalorder %v5079, 0
      %vm5796 = vcmp.lt.s32.totalorder %v5108, 0
      %vm5797 = vcmp.lt.s32.totalorder %v5137, 0
      %vm5798 = vcmp.lt.s32.totalorder %v5166, 0
      %vm5799 = vcmp.lt.s32.totalorder %v5195, 0
      %vm5800 = vcmp.lt.s32.totalorder %v5224, 0
      %vm5801 = vcmp.lt.s32.totalorder %v5253, 0
      %vm5802 = vcmp.lt.s32.totalorder %v5282, 0
      %vm5803 = vcmp.lt.s32.totalorder %v5311, 0
      %vm5804 = vcmp.lt.s32.totalorder %v5340, 0
      %vm5805 = vcmp.lt.s32.totalorder %v5369, 0
      %vm5806 = vcmp.lt.s32.totalorder %v5398, 0
      %vm5807 = vcmp.lt.s32.totalorder %v5427, 0
      %vm5808 = vcmp.lt.s32.totalorder %v5456, 0
      %vm5809 = vcmp.lt.s32.totalorder %v5485, 0
      %vm5810 = vcmp.lt.s32.totalorder %v5514, 0
      %vm5811 = vcmp.lt.s32.totalorder %v5543, 0
      %vm5812 = vcmp.lt.s32.totalorder %v5572, 0
      %vm5813 = vcmp.lt.s32.totalorder %v5601, 0
      %vm5814 = vcmp.lt.s32.totalorder %v5630, 0
      %vm5815 = vcmp.lt.s32.totalorder %v5659, 0
      %vm5816 = vcmp.lt.s32.totalorder %v5688, 0
      %vm5817 = vcmp.lt.s32.totalorder %v5717, 0
      %vm5818 = vcmp.lt.s32.totalorder %v5746, 0
      %vm5819 = vmand %vm5783, %vm5747
      %vm5820 = vmand %vm5784, %vm5748
      %vm5821 = vmand %vm5785, %vm5749
      %vm5822 = vmand %vm5786, %vm5750
      %vm5823 = vmand %vm5787, %vm5751
      %vm5824 = vmand %vm5788, %vm5752
      %vm5825 = vmand %vm5789, %vm5753
      %vm5826 = vmand %vm5790, %vm5754
      %vm5827 = vmand %vm5791, %vm5755
      %vm5828 = vmand %vm5792, %vm5756
      %vm5829 = vmand %vm5793, %vm5757
      %vm5830 = vmand %vm5794, %vm5758
      %vm5831 = vmand %vm5795, %vm5759
      %vm5832 = vmand %vm5796, %vm5760
      %vm5833 = vmand %vm5797, %vm5761
      %vm5834 = vmand %vm5798, %vm5762
      %vm5835 = vmand %vm5799, %vm5763
      %vm5836 = vmand %vm5800, %vm5764
      %vm5837 = vmand %vm5801, %vm5765
      %vm5838 = vmand %vm5802, %vm5766
      %vm5839 = vmand %vm5803, %vm5767
      %vm5840 = vmand %vm5804, %vm5768
      %vm5841 = vmand %vm5805, %vm5769
      %vm5842 = vmand %vm5806, %vm5770
      %vm5843 = vmand %vm5807, %vm5771
      %vm5844 = vmand %vm5808, %vm5772
      %vm5845 = vmand %vm5809, %vm5773
      %vm5846 = vmand %vm5810, %vm5774
      %vm5847 = vmand %vm5811, %vm5775
      %vm5848 = vmand %vm5812, %vm5776
      %vm5849 = vmand %vm5813, %vm5777
      %vm5850 = vmand %vm5814, %vm5778
      %vm5851 = vmand %vm5815, %vm5779
      %vm5852 = vmand %vm5816, %vm5780
      %vm5853 = vmand %vm5817, %vm5781
      %vm5854 = vmand %vm5818, %vm5782
      %v5855 = vadd.s32 %v4731, 18
      %v5856 = vadd.s32 %v4760, 18
      %v5857 = vadd.s32 %v4789, 18
      %v5858 = vadd.s32 %v4818, 18
      %v5859 = vadd.s32 %v4847, 18
      %v5860 = vadd.s32 %v4876, 18
      %v5861 = vadd.s32 %v4905, 18
      %v5862 = vadd.s32 %v4934, 18
      %v5863 = vadd.s32 %v4963, 18
      %v5864 = vadd.s32 %v4992, 18
      %v5865 = vadd.s32 %v5021, 18
      %v5866 = vadd.s32 %v5050, 18
      %v5867 = vadd.s32 %v5079, 18
      %v5868 = vadd.s32 %v5108, 18
      %v5869 = vadd.s32 %v5137, 18
      %v5870 = vadd.s32 %v5166, 18
      %v5871 = vadd.s32 %v5195, 18
      %v5872 = vadd.s32 %v5224, 18
      %v5873 = vadd.s32 %v5253, 18
      %v5874 = vadd.s32 %v5282, 18
      %v5875 = vadd.s32 %v5311, 18
      %v5876 = vadd.s32 %v5340, 18
      %v5877 = vadd.s32 %v5369, 18
      %v5878 = vadd.s32 %v5398, 18
      %v5879 = vadd.s32 %v5427, 18
      %v5880 = vadd.s32 %v5456, 18
      %v5881 = vadd.s32 %v5485, 18
      %v5882 = vadd.s32 %v5514, 18
      %v5883 = vadd.s32 %v5543, 18
      %v5884 = vadd.s32 %v5572, 18
      %v5885 = vadd.s32 %v5601, 18
      %v5886 = vadd.s32 %v5630, 18
      %v5887 = vadd.s32 %v5659, 18
      %v5888 = vadd.s32 %v5688, 18
      %v5889 = vadd.s32 %v5717, 18
      %v5890 = vadd.s32 %v5746, 18
      %v5891 = vsel %vm5819, %v5855, %v4731
      %v5892 = vsel %vm5820, %v5856, %v4760
      %v5893 = vsel %vm5821, %v5857, %v4789
      %v5894 = vsel %vm5822, %v5858, %v4818
      %v5895 = vsel %vm5823, %v5859, %v4847
      %v5896 = vsel %vm5824, %v5860, %v4876
      %v5897 = vsel %vm5825, %v5861, %v4905
      %v5898 = vsel %vm5826, %v5862, %v4934
      %v5899 = vsel %vm5827, %v5863, %v4963
      %v5900 = vsel %vm5828, %v5864, %v4992
      %v5901 = vsel %vm5829, %v5865, %v5021
      %v5902 = vsel %vm5830, %v5866, %v5050
      %v5903 = vsel %vm5831, %v5867, %v5079
      %v5904 = vsel %vm5832, %v5868, %v5108
      %v5905 = vsel %vm5833, %v5869, %v5137
      %v5906 = vsel %vm5834, %v5870, %v5166
      %v5907 = vsel %vm5835, %v5871, %v5195
      %v5908 = vsel %vm5836, %v5872, %v5224
      %v5909 = vsel %vm5837, %v5873, %v5253
      %v5910 = vsel %vm5838, %v5874, %v5282
      %v5911 = vsel %vm5839, %v5875, %v5311
      %v5912 = vsel %vm5840, %v5876, %v5340
      %v5913 = vsel %vm5841, %v5877, %v5369
      %v5914 = vsel %vm5842, %v5878, %v5398
      %v5915 = vsel %vm5843, %v5879, %v5427
      %v5916 = vsel %vm5844, %v5880, %v5456
      %v5917 = vsel %vm5845, %v5881, %v5485
      %v5918 = vsel %vm5846, %v5882, %v5514
      %v5919 = vsel %vm5847, %v5883, %v5543
      %v5920 = vsel %vm5848, %v5884, %v5572
      %v5921 = vsel %vm5849, %v5885, %v5601
      %v5922 = vsel %vm5850, %v5886, %v5630
      %v5923 = vsel %vm5851, %v5887, %v5659
      %v5924 = vsel %vm5852, %v5888, %v5688
      %v5925 = vsel %vm5853, %v5889, %v5717
      %v5926 = vsel %vm5854, %v5890, %v5746
      %vm5927 = vcmp.lt.s32.totalorder %v5891, 16
      %vm5928 = vcmp.lt.s32.totalorder %v5892, 16
      %vm5929 = vcmp.lt.s32.totalorder %v5893, 16
      %vm5930 = vcmp.lt.s32.totalorder %v5894, 16
      %vm5931 = vcmp.lt.s32.totalorder %v5895, 16
      %vm5932 = vcmp.lt.s32.totalorder %v5896, 16
      %vm5933 = vcmp.lt.s32.totalorder %v5897, 16
      %vm5934 = vcmp.lt.s32.totalorder %v5898, 16
      %vm5935 = vcmp.lt.s32.totalorder %v5899, 16
      %vm5936 = vcmp.lt.s32.totalorder %v5900, 16
      %vm5937 = vcmp.lt.s32.totalorder %v5901, 16
      %vm5938 = vcmp.lt.s32.totalorder %v5902, 16
      %vm5939 = vcmp.lt.s32.totalorder %v5903, 16
      %vm5940 = vcmp.lt.s32.totalorder %v5904, 16
      %vm5941 = vcmp.lt.s32.totalorder %v5905, 16
      %vm5942 = vcmp.lt.s32.totalorder %v5906, 16
      %vm5943 = vcmp.lt.s32.totalorder %v5907, 16
      %vm5944 = vcmp.lt.s32.totalorder %v5908, 16
      %vm5945 = vcmp.lt.s32.totalorder %v5909, 16
      %vm5946 = vcmp.lt.s32.totalorder %v5910, 16
      %vm5947 = vcmp.lt.s32.totalorder %v5911, 16
      %vm5948 = vcmp.lt.s32.totalorder %v5912, 16
      %vm5949 = vcmp.lt.s32.totalorder %v5913, 16
      %vm5950 = vcmp.lt.s32.totalorder %v5914, 16
      %vm5951 = vcmp.lt.s32.totalorder %v5915, 16
      %vm5952 = vcmp.lt.s32.totalorder %v5916, 16
      %vm5953 = vcmp.lt.s32.totalorder %v5917, 16
      %vm5954 = vcmp.lt.s32.totalorder %v5918, 16
      %vm5955 = vcmp.lt.s32.totalorder %v5919, 16
      %vm5956 = vcmp.lt.s32.totalorder %v5920, 16
      %vm5957 = vcmp.lt.s32.totalorder %v5921, 16
      %vm5958 = vcmp.lt.s32.totalorder %v5922, 16
      %vm5959 = vcmp.lt.s32.totalorder %v5923, 16
      %vm5960 = vcmp.lt.s32.totalorder %v5924, 16
      %vm5961 = vcmp.lt.s32.totalorder %v5925, 16
      %vm5962 = vcmp.lt.s32.totalorder %v5926, 16
      %v5963 = vsel %vm5927, 1, 0
      %v5964 = vsel %vm5928, 1, 0
      %v5965 = vsel %vm5929, 1, 0
      %v5966 = vsel %vm5930, 1, 0
      %v5967 = vsel %vm5931, 1, 0
      %v5968 = vsel %vm5932, 1, 0
      %v5969 = vsel %vm5933, 1, 0
      %v5970 = vsel %vm5934, 1, 0
      %v5971 = vsel %vm5935, 1, 0
      %v5972 = vsel %vm5936, 1, 0
      %v5973 = vsel %vm5937, 1, 0
      %v5974 = vsel %vm5938, 1, 0
      %v5975 = vsel %vm5939, 1, 0
      %v5976 = vsel %vm5940, 1, 0
      %v5977 = vsel %vm5941, 1, 0
      %v5978 = vsel %vm5942, 1, 0
      %v5979 = vsel %vm5943, 1, 0
      %v5980 = vsel %vm5944, 1, 0
      %v5981 = vsel %vm5945, 1, 0
      %v5982 = vsel %vm5946, 1, 0
      %v5983 = vsel %vm5947, 1, 0
      %v5984 = vsel %vm5948, 1, 0
      %v5985 = vsel %vm5949, 1, 0
      %v5986 = vsel %vm5950, 1, 0
      %v5987 = vsel %vm5951, 1, 0
      %v5988 = vsel %vm5952, 1, 0
      %v5989 = vsel %vm5953, 1, 0
      %v5990 = vsel %vm5954, 1, 0
      %v5991 = vsel %vm5955, 1, 0
      %v5992 = vsel %vm5956, 1, 0
      %v5993 = vsel %vm5957, 1, 0
      %v5994 = vsel %vm5958, 1, 0
      %v5995 = vsel %vm5959, 1, 0
      %v5996 = vsel %vm5960, 1, 0
      %v5997 = vsel %vm5961, 1, 0
      %v5998 = vsel %vm5962, 1, 0
      %vm5999 = vcmp.eq.s32.totalorder %v5963, 1
      %vm6000 = vcmp.eq.s32.totalorder %v5964, 1
      %vm6001 = vcmp.eq.s32.totalorder %v5965, 1
      %vm6002 = vcmp.eq.s32.totalorder %v5966, 1
      %vm6003 = vcmp.eq.s32.totalorder %v5967, 1
      %vm6004 = vcmp.eq.s32.totalorder %v5968, 1
      %vm6005 = vcmp.eq.s32.totalorder %v5969, 1
      %vm6006 = vcmp.eq.s32.totalorder %v5970, 1
      %vm6007 = vcmp.eq.s32.totalorder %v5971, 1
      %vm6008 = vcmp.eq.s32.totalorder %v5972, 1
      %vm6009 = vcmp.eq.s32.totalorder %v5973, 1
      %vm6010 = vcmp.eq.s32.totalorder %v5974, 1
      %vm6011 = vcmp.eq.s32.totalorder %v5975, 1
      %vm6012 = vcmp.eq.s32.totalorder %v5976, 1
      %vm6013 = vcmp.eq.s32.totalorder %v5977, 1
      %vm6014 = vcmp.eq.s32.totalorder %v5978, 1
      %vm6015 = vcmp.eq.s32.totalorder %v5979, 1
      %vm6016 = vcmp.eq.s32.totalorder %v5980, 1
      %vm6017 = vcmp.eq.s32.totalorder %v5981, 1
      %vm6018 = vcmp.eq.s32.totalorder %v5982, 1
      %vm6019 = vcmp.eq.s32.totalorder %v5983, 1
      %vm6020 = vcmp.eq.s32.totalorder %v5984, 1
      %vm6021 = vcmp.eq.s32.totalorder %v5985, 1
      %vm6022 = vcmp.eq.s32.totalorder %v5986, 1
      %vm6023 = vcmp.eq.s32.totalorder %v5987, 1
      %vm6024 = vcmp.eq.s32.totalorder %v5988, 1
      %vm6025 = vcmp.eq.s32.totalorder %v5989, 1
      %vm6026 = vcmp.eq.s32.totalorder %v5990, 1
      %vm6027 = vcmp.eq.s32.totalorder %v5991, 1
      %vm6028 = vcmp.eq.s32.totalorder %v5992, 1
      %vm6029 = vcmp.eq.s32.totalorder %v5993, 1
      %vm6030 = vcmp.eq.s32.totalorder %v5994, 1
      %vm6031 = vcmp.eq.s32.totalorder %v5995, 1
      %vm6032 = vcmp.eq.s32.totalorder %v5996, 1
      %vm6033 = vcmp.eq.s32.totalorder %v5997, 1
      %vm6034 = vcmp.eq.s32.totalorder %v5998, 1
      %v6035 = vsel %vm5999, %v4630, 0.0
      %v6036 = vsel %vm6000, %v4631, 0.0
      %v6037 = vsel %vm6001, %v4632, 0.0
      %v6038 = vsel %vm6002, %v4633, 0.0
      %v6039 = vsel %vm6003, %v4634, 0.0
      %v6040 = vsel %vm6004, %v4635, 0.0
      %v6041 = vsel %vm6005, %v4636, 0.0
      %v6042 = vsel %vm6006, %v4637, 0.0
      %v6043 = vsel %vm6007, %v4638, 0.0
      %v6044 = vsel %vm6008, %v4639, 0.0
      %v6045 = vsel %vm6009, %v4640, 0.0
      %v6046 = vsel %vm6010, %v4641, 0.0
      %v6047 = vsel %vm6011, %v4642, 0.0
      %v6048 = vsel %vm6012, %v4643, 0.0
      %v6049 = vsel %vm6013, %v4644, 0.0
      %v6050 = vsel %vm6014, %v4645, 0.0
      %v6051 = vsel %vm6015, %v4646, 0.0
      %v6052 = vsel %vm6016, %v4647, 0.0
      %v6053 = vsel %vm6017, %v4648, 0.0
      %v6054 = vsel %vm6018, %v4649, 0.0
      %v6055 = vsel %vm6019, %v4650, 0.0
      %v6056 = vsel %vm6020, %v4651, 0.0
      %v6057 = vsel %vm6021, %v4652, 0.0
      %v6058 = vsel %vm6022, %v4653, 0.0
      %v6059 = vsel %vm6023, %v4654, 0.0
      %v6060 = vsel %vm6024, %v4655, 0.0
      %v6061 = vsel %vm6025, %v4656, 0.0
      %v6062 = vsel %vm6026, %v4657, 0.0
      %v6063 = vsel %vm6027, %v4658, 0.0
      %v6064 = vsel %vm6028, %v4659, 0.0
      %v6065 = vsel %vm6029, %v4660, 0.0
      %v6066 = vsel %vm6030, %v4661, 0.0
      %v6067 = vsel %vm6031, %v4662, 0.0
      %v6068 = vsel %vm6032, %v4663, 0.0
      %v6069 = vsel %vm6033, %v4664, 0.0
      %v6070 = vsel %vm6034, %v4665, 0.0
      %6071 = vst [vmem:[%s170] sm:$0xf] 0
      %6072 = vst [vmem:[%s170 + $0x4] sm:$0xf] 0
      %6073 = vst [vmem:[%s170 + $0x8] sm:$0xf] 0
      %6074 = vst [vmem:[%s170 + $0xc] sm:$0xf] 0
      %6075 = vst [vmem:[%s170 + $0x10] sm:$0xf] 0
      %6076 = vst [vmem:[%s170 + $0x14] sm:$0xf] 0
      %6077 = vst [vmem:[%s170 + $0x18] sm:$0xf] 0
      %6078 = vst [vmem:[%s170 + $0x1c] sm:$0xf] 0
      %6079 = vst [vmem:[%s170 + $0x20] sm:$0xf] 0
      %6080 = vst [vmem:[%s170 + $0x24] sm:$0xf] 0
      %6081 = vst [vmem:[%s170 + $0x28] sm:$0xf] 0
      %6082 = vst [vmem:[%s170 + $0x2c] sm:$0xf] 0
      %6083 = vst [vmem:[%s170 + $0x30] sm:$0xf] 0
      %6084 = vst [vmem:[%s170 + $0x34] sm:$0xf] 0
      %6085 = vst [vmem:[%s170 + $0x38] sm:$0xf] 0
      %6086 = vst [vmem:[%s170 + $0x3c] sm:$0xf] 0
      %6087 = vst [vmem:[%s170 + $0x40] sm:$0xf] 0
      %6088 = vst [vmem:[%s170 + $0x44] sm:$0xf] 0
      %6089 = vst [vmem:[%s170 + $0x48] sm:$0xf] 0
      %6090 = vst [vmem:[%s170 + $0x4c] sm:$0xf] 0
      %6091 = vst [vmem:[%s170 + $0x50] sm:$0xf] 0
      %6092 = vst [vmem:[%s170 + $0x54] sm:$0xf] 0
      %6093 = vst [vmem:[%s170 + $0x58] sm:$0xf] 0
      %6094 = vst [vmem:[%s170 + $0x5c] sm:$0xf] 0
      %6095 = vst [vmem:[%s170 + $0x60] sm:$0xf] 0
      %6096 = vst [vmem:[%s170 + $0x64] sm:$0xf] 0
      %6097 = vst [vmem:[%s170 + $0x68] sm:$0xf] 0
      %6098 = vst [vmem:[%s170 + $0x6c] sm:$0xf] 0
      %6099 = vst [vmem:[%s170 + $0x70] sm:$0xf] 0
      %6100 = vst [vmem:[%s170 + $0x74] sm:$0xf] 0
      %6101 = vst [vmem:[%s170 + $0x78] sm:$0xf] 0
      %6102 = vst [vmem:[%s170 + $0x7c] sm:$0xf] 0
      %6103 = vst [vmem:[%s170 + $0x80] sm:$0xf] 0
      %6104 = vst [vmem:[%s170 + $0x84] sm:$0xf] 0
      %6105 = vst [vmem:[%s170 + $0x88] sm:$0xf] 0
      %6106 = vst [vmem:[%s170 + $0x8c] sm:$0xf] 0
      %6107 = vst [vmem:[%s170 + $0x90] sm:$0xf] 0
      %6108 = vst [vmem:[%s170 + $0x94] sm:$0xf] 0
      %6109 = vst [vmem:[%s170 + $0x98] sm:$0xf] 0
      %6110 = vst [vmem:[%s170 + $0x9c] sm:$0xf] 0
      %6111 = vst [vmem:[%s170 + $0xa0] sm:$0xf] 0
      %6112 = vst [vmem:[%s170 + $0xa4] sm:$0xf] 0
      %6113 = vst [vmem:[%s170 + $0xa8] sm:$0x7] 0
      %v6114 = vpack.c.bf16 %v6035, %v6035
      %v6115 = vpack.c.bf16 %v6036, %v6036
      %v6116 = vpack.c.bf16 %v6037, %v6037
      %v6117 = vpack.c.bf16 %v6038, %v6038
      %v6118 = vpack.c.bf16 %v6039, %v6039
      %v6119 = vpack.c.bf16 %v6040, %v6040
      %v6120 = vpack.c.bf16 %v6041, %v6041
      %v6121 = vpack.c.bf16 %v6042, %v6042
      %v6122 = vpack.c.bf16 %v6043, %v6043
      %v6123 = vpack.c.bf16 %v6044, %v6044
      %v6124 = vpack.c.bf16 %v6045, %v6045
      %v6125 = vpack.c.bf16 %v6046, %v6046
      %v6126 = vpack.c.bf16 %v6047, %v6047
      %v6127 = vpack.c.bf16 %v6048, %v6048
      %v6128 = vpack.c.bf16 %v6049, %v6049
      %v6129 = vpack.c.bf16 %v6050, %v6050
      %v6130 = vpack.c.bf16 %v6051, %v6051
      %v6131 = vpack.c.bf16 %v6052, %v6052
      %v6132 = vpack.c.bf16 %v6053, %v6053
      %v6133 = vpack.c.bf16 %v6054, %v6054
      %v6134 = vpack.c.bf16 %v6055, %v6055
      %v6135 = vpack.c.bf16 %v6056, %v6056
      %v6136 = vpack.c.bf16 %v6057, %v6057
      %v6137 = vpack.c.bf16 %v6058, %v6058
      %v6138 = vpack.c.bf16 %v6059, %v6059
      %v6139 = vpack.c.bf16 %v6060, %v6060
      %v6140 = vpack.c.bf16 %v6061, %v6061
      %v6141 = vpack.c.bf16 %v6062, %v6062
      %v6142 = vpack.c.bf16 %v6063, %v6063
      %v6143 = vpack.c.bf16 %v6064, %v6064
      %v6144 = vpack.c.bf16 %v6065, %v6065
      %v6145 = vpack.c.bf16 %v6066, %v6066
      %v6146 = vpack.c.bf16 %v6067, %v6067
      %v6147 = vpack.c.bf16 %v6068, %v6068
      %v6148 = vpack.c.bf16 %v6069, %v6069
      %v6149 = vpack.c.bf16 %v6070, %v6070
      %vm6150 = vsmask.f32 1280
      %vm6151 = vsmask.f32 5392
      %vm6152 = vmor %vm6150, %vm6151
      %v6154 = vshrl.u32 %v6114, 16
      %v6156 = vrot.slane %v6154, 6
      %v6157 = vshll.u32 %v6114, 16
      %v6159 = vrot.slane %v6157, 7
      %v6160 = vor.u32 %v6156, %v6159
      %v6161 = vrot.slane %v6160, 4
      %v6163 = vshrl.u32 %v6115, 16
      %v6165 = vrot.slane %v6163, 6
      %v6166 = vshll.u32 %v6115, 16
      %v6168 = vrot.slane %v6166, 7
      %v6169 = vor.u32 %v6165, %v6168
      %v6170 = vsel %vm6152, %v6161, %v6169
      %v6171 = vrot.slane %v6169, 4
      %v6173 = vshrl.u32 %v6116, 16
      %v6175 = vrot.slane %v6173, 6
      %v6176 = vshll.u32 %v6116, 16
      %v6178 = vrot.slane %v6176, 7
      %v6179 = vor.u32 %v6175, %v6178
      %v6180 = vsel %vm6152, %v6171, %v6179
      %v6181 = vrot.slane %v6179, 4
      %v6183 = vshrl.u32 %v6117, 16
      %v6185 = vrot.slane %v6183, 6
      %v6186 = vshll.u32 %v6117, 16
      %v6188 = vrot.slane %v6186, 7
      %v6189 = vor.u32 %v6185, %v6188
      %v6190 = vsel %vm6152, %v6181, %v6189
      %v6191 = vrot.slane %v6189, 4
      %v6193 = vshrl.u32 %v6118, 16
      %v6195 = vrot.slane %v6193, 6
      %v6196 = vshll.u32 %v6118, 16
      %v6198 = vrot.slane %v6196, 7
      %v6199 = vor.u32 %v6195, %v6198
      %v6200 = vsel %vm6152, %v6191, %v6199
      %v6201 = vrot.slane %v6199, 4
      %v6203 = vshrl.u32 %v6119, 16
      %v6205 = vrot.slane %v6203, 6
      %v6206 = vshll.u32 %v6119, 16
      %v6208 = vrot.slane %v6206, 7
      %v6209 = vor.u32 %v6205, %v6208
      %v6210 = vsel %vm6152, %v6201, %v6209
      %v6211 = vrot.slane %v6209, 4
      %v6213 = vshrl.u32 %v6120, 16
      %v6215 = vrot.slane %v6213, 6
      %v6216 = vshll.u32 %v6120, 16
      %v6218 = vrot.slane %v6216, 7
      %v6219 = vor.u32 %v6215, %v6218
      %v6220 = vsel %vm6152, %v6211, %v6219
      %v6221 = vrot.slane %v6219, 4
      %v6223 = vshrl.u32 %v6121, 16
      %v6225 = vrot.slane %v6223, 6
      %v6226 = vshll.u32 %v6121, 16
      %v6228 = vrot.slane %v6226, 7
      %v6229 = vor.u32 %v6225, %v6228
      %v6230 = vsel %vm6152, %v6221, %v6229
      %v6231 = vrot.slane %v6229, 4
      %v6233 = vshrl.u32 %v6122, 16
      %v6235 = vrot.slane %v6233, 6
      %v6236 = vshll.u32 %v6122, 16
      %v6238 = vrot.slane %v6236, 7
      %v6239 = vor.u32 %v6235, %v6238
      %v6240 = vsel %vm6152, %v6231, %v6239
      %v6241 = vrot.slane %v6239, 4
      %v6243 = vshrl.u32 %v6123, 16
      %v6245 = vrot.slane %v6243, 6
      %v6246 = vshll.u32 %v6123, 16
      %v6248 = vrot.slane %v6246, 7
      %v6249 = vor.u32 %v6245, %v6248
      %v6250 = vsel %vm6152, %v6241, %v6249
      %v6251 = vrot.slane %v6249, 4
      %v6253 = vshrl.u32 %v6124, 16
      %v6255 = vrot.slane %v6253, 6
      %v6256 = vshll.u32 %v6124, 16
      %v6258 = vrot.slane %v6256, 7
      %v6259 = vor.u32 %v6255, %v6258
      %v6260 = vsel %vm6152, %v6251, %v6259
      %v6261 = vrot.slane %v6259, 4
      %v6263 = vshrl.u32 %v6125, 16
      %v6265 = vrot.slane %v6263, 6
      %v6266 = vshll.u32 %v6125, 16
      %v6268 = vrot.slane %v6266, 7
      %v6269 = vor.u32 %v6265, %v6268
      %v6270 = vsel %vm6152, %v6261, %v6269
      %v6271 = vrot.slane %v6269, 4
      %v6273 = vshrl.u32 %v6126, 16
      %v6275 = vrot.slane %v6273, 6
      %v6276 = vshll.u32 %v6126, 16
      %v6278 = vrot.slane %v6276, 7
      %v6279 = vor.u32 %v6275, %v6278
      %v6280 = vsel %vm6152, %v6271, %v6279
      %v6281 = vrot.slane %v6279, 4
      %v6283 = vshrl.u32 %v6127, 16
      %v6285 = vrot.slane %v6283, 6
      %v6286 = vshll.u32 %v6127, 16
      %v6288 = vrot.slane %v6286, 7
      %v6289 = vor.u32 %v6285, %v6288
      %v6290 = vsel %vm6152, %v6281, %v6289
      %v6291 = vrot.slane %v6289, 4
      %v6293 = vshrl.u32 %v6128, 16
      %v6295 = vrot.slane %v6293, 6
      %v6296 = vshll.u32 %v6128, 16
      %v6298 = vrot.slane %v6296, 7
      %v6299 = vor.u32 %v6295, %v6298
      %v6300 = vsel %vm6152, %v6291, %v6299
      %v6301 = vrot.slane %v6299, 4
      %v6303 = vshrl.u32 %v6129, 16
      %v6305 = vrot.slane %v6303, 6
      %v6306 = vshll.u32 %v6129, 16
      %v6308 = vrot.slane %v6306, 7
      %v6309 = vor.u32 %v6305, %v6308
      %v6310 = vsel %vm6152, %v6301, %v6309
      %v6311 = vrot.slane %v6309, 4
      %v6313 = vshrl.u32 %v6130, 16
      %v6315 = vrot.slane %v6313, 6
      %v6316 = vshll.u32 %v6130, 16
      %v6318 = vrot.slane %v6316, 7
      %v6319 = vor.u32 %v6315, %v6318
      %v6320 = vsel %vm6152, %v6311, %v6319
      %v6321 = vrot.slane %v6319, 4
      %v6323 = vshrl.u32 %v6131, 16
      %v6325 = vrot.slane %v6323, 6
      %v6326 = vshll.u32 %v6131, 16
      %v6328 = vrot.slane %v6326, 7
      %v6329 = vor.u32 %v6325, %v6328
      %v6330 = vsel %vm6152, %v6321, %v6329
      %v6331 = vrot.slane %v6329, 4
      %v6333 = vshrl.u32 %v6132, 16
      %v6335 = vrot.slane %v6333, 6
      %v6336 = vshll.u32 %v6132, 16
      %v6338 = vrot.slane %v6336, 7
      %v6339 = vor.u32 %v6335, %v6338
      %v6340 = vsel %vm6152, %v6331, %v6339
      %v6341 = vrot.slane %v6339, 4
      %v6343 = vshrl.u32 %v6133, 16
      %v6345 = vrot.slane %v6343, 6
      %v6346 = vshll.u32 %v6133, 16
      %v6348 = vrot.slane %v6346, 7
      %v6349 = vor.u32 %v6345, %v6348
      %v6350 = vsel %vm6152, %v6341, %v6349
      %v6351 = vrot.slane %v6349, 4
      %v6353 = vshrl.u32 %v6134, 16
      %v6355 = vrot.slane %v6353, 6
      %v6356 = vshll.u32 %v6134, 16
      %v6358 = vrot.slane %v6356, 7
      %v6359 = vor.u32 %v6355, %v6358
      %v6360 = vsel %vm6152, %v6351, %v6359
      %v6361 = vrot.slane %v6359, 4
      %v6363 = vshrl.u32 %v6135, 16
      %v6365 = vrot.slane %v6363, 6
      %v6366 = vshll.u32 %v6135, 16
      %v6368 = vrot.slane %v6366, 7
      %v6369 = vor.u32 %v6365, %v6368
      %v6370 = vsel %vm6152, %v6361, %v6369
      %v6371 = vrot.slane %v6369, 4
      %v6373 = vshrl.u32 %v6136, 16
      %v6375 = vrot.slane %v6373, 6
      %v6376 = vshll.u32 %v6136, 16
      %v6378 = vrot.slane %v6376, 7
      %v6379 = vor.u32 %v6375, %v6378
      %v6380 = vsel %vm6152, %v6371, %v6379
      %v6381 = vrot.slane %v6379, 4
      %v6383 = vshrl.u32 %v6137, 16
      %v6385 = vrot.slane %v6383, 6
      %v6386 = vshll.u32 %v6137, 16
      %v6388 = vrot.slane %v6386, 7
      %v6389 = vor.u32 %v6385, %v6388
      %v6390 = vsel %vm6152, %v6381, %v6389
      %v6391 = vrot.slane %v6389, 4
      %v6393 = vshrl.u32 %v6138, 16
      %v6395 = vrot.slane %v6393, 6
      %v6396 = vshll.u32 %v6138, 16
      %v6398 = vrot.slane %v6396, 7
      %v6399 = vor.u32 %v6395, %v6398
      %v6400 = vsel %vm6152, %v6391, %v6399
      %v6401 = vrot.slane %v6399, 4
      %v6403 = vshrl.u32 %v6139, 16
      %v6405 = vrot.slane %v6403, 6
      %v6406 = vshll.u32 %v6139, 16
      %v6408 = vrot.slane %v6406, 7
      %v6409 = vor.u32 %v6405, %v6408
      %v6410 = vsel %vm6152, %v6401, %v6409
      %v6411 = vrot.slane %v6409, 4
      %v6413 = vshrl.u32 %v6140, 16
      %v6415 = vrot.slane %v6413, 6
      %v6416 = vshll.u32 %v6140, 16
      %v6418 = vrot.slane %v6416, 7
      %v6419 = vor.u32 %v6415, %v6418
      %v6420 = vsel %vm6152, %v6411, %v6419
      %v6421 = vrot.slane %v6419, 4
      %v6423 = vshrl.u32 %v6141, 16
      %v6425 = vrot.slane %v6423, 6
      %v6426 = vshll.u32 %v6141, 16
      %v6428 = vrot.slane %v6426, 7
      %v6429 = vor.u32 %v6425, %v6428
      %v6430 = vsel %vm6152, %v6421, %v6429
      %v6431 = vrot.slane %v6429, 4
      %v6433 = vshrl.u32 %v6142, 16
      %v6435 = vrot.slane %v6433, 6
      %v6436 = vshll.u32 %v6142, 16
      %v6438 = vrot.slane %v6436, 7
      %v6439 = vor.u32 %v6435, %v6438
      %v6440 = vsel %vm6152, %v6431, %v6439
      %v6441 = vrot.slane %v6439, 4
      %v6443 = vshrl.u32 %v6143, 16
      %v6445 = vrot.slane %v6443, 6
      %v6446 = vshll.u32 %v6143, 16
      %v6448 = vrot.slane %v6446, 7
      %v6449 = vor.u32 %v6445, %v6448
      %v6450 = vsel %vm6152, %v6441, %v6449
      %v6451 = vrot.slane %v6449, 4
      %v6453 = vshrl.u32 %v6144, 16
      %v6455 = vrot.slane %v6453, 6
      %v6456 = vshll.u32 %v6144, 16
      %v6458 = vrot.slane %v6456, 7
      %v6459 = vor.u32 %v6455, %v6458
      %v6460 = vsel %vm6152, %v6451, %v6459
      %v6461 = vrot.slane %v6459, 4
      %v6463 = vshrl.u32 %v6145, 16
      %v6465 = vrot.slane %v6463, 6
      %v6466 = vshll.u32 %v6145, 16
      %v6468 = vrot.slane %v6466, 7
      %v6469 = vor.u32 %v6465, %v6468
      %v6470 = vsel %vm6152, %v6461, %v6469
      %v6471 = vrot.slane %v6469, 4
      %v6473 = vshrl.u32 %v6146, 16
      %v6475 = vrot.slane %v6473, 6
      %v6476 = vshll.u32 %v6146, 16
      %v6478 = vrot.slane %v6476, 7
      %v6479 = vor.u32 %v6475, %v6478
      %v6480 = vsel %vm6152, %v6471, %v6479
      %v6481 = vrot.slane %v6479, 4
      %v6483 = vshrl.u32 %v6147, 16
      %v6485 = vrot.slane %v6483, 6
      %v6486 = vshll.u32 %v6147, 16
      %v6488 = vrot.slane %v6486, 7
      %v6489 = vor.u32 %v6485, %v6488
      %v6490 = vsel %vm6152, %v6481, %v6489
      %v6491 = vrot.slane %v6489, 4
      %v6493 = vshrl.u32 %v6148, 16
      %v6495 = vrot.slane %v6493, 6
      %v6496 = vshll.u32 %v6148, 16
      %v6498 = vrot.slane %v6496, 7
      %v6499 = vor.u32 %v6495, %v6498
      %v6500 = vsel %vm6152, %v6491, %v6499
      %v6501 = vrot.slane %v6499, 4
      %v6503 = vshrl.u32 %v6149, 16
      %v6505 = vrot.slane %v6503, 6
      %v6506 = vshll.u32 %v6149, 16
      %v6508 = vrot.slane %v6506, 7
      %v6509 = vor.u32 %v6505, %v6508
      %v6510 = vsel %vm6152, %v6501, %v6509
      %v6511 = vrot.slane %v6509, 4
      %vm6549 = vcmask 1043457
      %vm6550 = vsmask.f32 7942
      %vm6551 = vmand %vm6549, %vm6550
      %v6552 = vld [vmem:[%s170 + $0x8] sm:$0xe]
      %v6553 = vsel %vm6551, %v6160, %v6552
      %6554 = vst [vmem:[%s170 + $0x8] sm:$0xe] %v6553
      %6555 = vst [vmem:[%s170 + $0xc] sm:$0xf] %v6170
      %6556 = vst [vmem:[%s170 + $0x10] sm:$0xf] %v6180
      %6557 = vst [vmem:[%s170 + $0x14] sm:$0xf] %v6190
      %6558 = vst [vmem:[%s170 + $0x18] sm:$0xf] %v6200
      %6559 = vst [vmem:[%s170 + $0x1c] sm:$0xf] %v6210
      %6560 = vst [vmem:[%s170 + $0x20] sm:$0xf] %v6220
      %6561 = vst [vmem:[%s170 + $0x24] sm:$0xf] %v6230
      %6562 = vst [vmem:[%s170 + $0x28] sm:$0xf] %v6240
      %6563 = vst [vmem:[%s170 + $0x2c] sm:$0xf] %v6250
      %6564 = vst [vmem:[%s170 + $0x30] sm:$0xf] %v6260
      %6565 = vst [vmem:[%s170 + $0x34] sm:$0xf] %v6270
      %6566 = vst [vmem:[%s170 + $0x38] sm:$0xf] %v6280
      %6567 = vst [vmem:[%s170 + $0x3c] sm:$0xf] %v6290
      %6568 = vst [vmem:[%s170 + $0x40] sm:$0xf] %v6300
      %6569 = vst [vmem:[%s170 + $0x44] sm:$0xf] %v6310
      %6570 = vst [vmem:[%s170 + $0x48] sm:$0xf] %v6320
      %6571 = vst [vmem:[%s170 + $0x4c] sm:$0xf] %v6330
      %6572 = vst [vmem:[%s170 + $0x50] sm:$0xf] %v6340
      %6573 = vst [vmem:[%s170 + $0x54] sm:$0xf] %v6350
      %6574 = vst [vmem:[%s170 + $0x58] sm:$0xf] %v6360
      %6575 = vst [vmem:[%s170 + $0x5c] sm:$0xf] %v6370
      %6576 = vst [vmem:[%s170 + $0x60] sm:$0xf] %v6380
      %6577 = vst [vmem:[%s170 + $0x64] sm:$0xf] %v6390
      %6578 = vst [vmem:[%s170 + $0x68] sm:$0xf] %v6400
      %6579 = vst [vmem:[%s170 + $0x6c] sm:$0xf] %v6410
      %6580 = vst [vmem:[%s170 + $0x70] sm:$0xf] %v6420
      %6581 = vst [vmem:[%s170 + $0x74] sm:$0xf] %v6430
      %6582 = vst [vmem:[%s170 + $0x78] sm:$0xf] %v6440
      %6583 = vst [vmem:[%s170 + $0x7c] sm:$0xf] %v6450
      %6584 = vst [vmem:[%s170 + $0x80] sm:$0xf] %v6460
      %6585 = vst [vmem:[%s170 + $0x84] sm:$0xf] %v6470
      %6586 = vst [vmem:[%s170 + $0x88] sm:$0xf] %v6480
      %6587 = vst [vmem:[%s170 + $0x8c] sm:$0xf] %v6490
      %6588 = vst [vmem:[%s170 + $0x90] sm:$0xf] %v6500
      %6589 = vst [vmem:[%s170 + $0x94] sm:$0xf] %v6510
      %vm6590 = vcmask 1041408
      %vm6591 = vmand %vm6590, %vm6150
      %v6592 = vld [vmem:[%s170 + $0x98] sm:$0x3]
      %v6593 = vsel %vm6591, %v6511, %v6592
      %6594 = vst [vmem:[%s170 + $0x98] sm:$0x3] %v6593
      %p6595 = scmp.lt.s32.totalorder %s14, 1
      %s6596 = scalar_select %p6595, %s14, 1
      %s6597 = smul.addr %s6596, 43
      %s6598 = smul.addr %s6597, 4
      %s6599 = scalar_lea.vmem %s3, %s6598
      // Predicated region
      $region33: #{basic_block_forward.2} parent=31 // pred_check
        %p6600 = pneg %p100
      $region34: #{basic_block_forward.2} parent=31 // pred_check_branch
        %6602 = sbr.rel (%p6600) target = $region36
      $region35: #{basic_block_forward.2} parent=31 // pred_region
        _
      $region36: #{basic_block_forward.2} parent=31 // pred_fallthru
        _
    $region32: #{basic_block_forward.2} parent=5 // pred_fallthru
      _
    %p6603 = scmp.le.s32.totalorder 2, %s9
    // Predicated region
    $region37: #{basic_block_forward.2} parent=5 // pred_check
      %p6604 = pneg %p6603
    $region38: #{basic_block_forward.2} parent=5 // pred_check_branch
      %6606 = sbr.rel (%p6604) target = $region40
    $region39: #{basic_block_forward.2} parent=5 // pred_region
      %s6607 = ssub.s32 %s9, 2
      // Predicated region
      $region41: #{basic_block_forward.2} parent=39 // pred_check
        %p6608 = pneg %p106
      $region42: #{basic_block_forward.2} parent=39 // pred_check_branch
        %6610 = sbr.rel (%p6608) target = $region44
      $region43: #{basic_block_forward.2} parent=39 // pred_region
        %p6611 = scmp.lt.s32.totalorder %s15, 1
        %s6612 = scalar_select %p6611, %s15, 1
        %s6613 = smul.addr %s6612, 43
        %s6614 = smul.addr %s6613, 4
        %s6615 = scalar_lea.vmem %s3, %s6614
      $region44: #{basic_block_forward.2} parent=39 // pred_fallthru
        _
    $region40: #{basic_block_forward.2} parent=5 // pred_fallthru
      _
  $region6: #{basic_block_forward.2} parent=0 // loop_footer
    %s13 = sadd.s32 1, %s9
  $region7: #{basic_block_forward.2} parent=0 // loop_footer_branch
    %8 = sbr.rel target = $region3
  $region8: #{basic_block_forward.2} parent=0 // loop_exit
    _

</llo_original>
